<compile_context>
chip_gen: v6e
topology: v6e:2x2x1
jax: 0.10.0
libtpu: 0.0.40
codegen_flags: <defaults>
</compile_context>

<pallas_src>
import jax
import jax.numpy as jnp
import numpy as np
from jax.experimental import pallas as pl
from jax.experimental.pallas import tpu as pltpu

H_PR_DIM = 50      # small-MLP hidden width (module constant)
HP_PAD = 64        # H_PR_DIM padded to a lane-friendly width
PACK_W = 128       # lane width of the packed per-step output row


# ---------------------------------------------------------------------------
# Parameter initialization (deterministic, PyTorch-Linear-style uniform init)
# ---------------------------------------------------------------------------
def _linear_params(key, fan_in, fan_out):
    kw, kb = jax.random.split(key)
    bound = 1.0 / np.sqrt(fan_in)
    W = jax.random.uniform(kw, (fan_in, fan_out), jnp.float32, -bound, bound)
    b = jax.random.uniform(kb, (1, fan_out), jnp.float32, -bound, bound)
    return W, b


def init_params(key, input_dim, hidden_dim, latent_dim):
    keys = jax.random.split(key, 11)
    p = {}
    p["post_mu"] = _linear_params(keys[0], input_dim + hidden_dim, H_PR_DIM) + \
                   _linear_params(keys[1], H_PR_DIM, latent_dim)
    p["post_lv"] = _linear_params(keys[2], input_dim + hidden_dim, H_PR_DIM) + \
                   _linear_params(keys[3], H_PR_DIM, latent_dim)
    p["prior_mu"] = _linear_params(keys[4], hidden_dim, H_PR_DIM) + \
                    _linear_params(keys[5], H_PR_DIM, latent_dim)
    p["prior_lv"] = _linear_params(keys[6], hidden_dim, H_PR_DIM) + \
                    _linear_params(keys[7], H_PR_DIM, latent_dim)
    p["hid_next"] = _linear_params(keys[8], input_dim + hidden_dim + latent_dim,
                                   H_PR_DIM) + \
                    _linear_params(keys[9], H_PR_DIM, hidden_dim)
    p["out"] = _linear_params(keys[10], hidden_dim + latent_dim, input_dim)
    return p


# ---------------------------------------------------------------------------
# Weight packing: fused / split / lane-padded slabs (done once, outside kernel)
# ---------------------------------------------------------------------------
def _pack_params(p, input_dim, hidden_dim, latent_dim):
    D, H, L = input_dim, hidden_dim, latent_dim
    HP = H_PR_DIM
    N1 = 4 * HP_PAD   # 256-wide fused first layer (fills an MXU pass)
    f32 = jnp.float32

    pm_W1, pm_b1, pm_W2, pm_b2 = p["post_mu"]
    plv_W1, plv_b1, plv_W2, plv_b2 = p["post_lv"]
    prm_W1, prm_b1, prm_W2, prm_b2 = p["prior_mu"]
    prl_W1, prl_b1, prl_W2, prl_b2 = p["prior_lv"]
    hn_W1, hn_b1, hn_W2, hn_b2 = p["hid_next"]
    out_W, out_b = p["out"]

    # Packed-output lane offsets.
    pm_o, plv_o, prm_o, prl_o, xh_o = 0, L, 2 * L, 3 * L, 4 * L

    # --- Stage A: fused first layer of the 4 statistic MLPs, split into an
    #     x-block and an h-block so the kernel never concatenates [x, h].
    wa_x = jnp.zeros((D, N1), f32)
    wa_x = wa_x.at[:, 0 * HP_PAD:0 * HP_PAD + HP].set(pm_W1[:D])
    wa_x = wa_x.at[:, 1 * HP_PAD:1 * HP_PAD + HP].set(plv_W1[:D])
    # prior MLPs have no x input -> their x-block columns stay zero.

    wa_h = jnp.zeros((H, N1), f32)
    wa_h = wa_h.at[:, 0 * HP_PAD:0 * HP_PAD + HP].set(pm_W1[D:])
    wa_h = wa_h.at[:, 1 * HP_PAD:1 * HP_PAD + HP].set(plv_W1[D:])
    wa_h = wa_h.at[:, 2 * HP_PAD:2 * HP_PAD + HP].set(prm_W1)
    wa_h = wa_h.at[:, 3 * HP_PAD:3 * HP_PAD + HP].set(prl_W1)

    ba = jnp.zeros((1, N1), f32)
    ba = ba.at[:, 0 * HP_PAD:0 * HP_PAD + HP].set(pm_b1)
    ba = ba.at[:, 1 * HP_PAD:1 * HP_PAD + HP].set(plv_b1)
    ba = ba.at[:, 2 * HP_PAD:2 * HP_PAD + HP].set(prm_b1)
    ba = ba.at[:, 3 * HP_PAD:3 * HP_PAD + HP].set(prl_b1)

    # --- Stage A second layer: block-structured (256, 128) so each statistic
    #     lands directly at its packed-output lane offset.
    wa2 = jnp.zeros((N1, PACK_W), f32)
    wa2 = wa2.at[0 * HP_PAD:0 * HP_PAD + HP, pm_o:pm_o + L].set(pm_W2)
    wa2 = wa2.at[1 * HP_PAD:1 * HP_PAD + HP, plv_o:plv_o + L].set(plv_W2)
    wa2 = wa2.at[2 * HP_PAD:2 * HP_PAD + HP, prm_o:prm_o + L].set(prm_W2)
    wa2 = wa2.at[3 * HP_PAD:3 * HP_PAD + HP, prl_o:prl_o + L].set(prl_W2)

    ba2 = jnp.zeros((1, PACK_W), f32)
    ba2 = ba2.at[:, pm_o:pm_o + L].set(pm_b2)
    ba2 = ba2.at[:, plv_o:plv_o + L].set(plv_b2)
    ba2 = ba2.at[:, prm_o:prm_o + L].set(prm_b2)
    ba2 = ba2.at[:, prl_o:prl_o + L].set(prl_b2)

    # --- Stage B: to_hidden_next MLP, first layer split (x | h | z).
    wb_x = jnp.zeros((D, HP_PAD), f32).at[:, :HP].set(hn_W1[:D])
    wb_h = jnp.zeros((H, HP_PAD), f32).at[:, :HP].set(hn_W1[D:D + H])
    wb_z = jnp.zeros((L, HP_PAD), f32).at[:, :HP].set(hn_W1[D + H:])
    bb = jnp.zeros((1, HP_PAD), f32).at[:, :HP].set(hn_b1)
    wb2 = jnp.zeros((HP_PAD, H), f32).at[:HP, :].set(hn_W2)
    bb2 = hn_b2.astype(f32)

    # --- Stage C: output head, split (h | z), writing straight into the
    #     x_hat lanes of the packed output.
    wc_h = jnp.zeros((H, PACK_W), f32).at[:, xh_o:xh_o + D].set(out_W[:H])
    wc_z = jnp.zeros((L, PACK_W), f32).at[:, xh_o:xh_o + D].set(out_W[H:])
    bc = jnp.zeros((1, PACK_W), f32).at[:, xh_o:xh_o + D].set(out_b)

    return (wa_x, wa_h, ba, wa2, ba2,
            wb_x, wb_h, wb_z, bb, wb2, bb2,
            wc_h, wc_z, bc)


# ---------------------------------------------------------------------------
# Pallas kernel: the whole T-step recurrence in one invocation
# ---------------------------------------------------------------------------
def _stochastic_lstm_kernel(
    x_ref, eps_ref, h0_ref,
    wa_x_ref, wa_h_ref, ba_ref, wa2_ref, ba2_ref,
    wb_x_ref, wb_h_ref, wb_z_ref, bb_ref, wb2_ref, bb2_ref,
    wc_h_ref, wc_z_ref, bc_ref,
    out_ref,
):
    T, B, D = x_ref.shape
    L = eps_ref.shape[2]
    W = out_ref.shape[2]
    xh_o = 4 * L
    f32 = jnp.float32

    # Hoist bias broadcasts out of the time loop (JAX does not CSE
    # broadcast_in_dim inside the loop body).
    ba = jnp.broadcast_to(ba_ref[...], (B, ba_ref.shape[1]))
    ba2 = jnp.broadcast_to(ba2_ref[...], (B, ba2_ref.shape[1]))
    bb = jnp.broadcast_to(bb_ref[...], (B, bb_ref.shape[1]))
    bb2 = jnp.broadcast_to(bb2_ref[...], (B, bb2_ref.shape[1]))
    bc = jnp.broadcast_to(bc_ref[...], (B, bc_ref.shape[1]))

    lane = jax.lax.broadcasted_iota(jnp.int32, (B, W), 1)
    xhat_mask = (lane >= xh_o) & (lane < xh_o + D)

    def dot(a, w_ref):
        # Weight reads stay inside the loop (vld slack >> vreg pressure).
        return jnp.dot(a, w_ref[...], preferred_element_type=f32)

    def step(t, h):
        x_t = x_ref[t]                          # (B, D)
        eps = eps_ref[t]                        # (B, L)

        # Stage A: 4 statistic MLPs fused (one 256-wide matmul + one
        # block-structured second layer into the packed lane layout).
        h1 = jnp.maximum(dot(x_t, wa_x_ref) + dot(h, wa_h_ref) + ba, 0.0)
        stats = dot(h1, wa2_ref) + ba2          # (B, 128), packed layout

        post_mu = stats[:, 0:L]
        post_lv = stats[:, L:2 * L]
        z = post_mu + jnp.exp(0.5 * post_lv) * eps            # (B, L)

        # Stage B: to_hidden_next (split matmuls, no lane concat).
        h2 = jnp.maximum(
            dot(x_t, wb_x_ref) + dot(h, wb_h_ref) + dot(z, wb_z_ref) + bb, 0.0)
        h_next = dot(h2, wb2_ref) + bb2         # (B, H)

        # Stage C: output head written straight into the x_hat lanes.
        logits = dot(h, wc_h_ref) + dot(z, wc_z_ref) + bc     # (B, 128)
        out_ref[t] = jnp.where(xhat_mask, jax.nn.sigmoid(logits), stats)
        return h_next

    jax.lax.fori_loop(0, T, step, h0_ref[...], unroll=(T <= 16))


# ---------------------------------------------------------------------------
# Wrapper: batch padding, weight packing, pallas_call, output unpacking
# ---------------------------------------------------------------------------
@jax.jit
def stochastic_lstm_forward(x, hidden, noise, params):
    """x: (B, T, D_in), hidden: (B, H), noise: (B, T, L) -> 5 arrays (B, T, *)."""
    B, T, D = x.shape
    H = hidden.shape[1]
    L = noise.shape[2]
    B_pad = ((B + 7) // 8) * 8      # full 8-sublane rows
    f32 = jnp.float32

    # Time-major, zero-padded batch (padded rows are garbage; sliced off below).
    x_seq = jnp.zeros((T, B_pad, D), f32).at[:, :B].set(
        jnp.transpose(x, (1, 0, 2)).astype(f32))
    eps_seq = jnp.zeros((T, B_pad, L), f32).at[:, :B].set(
        jnp.transpose(noise, (1, 0, 2)).astype(f32))
    h0 = jnp.zeros((B_pad, H), f32).at[:B].set(hidden.astype(f32))

    slabs = _pack_params(params, D, H, L)

    vmem = pl.BlockSpec(memory_space=pltpu.MemorySpace.VMEM)
    packed = pl.pallas_call(
        _stochastic_lstm_kernel,
        out_shape=jax.ShapeDtypeStruct((T, B_pad, PACK_W), f32),
        in_specs=[vmem] * (3 + len(slabs)),
        out_specs=vmem,
    )(x_seq, eps_seq, h0, *slabs)

    # (T, B_pad, 128) -> (B, T, 128); unpack lanes; drop batch padding.
    packed = jnp.transpose(packed, (1, 0, 2))[:B]
    x_hat = packed[:, :, 4 * L:4 * L + D]
    prior_mu = packed[:, :, 2 * L:3 * L]
    prior_lv = packed[:, :, 3 * L:4 * L]
    post_mu = packed[:, :, 0:L]
    post_lv = packed[:, :, L:2 * L]
    return x_hat, prior_mu, prior_lv, post_mu, post_lv


# ---------------------------------------------------------------------------
# Pure-JAX reference (mirrors the PyTorch forward) for correctness checking
# ---------------------------------------------------------------------------
def reference_forward(x, hidden, noise, p):
    def mlp(inp, W1, b1, W2, b2):
        return jnp.maximum(inp @ W1 + b1, 0.0) @ W2 + b2

    def step(h, inputs):
        x_t, eps = inputs
        x_h = jnp.concatenate([x_t, h], axis=1)
        post_mu = mlp(x_h, *p["post_mu"])
        post_lv = mlp(x_h, *p["post_lv"])
        prior_mu = mlp(h, *p["prior_mu"])
        prior_lv = mlp(h, *p["prior_lv"])
        z = post_mu + jnp.exp(0.5 * post_lv) * eps
        h_next = mlp(jnp.concatenate([x_t, h, z], axis=1), *p["hid_next"])
        out = jax.nn.sigmoid(
            jnp.concatenate([h, z], axis=1) @ p["out"][0] + p["out"][1])
        return h_next, (out, prior_mu, prior_lv, post_mu, post_lv)

    _, ys = jax.lax.scan(
        step, hidden,
        (jnp.transpose(x, (1, 0, 2)), jnp.transpose(noise, (1, 0, 2))))
    return tuple(jnp.transpose(y, (1, 0, 2)) for y in ys)


# ---------------------------------------------------------------------------
if __name__ == "__main__":
    B, T = 2, 8
    INPUT_DIM, HIDDEN_DIM, LATENT_DIM = 16, 32, 8

    key = jax.random.PRNGKey(0)
    k_x, k_noise, k_params = jax.random.split(key, 3)

    x = jax.random.normal(k_x, (B, T, INPUT_DIM), jnp.float32)
    hidden0 = jnp.zeros((B, HIDDEN_DIM), jnp.float32)        # get_init_hidden
    # reparameterization noise: torch.normal(0, ones_like(posterior_logvar))
    noise = jax.random.normal(k_noise, (B, T, LATENT_DIM), jnp.float32)

    params = init_params(k_params, INPUT_DIM, HIDDEN_DIM, LATENT_DIM)

    outs = stochastic_lstm_forward(x, hidden0, noise, params)
    outs = jax.block_until_ready(outs)

    refs = reference_forward(x, hidden0, noise, params)
    names = ["x_hat", "prior_mu", "prior_logvar", "posterior_mu",
             "posterior_logvar"]
    for name, o, r in zip(names, outs, refs):
        np.testing.assert_allclose(np.asarray(o), np.asarray(r),
                                   rtol=2e-3, atol=2e-3, err_msg=name)

    print("KERNEL_OK")
</pallas_src>

<mosaic_0001>
module attributes {stable_mosaic.version = 11 : i64} {
  func.func @_stochastic_lstm_kernel(%arg0: memref<8x8x16xf32, #tpu.memory_space<vmem>>, %arg1: memref<8x8x8xf32, #tpu.memory_space<vmem>>, %arg2: memref<8x32xf32, #tpu.memory_space<vmem>>, %arg3: memref<16x256xf32, #tpu.memory_space<vmem>>, %arg4: memref<32x256xf32, #tpu.memory_space<vmem>>, %arg5: memref<1x256xf32, #tpu.memory_space<vmem>>, %arg6: memref<256x128xf32, #tpu.memory_space<vmem>>, %arg7: memref<1x128xf32, #tpu.memory_space<vmem>>, %arg8: memref<16x64xf32, #tpu.memory_space<vmem>>, %arg9: memref<32x64xf32, #tpu.memory_space<vmem>>, %arg10: memref<8x64xf32, #tpu.memory_space<vmem>>, %arg11: memref<1x64xf32, #tpu.memory_space<vmem>>, %arg12: memref<64x32xf32, #tpu.memory_space<vmem>>, %arg13: memref<1x32xf32, #tpu.memory_space<vmem>>, %arg14: memref<32x128xf32, #tpu.memory_space<vmem>>, %arg15: memref<8x128xf32, #tpu.memory_space<vmem>>, %arg16: memref<1x128xf32, #tpu.memory_space<vmem>>, %arg17: memref<8x8x128xf32, #tpu.memory_space<vmem>>) attributes {dimension_semantics = [], scalar_prefetch = 0 : i64, scratch_operands = 0 : i64, tpu.core_type = #tpu.core_type<tc>} {
    %c0 = arith.constant 0 : index
    %c0_0 = arith.constant 0 : index
    %0 = vector.load %arg5[%c0, %c0_0] : memref<1x256xf32, #tpu.memory_space<vmem>>, vector<1x256xf32>
    %1 = vector.shape_cast %0 : vector<1x256xf32> to vector<1x256xf32>
    %2 = vector.broadcast %1 : vector<1x256xf32> to vector<8x256xf32>
    %c0_1 = arith.constant 0 : index
    %c0_2 = arith.constant 0 : index
    %3 = vector.load %arg7[%c0_1, %c0_2] : memref<1x128xf32, #tpu.memory_space<vmem>>, vector<1x128xf32>
    %4 = vector.shape_cast %3 : vector<1x128xf32> to vector<1x128xf32>
    %5 = vector.broadcast %4 : vector<1x128xf32> to vector<8x128xf32>
    %c0_3 = arith.constant 0 : index
    %c0_4 = arith.constant 0 : index
    %6 = vector.load %arg11[%c0_3, %c0_4] : memref<1x64xf32, #tpu.memory_space<vmem>>, vector<1x64xf32>
    %7 = vector.shape_cast %6 : vector<1x64xf32> to vector<1x64xf32>
    %8 = vector.broadcast %7 : vector<1x64xf32> to vector<8x64xf32>
    %c0_5 = arith.constant 0 : index
    %c0_6 = arith.constant 0 : index
    %9 = vector.load %arg13[%c0_5, %c0_6] : memref<1x32xf32, #tpu.memory_space<vmem>>, vector<1x32xf32>
    %10 = vector.shape_cast %9 : vector<1x32xf32> to vector<1x32xf32>
    %11 = vector.broadcast %10 : vector<1x32xf32> to vector<8x32xf32>
    %c0_7 = arith.constant 0 : index
    %c0_8 = arith.constant 0 : index
    %12 = vector.load %arg16[%c0_7, %c0_8] : memref<1x128xf32, #tpu.memory_space<vmem>>, vector<1x128xf32>
    %13 = vector.shape_cast %12 : vector<1x128xf32> to vector<1x128xf32>
    %14 = vector.broadcast %13 : vector<1x128xf32> to vector<8x128xf32>
    %15 = tpu.iota {dimensions = array<i32: 1>} : vector<8x128xi32>
    %c32_i32 = arith.constant 32 : i32
    %16 = vector.broadcast %c32_i32 : i32 to vector<8x128xi32>
    %17 = arith.cmpi sge, %15, %16 : vector<8x128xi32>
    %c48_i32 = arith.constant 48 : i32
    %18 = vector.broadcast %c48_i32 : i32 to vector<8x128xi32>
    %19 = arith.cmpi slt, %15, %18 : vector<8x128xi32>
    %20 = arith.andi %17, %19 : vector<8x128xi1>
    %c0_9 = arith.constant 0 : index
    %c0_10 = arith.constant 0 : index
    %21 = vector.load %arg2[%c0_9, %c0_10] : memref<8x32xf32, #tpu.memory_space<vmem>>, vector<8x32xf32>
    %c0_i32 = arith.constant 0 : i32
    %22 = arith.index_cast %c0_i32 : i32 to index
    %c0_11 = arith.constant 0 : index
    %c0_12 = arith.constant 0 : index
    %23 = vector.load %arg0[%22, %c0_11, %c0_12] : memref<8x8x16xf32, #tpu.memory_space<vmem>>, vector<1x8x16xf32>
    %24 = vector.shape_cast %23 : vector<1x8x16xf32> to vector<8x16xf32>
    %25 = arith.index_cast %c0_i32 : i32 to index
    %c0_13 = arith.constant 0 : index
    %c0_14 = arith.constant 0 : index
    %26 = vector.load %arg1[%25, %c0_13, %c0_14] : memref<8x8x8xf32, #tpu.memory_space<vmem>>, vector<1x8x8xf32>
    %27 = vector.shape_cast %26 : vector<1x8x8xf32> to vector<8x8xf32>
    %c0_15 = arith.constant 0 : index
    %c0_16 = arith.constant 0 : index
    %28 = vector.load %arg3[%c0_15, %c0_16] : memref<16x256xf32, #tpu.memory_space<vmem>>, vector<16x256xf32>
    %cst = arith.constant dense<0.000000e+00> : vector<8x256xf32>
    %29 = tpu.matmul %24, %28, %cst {dimension_numbers = #tpu.dot_dimension_numbers<[1], [0], [0], [1], [0, 0, 1, 1], [], []>} : vector<8x16xf32>, vector<16x256xf32>, vector<8x256xf32> -> vector<8x256xf32>
    %c0_17 = arith.constant 0 : index
    %c0_18 = arith.constant 0 : index
    %30 = vector.load %arg4[%c0_17, %c0_18] : memref<32x256xf32, #tpu.memory_space<vmem>>, vector<32x256xf32>
    %cst_19 = arith.constant dense<0.000000e+00> : vector<8x256xf32>
    %31 = tpu.matmul %21, %30, %cst_19 {dimension_numbers = #tpu.dot_dimension_numbers<[1], [0], [0], [1], [0, 0, 1, 1], [], []>} : vector<8x32xf32>, vector<32x256xf32>, vector<8x256xf32> -> vector<8x256xf32>
    %32 = arith.addf %29, %31 : vector<8x256xf32>
    %33 = arith.addf %32, %2 : vector<8x256xf32>
    %cst_20 = arith.constant 0.000000e+00 : f32
    %34 = vector.broadcast %cst_20 : f32 to vector<8x256xf32>
    %35 = arith.maximumf %33, %34 : vector<8x256xf32>
    %c0_21 = arith.constant 0 : index
    %c0_22 = arith.constant 0 : index
    %36 = vector.load %arg6[%c0_21, %c0_22] : memref<256x128xf32, #tpu.memory_space<vmem>>, vector<256x128xf32>
    %cst_23 = arith.constant dense<0.000000e+00> : vector<8x128xf32>
    %37 = tpu.matmul %35, %36, %cst_23 {dimension_numbers = #tpu.dot_dimension_numbers<[1], [0], [0], [1], [0, 0, 1, 1], [], []>} : vector<8x256xf32>, vector<256x128xf32>, vector<8x128xf32> -> vector<8x128xf32>
    %38 = arith.addf %37, %5 : vector<8x128xf32>
    %39 = vector.extract_strided_slice %38 {offsets = [0, 0], sizes = [8, 8], strides = [1, 1]} : vector<8x128xf32> to vector<8x8xf32>
    %40 = vector.extract_strided_slice %38 {offsets = [0, 8], sizes = [8, 8], strides = [1, 1]} : vector<8x128xf32> to vector<8x8xf32>
    %cst_24 = arith.constant 5.000000e-01 : f32
    %41 = vector.broadcast %cst_24 : f32 to vector<8x8xf32>
    %42 = arith.mulf %41, %40 : vector<8x8xf32>
    %43 = math.exp %42 : vector<8x8xf32>
    %44 = arith.mulf %43, %27 : vector<8x8xf32>
    %45 = arith.addf %39, %44 : vector<8x8xf32>
    %c0_25 = arith.constant 0 : index
    %c0_26 = arith.constant 0 : index
    %46 = vector.load %arg8[%c0_25, %c0_26] : memref<16x64xf32, #tpu.memory_space<vmem>>, vector<16x64xf32>
    %cst_27 = arith.constant dense<0.000000e+00> : vector<8x64xf32>
    %47 = tpu.matmul %24, %46, %cst_27 {dimension_numbers = #tpu.dot_dimension_numbers<[1], [0], [0], [1], [0, 0, 1, 1], [], []>} : vector<8x16xf32>, vector<16x64xf32>, vector<8x64xf32> -> vector<8x64xf32>
    %c0_28 = arith.constant 0 : index
    %c0_29 = arith.constant 0 : index
    %48 = vector.load %arg9[%c0_28, %c0_29] : memref<32x64xf32, #tpu.memory_space<vmem>>, vector<32x64xf32>
    %cst_30 = arith.constant dense<0.000000e+00> : vector<8x64xf32>
    %49 = tpu.matmul %21, %48, %cst_30 {dimension_numbers = #tpu.dot_dimension_numbers<[1], [0], [0], [1], [0, 0, 1, 1], [], []>} : vector<8x32xf32>, vector<32x64xf32>, vector<8x64xf32> -> vector<8x64xf32>
    %50 = arith.addf %47, %49 : vector<8x64xf32>
    %c0_31 = arith.constant 0 : index
    %c0_32 = arith.constant 0 : index
    %51 = vector.load %arg10[%c0_31, %c0_32] : memref<8x64xf32, #tpu.memory_space<vmem>>, vector<8x64xf32>
    %cst_33 = arith.constant dense<0.000000e+00> : vector<8x64xf32>
    %52 = tpu.matmul %45, %51, %cst_33 {dimension_numbers = #tpu.dot_dimension_numbers<[1], [0], [0], [1], [0, 0, 1, 1], [], []>} : vector<8x8xf32>, vector<8x64xf32>, vector<8x64xf32> -> vector<8x64xf32>
    %53 = arith.addf %50, %52 : vector<8x64xf32>
    %54 = arith.addf %53, %8 : vector<8x64xf32>
    %cst_34 = arith.constant 0.000000e+00 : f32
    %55 = vector.broadcast %cst_34 : f32 to vector<8x64xf32>
    %56 = arith.maximumf %54, %55 : vector<8x64xf32>
    %c0_35 = arith.constant 0 : index
    %c0_36 = arith.constant 0 : index
    %57 = vector.load %arg12[%c0_35, %c0_36] : memref<64x32xf32, #tpu.memory_space<vmem>>, vector<64x32xf32>
    %cst_37 = arith.constant dense<0.000000e+00> : vector<8x32xf32>
    %58 = tpu.matmul %56, %57, %cst_37 {dimension_numbers = #tpu.dot_dimension_numbers<[1], [0], [0], [1], [0, 0, 1, 1], [], []>} : vector<8x64xf32>, vector<64x32xf32>, vector<8x32xf32> -> vector<8x32xf32>
    %59 = arith.addf %58, %11 : vector<8x32xf32>
    %c0_38 = arith.constant 0 : index
    %c0_39 = arith.constant 0 : index
    %60 = vector.load %arg14[%c0_38, %c0_39] : memref<32x128xf32, #tpu.memory_space<vmem>>, vector<32x128xf32>
    %cst_40 = arith.constant dense<0.000000e+00> : vector<8x128xf32>
    %61 = tpu.matmul %21, %60, %cst_40 {dimension_numbers = #tpu.dot_dimension_numbers<[1], [0], [0], [1], [0, 0, 1, 1], [], []>} : vector<8x32xf32>, vector<32x128xf32>, vector<8x128xf32> -> vector<8x128xf32>
    %c0_41 = arith.constant 0 : index
    %c0_42 = arith.constant 0 : index
    %62 = vector.load %arg15[%c0_41, %c0_42] : memref<8x128xf32, #tpu.memory_space<vmem>>, vector<8x128xf32>
    %cst_43 = arith.constant dense<0.000000e+00> : vector<8x128xf32>
    %63 = tpu.matmul %45, %62, %cst_43 {dimension_numbers = #tpu.dot_dimension_numbers<[1], [0], [0], [1], [0, 0, 1, 1], [], []>} : vector<8x8xf32>, vector<8x128xf32>, vector<8x128xf32> -> vector<8x128xf32>
    %64 = arith.addf %61, %63 : vector<8x128xf32>
    %65 = arith.addf %64, %14 : vector<8x128xf32>
    %66 = arith.negf %65 : vector<8x128xf32>
    %67 = math.exp %66 : vector<8x128xf32>
    %cst_44 = arith.constant 1.000000e+00 : f32
    %68 = vector.broadcast %cst_44 : f32 to vector<8x128xf32>
    %69 = arith.addf %68, %67 : vector<8x128xf32>
    %70 = arith.divf %68, %69 : vector<8x128xf32>
    %71 = arith.select %20, %70, %38 : vector<8x128xi1>, vector<8x128xf32>
    %72 = arith.index_cast %c0_i32 : i32 to index
    %c0_45 = arith.constant 0 : index
    %c0_46 = arith.constant 0 : index
    %73 = vector.load %arg17[%72, %c0_45, %c0_46] : memref<8x8x128xf32, #tpu.memory_space<vmem>>, vector<1x8x128xf32>
    %74 = vector.shape_cast %73 : vector<1x8x128xf32> to vector<8x128xf32>
    %75 = vector.shape_cast %71 : vector<8x128xf32> to vector<1x8x128xf32>
    tpu.vector_store %arg17[%72, %c0_45, %c0_46], %75 {strides = array<i32>} : memref<8x8x128xf32, #tpu.memory_space<vmem>>, vector<1x8x128xf32>,
    %c1_i32 = arith.constant 1 : i32
    %76 = arith.index_cast %c1_i32 : i32 to index
    %c0_47 = arith.constant 0 : index
    %c0_48 = arith.constant 0 : index
    %77 = vector.load %arg0[%76, %c0_47, %c0_48] : memref<8x8x16xf32, #tpu.memory_space<vmem>>, vector<1x8x16xf32>
    %78 = vector.shape_cast %77 : vector<1x8x16xf32> to vector<8x16xf32>
    %79 = arith.index_cast %c1_i32 : i32 to index
    %c0_49 = arith.constant 0 : index
    %c0_50 = arith.constant 0 : index
    %80 = vector.load %arg1[%79, %c0_49, %c0_50] : memref<8x8x8xf32, #tpu.memory_space<vmem>>, vector<1x8x8xf32>
    %81 = vector.shape_cast %80 : vector<1x8x8xf32> to vector<8x8xf32>
    %c0_51 = arith.constant 0 : index
    %c0_52 = arith.constant 0 : index
    %82 = vector.load %arg3[%c0_51, %c0_52] : memref<16x256xf32, #tpu.memory_space<vmem>>, vector<16x256xf32>
    %cst_53 = arith.constant dense<0.000000e+00> : vector<8x256xf32>
    %83 = tpu.matmul %78, %82, %cst_53 {dimension_numbers = #tpu.dot_dimension_numbers<[1], [0], [0], [1], [0, 0, 1, 1], [], []>} : vector<8x16xf32>, vector<16x256xf32>, vector<8x256xf32> -> vector<8x256xf32>
    %c0_54 = arith.constant 0 : index
    %c0_55 = arith.constant 0 : index
    %84 = vector.load %arg4[%c0_54, %c0_55] : memref<32x256xf32, #tpu.memory_space<vmem>>, vector<32x256xf32>
    %cst_56 = arith.constant dense<0.000000e+00> : vector<8x256xf32>
    %85 = tpu.matmul %59, %84, %cst_56 {dimension_numbers = #tpu.dot_dimension_numbers<[1], [0], [0], [1], [0, 0, 1, 1], [], []>} : vector<8x32xf32>, vector<32x256xf32>, vector<8x256xf32> -> vector<8x256xf32>
    %86 = arith.addf %83, %85 : vector<8x256xf32>
    %87 = arith.addf %86, %2 : vector<8x256xf32>
    %cst_57 = arith.constant 0.000000e+00 : f32
    %88 = vector.broadcast %cst_57 : f32 to vector<8x256xf32>
    %89 = arith.maximumf %87, %88 : vector<8x256xf32>
    %c0_58 = arith.constant 0 : index
    %c0_59 = arith.constant 0 : index
    %90 = vector.load %arg6[%c0_58, %c0_59] : memref<256x128xf32, #tpu.memory_space<vmem>>, vector<256x128xf32>
    %cst_60 = arith.constant dense<0.000000e+00> : vector<8x128xf32>
    %91 = tpu.matmul %89, %90, %cst_60 {dimension_numbers = #tpu.dot_dimension_numbers<[1], [0], [0], [1], [0, 0, 1, 1], [], []>} : vector<8x256xf32>, vector<256x128xf32>, vector<8x128xf32> -> vector<8x128xf32>
    %92 = arith.addf %91, %5 : vector<8x128xf32>
    %93 = vector.extract_strided_slice %92 {offsets = [0, 0], sizes = [8, 8], strides = [1, 1]} : vector<8x128xf32> to vector<8x8xf32>
    %94 = vector.extract_strided_slice %92 {offsets = [0, 8], sizes = [8, 8], strides = [1, 1]} : vector<8x128xf32> to vector<8x8xf32>
    %cst_61 = arith.constant 5.000000e-01 : f32
    %95 = vector.broadcast %cst_61 : f32 to vector<8x8xf32>
    %96 = arith.mulf %95, %94 : vector<8x8xf32>
    %97 = math.exp %96 : vector<8x8xf32>
    %98 = arith.mulf %97, %81 : vector<8x8xf32>
    %99 = arith.addf %93, %98 : vector<8x8xf32>
    %c0_62 = arith.constant 0 : index
    %c0_63 = arith.constant 0 : index
    %100 = vector.load %arg8[%c0_62, %c0_63] : memref<16x64xf32, #tpu.memory_space<vmem>>, vector<16x64xf32>
    %cst_64 = arith.constant dense<0.000000e+00> : vector<8x64xf32>
    %101 = tpu.matmul %78, %100, %cst_64 {dimension_numbers = #tpu.dot_dimension_numbers<[1], [0], [0], [1], [0, 0, 1, 1], [], []>} : vector<8x16xf32>, vector<16x64xf32>, vector<8x64xf32> -> vector<8x64xf32>
    %c0_65 = arith.constant 0 : index
    %c0_66 = arith.constant 0 : index
    %102 = vector.load %arg9[%c0_65, %c0_66] : memref<32x64xf32, #tpu.memory_space<vmem>>, vector<32x64xf32>
    %cst_67 = arith.constant dense<0.000000e+00> : vector<8x64xf32>
    %103 = tpu.matmul %59, %102, %cst_67 {dimension_numbers = #tpu.dot_dimension_numbers<[1], [0], [0], [1], [0, 0, 1, 1], [], []>} : vector<8x32xf32>, vector<32x64xf32>, vector<8x64xf32> -> vector<8x64xf32>
    %104 = arith.addf %101, %103 : vector<8x64xf32>
    %c0_68 = arith.constant 0 : index
    %c0_69 = arith.constant 0 : index
    %105 = vector.load %arg10[%c0_68, %c0_69] : memref<8x64xf32, #tpu.memory_space<vmem>>, vector<8x64xf32>
    %cst_70 = arith.constant dense<0.000000e+00> : vector<8x64xf32>
    %106 = tpu.matmul %99, %105, %cst_70 {dimension_numbers = #tpu.dot_dimension_numbers<[1], [0], [0], [1], [0, 0, 1, 1], [], []>} : vector<8x8xf32>, vector<8x64xf32>, vector<8x64xf32> -> vector<8x64xf32>
    %107 = arith.addf %104, %106 : vector<8x64xf32>
    %108 = arith.addf %107, %8 : vector<8x64xf32>
    %cst_71 = arith.constant 0.000000e+00 : f32
    %109 = vector.broadcast %cst_71 : f32 to vector<8x64xf32>
    %110 = arith.maximumf %108, %109 : vector<8x64xf32>
    %c0_72 = arith.constant 0 : index
    %c0_73 = arith.constant 0 : index
    %111 = vector.load %arg12[%c0_72, %c0_73] : memref<64x32xf32, #tpu.memory_space<vmem>>, vector<64x32xf32>
    %cst_74 = arith.constant dense<0.000000e+00> : vector<8x32xf32>
    %112 = tpu.matmul %110, %111, %cst_74 {dimension_numbers = #tpu.dot_dimension_numbers<[1], [0], [0], [1], [0, 0, 1, 1], [], []>} : vector<8x64xf32>, vector<64x32xf32>, vector<8x32xf32> -> vector<8x32xf32>
    %113 = arith.addf %112, %11 : vector<8x32xf32>
    %c0_75 = arith.constant 0 : index
    %c0_76 = arith.constant 0 : index
    %114 = vector.load %arg14[%c0_75, %c0_76] : memref<32x128xf32, #tpu.memory_space<vmem>>, vector<32x128xf32>
    %cst_77 = arith.constant dense<0.000000e+00> : vector<8x128xf32>
    %115 = tpu.matmul %59, %114, %cst_77 {dimension_numbers = #tpu.dot_dimension_numbers<[1], [0], [0], [1], [0, 0, 1, 1], [], []>} : vector<8x32xf32>, vector<32x128xf32>, vector<8x128xf32> -> vector<8x128xf32>
    %c0_78 = arith.constant 0 : index
    %c0_79 = arith.constant 0 : index
    %116 = vector.load %arg15[%c0_78, %c0_79] : memref<8x128xf32, #tpu.memory_space<vmem>>, vector<8x128xf32>
    %cst_80 = arith.constant dense<0.000000e+00> : vector<8x128xf32>
    %117 = tpu.matmul %99, %116, %cst_80 {dimension_numbers = #tpu.dot_dimension_numbers<[1], [0], [0], [1], [0, 0, 1, 1], [], []>} : vector<8x8xf32>, vector<8x128xf32>, vector<8x128xf32> -> vector<8x128xf32>
    %118 = arith.addf %115, %117 : vector<8x128xf32>
    %119 = arith.addf %118, %14 : vector<8x128xf32>
    %120 = arith.negf %119 : vector<8x128xf32>
    %121 = math.exp %120 : vector<8x128xf32>
    %cst_81 = arith.constant 1.000000e+00 : f32
    %122 = vector.broadcast %cst_81 : f32 to vector<8x128xf32>
    %123 = arith.addf %122, %121 : vector<8x128xf32>
    %124 = arith.divf %122, %123 : vector<8x128xf32>
    %125 = arith.select %20, %124, %92 : vector<8x128xi1>, vector<8x128xf32>
    %126 = arith.index_cast %c1_i32 : i32 to index
    %c0_82 = arith.constant 0 : index
    %c0_83 = arith.constant 0 : index
    %127 = vector.load %arg17[%126, %c0_82, %c0_83] : memref<8x8x128xf32, #tpu.memory_space<vmem>>, vector<1x8x128xf32>
    %128 = vector.shape_cast %127 : vector<1x8x128xf32> to vector<8x128xf32>
    %129 = vector.shape_cast %125 : vector<8x128xf32> to vector<1x8x128xf32>
    tpu.vector_store %arg17[%126, %c0_82, %c0_83], %129 {strides = array<i32>} : memref<8x8x128xf32, #tpu.memory_space<vmem>>, vector<1x8x128xf32>,
    %c2_i32 = arith.constant 2 : i32
    %130 = arith.index_cast %c2_i32 : i32 to index
    %c0_84 = arith.constant 0 : index
    %c0_85 = arith.constant 0 : index
    %131 = vector.load %arg0[%130, %c0_84, %c0_85] : memref<8x8x16xf32, #tpu.memory_space<vmem>>, vector<1x8x16xf32>
    %132 = vector.shape_cast %131 : vector<1x8x16xf32> to vector<8x16xf32>
    %133 = arith.index_cast %c2_i32 : i32 to index
    %c0_86 = arith.constant 0 : index
    %c0_87 = arith.constant 0 : index
    %134 = vector.load %arg1[%133, %c0_86, %c0_87] : memref<8x8x8xf32, #tpu.memory_space<vmem>>, vector<1x8x8xf32>
    %135 = vector.shape_cast %134 : vector<1x8x8xf32> to vector<8x8xf32>
    %c0_88 = arith.constant 0 : index
    %c0_89 = arith.constant 0 : index
    %136 = vector.load %arg3[%c0_88, %c0_89] : memref<16x256xf32, #tpu.memory_space<vmem>>, vector<16x256xf32>
    %cst_90 = arith.constant dense<0.000000e+00> : vector<8x256xf32>
    %137 = tpu.matmul %132, %136, %cst_90 {dimension_numbers = #tpu.dot_dimension_numbers<[1], [0], [0], [1], [0, 0, 1, 1], [], []>} : vector<8x16xf32>, vector<16x256xf32>, vector<8x256xf32> -> vector<8x256xf32>
    %c0_91 = arith.constant 0 : index
    %c0_92 = arith.constant 0 : index
    %138 = vector.load %arg4[%c0_91, %c0_92] : memref<32x256xf32, #tpu.memory_space<vmem>>, vector<32x256xf32>
    %cst_93 = arith.constant dense<0.000000e+00> : vector<8x256xf32>
    %139 = tpu.matmul %113, %138, %cst_93 {dimension_numbers = #tpu.dot_dimension_numbers<[1], [0], [0], [1], [0, 0, 1, 1], [], []>} : vector<8x32xf32>, vector<32x256xf32>, vector<8x256xf32> -> vector<8x256xf32>
    %140 = arith.addf %137, %139 : vector<8x256xf32>
    %141 = arith.addf %140, %2 : vector<8x256xf32>
    %cst_94 = arith.constant 0.000000e+00 : f32
    %142 = vector.broadcast %cst_94 : f32 to vector<8x256xf32>
    %143 = arith.maximumf %141, %142 : vector<8x256xf32>
    %c0_95 = arith.constant 0 : index
    %c0_96 = arith.constant 0 : index
    %144 = vector.load %arg6[%c0_95, %c0_96] : memref<256x128xf32, #tpu.memory_space<vmem>>, vector<256x128xf32>
    %cst_97 = arith.constant dense<0.000000e+00> : vector<8x128xf32>
    %145 = tpu.matmul %143, %144, %cst_97 {dimension_numbers = #tpu.dot_dimension_numbers<[1], [0], [0], [1], [0, 0, 1, 1], [], []>} : vector<8x256xf32>, vector<256x128xf32>, vector<8x128xf32> -> vector<8x128xf32>
    %146 = arith.addf %145, %5 : vector<8x128xf32>
    %147 = vector.extract_strided_slice %146 {offsets = [0, 0], sizes = [8, 8], strides = [1, 1]} : vector<8x128xf32> to vector<8x8xf32>
    %148 = vector.extract_strided_slice %146 {offsets = [0, 8], sizes = [8, 8], strides = [1, 1]} : vector<8x128xf32> to vector<8x8xf32>
    %cst_98 = arith.constant 5.000000e-01 : f32
    %149 = vector.broadcast %cst_98 : f32 to vector<8x8xf32>
    %150 = arith.mulf %149, %148 : vector<8x8xf32>
    %151 = math.exp %150 : vector<8x8xf32>
    %152 = arith.mulf %151, %135 : vector<8x8xf32>
    %153 = arith.addf %147, %152 : vector<8x8xf32>
    %c0_99 = arith.constant 0 : index
    %c0_100 = arith.constant 0 : index
    %154 = vector.load %arg8[%c0_99, %c0_100] : memref<16x64xf32, #tpu.memory_space<vmem>>, vector<16x64xf32>
    %cst_101 = arith.constant dense<0.000000e+00> : vector<8x64xf32>
    %155 = tpu.matmul %132, %154, %cst_101 {dimension_numbers = #tpu.dot_dimension_numbers<[1], [0], [0], [1], [0, 0, 1, 1], [], []>} : vector<8x16xf32>, vector<16x64xf32>, vector<8x64xf32> -> vector<8x64xf32>
    %c0_102 = arith.constant 0 : index
    %c0_103 = arith.constant 0 : index
    %156 = vector.load %arg9[%c0_102, %c0_103] : memref<32x64xf32, #tpu.memory_space<vmem>>, vector<32x64xf32>
    %cst_104 = arith.constant dense<0.000000e+00> : vector<8x64xf32>
    %157 = tpu.matmul %113, %156, %cst_104 {dimension_numbers = #tpu.dot_dimension_numbers<[1], [0], [0], [1], [0, 0, 1, 1], [], []>} : vector<8x32xf32>, vector<32x64xf32>, vector<8x64xf32> -> vector<8x64xf32>
    %158 = arith.addf %155, %157 : vector<8x64xf32>
    %c0_105 = arith.constant 0 : index
    %c0_106 = arith.constant 0 : index
    %159 = vector.load %arg10[%c0_105, %c0_106] : memref<8x64xf32, #tpu.memory_space<vmem>>, vector<8x64xf32>
    %cst_107 = arith.constant dense<0.000000e+00> : vector<8x64xf32>
    %160 = tpu.matmul %153, %159, %cst_107 {dimension_numbers = #tpu.dot_dimension_numbers<[1], [0], [0], [1], [0, 0, 1, 1], [], []>} : vector<8x8xf32>, vector<8x64xf32>, vector<8x64xf32> -> vector<8x64xf32>
    %161 = arith.addf %158, %160 : vector<8x64xf32>
    %162 = arith.addf %161, %8 : vector<8x64xf32>
    %cst_108 = arith.constant 0.000000e+00 : f32
    %163 = vector.broadcast %cst_108 : f32 to vector<8x64xf32>
    %164 = arith.maximumf %162, %163 : vector<8x64xf32>
    %c0_109 = arith.constant 0 : index
    %c0_110 = arith.constant 0 : index
    %165 = vector.load %arg12[%c0_109, %c0_110] : memref<64x32xf32, #tpu.memory_space<vmem>>, vector<64x32xf32>
    %cst_111 = arith.constant dense<0.000000e+00> : vector<8x32xf32>
    %166 = tpu.matmul %164, %165, %cst_111 {dimension_numbers = #tpu.dot_dimension_numbers<[1], [0], [0], [1], [0, 0, 1, 1], [], []>} : vector<8x64xf32>, vector<64x32xf32>, vector<8x32xf32> -> vector<8x32xf32>
    %167 = arith.addf %166, %11 : vector<8x32xf32>
    %c0_112 = arith.constant 0 : index
    %c0_113 = arith.constant 0 : index
    %168 = vector.load %arg14[%c0_112, %c0_113] : memref<32x128xf32, #tpu.memory_space<vmem>>, vector<32x128xf32>
    %cst_114 = arith.constant dense<0.000000e+00> : vector<8x128xf32>
    %169 = tpu.matmul %113, %168, %cst_114 {dimension_numbers = #tpu.dot_dimension_numbers<[1], [0], [0], [1], [0, 0, 1, 1], [], []>} : vector<8x32xf32>, vector<32x128xf32>, vector<8x128xf32> -> vector<8x128xf32>
    %c0_115 = arith.constant 0 : index
    %c0_116 = arith.constant 0 : index
    %170 = vector.load %arg15[%c0_115, %c0_116] : memref<8x128xf32, #tpu.memory_space<vmem>>, vector<8x128xf32>
    %cst_117 = arith.constant dense<0.000000e+00> : vector<8x128xf32>
    %171 = tpu.matmul %153, %170, %cst_117 {dimension_numbers = #tpu.dot_dimension_numbers<[1], [0], [0], [1], [0, 0, 1, 1], [], []>} : vector<8x8xf32>, vector<8x128xf32>, vector<8x128xf32> -> vector<8x128xf32>
    %172 = arith.addf %169, %171 : vector<8x128xf32>
    %173 = arith.addf %172, %14 : vector<8x128xf32>
    %174 = arith.negf %173 : vector<8x128xf32>
    %175 = math.exp %174 : vector<8x128xf32>
    %cst_118 = arith.constant 1.000000e+00 : f32
    %176 = vector.broadcast %cst_118 : f32 to vector<8x128xf32>
    %177 = arith.addf %176, %175 : vector<8x128xf32>
    %178 = arith.divf %176, %177 : vector<8x128xf32>
    %179 = arith.select %20, %178, %146 : vector<8x128xi1>, vector<8x128xf32>
    %180 = arith.index_cast %c2_i32 : i32 to index
    %c0_119 = arith.constant 0 : index
    %c0_120 = arith.constant 0 : index
    %181 = vector.load %arg17[%180, %c0_119, %c0_120] : memref<8x8x128xf32, #tpu.memory_space<vmem>>, vector<1x8x128xf32>
    %182 = vector.shape_cast %181 : vector<1x8x128xf32> to vector<8x128xf32>
    %183 = vector.shape_cast %179 : vector<8x128xf32> to vector<1x8x128xf32>
    tpu.vector_store %arg17[%180, %c0_119, %c0_120], %183 {strides = array<i32>} : memref<8x8x128xf32, #tpu.memory_space<vmem>>, vector<1x8x128xf32>,
    %c3_i32 = arith.constant 3 : i32
    %184 = arith.index_cast %c3_i32 : i32 to index
    %c0_121 = arith.constant 0 : index
    %c0_122 = arith.constant 0 : index
    %185 = vector.load %arg0[%184, %c0_121, %c0_122] : memref<8x8x16xf32, #tpu.memory_space<vmem>>, vector<1x8x16xf32>
    %186 = vector.shape_cast %185 : vector<1x8x16xf32> to vector<8x16xf32>
    %187 = arith.index_cast %c3_i32 : i32 to index
    %c0_123 = arith.constant 0 : index
    %c0_124 = arith.constant 0 : index
    %188 = vector.load %arg1[%187, %c0_123, %c0_124] : memref<8x8x8xf32, #tpu.memory_space<vmem>>, vector<1x8x8xf32>
    %189 = vector.shape_cast %188 : vector<1x8x8xf32> to vector<8x8xf32>
    %c0_125 = arith.constant 0 : index
    %c0_126 = arith.constant 0 : index
    %190 = vector.load %arg3[%c0_125, %c0_126] : memref<16x256xf32, #tpu.memory_space<vmem>>, vector<16x256xf32>
    %cst_127 = arith.constant dense<0.000000e+00> : vector<8x256xf32>
    %191 = tpu.matmul %186, %190, %cst_127 {dimension_numbers = #tpu.dot_dimension_numbers<[1], [0], [0], [1], [0, 0, 1, 1], [], []>} : vector<8x16xf32>, vector<16x256xf32>, vector<8x256xf32> -> vector<8x256xf32>
    %c0_128 = arith.constant 0 : index
    %c0_129 = arith.constant 0 : index
    %192 = vector.load %arg4[%c0_128, %c0_129] : memref<32x256xf32, #tpu.memory_space<vmem>>, vector<32x256xf32>
    %cst_130 = arith.constant dense<0.000000e+00> : vector<8x256xf32>
    %193 = tpu.matmul %167, %192, %cst_130 {dimension_numbers = #tpu.dot_dimension_numbers<[1], [0], [0], [1], [0, 0, 1, 1], [], []>} : vector<8x32xf32>, vector<32x256xf32>, vector<8x256xf32> -> vector<8x256xf32>
    %194 = arith.addf %191, %193 : vector<8x256xf32>
    %195 = arith.addf %194, %2 : vector<8x256xf32>
    %cst_131 = arith.constant 0.000000e+00 : f32
    %196 = vector.broadcast %cst_131 : f32 to vector<8x256xf32>
    %197 = arith.maximumf %195, %196 : vector<8x256xf32>
    %c0_132 = arith.constant 0 : index
    %c0_133 = arith.constant 0 : index
    %198 = vector.load %arg6[%c0_132, %c0_133] : memref<256x128xf32, #tpu.memory_space<vmem>>, vector<256x128xf32>
    %cst_134 = arith.constant dense<0.000000e+00> : vector<8x128xf32>
    %199 = tpu.matmul %197, %198, %cst_134 {dimension_numbers = #tpu.dot_dimension_numbers<[1], [0], [0], [1], [0, 0, 1, 1], [], []>} : vector<8x256xf32>, vector<256x128xf32>, vector<8x128xf32> -> vector<8x128xf32>
    %200 = arith.addf %199, %5 : vector<8x128xf32>
    %201 = vector.extract_strided_slice %200 {offsets = [0, 0], sizes = [8, 8], strides = [1, 1]} : vector<8x128xf32> to vector<8x8xf32>
    %202 = vector.extract_strided_slice %200 {offsets = [0, 8], sizes = [8, 8], strides = [1, 1]} : vector<8x128xf32> to vector<8x8xf32>
    %cst_135 = arith.constant 5.000000e-01 : f32
    %203 = vector.broadcast %cst_135 : f32 to vector<8x8xf32>
    %204 = arith.mulf %203, %202 : vector<8x8xf32>
    %205 = math.exp %204 : vector<8x8xf32>
    %206 = arith.mulf %205, %189 : vector<8x8xf32>
    %207 = arith.addf %201, %206 : vector<8x8xf32>
    %c0_136 = arith.constant 0 : index
    %c0_137 = arith.constant 0 : index
    %208 = vector.load %arg8[%c0_136, %c0_137] : memref<16x64xf32, #tpu.memory_space<vmem>>, vector<16x64xf32>
    %cst_138 = arith.constant dense<0.000000e+00> : vector<8x64xf32>
    %209 = tpu.matmul %186, %208, %cst_138 {dimension_numbers = #tpu.dot_dimension_numbers<[1], [0], [0], [1], [0, 0, 1, 1], [], []>} : vector<8x16xf32>, vector<16x64xf32>, vector<8x64xf32> -> vector<8x64xf32>
    %c0_139 = arith.constant 0 : index
    %c0_140 = arith.constant 0 : index
    %210 = vector.load %arg9[%c0_139, %c0_140] : memref<32x64xf32, #tpu.memory_space<vmem>>, vector<32x64xf32>
    %cst_141 = arith.constant dense<0.000000e+00> : vector<8x64xf32>
    %211 = tpu.matmul %167, %210, %cst_141 {dimension_numbers = #tpu.dot_dimension_numbers<[1], [0], [0], [1], [0, 0, 1, 1], [], []>} : vector<8x32xf32>, vector<32x64xf32>, vector<8x64xf32> -> vector<8x64xf32>
    %212 = arith.addf %209, %211 : vector<8x64xf32>
    %c0_142 = arith.constant 0 : index
    %c0_143 = arith.constant 0 : index
    %213 = vector.load %arg10[%c0_142, %c0_143] : memref<8x64xf32, #tpu.memory_space<vmem>>, vector<8x64xf32>
    %cst_144 = arith.constant dense<0.000000e+00> : vector<8x64xf32>
    %214 = tpu.matmul %207, %213, %cst_144 {dimension_numbers = #tpu.dot_dimension_numbers<[1], [0], [0], [1], [0, 0, 1, 1], [], []>} : vector<8x8xf32>, vector<8x64xf32>, vector<8x64xf32> -> vector<8x64xf32>
    %215 = arith.addf %212, %214 : vector<8x64xf32>
    %216 = arith.addf %215, %8 : vector<8x64xf32>
    %cst_145 = arith.constant 0.000000e+00 : f32
    %217 = vector.broadcast %cst_145 : f32 to vector<8x64xf32>
    %218 = arith.maximumf %216, %217 : vector<8x64xf32>
    %c0_146 = arith.constant 0 : index
    %c0_147 = arith.constant 0 : index
    %219 = vector.load %arg12[%c0_146, %c0_147] : memref<64x32xf32, #tpu.memory_space<vmem>>, vector<64x32xf32>
    %cst_148 = arith.constant dense<0.000000e+00> : vector<8x32xf32>
    %220 = tpu.matmul %218, %219, %cst_148 {dimension_numbers = #tpu.dot_dimension_numbers<[1], [0], [0], [1], [0, 0, 1, 1], [], []>} : vector<8x64xf32>, vector<64x32xf32>, vector<8x32xf32> -> vector<8x32xf32>
    %221 = arith.addf %220, %11 : vector<8x32xf32>
    %c0_149 = arith.constant 0 : index
    %c0_150 = arith.constant 0 : index
    %222 = vector.load %arg14[%c0_149, %c0_150] : memref<32x128xf32, #tpu.memory_space<vmem>>, vector<32x128xf32>
    %cst_151 = arith.constant dense<0.000000e+00> : vector<8x128xf32>
    %223 = tpu.matmul %167, %222, %cst_151 {dimension_numbers = #tpu.dot_dimension_numbers<[1], [0], [0], [1], [0, 0, 1, 1], [], []>} : vector<8x32xf32>, vector<32x128xf32>, vector<8x128xf32> -> vector<8x128xf32>
    %c0_152 = arith.constant 0 : index
    %c0_153 = arith.constant 0 : index
    %224 = vector.load %arg15[%c0_152, %c0_153] : memref<8x128xf32, #tpu.memory_space<vmem>>, vector<8x128xf32>
    %cst_154 = arith.constant dense<0.000000e+00> : vector<8x128xf32>
    %225 = tpu.matmul %207, %224, %cst_154 {dimension_numbers = #tpu.dot_dimension_numbers<[1], [0], [0], [1], [0, 0, 1, 1], [], []>} : vector<8x8xf32>, vector<8x128xf32>, vector<8x128xf32> -> vector<8x128xf32>
    %226 = arith.addf %223, %225 : vector<8x128xf32>
    %227 = arith.addf %226, %14 : vector<8x128xf32>
    %228 = arith.negf %227 : vector<8x128xf32>
    %229 = math.exp %228 : vector<8x128xf32>
    %cst_155 = arith.constant 1.000000e+00 : f32
    %230 = vector.broadcast %cst_155 : f32 to vector<8x128xf32>
    %231 = arith.addf %230, %229 : vector<8x128xf32>
    %232 = arith.divf %230, %231 : vector<8x128xf32>
    %233 = arith.select %20, %232, %200 : vector<8x128xi1>, vector<8x128xf32>
    %234 = arith.index_cast %c3_i32 : i32 to index
    %c0_156 = arith.constant 0 : index
    %c0_157 = arith.constant 0 : index
    %235 = vector.load %arg17[%234, %c0_156, %c0_157] : memref<8x8x128xf32, #tpu.memory_space<vmem>>, vector<1x8x128xf32>
    %236 = vector.shape_cast %235 : vector<1x8x128xf32> to vector<8x128xf32>
    %237 = vector.shape_cast %233 : vector<8x128xf32> to vector<1x8x128xf32>
    tpu.vector_store %arg17[%234, %c0_156, %c0_157], %237 {strides = array<i32>} : memref<8x8x128xf32, #tpu.memory_space<vmem>>, vector<1x8x128xf32>,
    %c4_i32 = arith.constant 4 : i32
    %238 = arith.index_cast %c4_i32 : i32 to index
    %c0_158 = arith.constant 0 : index
    %c0_159 = arith.constant 0 : index
    %239 = vector.load %arg0[%238, %c0_158, %c0_159] : memref<8x8x16xf32, #tpu.memory_space<vmem>>, vector<1x8x16xf32>
    %240 = vector.shape_cast %239 : vector<1x8x16xf32> to vector<8x16xf32>
    %241 = arith.index_cast %c4_i32 : i32 to index
    %c0_160 = arith.constant 0 : index
    %c0_161 = arith.constant 0 : index
    %242 = vector.load %arg1[%241, %c0_160, %c0_161] : memref<8x8x8xf32, #tpu.memory_space<vmem>>, vector<1x8x8xf32>
    %243 = vector.shape_cast %242 : vector<1x8x8xf32> to vector<8x8xf32>
    %c0_162 = arith.constant 0 : index
    %c0_163 = arith.constant 0 : index
    %244 = vector.load %arg3[%c0_162, %c0_163] : memref<16x256xf32, #tpu.memory_space<vmem>>, vector<16x256xf32>
    %cst_164 = arith.constant dense<0.000000e+00> : vector<8x256xf32>
    %245 = tpu.matmul %240, %244, %cst_164 {dimension_numbers = #tpu.dot_dimension_numbers<[1], [0], [0], [1], [0, 0, 1, 1], [], []>} : vector<8x16xf32>, vector<16x256xf32>, vector<8x256xf32> -> vector<8x256xf32>
    %c0_165 = arith.constant 0 : index
    %c0_166 = arith.constant 0 : index
    %246 = vector.load %arg4[%c0_165, %c0_166] : memref<32x256xf32, #tpu.memory_space<vmem>>, vector<32x256xf32>
    %cst_167 = arith.constant dense<0.000000e+00> : vector<8x256xf32>
    %247 = tpu.matmul %221, %246, %cst_167 {dimension_numbers = #tpu.dot_dimension_numbers<[1], [0], [0], [1], [0, 0, 1, 1], [], []>} : vector<8x32xf32>, vector<32x256xf32>, vector<8x256xf32> -> vector<8x256xf32>
    %248 = arith.addf %245, %247 : vector<8x256xf32>
    %249 = arith.addf %248, %2 : vector<8x256xf32>
    %cst_168 = arith.constant 0.000000e+00 : f32
    %250 = vector.broadcast %cst_168 : f32 to vector<8x256xf32>
    %251 = arith.maximumf %249, %250 : vector<8x256xf32>
    %c0_169 = arith.constant 0 : index
    %c0_170 = arith.constant 0 : index
    %252 = vector.load %arg6[%c0_169, %c0_170] : memref<256x128xf32, #tpu.memory_space<vmem>>, vector<256x128xf32>
    %cst_171 = arith.constant dense<0.000000e+00> : vector<8x128xf32>
    %253 = tpu.matmul %251, %252, %cst_171 {dimension_numbers = #tpu.dot_dimension_numbers<[1], [0], [0], [1], [0, 0, 1, 1], [], []>} : vector<8x256xf32>, vector<256x128xf32>, vector<8x128xf32> -> vector<8x128xf32>
    %254 = arith.addf %253, %5 : vector<8x128xf32>
    %255 = vector.extract_strided_slice %254 {offsets = [0, 0], sizes = [8, 8], strides = [1, 1]} : vector<8x128xf32> to vector<8x8xf32>
    %256 = vector.extract_strided_slice %254 {offsets = [0, 8], sizes = [8, 8], strides = [1, 1]} : vector<8x128xf32> to vector<8x8xf32>
    %cst_172 = arith.constant 5.000000e-01 : f32
    %257 = vector.broadcast %cst_172 : f32 to vector<8x8xf32>
    %258 = arith.mulf %257, %256 : vector<8x8xf32>
    %259 = math.exp %258 : vector<8x8xf32>
    %260 = arith.mulf %259, %243 : vector<8x8xf32>
    %261 = arith.addf %255, %260 : vector<8x8xf32>
    %c0_173 = arith.constant 0 : index
    %c0_174 = arith.constant 0 : index
    %262 = vector.load %arg8[%c0_173, %c0_174] : memref<16x64xf32, #tpu.memory_space<vmem>>, vector<16x64xf32>
    %cst_175 = arith.constant dense<0.000000e+00> : vector<8x64xf32>
    %263 = tpu.matmul %240, %262, %cst_175 {dimension_numbers = #tpu.dot_dimension_numbers<[1], [0], [0], [1], [0, 0, 1, 1], [], []>} : vector<8x16xf32>, vector<16x64xf32>, vector<8x64xf32> -> vector<8x64xf32>
    %c0_176 = arith.constant 0 : index
    %c0_177 = arith.constant 0 : index
    %264 = vector.load %arg9[%c0_176, %c0_177] : memref<32x64xf32, #tpu.memory_space<vmem>>, vector<32x64xf32>
    %cst_178 = arith.constant dense<0.000000e+00> : vector<8x64xf32>
    %265 = tpu.matmul %221, %264, %cst_178 {dimension_numbers = #tpu.dot_dimension_numbers<[1], [0], [0], [1], [0, 0, 1, 1], [], []>} : vector<8x32xf32>, vector<32x64xf32>, vector<8x64xf32> -> vector<8x64xf32>
    %266 = arith.addf %263, %265 : vector<8x64xf32>
    %c0_179 = arith.constant 0 : index
    %c0_180 = arith.constant 0 : index
    %267 = vector.load %arg10[%c0_179, %c0_180] : memref<8x64xf32, #tpu.memory_space<vmem>>, vector<8x64xf32>
    %cst_181 = arith.constant dense<0.000000e+00> : vector<8x64xf32>
    %268 = tpu.matmul %261, %267, %cst_181 {dimension_numbers = #tpu.dot_dimension_numbers<[1], [0], [0], [1], [0, 0, 1, 1], [], []>} : vector<8x8xf32>, vector<8x64xf32>, vector<8x64xf32> -> vector<8x64xf32>
    %269 = arith.addf %266, %268 : vector<8x64xf32>
    %270 = arith.addf %269, %8 : vector<8x64xf32>
    %cst_182 = arith.constant 0.000000e+00 : f32
    %271 = vector.broadcast %cst_182 : f32 to vector<8x64xf32>
    %272 = arith.maximumf %270, %271 : vector<8x64xf32>
    %c0_183 = arith.constant 0 : index
    %c0_184 = arith.constant 0 : index
    %273 = vector.load %arg12[%c0_183, %c0_184] : memref<64x32xf32, #tpu.memory_space<vmem>>, vector<64x32xf32>
    %cst_185 = arith.constant dense<0.000000e+00> : vector<8x32xf32>
    %274 = tpu.matmul %272, %273, %cst_185 {dimension_numbers = #tpu.dot_dimension_numbers<[1], [0], [0], [1], [0, 0, 1, 1], [], []>} : vector<8x64xf32>, vector<64x32xf32>, vector<8x32xf32> -> vector<8x32xf32>
    %275 = arith.addf %274, %11 : vector<8x32xf32>
    %c0_186 = arith.constant 0 : index
    %c0_187 = arith.constant 0 : index
    %276 = vector.load %arg14[%c0_186, %c0_187] : memref<32x128xf32, #tpu.memory_space<vmem>>, vector<32x128xf32>
    %cst_188 = arith.constant dense<0.000000e+00> : vector<8x128xf32>
    %277 = tpu.matmul %221, %276, %cst_188 {dimension_numbers = #tpu.dot_dimension_numbers<[1], [0], [0], [1], [0, 0, 1, 1], [], []>} : vector<8x32xf32>, vector<32x128xf32>, vector<8x128xf32> -> vector<8x128xf32>
    %c0_189 = arith.constant 0 : index
    %c0_190 = arith.constant 0 : index
    %278 = vector.load %arg15[%c0_189, %c0_190] : memref<8x128xf32, #tpu.memory_space<vmem>>, vector<8x128xf32>
    %cst_191 = arith.constant dense<0.000000e+00> : vector<8x128xf32>
    %279 = tpu.matmul %261, %278, %cst_191 {dimension_numbers = #tpu.dot_dimension_numbers<[1], [0], [0], [1], [0, 0, 1, 1], [], []>} : vector<8x8xf32>, vector<8x128xf32>, vector<8x128xf32> -> vector<8x128xf32>
    %280 = arith.addf %277, %279 : vector<8x128xf32>
    %281 = arith.addf %280, %14 : vector<8x128xf32>
    %282 = arith.negf %281 : vector<8x128xf32>
    %283 = math.exp %282 : vector<8x128xf32>
    %cst_192 = arith.constant 1.000000e+00 : f32
    %284 = vector.broadcast %cst_192 : f32 to vector<8x128xf32>
    %285 = arith.addf %284, %283 : vector<8x128xf32>
    %286 = arith.divf %284, %285 : vector<8x128xf32>
    %287 = arith.select %20, %286, %254 : vector<8x128xi1>, vector<8x128xf32>
    %288 = arith.index_cast %c4_i32 : i32 to index
    %c0_193 = arith.constant 0 : index
    %c0_194 = arith.constant 0 : index
    %289 = vector.load %arg17[%288, %c0_193, %c0_194] : memref<8x8x128xf32, #tpu.memory_space<vmem>>, vector<1x8x128xf32>
    %290 = vector.shape_cast %289 : vector<1x8x128xf32> to vector<8x128xf32>
    %291 = vector.shape_cast %287 : vector<8x128xf32> to vector<1x8x128xf32>
    tpu.vector_store %arg17[%288, %c0_193, %c0_194], %291 {strides = array<i32>} : memref<8x8x128xf32, #tpu.memory_space<vmem>>, vector<1x8x128xf32>,
    %c5_i32 = arith.constant 5 : i32
    %292 = arith.index_cast %c5_i32 : i32 to index
    %c0_195 = arith.constant 0 : index
    %c0_196 = arith.constant 0 : index
    %293 = vector.load %arg0[%292, %c0_195, %c0_196] : memref<8x8x16xf32, #tpu.memory_space<vmem>>, vector<1x8x16xf32>
    %294 = vector.shape_cast %293 : vector<1x8x16xf32> to vector<8x16xf32>
    %295 = arith.index_cast %c5_i32 : i32 to index
    %c0_197 = arith.constant 0 : index
    %c0_198 = arith.constant 0 : index
    %296 = vector.load %arg1[%295, %c0_197, %c0_198] : memref<8x8x8xf32, #tpu.memory_space<vmem>>, vector<1x8x8xf32>
    %297 = vector.shape_cast %296 : vector<1x8x8xf32> to vector<8x8xf32>
    %c0_199 = arith.constant 0 : index
    %c0_200 = arith.constant 0 : index
    %298 = vector.load %arg3[%c0_199, %c0_200] : memref<16x256xf32, #tpu.memory_space<vmem>>, vector<16x256xf32>
    %cst_201 = arith.constant dense<0.000000e+00> : vector<8x256xf32>
    %299 = tpu.matmul %294, %298, %cst_201 {dimension_numbers = #tpu.dot_dimension_numbers<[1], [0], [0], [1], [0, 0, 1, 1], [], []>} : vector<8x16xf32>, vector<16x256xf32>, vector<8x256xf32> -> vector<8x256xf32>
    %c0_202 = arith.constant 0 : index
    %c0_203 = arith.constant 0 : index
    %300 = vector.load %arg4[%c0_202, %c0_203] : memref<32x256xf32, #tpu.memory_space<vmem>>, vector<32x256xf32>
    %cst_204 = arith.constant dense<0.000000e+00> : vector<8x256xf32>
    %301 = tpu.matmul %275, %300, %cst_204 {dimension_numbers = #tpu.dot_dimension_numbers<[1], [0], [0], [1], [0, 0, 1, 1], [], []>} : vector<8x32xf32>, vector<32x256xf32>, vector<8x256xf32> -> vector<8x256xf32>
    %302 = arith.addf %299, %301 : vector<8x256xf32>
    %303 = arith.addf %302, %2 : vector<8x256xf32>
    %cst_205 = arith.constant 0.000000e+00 : f32
    %304 = vector.broadcast %cst_205 : f32 to vector<8x256xf32>
    %305 = arith.maximumf %303, %304 : vector<8x256xf32>
    %c0_206 = arith.constant 0 : index
    %c0_207 = arith.constant 0 : index
    %306 = vector.load %arg6[%c0_206, %c0_207] : memref<256x128xf32, #tpu.memory_space<vmem>>, vector<256x128xf32>
    %cst_208 = arith.constant dense<0.000000e+00> : vector<8x128xf32>
    %307 = tpu.matmul %305, %306, %cst_208 {dimension_numbers = #tpu.dot_dimension_numbers<[1], [0], [0], [1], [0, 0, 1, 1], [], []>} : vector<8x256xf32>, vector<256x128xf32>, vector<8x128xf32> -> vector<8x128xf32>
    %308 = arith.addf %307, %5 : vector<8x128xf32>
    %309 = vector.extract_strided_slice %308 {offsets = [0, 0], sizes = [8, 8], strides = [1, 1]} : vector<8x128xf32> to vector<8x8xf32>
    %310 = vector.extract_strided_slice %308 {offsets = [0, 8], sizes = [8, 8], strides = [1, 1]} : vector<8x128xf32> to vector<8x8xf32>
    %cst_209 = arith.constant 5.000000e-01 : f32
    %311 = vector.broadcast %cst_209 : f32 to vector<8x8xf32>
    %312 = arith.mulf %311, %310 : vector<8x8xf32>
    %313 = math.exp %312 : vector<8x8xf32>
    %314 = arith.mulf %313, %297 : vector<8x8xf32>
    %315 = arith.addf %309, %314 : vector<8x8xf32>
    %c0_210 = arith.constant 0 : index
    %c0_211 = arith.constant 0 : index
    %316 = vector.load %arg8[%c0_210, %c0_211] : memref<16x64xf32, #tpu.memory_space<vmem>>, vector<16x64xf32>
    %cst_212 = arith.constant dense<0.000000e+00> : vector<8x64xf32>
    %317 = tpu.matmul %294, %316, %cst_212 {dimension_numbers = #tpu.dot_dimension_numbers<[1], [0], [0], [1], [0, 0, 1, 1], [], []>} : vector<8x16xf32>, vector<16x64xf32>, vector<8x64xf32> -> vector<8x64xf32>
    %c0_213 = arith.constant 0 : index
    %c0_214 = arith.constant 0 : index
    %318 = vector.load %arg9[%c0_213, %c0_214] : memref<32x64xf32, #tpu.memory_space<vmem>>, vector<32x64xf32>
    %cst_215 = arith.constant dense<0.000000e+00> : vector<8x64xf32>
    %319 = tpu.matmul %275, %318, %cst_215 {dimension_numbers = #tpu.dot_dimension_numbers<[1], [0], [0], [1], [0, 0, 1, 1], [], []>} : vector<8x32xf32>, vector<32x64xf32>, vector<8x64xf32> -> vector<8x64xf32>
    %320 = arith.addf %317, %319 : vector<8x64xf32>
    %c0_216 = arith.constant 0 : index
    %c0_217 = arith.constant 0 : index
    %321 = vector.load %arg10[%c0_216, %c0_217] : memref<8x64xf32, #tpu.memory_space<vmem>>, vector<8x64xf32>
    %cst_218 = arith.constant dense<0.000000e+00> : vector<8x64xf32>
    %322 = tpu.matmul %315, %321, %cst_218 {dimension_numbers = #tpu.dot_dimension_numbers<[1], [0], [0], [1], [0, 0, 1, 1], [], []>} : vector<8x8xf32>, vector<8x64xf32>, vector<8x64xf32> -> vector<8x64xf32>
    %323 = arith.addf %320, %322 : vector<8x64xf32>
    %324 = arith.addf %323, %8 : vector<8x64xf32>
    %cst_219 = arith.constant 0.000000e+00 : f32
    %325 = vector.broadcast %cst_219 : f32 to vector<8x64xf32>
    %326 = arith.maximumf %324, %325 : vector<8x64xf32>
    %c0_220 = arith.constant 0 : index
    %c0_221 = arith.constant 0 : index
    %327 = vector.load %arg12[%c0_220, %c0_221] : memref<64x32xf32, #tpu.memory_space<vmem>>, vector<64x32xf32>
    %cst_222 = arith.constant dense<0.000000e+00> : vector<8x32xf32>
    %328 = tpu.matmul %326, %327, %cst_222 {dimension_numbers = #tpu.dot_dimension_numbers<[1], [0], [0], [1], [0, 0, 1, 1], [], []>} : vector<8x64xf32>, vector<64x32xf32>, vector<8x32xf32> -> vector<8x32xf32>
    %329 = arith.addf %328, %11 : vector<8x32xf32>
    %c0_223 = arith.constant 0 : index
    %c0_224 = arith.constant 0 : index
    %330 = vector.load %arg14[%c0_223, %c0_224] : memref<32x128xf32, #tpu.memory_space<vmem>>, vector<32x128xf32>
    %cst_225 = arith.constant dense<0.000000e+00> : vector<8x128xf32>
    %331 = tpu.matmul %275, %330, %cst_225 {dimension_numbers = #tpu.dot_dimension_numbers<[1], [0], [0], [1], [0, 0, 1, 1], [], []>} : vector<8x32xf32>, vector<32x128xf32>, vector<8x128xf32> -> vector<8x128xf32>
    %c0_226 = arith.constant 0 : index
    %c0_227 = arith.constant 0 : index
    %332 = vector.load %arg15[%c0_226, %c0_227] : memref<8x128xf32, #tpu.memory_space<vmem>>, vector<8x128xf32>
    %cst_228 = arith.constant dense<0.000000e+00> : vector<8x128xf32>
    %333 = tpu.matmul %315, %332, %cst_228 {dimension_numbers = #tpu.dot_dimension_numbers<[1], [0], [0], [1], [0, 0, 1, 1], [], []>} : vector<8x8xf32>, vector<8x128xf32>, vector<8x128xf32> -> vector<8x128xf32>
    %334 = arith.addf %331, %333 : vector<8x128xf32>
    %335 = arith.addf %334, %14 : vector<8x128xf32>
    %336 = arith.negf %335 : vector<8x128xf32>
    %337 = math.exp %336 : vector<8x128xf32>
    %cst_229 = arith.constant 1.000000e+00 : f32
    %338 = vector.broadcast %cst_229 : f32 to vector<8x128xf32>
    %339 = arith.addf %338, %337 : vector<8x128xf32>
    %340 = arith.divf %338, %339 : vector<8x128xf32>
    %341 = arith.select %20, %340, %308 : vector<8x128xi1>, vector<8x128xf32>
    %342 = arith.index_cast %c5_i32 : i32 to index
    %c0_230 = arith.constant 0 : index
    %c0_231 = arith.constant 0 : index
    %343 = vector.load %arg17[%342, %c0_230, %c0_231] : memref<8x8x128xf32, #tpu.memory_space<vmem>>, vector<1x8x128xf32>
    %344 = vector.shape_cast %343 : vector<1x8x128xf32> to vector<8x128xf32>
    %345 = vector.shape_cast %341 : vector<8x128xf32> to vector<1x8x128xf32>
    tpu.vector_store %arg17[%342, %c0_230, %c0_231], %345 {strides = array<i32>} : memref<8x8x128xf32, #tpu.memory_space<vmem>>, vector<1x8x128xf32>,
    %c6_i32 = arith.constant 6 : i32
    %346 = arith.index_cast %c6_i32 : i32 to index
    %c0_232 = arith.constant 0 : index
    %c0_233 = arith.constant 0 : index
    %347 = vector.load %arg0[%346, %c0_232, %c0_233] : memref<8x8x16xf32, #tpu.memory_space<vmem>>, vector<1x8x16xf32>
    %348 = vector.shape_cast %347 : vector<1x8x16xf32> to vector<8x16xf32>
    %349 = arith.index_cast %c6_i32 : i32 to index
    %c0_234 = arith.constant 0 : index
    %c0_235 = arith.constant 0 : index
    %350 = vector.load %arg1[%349, %c0_234, %c0_235] : memref<8x8x8xf32, #tpu.memory_space<vmem>>, vector<1x8x8xf32>
    %351 = vector.shape_cast %350 : vector<1x8x8xf32> to vector<8x8xf32>
    %c0_236 = arith.constant 0 : index
    %c0_237 = arith.constant 0 : index
    %352 = vector.load %arg3[%c0_236, %c0_237] : memref<16x256xf32, #tpu.memory_space<vmem>>, vector<16x256xf32>
    %cst_238 = arith.constant dense<0.000000e+00> : vector<8x256xf32>
    %353 = tpu.matmul %348, %352, %cst_238 {dimension_numbers = #tpu.dot_dimension_numbers<[1], [0], [0], [1], [0, 0, 1, 1], [], []>} : vector<8x16xf32>, vector<16x256xf32>, vector<8x256xf32> -> vector<8x256xf32>
    %c0_239 = arith.constant 0 : index
    %c0_240 = arith.constant 0 : index
    %354 = vector.load %arg4[%c0_239, %c0_240] : memref<32x256xf32, #tpu.memory_space<vmem>>, vector<32x256xf32>
    %cst_241 = arith.constant dense<0.000000e+00> : vector<8x256xf32>
    %355 = tpu.matmul %329, %354, %cst_241 {dimension_numbers = #tpu.dot_dimension_numbers<[1], [0], [0], [1], [0, 0, 1, 1], [], []>} : vector<8x32xf32>, vector<32x256xf32>, vector<8x256xf32> -> vector<8x256xf32>
    %356 = arith.addf %353, %355 : vector<8x256xf32>
    %357 = arith.addf %356, %2 : vector<8x256xf32>
    %cst_242 = arith.constant 0.000000e+00 : f32
    %358 = vector.broadcast %cst_242 : f32 to vector<8x256xf32>
    %359 = arith.maximumf %357, %358 : vector<8x256xf32>
    %c0_243 = arith.constant 0 : index
    %c0_244 = arith.constant 0 : index
    %360 = vector.load %arg6[%c0_243, %c0_244] : memref<256x128xf32, #tpu.memory_space<vmem>>, vector<256x128xf32>
    %cst_245 = arith.constant dense<0.000000e+00> : vector<8x128xf32>
    %361 = tpu.matmul %359, %360, %cst_245 {dimension_numbers = #tpu.dot_dimension_numbers<[1], [0], [0], [1], [0, 0, 1, 1], [], []>} : vector<8x256xf32>, vector<256x128xf32>, vector<8x128xf32> -> vector<8x128xf32>
    %362 = arith.addf %361, %5 : vector<8x128xf32>
    %363 = vector.extract_strided_slice %362 {offsets = [0, 0], sizes = [8, 8], strides = [1, 1]} : vector<8x128xf32> to vector<8x8xf32>
    %364 = vector.extract_strided_slice %362 {offsets = [0, 8], sizes = [8, 8], strides = [1, 1]} : vector<8x128xf32> to vector<8x8xf32>
    %cst_246 = arith.constant 5.000000e-01 : f32
    %365 = vector.broadcast %cst_246 : f32 to vector<8x8xf32>
    %366 = arith.mulf %365, %364 : vector<8x8xf32>
    %367 = math.exp %366 : vector<8x8xf32>
    %368 = arith.mulf %367, %351 : vector<8x8xf32>
    %369 = arith.addf %363, %368 : vector<8x8xf32>
    %c0_247 = arith.constant 0 : index
    %c0_248 = arith.constant 0 : index
    %370 = vector.load %arg8[%c0_247, %c0_248] : memref<16x64xf32, #tpu.memory_space<vmem>>, vector<16x64xf32>
    %cst_249 = arith.constant dense<0.000000e+00> : vector<8x64xf32>
    %371 = tpu.matmul %348, %370, %cst_249 {dimension_numbers = #tpu.dot_dimension_numbers<[1], [0], [0], [1], [0, 0, 1, 1], [], []>} : vector<8x16xf32>, vector<16x64xf32>, vector<8x64xf32> -> vector<8x64xf32>
    %c0_250 = arith.constant 0 : index
    %c0_251 = arith.constant 0 : index
    %372 = vector.load %arg9[%c0_250, %c0_251] : memref<32x64xf32, #tpu.memory_space<vmem>>, vector<32x64xf32>
    %cst_252 = arith.constant dense<0.000000e+00> : vector<8x64xf32>
    %373 = tpu.matmul %329, %372, %cst_252 {dimension_numbers = #tpu.dot_dimension_numbers<[1], [0], [0], [1], [0, 0, 1, 1], [], []>} : vector<8x32xf32>, vector<32x64xf32>, vector<8x64xf32> -> vector<8x64xf32>
    %374 = arith.addf %371, %373 : vector<8x64xf32>
    %c0_253 = arith.constant 0 : index
    %c0_254 = arith.constant 0 : index
    %375 = vector.load %arg10[%c0_253, %c0_254] : memref<8x64xf32, #tpu.memory_space<vmem>>, vector<8x64xf32>
    %cst_255 = arith.constant dense<0.000000e+00> : vector<8x64xf32>
    %376 = tpu.matmul %369, %375, %cst_255 {dimension_numbers = #tpu.dot_dimension_numbers<[1], [0], [0], [1], [0, 0, 1, 1], [], []>} : vector<8x8xf32>, vector<8x64xf32>, vector<8x64xf32> -> vector<8x64xf32>
    %377 = arith.addf %374, %376 : vector<8x64xf32>
    %378 = arith.addf %377, %8 : vector<8x64xf32>
    %cst_256 = arith.constant 0.000000e+00 : f32
    %379 = vector.broadcast %cst_256 : f32 to vector<8x64xf32>
    %380 = arith.maximumf %378, %379 : vector<8x64xf32>
    %c0_257 = arith.constant 0 : index
    %c0_258 = arith.constant 0 : index
    %381 = vector.load %arg12[%c0_257, %c0_258] : memref<64x32xf32, #tpu.memory_space<vmem>>, vector<64x32xf32>
    %cst_259 = arith.constant dense<0.000000e+00> : vector<8x32xf32>
    %382 = tpu.matmul %380, %381, %cst_259 {dimension_numbers = #tpu.dot_dimension_numbers<[1], [0], [0], [1], [0, 0, 1, 1], [], []>} : vector<8x64xf32>, vector<64x32xf32>, vector<8x32xf32> -> vector<8x32xf32>
    %383 = arith.addf %382, %11 : vector<8x32xf32>
    %c0_260 = arith.constant 0 : index
    %c0_261 = arith.constant 0 : index
    %384 = vector.load %arg14[%c0_260, %c0_261] : memref<32x128xf32, #tpu.memory_space<vmem>>, vector<32x128xf32>
    %cst_262 = arith.constant dense<0.000000e+00> : vector<8x128xf32>
    %385 = tpu.matmul %329, %384, %cst_262 {dimension_numbers = #tpu.dot_dimension_numbers<[1], [0], [0], [1], [0, 0, 1, 1], [], []>} : vector<8x32xf32>, vector<32x128xf32>, vector<8x128xf32> -> vector<8x128xf32>
    %c0_263 = arith.constant 0 : index
    %c0_264 = arith.constant 0 : index
    %386 = vector.load %arg15[%c0_263, %c0_264] : memref<8x128xf32, #tpu.memory_space<vmem>>, vector<8x128xf32>
    %cst_265 = arith.constant dense<0.000000e+00> : vector<8x128xf32>
    %387 = tpu.matmul %369, %386, %cst_265 {dimension_numbers = #tpu.dot_dimension_numbers<[1], [0], [0], [1], [0, 0, 1, 1], [], []>} : vector<8x8xf32>, vector<8x128xf32>, vector<8x128xf32> -> vector<8x128xf32>
    %388 = arith.addf %385, %387 : vector<8x128xf32>
    %389 = arith.addf %388, %14 : vector<8x128xf32>
    %390 = arith.negf %389 : vector<8x128xf32>
    %391 = math.exp %390 : vector<8x128xf32>
    %cst_266 = arith.constant 1.000000e+00 : f32
    %392 = vector.broadcast %cst_266 : f32 to vector<8x128xf32>
    %393 = arith.addf %392, %391 : vector<8x128xf32>
    %394 = arith.divf %392, %393 : vector<8x128xf32>
    %395 = arith.select %20, %394, %362 : vector<8x128xi1>, vector<8x128xf32>
    %396 = arith.index_cast %c6_i32 : i32 to index
    %c0_267 = arith.constant 0 : index
    %c0_268 = arith.constant 0 : index
    %397 = vector.load %arg17[%396, %c0_267, %c0_268] : memref<8x8x128xf32, #tpu.memory_space<vmem>>, vector<1x8x128xf32>
    %398 = vector.shape_cast %397 : vector<1x8x128xf32> to vector<8x128xf32>
    %399 = vector.shape_cast %395 : vector<8x128xf32> to vector<1x8x128xf32>
    tpu.vector_store %arg17[%396, %c0_267, %c0_268], %399 {strides = array<i32>} : memref<8x8x128xf32, #tpu.memory_space<vmem>>, vector<1x8x128xf32>,
    %c7_i32 = arith.constant 7 : i32
    %400 = arith.index_cast %c7_i32 : i32 to index
    %c0_269 = arith.constant 0 : index
    %c0_270 = arith.constant 0 : index
    %401 = vector.load %arg0[%400, %c0_269, %c0_270] : memref<8x8x16xf32, #tpu.memory_space<vmem>>, vector<1x8x16xf32>
    %402 = vector.shape_cast %401 : vector<1x8x16xf32> to vector<8x16xf32>
    %403 = arith.index_cast %c7_i32 : i32 to index
    %c0_271 = arith.constant 0 : index
    %c0_272 = arith.constant 0 : index
    %404 = vector.load %arg1[%403, %c0_271, %c0_272] : memref<8x8x8xf32, #tpu.memory_space<vmem>>, vector<1x8x8xf32>
    %405 = vector.shape_cast %404 : vector<1x8x8xf32> to vector<8x8xf32>
    %c0_273 = arith.constant 0 : index
    %c0_274 = arith.constant 0 : index
    %406 = vector.load %arg3[%c0_273, %c0_274] : memref<16x256xf32, #tpu.memory_space<vmem>>, vector<16x256xf32>
    %cst_275 = arith.constant dense<0.000000e+00> : vector<8x256xf32>
    %407 = tpu.matmul %402, %406, %cst_275 {dimension_numbers = #tpu.dot_dimension_numbers<[1], [0], [0], [1], [0, 0, 1, 1], [], []>} : vector<8x16xf32>, vector<16x256xf32>, vector<8x256xf32> -> vector<8x256xf32>
    %c0_276 = arith.constant 0 : index
    %c0_277 = arith.constant 0 : index
    %408 = vector.load %arg4[%c0_276, %c0_277] : memref<32x256xf32, #tpu.memory_space<vmem>>, vector<32x256xf32>
    %cst_278 = arith.constant dense<0.000000e+00> : vector<8x256xf32>
    %409 = tpu.matmul %383, %408, %cst_278 {dimension_numbers = #tpu.dot_dimension_numbers<[1], [0], [0], [1], [0, 0, 1, 1], [], []>} : vector<8x32xf32>, vector<32x256xf32>, vector<8x256xf32> -> vector<8x256xf32>
    %410 = arith.addf %407, %409 : vector<8x256xf32>
    %411 = arith.addf %410, %2 : vector<8x256xf32>
    %cst_279 = arith.constant 0.000000e+00 : f32
    %412 = vector.broadcast %cst_279 : f32 to vector<8x256xf32>
    %413 = arith.maximumf %411, %412 : vector<8x256xf32>
    %c0_280 = arith.constant 0 : index
    %c0_281 = arith.constant 0 : index
    %414 = vector.load %arg6[%c0_280, %c0_281] : memref<256x128xf32, #tpu.memory_space<vmem>>, vector<256x128xf32>
    %cst_282 = arith.constant dense<0.000000e+00> : vector<8x128xf32>
    %415 = tpu.matmul %413, %414, %cst_282 {dimension_numbers = #tpu.dot_dimension_numbers<[1], [0], [0], [1], [0, 0, 1, 1], [], []>} : vector<8x256xf32>, vector<256x128xf32>, vector<8x128xf32> -> vector<8x128xf32>
    %416 = arith.addf %415, %5 : vector<8x128xf32>
    %417 = vector.extract_strided_slice %416 {offsets = [0, 0], sizes = [8, 8], strides = [1, 1]} : vector<8x128xf32> to vector<8x8xf32>
    %418 = vector.extract_strided_slice %416 {offsets = [0, 8], sizes = [8, 8], strides = [1, 1]} : vector<8x128xf32> to vector<8x8xf32>
    %cst_283 = arith.constant 5.000000e-01 : f32
    %419 = vector.broadcast %cst_283 : f32 to vector<8x8xf32>
    %420 = arith.mulf %419, %418 : vector<8x8xf32>
    %421 = math.exp %420 : vector<8x8xf32>
    %422 = arith.mulf %421, %405 : vector<8x8xf32>
    %423 = arith.addf %417, %422 : vector<8x8xf32>
    %c0_284 = arith.constant 0 : index
    %c0_285 = arith.constant 0 : index
    %424 = vector.load %arg8[%c0_284, %c0_285] : memref<16x64xf32, #tpu.memory_space<vmem>>, vector<16x64xf32>
    %cst_286 = arith.constant dense<0.000000e+00> : vector<8x64xf32>
    %425 = tpu.matmul %402, %424, %cst_286 {dimension_numbers = #tpu.dot_dimension_numbers<[1], [0], [0], [1], [0, 0, 1, 1], [], []>} : vector<8x16xf32>, vector<16x64xf32>, vector<8x64xf32> -> vector<8x64xf32>
    %c0_287 = arith.constant 0 : index
    %c0_288 = arith.constant 0 : index
    %426 = vector.load %arg9[%c0_287, %c0_288] : memref<32x64xf32, #tpu.memory_space<vmem>>, vector<32x64xf32>
    %cst_289 = arith.constant dense<0.000000e+00> : vector<8x64xf32>
    %427 = tpu.matmul %383, %426, %cst_289 {dimension_numbers = #tpu.dot_dimension_numbers<[1], [0], [0], [1], [0, 0, 1, 1], [], []>} : vector<8x32xf32>, vector<32x64xf32>, vector<8x64xf32> -> vector<8x64xf32>
    %428 = arith.addf %425, %427 : vector<8x64xf32>
    %c0_290 = arith.constant 0 : index
    %c0_291 = arith.constant 0 : index
    %429 = vector.load %arg10[%c0_290, %c0_291] : memref<8x64xf32, #tpu.memory_space<vmem>>, vector<8x64xf32>
    %cst_292 = arith.constant dense<0.000000e+00> : vector<8x64xf32>
    %430 = tpu.matmul %423, %429, %cst_292 {dimension_numbers = #tpu.dot_dimension_numbers<[1], [0], [0], [1], [0, 0, 1, 1], [], []>} : vector<8x8xf32>, vector<8x64xf32>, vector<8x64xf32> -> vector<8x64xf32>
    %431 = arith.addf %428, %430 : vector<8x64xf32>
    %432 = arith.addf %431, %8 : vector<8x64xf32>
    %cst_293 = arith.constant 0.000000e+00 : f32
    %433 = vector.broadcast %cst_293 : f32 to vector<8x64xf32>
    %434 = arith.maximumf %432, %433 : vector<8x64xf32>
    %c0_294 = arith.constant 0 : index
    %c0_295 = arith.constant 0 : index
    %435 = vector.load %arg12[%c0_294, %c0_295] : memref<64x32xf32, #tpu.memory_space<vmem>>, vector<64x32xf32>
    %cst_296 = arith.constant dense<0.000000e+00> : vector<8x32xf32>
    %436 = tpu.matmul %434, %435, %cst_296 {dimension_numbers = #tpu.dot_dimension_numbers<[1], [0], [0], [1], [0, 0, 1, 1], [], []>} : vector<8x64xf32>, vector<64x32xf32>, vector<8x32xf32> -> vector<8x32xf32>
    %437 = arith.addf %436, %11 : vector<8x32xf32>
    %c0_297 = arith.constant 0 : index
    %c0_298 = arith.constant 0 : index
    %438 = vector.load %arg14[%c0_297, %c0_298] : memref<32x128xf32, #tpu.memory_space<vmem>>, vector<32x128xf32>
    %cst_299 = arith.constant dense<0.000000e+00> : vector<8x128xf32>
    %439 = tpu.matmul %383, %438, %cst_299 {dimension_numbers = #tpu.dot_dimension_numbers<[1], [0], [0], [1], [0, 0, 1, 1], [], []>} : vector<8x32xf32>, vector<32x128xf32>, vector<8x128xf32> -> vector<8x128xf32>
    %c0_300 = arith.constant 0 : index
    %c0_301 = arith.constant 0 : index
    %440 = vector.load %arg15[%c0_300, %c0_301] : memref<8x128xf32, #tpu.memory_space<vmem>>, vector<8x128xf32>
    %cst_302 = arith.constant dense<0.000000e+00> : vector<8x128xf32>
    %441 = tpu.matmul %423, %440, %cst_302 {dimension_numbers = #tpu.dot_dimension_numbers<[1], [0], [0], [1], [0, 0, 1, 1], [], []>} : vector<8x8xf32>, vector<8x128xf32>, vector<8x128xf32> -> vector<8x128xf32>
    %442 = arith.addf %439, %441 : vector<8x128xf32>
    %443 = arith.addf %442, %14 : vector<8x128xf32>
    %444 = arith.negf %443 : vector<8x128xf32>
    %445 = math.exp %444 : vector<8x128xf32>
    %cst_303 = arith.constant 1.000000e+00 : f32
    %446 = vector.broadcast %cst_303 : f32 to vector<8x128xf32>
    %447 = arith.addf %446, %445 : vector<8x128xf32>
    %448 = arith.divf %446, %447 : vector<8x128xf32>
    %449 = arith.select %20, %448, %416 : vector<8x128xi1>, vector<8x128xf32>
    %450 = arith.index_cast %c7_i32 : i32 to index
    %c0_304 = arith.constant 0 : index
    %c0_305 = arith.constant 0 : index
    %451 = vector.load %arg17[%450, %c0_304, %c0_305] : memref<8x8x128xf32, #tpu.memory_space<vmem>>, vector<1x8x128xf32>
    %452 = vector.shape_cast %451 : vector<1x8x128xf32> to vector<8x128xf32>
    %453 = vector.shape_cast %449 : vector<8x128xf32> to vector<1x8x128xf32>
    tpu.vector_store %arg17[%450, %c0_304, %c0_305], %453 {strides = array<i32>} : memref<8x8x128xf32, #tpu.memory_space<vmem>>, vector<1x8x128xf32>,
    %c8_i32 = arith.constant 8 : i32
    return
  }
}

</mosaic_0001>

<llo_original>
// kernel: stochastic_lstm_forward.1
$region0: #{stochastic_lstm_forward.1}
  #allocation0 [shape = 'u32[]', space=smem, size = 0x4, offset = 0x4, fixed_abs, tag = 'smem constant byte address 0x4 - core index']
  #allocation1 [shape = 'u32[144,128]{1,0:T(1,128)}', space=vmem, size = 0x12000, scoped, tag = 'internal scratch']
  %s0 = inlined_call_operand.vmem [shape: f32[8,8,16], index: 0, kind: input, shape index: {}]
  %s1 = inlined_call_operand.vmem [shape: f32[8,8,8], index: 1, kind: input, shape index: {}]
  %s2 = inlined_call_operand.vmem [shape: f32[8,32], index: 2, kind: input, shape index: {}]
  %s3 = inlined_call_operand.vmem [shape: f32[16,256], index: 3, kind: input, shape index: {}]
  %s4 = inlined_call_operand.vmem [shape: f32[32,256], index: 4, kind: input, shape index: {}]
  %s5 = inlined_call_operand.vmem [shape: f32[1,256], index: 5, kind: input, shape index: {}]
  %s6 = inlined_call_operand.vmem [shape: f32[256,128], index: 6, kind: input, shape index: {}]
  %s7 = inlined_call_operand.vmem [shape: f32[1,128], index: 7, kind: input, shape index: {}]
  %s8 = inlined_call_operand.vmem [shape: f32[16,64], index: 8, kind: input, shape index: {}]
  %s9 = inlined_call_operand.vmem [shape: f32[32,64], index: 9, kind: input, shape index: {}]
  %s10 = inlined_call_operand.vmem [shape: f32[8,64], index: 10, kind: input, shape index: {}]
  %s11 = inlined_call_operand.vmem [shape: f32[1,64], index: 11, kind: input, shape index: {}]
  %s12 = inlined_call_operand.vmem [shape: f32[64,32], index: 12, kind: input, shape index: {}]
  %s13 = inlined_call_operand.vmem [shape: f32[1,32], index: 13, kind: input, shape index: {}]
  %s14 = inlined_call_operand.vmem [shape: f32[32,128], index: 14, kind: input, shape index: {}]
  %s15 = inlined_call_operand.vmem [shape: f32[8,128], index: 15, kind: input, shape index: {}]
  %s16 = inlined_call_operand.vmem [shape: f32[1,128], index: 16, kind: input, shape index: {}]
  %s17 = inlined_call_operand.vmem [shape: f32[8,8,128], index: 17, kind: output, shape index: {}]
  %s18 = sld [smem:[#allocation0]]
  $region78: #{stochastic_lstm_forward.1} parent=0
    _
  %s20 = ssub.s32 1, %s18
  %s21 = scalar_select 0, %s20, %s18
  // Predicated region
  $region2: #{stochastic_lstm_forward.1} parent=0 // pred_check
    _
  $region3: #{stochastic_lstm_forward.1} parent=0 // pred_check_branch
    %23 = sbr.rel (0) target = $region5
  $region4: #{stochastic_lstm_forward.1} parent=0 // pred_region
    _
  $region5: #{stochastic_lstm_forward.1} parent=0 // pred_fallthru
    _
  // Predicated region
  $region6: #{stochastic_lstm_forward.1} parent=0 // pred_check
    _
  $region7: #{stochastic_lstm_forward.1} parent=0 // pred_check_branch
    %25 = sbr.rel (0) target = $region9
  $region8: #{stochastic_lstm_forward.1} parent=0 // pred_region
    _
  $region9: #{stochastic_lstm_forward.1} parent=0 // pred_fallthru
    _
  // Predicated region
  $region10: #{stochastic_lstm_forward.1} parent=0 // pred_check
    _
  $region11: #{stochastic_lstm_forward.1} parent=0 // pred_check_branch
    %27 = sbr.rel (0) target = $region13
  $region12: #{stochastic_lstm_forward.1} parent=0 // pred_region
    _
  $region13: #{stochastic_lstm_forward.1} parent=0 // pred_fallthru
    _
  // Predicated region
  $region14: #{stochastic_lstm_forward.1} parent=0 // pred_check
    _
  $region15: #{stochastic_lstm_forward.1} parent=0 // pred_check_branch
    %29 = sbr.rel (0) target = $region17
  $region16: #{stochastic_lstm_forward.1} parent=0 // pred_region
    _
  $region17: #{stochastic_lstm_forward.1} parent=0 // pred_fallthru
    _
  // Predicated region
  $region18: #{stochastic_lstm_forward.1} parent=0 // pred_check
    _
  $region19: #{stochastic_lstm_forward.1} parent=0 // pred_check_branch
    %31 = sbr.rel (0) target = $region21
  $region20: #{stochastic_lstm_forward.1} parent=0 // pred_region
    _
  $region21: #{stochastic_lstm_forward.1} parent=0 // pred_fallthru
    _
  // Predicated region
  $region22: #{stochastic_lstm_forward.1} parent=0 // pred_check
    _
  $region23: #{stochastic_lstm_forward.1} parent=0 // pred_check_branch
    %33 = sbr.rel (0) target = $region25
  $region24: #{stochastic_lstm_forward.1} parent=0 // pred_region
    _
  $region25: #{stochastic_lstm_forward.1} parent=0 // pred_fallthru
    _
  // Predicated region
  $region26: #{stochastic_lstm_forward.1} parent=0 // pred_check
    _
  $region27: #{stochastic_lstm_forward.1} parent=0 // pred_check_branch
    %35 = sbr.rel (0) target = $region29
  $region28: #{stochastic_lstm_forward.1} parent=0 // pred_region
    _
  $region29: #{stochastic_lstm_forward.1} parent=0 // pred_fallthru
    _
  // Predicated region
  $region30: #{stochastic_lstm_forward.1} parent=0 // pred_check
    _
  $region31: #{stochastic_lstm_forward.1} parent=0 // pred_check_branch
    %37 = sbr.rel (0) target = $region33
  $region32: #{stochastic_lstm_forward.1} parent=0 // pred_region
    _
  $region33: #{stochastic_lstm_forward.1} parent=0 // pred_fallthru
    _
  // Predicated region
  $region34: #{stochastic_lstm_forward.1} parent=0 // pred_check
    _
  $region35: #{stochastic_lstm_forward.1} parent=0 // pred_check_branch
    %39 = sbr.rel (0) target = $region37
  $region36: #{stochastic_lstm_forward.1} parent=0 // pred_region
    _
  $region37: #{stochastic_lstm_forward.1} parent=0 // pred_fallthru
    _
  // Predicated region
  $region38: #{stochastic_lstm_forward.1} parent=0 // pred_check
    _
  $region39: #{stochastic_lstm_forward.1} parent=0 // pred_check_branch
    %41 = sbr.rel (0) target = $region41
  $region40: #{stochastic_lstm_forward.1} parent=0 // pred_region
    _
  $region41: #{stochastic_lstm_forward.1} parent=0 // pred_fallthru
    _
  // Predicated region
  $region42: #{stochastic_lstm_forward.1} parent=0 // pred_check
    _
  $region43: #{stochastic_lstm_forward.1} parent=0 // pred_check_branch
    %43 = sbr.rel (0) target = $region45
  $region44: #{stochastic_lstm_forward.1} parent=0 // pred_region
    _
  $region45: #{stochastic_lstm_forward.1} parent=0 // pred_fallthru
    _
  // Predicated region
  $region46: #{stochastic_lstm_forward.1} parent=0 // pred_check
    _
  $region47: #{stochastic_lstm_forward.1} parent=0 // pred_check_branch
    %45 = sbr.rel (0) target = $region49
  $region48: #{stochastic_lstm_forward.1} parent=0 // pred_region
    _
  $region49: #{stochastic_lstm_forward.1} parent=0 // pred_fallthru
    _
  // Predicated region
  $region50: #{stochastic_lstm_forward.1} parent=0 // pred_check
    _
  $region51: #{stochastic_lstm_forward.1} parent=0 // pred_check_branch
    %47 = sbr.rel (0) target = $region53
  $region52: #{stochastic_lstm_forward.1} parent=0 // pred_region
    _
  $region53: #{stochastic_lstm_forward.1} parent=0 // pred_fallthru
    _
  // Predicated region
  $region54: #{stochastic_lstm_forward.1} parent=0 // pred_check
    _
  $region55: #{stochastic_lstm_forward.1} parent=0 // pred_check_branch
    %49 = sbr.rel (0) target = $region57
  $region56: #{stochastic_lstm_forward.1} parent=0 // pred_region
    _
  $region57: #{stochastic_lstm_forward.1} parent=0 // pred_fallthru
    _
  // Predicated region
  $region58: #{stochastic_lstm_forward.1} parent=0 // pred_check
    _
  $region59: #{stochastic_lstm_forward.1} parent=0 // pred_check_branch
    %51 = sbr.rel (0) target = $region61
  $region60: #{stochastic_lstm_forward.1} parent=0 // pred_region
    _
  $region61: #{stochastic_lstm_forward.1} parent=0 // pred_fallthru
    _
  // Predicated region
  $region62: #{stochastic_lstm_forward.1} parent=0 // pred_check
    _
  $region63: #{stochastic_lstm_forward.1} parent=0 // pred_check_branch
    %53 = sbr.rel (0) target = $region65
  $region64: #{stochastic_lstm_forward.1} parent=0 // pred_region
    _
  $region65: #{stochastic_lstm_forward.1} parent=0 // pred_fallthru
    _
  // Predicated region
  $region66: #{stochastic_lstm_forward.1} parent=0 // pred_check
    _
  $region67: #{stochastic_lstm_forward.1} parent=0 // pred_check_branch
    %55 = sbr.rel (0) target = $region69
  $region68: #{stochastic_lstm_forward.1} parent=0 // pred_region
    _
  $region69: #{stochastic_lstm_forward.1} parent=0 // pred_fallthru
    _
  %v56 = vld [vmem:[%s5] sm:$0x3]
  %v58 = vlaneseq
  %v59 = vshrl.u32 %v58, 7
  %v60 = vsub.s32 0, %v59
  %v61 = vrot.slane %v56, %v60
  %v62 = vlaneseq
  %v63 = vshrl.u32 %v62, 7
  %v64 = vsub.s32 1, %v63
  %v65 = vrot.slane %v56, %v64
  %v68 = vld [vmem:[%s7] sm:$0x1]
  %v70 = vlaneseq
  %v71 = vshrl.u32 %v70, 7
  %v72 = vsub.s32 0, %v71
  %v73 = vrot.slane %v68, %v72
  %v75 = vld [vmem:[%s11] sm:$0x1]
  %v77 = vlaneseq
  %v78 = vshrl.u32 %v77, 7
  %v79 = vsub.s32 0, %v78
  %v80 = vrot.slane %v75, %v79
  %v82 = vld [vmem:[%s13] sm:$0x1]
  %v84 = vlaneseq
  %v85 = vshrl.u32 %v84, 7
  %v86 = vsub.s32 0, %v85
  %v87 = vrot.slane %v82, %v86
  %v89 = vld [vmem:[%s16] sm:$0x1]
  %v91 = vlaneseq
  %v92 = vshrl.u32 %v91, 7
  %v93 = vsub.s32 0, %v92
  %v94 = vrot.slane %v89, %v93
  %v96 = vlaneseq
  %v97 = vand.u32 %v96, 127
  %vm98 = vcmp.ge.s32.totalorder %v97, 32
  %vm99 = vcmp.lt.s32.totalorder %v97, 48
  %vm100 = vmand %vm98, %vm99
  %v101 = vld [vmem:[%s2] sm:$0xff]
  %v102 = vld [vmem:[%s0] sm:$0xff]
  %v103 = vld [vmem:[%s1] sm:$0xff]
  %v104 = vld [vmem:[%s3] sm:$0xff]
  %v105 = vld [vmem:[%s3 + $0x8] sm:$0xff]
  %v106 = vld [vmem:[%s3 + $0x10] sm:$0xff]
  %v107 = vld [vmem:[%s3 + $0x18] sm:$0xff]
  %v108 = vld [vmem:[%s4] sm:$0xff]
  %v109 = vld [vmem:[%s4 + $0x8] sm:$0xff]
  %v110 = vld [vmem:[%s4 + $0x10] sm:$0xff]
  %v111 = vld [vmem:[%s4 + $0x18] sm:$0xff]
  %v112 = vld [vmem:[%s4 + $0x20] sm:$0xff]
  %v113 = vld [vmem:[%s4 + $0x28] sm:$0xff]
  %v114 = vld [vmem:[%s4 + $0x30] sm:$0xff]
  %v115 = vld [vmem:[%s4 + $0x38] sm:$0xff]
  %vm116 = vcmask 261120
  %v118 = vsel %vm116, %v101, 0
  %120 = vmatprep.subr.mxu0 0.0
  %121 = vmatpush1.msra.mxu0 0.0
  %122 = vmatprep.subr.mxu0 0.0
  %123 = vmatpush1.msra.mxu0 0.0
  %124 = vmatprep.subr.mxu0 0.0
  %125 = vmatpush1.msra.mxu0 0.0
  %126 = vmatprep.subr.mxu0 0.0
  %127 = vmatpush1.msra.mxu0 0.0
  %128 = vmatprep.subr.mxu0 0.0
  %129 = vmatpush1.msra.mxu0 0.0
  %130 = vmatprep.subr.mxu0 0.0
  %131 = vmatpush1.msra.mxu0 0.0
  %132 = vmatprep.subr.mxu0 0.0
  %133 = vmatpush1.msra.mxu0 0.0
  %134 = vmatprep.subr.mxu0 0.0
  %135 = vmatpush1.msra.mxu0 0.0
  %136 = vmatprep.subr.mxu0 0.0
  %137 = vmatpush1.msra.mxu0 0.0
  %138 = vmatprep.subr.mxu0 0.0
  %139 = vmatpush1.msra.mxu0 0.0
  %140 = vmatprep.subr.mxu0 0.0
  %141 = vmatpush1.msra.mxu0 0.0
  %142 = vmatprep.subr.mxu0 0.0
  %143 = vmatpush1.msra.mxu0 0.0
  %144 = vmatprep.subr.mxu0 %v115
  %145 = vmatpush1.msra.mxu0 %v114
  %146 = vmatprep.subr.mxu0 %v113
  %147 = vmatpush1.msra.mxu0 %v112
  %148 = vmatprep.subr.mxu0 %v111
  %149 = vmatpush1.msra.mxu0 %v110
  %150 = vmatprep.subr.mxu0 %v109
  %151 = vmatpush1.msra.mxu0 %v108
  %152 = vmatprep.subr.mxu0 0.0
  %153 = vmatpush2.msra.mxu0 0.0
  %154 = vmatprep.subr.mxu0 0.0
  %155 = vmatpush2.msra.mxu0 0.0
  %156 = vmatprep.subr.mxu0 0.0
  %157 = vmatpush2.msra.mxu0 0.0
  %158 = vmatprep.subr.mxu0 0.0
  %159 = vmatpush2.msra.mxu0 0.0
  %160 = vmatprep.subr.mxu0 0.0
  %161 = vmatpush2.msra.mxu0 0.0
  %162 = vmatprep.subr.mxu0 0.0
  %163 = vmatpush2.msra.mxu0 0.0
  %164 = vmatprep.subr.mxu0 0.0
  %165 = vmatpush2.msra.mxu0 0.0
  %166 = vmatprep.subr.mxu0 0.0
  %167 = vmatpush2.msra.mxu0 0.0
  %168 = vmatprep.subr.mxu0 0.0
  %169 = vmatpush2.msra.mxu0 0.0
  %170 = vmatprep.subr.mxu0 0.0
  %171 = vmatpush2.msra.mxu0 0.0
  %172 = vmatprep.subr.mxu0 0.0
  %173 = vmatpush2.msra.mxu0 0.0
  %174 = vmatprep.subr.mxu0 0.0
  %175 = vmatpush2.msra.mxu0 0.0
  %176 = vmatprep.subr.mxu0 0.0
  %177 = vmatpush2.msra.mxu0 0.0
  %178 = vmatprep.subr.mxu0 0.0
  %179 = vmatpush2.msra.mxu0 0.0
  %180 = vmatprep.subr.mxu0 0.0
  %181 = vmatpush2.msra.mxu0 0.0
  %182 = vmatprep.subr.mxu0 0.0
  %183 = vmatpush2.msra.mxu0 0.0
  %184 = vmatprep.mubr.f32.mxu0 0.0
  %185 = vmatmul.mubr.f32.gmra.mxu0 %v118
  %v186 = vpop.f32.mrf.mxu0
  %v187 = vadd.f32 0.0, %v186
  %v188 = vpop.f32.mrf.mxu0
  %v189 = vadd.f32 0.0, %v188
  %190 = vdwg.mxu0
  %vm191 = vcmask 130048
  %v193 = vsel %vm191, %v102, 0
  %195 = vmatprep.subr.mxu0 0.0
  %196 = vmatpush1.msra.mxu0 0.0
  %197 = vmatprep.subr.mxu0 0.0
  %198 = vmatpush1.msra.mxu0 0.0
  %199 = vmatprep.subr.mxu0 0.0
  %200 = vmatpush1.msra.mxu0 0.0
  %201 = vmatprep.subr.mxu0 0.0
  %202 = vmatpush1.msra.mxu0 0.0
  %203 = vmatprep.subr.mxu0 0.0
  %204 = vmatpush1.msra.mxu0 0.0
  %205 = vmatprep.subr.mxu0 0.0
  %206 = vmatpush1.msra.mxu0 0.0
  %207 = vmatprep.subr.mxu0 0.0
  %208 = vmatpush1.msra.mxu0 0.0
  %209 = vmatprep.subr.mxu0 0.0
  %210 = vmatpush1.msra.mxu0 0.0
  %211 = vmatprep.subr.mxu0 0.0
  %212 = vmatpush1.msra.mxu0 0.0
  %213 = vmatprep.subr.mxu0 0.0
  %214 = vmatpush1.msra.mxu0 0.0
  %215 = vmatprep.subr.mxu0 0.0
  %216 = vmatpush1.msra.mxu0 0.0
  %217 = vmatprep.subr.mxu0 0.0
  %218 = vmatpush1.msra.mxu0 0.0
  %219 = vmatprep.subr.mxu0 0.0
  %220 = vmatpush1.msra.mxu0 0.0
  %221 = vmatprep.subr.mxu0 0.0
  %222 = vmatpush1.msra.mxu0 0.0
  %223 = vmatprep.subr.mxu0 %v107
  %224 = vmatpush1.msra.mxu0 %v106
  %225 = vmatprep.subr.mxu0 %v105
  %226 = vmatpush1.msra.mxu0 %v104
  %227 = vmatprep.subr.mxu0 0.0
  %228 = vmatpush2.msra.mxu0 0.0
  %229 = vmatprep.subr.mxu0 0.0
  %230 = vmatpush2.msra.mxu0 0.0
  %231 = vmatprep.subr.mxu0 0.0
  %232 = vmatpush2.msra.mxu0 0.0
  %233 = vmatprep.subr.mxu0 0.0
  %234 = vmatpush2.msra.mxu0 0.0
  %235 = vmatprep.subr.mxu0 0.0
  %236 = vmatpush2.msra.mxu0 0.0
  %237 = vmatprep.subr.mxu0 0.0
  %238 = vmatpush2.msra.mxu0 0.0
  %239 = vmatprep.subr.mxu0 0.0
  %240 = vmatpush2.msra.mxu0 0.0
  %241 = vmatprep.subr.mxu0 0.0
  %242 = vmatpush2.msra.mxu0 0.0
  %243 = vmatprep.subr.mxu0 0.0
  %244 = vmatpush2.msra.mxu0 0.0
  %245 = vmatprep.subr.mxu0 0.0
  %246 = vmatpush2.msra.mxu0 0.0
  %247 = vmatprep.subr.mxu0 0.0
  %248 = vmatpush2.msra.mxu0 0.0
  %249 = vmatprep.subr.mxu0 0.0
  %250 = vmatpush2.msra.mxu0 0.0
  %251 = vmatprep.subr.mxu0 0.0
  %252 = vmatpush2.msra.mxu0 0.0
  %253 = vmatprep.subr.mxu0 0.0
  %254 = vmatpush2.msra.mxu0 0.0
  %255 = vmatprep.subr.mxu0 0.0
  %256 = vmatpush2.msra.mxu0 0.0
  %257 = vmatprep.subr.mxu0 0.0
  %258 = vmatpush2.msra.mxu0 0.0
  %259 = vmatprep.mubr.f32.mxu0 0.0
  %260 = vmatmul.mubr.f32.gmra.mxu0 %v193
  %v261 = vpop.f32.mrf.mxu0
  %v262 = vadd.f32 %v187, %v261
  %v263 = vpop.f32.mrf.mxu0
  %v264 = vadd.f32 %v189, %v263
  %265 = vdwg.mxu0
  %v266 = vadd.f32 %v262, %v61
  %v267 = vadd.f32 %v264, %v65
  %v268 = vmax.f32 %v266, 0.0
  %v269 = vmax.f32 %v267, 0.0
  %v270 = vld [vmem:[%s6] sm:$0xff]
  %v271 = vld [vmem:[%s6 + $0x8] sm:$0xff]
  %v272 = vld [vmem:[%s6 + $0x10] sm:$0xff]
  %v273 = vld [vmem:[%s6 + $0x18] sm:$0xff]
  %v274 = vld [vmem:[%s6 + $0x20] sm:$0xff]
  %v275 = vld [vmem:[%s6 + $0x28] sm:$0xff]
  %v276 = vld [vmem:[%s6 + $0x30] sm:$0xff]
  %v277 = vld [vmem:[%s6 + $0x38] sm:$0xff]
  %v278 = vld [vmem:[%s6 + $0x40] sm:$0xff]
  %v279 = vld [vmem:[%s6 + $0x48] sm:$0xff]
  %v280 = vld [vmem:[%s6 + $0x50] sm:$0xff]
  %v281 = vld [vmem:[%s6 + $0x58] sm:$0xff]
  %v282 = vld [vmem:[%s6 + $0x60] sm:$0xff]
  %v283 = vld [vmem:[%s6 + $0x68] sm:$0xff]
  %v284 = vld [vmem:[%s6 + $0x70] sm:$0xff]
  %v285 = vld [vmem:[%s6 + $0x78] sm:$0xff]
  %v286 = vld [vmem:[%s6 + $0x80] sm:$0xff]
  %v287 = vld [vmem:[%s6 + $0x88] sm:$0xff]
  %v288 = vld [vmem:[%s6 + $0x90] sm:$0xff]
  %v289 = vld [vmem:[%s6 + $0x98] sm:$0xff]
  %v290 = vld [vmem:[%s6 + $0xa0] sm:$0xff]
  %v291 = vld [vmem:[%s6 + $0xa8] sm:$0xff]
  %v292 = vld [vmem:[%s6 + $0xb0] sm:$0xff]
  %v293 = vld [vmem:[%s6 + $0xb8] sm:$0xff]
  %v294 = vld [vmem:[%s6 + $0xc0] sm:$0xff]
  %v295 = vld [vmem:[%s6 + $0xc8] sm:$0xff]
  %v296 = vld [vmem:[%s6 + $0xd0] sm:$0xff]
  %v297 = vld [vmem:[%s6 + $0xd8] sm:$0xff]
  %v298 = vld [vmem:[%s6 + $0xe0] sm:$0xff]
  %v299 = vld [vmem:[%s6 + $0xe8] sm:$0xff]
  %v300 = vld [vmem:[%s6 + $0xf0] sm:$0xff]
  %v301 = vld [vmem:[%s6 + $0xf8] sm:$0xff]
  %302 = vmatprep.subr.mxu0 0.0
  %303 = vmatpush1.msra.mxu0 %v285
  %304 = vmatprep.subr.mxu0 0.0
  %305 = vmatpush1.msra.mxu0 %v284
  %306 = vmatprep.subr.mxu0 0.0
  %307 = vmatpush1.msra.mxu0 %v283
  %308 = vmatprep.subr.mxu0 0.0
  %309 = vmatpush1.msra.mxu0 %v282
  %310 = vmatprep.subr.mxu0 0.0
  %311 = vmatpush1.msra.mxu0 %v281
  %312 = vmatprep.subr.mxu0 0.0
  %313 = vmatpush1.msra.mxu0 %v280
  %314 = vmatprep.subr.mxu0 0.0
  %315 = vmatpush1.msra.mxu0 %v279
  %316 = vmatprep.subr.mxu0 0.0
  %317 = vmatpush1.msra.mxu0 %v278
  %318 = vmatprep.subr.mxu0 0.0
  %319 = vmatpush1.msra.mxu0 %v277
  %320 = vmatprep.subr.mxu0 0.0
  %321 = vmatpush1.msra.mxu0 %v276
  %322 = vmatprep.subr.mxu0 0.0
  %323 = vmatpush1.msra.mxu0 %v275
  %324 = vmatprep.subr.mxu0 0.0
  %325 = vmatpush1.msra.mxu0 %v274
  %326 = vmatprep.subr.mxu0 0.0
  %327 = vmatpush1.msra.mxu0 %v273
  %328 = vmatprep.subr.mxu0 0.0
  %329 = vmatpush1.msra.mxu0 %v272
  %330 = vmatprep.subr.mxu0 0.0
  %331 = vmatpush1.msra.mxu0 %v271
  %332 = vmatprep.subr.mxu0 0.0
  %333 = vmatpush1.msra.mxu0 %v270
  %334 = vmatprep.subr.mxu0 0.0
  %335 = vmatpush2.msra.mxu0 %v301
  %336 = vmatprep.subr.mxu0 0.0
  %337 = vmatpush2.msra.mxu0 %v300
  %338 = vmatprep.subr.mxu0 0.0
  %339 = vmatpush2.msra.mxu0 %v299
  %340 = vmatprep.subr.mxu0 0.0
  %341 = vmatpush2.msra.mxu0 %v298
  %342 = vmatprep.subr.mxu0 0.0
  %343 = vmatpush2.msra.mxu0 %v297
  %344 = vmatprep.subr.mxu0 0.0
  %345 = vmatpush2.msra.mxu0 %v296
  %346 = vmatprep.subr.mxu0 0.0
  %347 = vmatpush2.msra.mxu0 %v295
  %348 = vmatprep.subr.mxu0 0.0
  %349 = vmatpush2.msra.mxu0 %v294
  %350 = vmatprep.subr.mxu0 0.0
  %351 = vmatpush2.msra.mxu0 %v293
  %352 = vmatprep.subr.mxu0 0.0
  %353 = vmatpush2.msra.mxu0 %v292
  %354 = vmatprep.subr.mxu0 0.0
  %355 = vmatpush2.msra.mxu0 %v291
  %356 = vmatprep.subr.mxu0 0.0
  %357 = vmatpush2.msra.mxu0 %v290
  %358 = vmatprep.subr.mxu0 0.0
  %359 = vmatpush2.msra.mxu0 %v289
  %360 = vmatprep.subr.mxu0 0.0
  %361 = vmatpush2.msra.mxu0 %v288
  %362 = vmatprep.subr.mxu0 0.0
  %363 = vmatpush2.msra.mxu0 %v287
  %364 = vmatprep.subr.mxu0 0.0
  %365 = vmatpush2.msra.mxu0 %v286
  %366 = vmatprep.mubr.f32.mxu0 %v269
  %367 = vmatmul.mubr.f32.gmra.mxu0 %v268
  %v368 = vpop.f32.mrf.mxu0
  %v369 = vadd.f32 %v73, %v368
  %v370 = vpop.f32.mrf.mxu0
  %371 = vdwg.mxu0
  %v372 = vmul.f32 %v369, 0.5
  %v373 = vmul.f32 %v372, 1.442695
  %v374 = vpow.pop %v373
  %376 = vrot.lane.b32.xlu0 %v103, 8
  %v377 = vpop.permute.xlu0 %376
  %v379 = vmul.f32 %v374, %v377
  %381 = vrot.lane.b32.xlu0 %v379, 120
  %v382 = vpop.permute.xlu0 %381
  %v384 = vadd.f32 %v369, %v382
  %v385 = vld [vmem:[%s8] sm:$0xff]
  %v386 = vld [vmem:[%s8 + $0x8] sm:$0xff]
  %v387 = vld [vmem:[%s9] sm:$0xff]
  %v388 = vld [vmem:[%s9 + $0x8] sm:$0xff]
  %v389 = vld [vmem:[%s9 + $0x10] sm:$0xff]
  %v390 = vld [vmem:[%s9 + $0x18] sm:$0xff]
  %391 = vmatprep.subr.mxu0 0.0
  %392 = vmatpush1.msra.mxu0 0.0
  %393 = vmatprep.subr.mxu0 0.0
  %394 = vmatpush1.msra.mxu0 0.0
  %395 = vmatprep.subr.mxu0 0.0
  %396 = vmatpush1.msra.mxu0 0.0
  %397 = vmatprep.subr.mxu0 0.0
  %398 = vmatpush1.msra.mxu0 0.0
  %399 = vmatprep.subr.mxu0 0.0
  %400 = vmatpush1.msra.mxu0 0.0
  %401 = vmatprep.subr.mxu0 0.0
  %402 = vmatpush1.msra.mxu0 0.0
  %403 = vmatprep.subr.mxu0 0.0
  %404 = vmatpush1.msra.mxu0 0.0
  %405 = vmatprep.subr.mxu0 0.0
  %406 = vmatpush1.msra.mxu0 0.0
  %407 = vmatprep.subr.mxu0 0.0
  %408 = vmatpush1.msra.mxu0 0.0
  %409 = vmatprep.subr.mxu0 0.0
  %410 = vmatpush1.msra.mxu0 0.0
  %411 = vmatprep.subr.mxu0 0.0
  %412 = vmatpush1.msra.mxu0 0.0
  %413 = vmatprep.subr.mxu0 0.0
  %414 = vmatpush1.msra.mxu0 0.0
  %415 = vmatprep.subr.mxu0 0.0
  %416 = vmatpush1.msra.mxu0 %v390
  %417 = vmatprep.subr.mxu0 0.0
  %418 = vmatpush1.msra.mxu0 %v389
  %419 = vmatprep.subr.mxu0 0.0
  %420 = vmatpush1.msra.mxu0 %v388
  %421 = vmatprep.subr.mxu0 0.0
  %422 = vmatpush1.msra.mxu0 %v387
  %423 = vmatprep.subr.mxu0 0.0
  %424 = vmatpush2.msra.mxu0 0.0
  %425 = vmatprep.subr.mxu0 0.0
  %426 = vmatpush2.msra.mxu0 0.0
  %427 = vmatprep.subr.mxu0 0.0
  %428 = vmatpush2.msra.mxu0 0.0
  %429 = vmatprep.subr.mxu0 0.0
  %430 = vmatpush2.msra.mxu0 0.0
  %431 = vmatprep.subr.mxu0 0.0
  %432 = vmatpush2.msra.mxu0 0.0
  %433 = vmatprep.subr.mxu0 0.0
  %434 = vmatpush2.msra.mxu0 0.0
  %435 = vmatprep.subr.mxu0 0.0
  %436 = vmatpush2.msra.mxu0 0.0
  %437 = vmatprep.subr.mxu0 0.0
  %438 = vmatpush2.msra.mxu0 0.0
  %439 = vmatprep.subr.mxu0 0.0
  %440 = vmatpush2.msra.mxu0 0.0
  %441 = vmatprep.subr.mxu0 0.0
  %442 = vmatpush2.msra.mxu0 0.0
  %443 = vmatprep.subr.mxu0 0.0
  %444 = vmatpush2.msra.mxu0 0.0
  %445 = vmatprep.subr.mxu0 0.0
  %446 = vmatpush2.msra.mxu0 0.0
  %447 = vmatprep.subr.mxu0 0.0
  %448 = vmatpush2.msra.mxu0 0.0
  %449 = vmatprep.subr.mxu0 0.0
  %450 = vmatpush2.msra.mxu0 0.0
  %451 = vmatprep.subr.mxu0 0.0
  %452 = vmatpush2.msra.mxu0 0.0
  %453 = vmatprep.subr.mxu0 0.0
  %454 = vmatpush2.msra.mxu0 0.0
  %455 = vmatprep.mubr.f32.mxu0 0.0
  %456 = vmatmul.mubr.f32.gmra.mxu0 %v118
  %v457 = vpop.f32.mrf.mxu0
  %v458 = vadd.f32 0.0, %v457
  %v459 = vpop.f32.mrf.mxu0
  %460 = vdwg.mxu0
  %461 = vmatprep.subr.mxu0 0.0
  %462 = vmatpush1.msra.mxu0 0.0
  %463 = vmatprep.subr.mxu0 0.0
  %464 = vmatpush1.msra.mxu0 0.0
  %465 = vmatprep.subr.mxu0 0.0
  %466 = vmatpush1.msra.mxu0 0.0
  %467 = vmatprep.subr.mxu0 0.0
  %468 = vmatpush1.msra.mxu0 0.0
  %469 = vmatprep.subr.mxu0 0.0
  %470 = vmatpush1.msra.mxu0 0.0
  %471 = vmatprep.subr.mxu0 0.0
  %472 = vmatpush1.msra.mxu0 0.0
  %473 = vmatprep.subr.mxu0 0.0
  %474 = vmatpush1.msra.mxu0 0.0
  %475 = vmatprep.subr.mxu0 0.0
  %476 = vmatpush1.msra.mxu0 0.0
  %477 = vmatprep.subr.mxu0 0.0
  %478 = vmatpush1.msra.mxu0 0.0
  %479 = vmatprep.subr.mxu0 0.0
  %480 = vmatpush1.msra.mxu0 0.0
  %481 = vmatprep.subr.mxu0 0.0
  %482 = vmatpush1.msra.mxu0 0.0
  %483 = vmatprep.subr.mxu0 0.0
  %484 = vmatpush1.msra.mxu0 0.0
  %485 = vmatprep.subr.mxu0 0.0
  %486 = vmatpush1.msra.mxu0 0.0
  %487 = vmatprep.subr.mxu0 0.0
  %488 = vmatpush1.msra.mxu0 0.0
  %489 = vmatprep.subr.mxu0 0.0
  %490 = vmatpush1.msra.mxu0 %v386
  %491 = vmatprep.subr.mxu0 0.0
  %492 = vmatpush1.msra.mxu0 %v385
  %493 = vmatprep.subr.mxu0 0.0
  %494 = vmatpush2.msra.mxu0 0.0
  %495 = vmatprep.subr.mxu0 0.0
  %496 = vmatpush2.msra.mxu0 0.0
  %497 = vmatprep.subr.mxu0 0.0
  %498 = vmatpush2.msra.mxu0 0.0
  %499 = vmatprep.subr.mxu0 0.0
  %500 = vmatpush2.msra.mxu0 0.0
  %501 = vmatprep.subr.mxu0 0.0
  %502 = vmatpush2.msra.mxu0 0.0
  %503 = vmatprep.subr.mxu0 0.0
  %504 = vmatpush2.msra.mxu0 0.0
  %505 = vmatprep.subr.mxu0 0.0
  %506 = vmatpush2.msra.mxu0 0.0
  %507 = vmatprep.subr.mxu0 0.0
  %508 = vmatpush2.msra.mxu0 0.0
  %509 = vmatprep.subr.mxu0 0.0
  %510 = vmatpush2.msra.mxu0 0.0
  %511 = vmatprep.subr.mxu0 0.0
  %512 = vmatpush2.msra.mxu0 0.0
  %513 = vmatprep.subr.mxu0 0.0
  %514 = vmatpush2.msra.mxu0 0.0
  %515 = vmatprep.subr.mxu0 0.0
  %516 = vmatpush2.msra.mxu0 0.0
  %517 = vmatprep.subr.mxu0 0.0
  %518 = vmatpush2.msra.mxu0 0.0
  %519 = vmatprep.subr.mxu0 0.0
  %520 = vmatpush2.msra.mxu0 0.0
  %521 = vmatprep.subr.mxu0 0.0
  %522 = vmatpush2.msra.mxu0 0.0
  %523 = vmatprep.subr.mxu0 0.0
  %524 = vmatpush2.msra.mxu0 0.0
  %525 = vmatprep.mubr.f32.mxu0 0.0
  %526 = vmatmul.mubr.f32.gmra.mxu0 %v193
  %v527 = vpop.f32.mrf.mxu0
  %v528 = vadd.f32 %v458, %v527
  %v529 = vpop.f32.mrf.mxu0
  %530 = vdwg.mxu0
  %v531 = vld [vmem:[%s10] sm:$0xff]
  %vm532 = vcmask 64512
  %v534 = vsel %vm532, %v384, 0
  %536 = vmatprep.subr.mxu0 0.0
  %537 = vmatpush1.msra.mxu0 0.0
  %538 = vmatprep.subr.mxu0 0.0
  %539 = vmatpush1.msra.mxu0 0.0
  %540 = vmatprep.subr.mxu0 0.0
  %541 = vmatpush1.msra.mxu0 0.0
  %542 = vmatprep.subr.mxu0 0.0
  %543 = vmatpush1.msra.mxu0 0.0
  %544 = vmatprep.subr.mxu0 0.0
  %545 = vmatpush1.msra.mxu0 0.0
  %546 = vmatprep.subr.mxu0 0.0
  %547 = vmatpush1.msra.mxu0 0.0
  %548 = vmatprep.subr.mxu0 0.0
  %549 = vmatpush1.msra.mxu0 0.0
  %550 = vmatprep.subr.mxu0 0.0
  %551 = vmatpush1.msra.mxu0 0.0
  %552 = vmatprep.subr.mxu0 0.0
  %553 = vmatpush1.msra.mxu0 0.0
  %554 = vmatprep.subr.mxu0 0.0
  %555 = vmatpush1.msra.mxu0 0.0
  %556 = vmatprep.subr.mxu0 0.0
  %557 = vmatpush1.msra.mxu0 0.0
  %558 = vmatprep.subr.mxu0 0.0
  %559 = vmatpush1.msra.mxu0 0.0
  %560 = vmatprep.subr.mxu0 0.0
  %561 = vmatpush1.msra.mxu0 0.0
  %562 = vmatprep.subr.mxu0 0.0
  %563 = vmatpush1.msra.mxu0 0.0
  %564 = vmatprep.subr.mxu0 0.0
  %565 = vmatpush1.msra.mxu0 0.0
  %566 = vmatprep.subr.mxu0 0.0
  %567 = vmatpush1.msra.mxu0 %v531
  %568 = vmatprep.subr.mxu0 0.0
  %569 = vmatpush2.msra.mxu0 0.0
  %570 = vmatprep.subr.mxu0 0.0
  %571 = vmatpush2.msra.mxu0 0.0
  %572 = vmatprep.subr.mxu0 0.0
  %573 = vmatpush2.msra.mxu0 0.0
  %574 = vmatprep.subr.mxu0 0.0
  %575 = vmatpush2.msra.mxu0 0.0
  %576 = vmatprep.subr.mxu0 0.0
  %577 = vmatpush2.msra.mxu0 0.0
  %578 = vmatprep.subr.mxu0 0.0
  %579 = vmatpush2.msra.mxu0 0.0
  %580 = vmatprep.subr.mxu0 0.0
  %581 = vmatpush2.msra.mxu0 0.0
  %582 = vmatprep.subr.mxu0 0.0
  %583 = vmatpush2.msra.mxu0 0.0
  %584 = vmatprep.subr.mxu0 0.0
  %585 = vmatpush2.msra.mxu0 0.0
  %586 = vmatprep.subr.mxu0 0.0
  %587 = vmatpush2.msra.mxu0 0.0
  %588 = vmatprep.subr.mxu0 0.0
  %589 = vmatpush2.msra.mxu0 0.0
  %590 = vmatprep.subr.mxu0 0.0
  %591 = vmatpush2.msra.mxu0 0.0
  %592 = vmatprep.subr.mxu0 0.0
  %593 = vmatpush2.msra.mxu0 0.0
  %594 = vmatprep.subr.mxu0 0.0
  %595 = vmatpush2.msra.mxu0 0.0
  %596 = vmatprep.subr.mxu0 0.0
  %597 = vmatpush2.msra.mxu0 0.0
  %598 = vmatprep.subr.mxu0 0.0
  %599 = vmatpush2.msra.mxu0 0.0
  %600 = vmatprep.mubr.f32.mxu0 0.0
  %601 = vmatmul.mubr.f32.gmra.mxu0 %v534
  %v602 = vpop.f32.mrf.mxu0
  %v603 = vadd.f32 0.0, %v602
  %v604 = vpop.f32.mrf.mxu0
  %605 = vdwg.mxu0
  %v606 = vadd.f32 %v528, %v603
  %v607 = vadd.f32 %v606, %v80
  %v608 = vmax.f32 %v607, 0.0
  %v609 = vld [vmem:[%s12] sm:$0xff]
  %v610 = vld [vmem:[%s12 + $0x8] sm:$0xff]
  %v611 = vld [vmem:[%s12 + $0x10] sm:$0xff]
  %v612 = vld [vmem:[%s12 + $0x18] sm:$0xff]
  %v613 = vld [vmem:[%s12 + $0x20] sm:$0xff]
  %v614 = vld [vmem:[%s12 + $0x28] sm:$0xff]
  %v615 = vld [vmem:[%s12 + $0x30] sm:$0xff]
  %v616 = vld [vmem:[%s12 + $0x38] sm:$0xff]
  %vm617 = vcmask 523264
  %v619 = vsel %vm617, %v608, 0
  %621 = vmatprep.subr.mxu0 0.0
  %622 = vmatpush1.msra.mxu0 0.0
  %623 = vmatprep.subr.mxu0 0.0
  %624 = vmatpush1.msra.mxu0 0.0
  %625 = vmatprep.subr.mxu0 0.0
  %626 = vmatpush1.msra.mxu0 0.0
  %627 = vmatprep.subr.mxu0 0.0
  %628 = vmatpush1.msra.mxu0 0.0
  %629 = vmatprep.subr.mxu0 0.0
  %630 = vmatpush1.msra.mxu0 0.0
  %631 = vmatprep.subr.mxu0 0.0
  %632 = vmatpush1.msra.mxu0 0.0
  %633 = vmatprep.subr.mxu0 0.0
  %634 = vmatpush1.msra.mxu0 0.0
  %635 = vmatprep.subr.mxu0 0.0
  %636 = vmatpush1.msra.mxu0 0.0
  %637 = vmatprep.subr.mxu0 0.0
  %638 = vmatpush1.msra.mxu0 %v616
  %639 = vmatprep.subr.mxu0 0.0
  %640 = vmatpush1.msra.mxu0 %v615
  %641 = vmatprep.subr.mxu0 0.0
  %642 = vmatpush1.msra.mxu0 %v614
  %643 = vmatprep.subr.mxu0 0.0
  %644 = vmatpush1.msra.mxu0 %v613
  %645 = vmatprep.subr.mxu0 0.0
  %646 = vmatpush1.msra.mxu0 %v612
  %647 = vmatprep.subr.mxu0 0.0
  %648 = vmatpush1.msra.mxu0 %v611
  %649 = vmatprep.subr.mxu0 0.0
  %650 = vmatpush1.msra.mxu0 %v610
  %651 = vmatprep.subr.mxu0 0.0
  %652 = vmatpush1.msra.mxu0 %v609
  %653 = vmatprep.subr.mxu0 0.0
  %654 = vmatpush2.msra.mxu0 0.0
  %655 = vmatprep.subr.mxu0 0.0
  %656 = vmatpush2.msra.mxu0 0.0
  %657 = vmatprep.subr.mxu0 0.0
  %658 = vmatpush2.msra.mxu0 0.0
  %659 = vmatprep.subr.mxu0 0.0
  %660 = vmatpush2.msra.mxu0 0.0
  %661 = vmatprep.subr.mxu0 0.0
  %662 = vmatpush2.msra.mxu0 0.0
  %663 = vmatprep.subr.mxu0 0.0
  %664 = vmatpush2.msra.mxu0 0.0
  %665 = vmatprep.subr.mxu0 0.0
  %666 = vmatpush2.msra.mxu0 0.0
  %667 = vmatprep.subr.mxu0 0.0
  %668 = vmatpush2.msra.mxu0 0.0
  %669 = vmatprep.subr.mxu0 0.0
  %670 = vmatpush2.msra.mxu0 0.0
  %671 = vmatprep.subr.mxu0 0.0
  %672 = vmatpush2.msra.mxu0 0.0
  %673 = vmatprep.subr.mxu0 0.0
  %674 = vmatpush2.msra.mxu0 0.0
  %675 = vmatprep.subr.mxu0 0.0
  %676 = vmatpush2.msra.mxu0 0.0
  %677 = vmatprep.subr.mxu0 0.0
  %678 = vmatpush2.msra.mxu0 0.0
  %679 = vmatprep.subr.mxu0 0.0
  %680 = vmatpush2.msra.mxu0 0.0
  %681 = vmatprep.subr.mxu0 0.0
  %682 = vmatpush2.msra.mxu0 0.0
  %683 = vmatprep.subr.mxu0 0.0
  %684 = vmatpush2.msra.mxu0 0.0
  %685 = vmatprep.mubr.f32.mxu0 0.0
  %686 = vmatmul.mubr.f32.gmra.mxu0 %v619
  %v687 = vpop.f32.mrf.mxu0
  %v688 = vadd.f32 %v87, %v687
  %v689 = vpop.f32.mrf.mxu0
  %690 = vdwg.mxu0
  %v691 = vld [vmem:[%s14] sm:$0xff]
  %v692 = vld [vmem:[%s14 + $0x8] sm:$0xff]
  %v693 = vld [vmem:[%s14 + $0x10] sm:$0xff]
  %v694 = vld [vmem:[%s14 + $0x18] sm:$0xff]
  %v695 = vld [vmem:[%s15] sm:$0xff]
  %696 = vmatprep.subr.mxu0 0.0
  %697 = vmatpush1.msra.mxu0 0.0
  %698 = vmatprep.subr.mxu0 0.0
  %699 = vmatpush1.msra.mxu0 0.0
  %700 = vmatprep.subr.mxu0 0.0
  %701 = vmatpush1.msra.mxu0 0.0
  %702 = vmatprep.subr.mxu0 0.0
  %703 = vmatpush1.msra.mxu0 0.0
  %704 = vmatprep.subr.mxu0 0.0
  %705 = vmatpush1.msra.mxu0 0.0
  %706 = vmatprep.subr.mxu0 0.0
  %707 = vmatpush1.msra.mxu0 0.0
  %708 = vmatprep.subr.mxu0 0.0
  %709 = vmatpush1.msra.mxu0 0.0
  %710 = vmatprep.subr.mxu0 0.0
  %711 = vmatpush1.msra.mxu0 0.0
  %712 = vmatprep.subr.mxu0 0.0
  %713 = vmatpush1.msra.mxu0 0.0
  %714 = vmatprep.subr.mxu0 0.0
  %715 = vmatpush1.msra.mxu0 0.0
  %716 = vmatprep.subr.mxu0 0.0
  %717 = vmatpush1.msra.mxu0 0.0
  %718 = vmatprep.subr.mxu0 0.0
  %719 = vmatpush1.msra.mxu0 0.0
  %720 = vmatprep.subr.mxu0 0.0
  %721 = vmatpush1.msra.mxu0 0.0
  %722 = vmatprep.subr.mxu0 0.0
  %723 = vmatpush1.msra.mxu0 0.0
  %724 = vmatprep.subr.mxu0 0.0
  %725 = vmatpush1.msra.mxu0 0.0
  %726 = vmatprep.subr.mxu0 0.0
  %727 = vmatpush1.msra.mxu0 %v695
  %728 = vmatprep.subr.mxu0 0.0
  %729 = vmatpush2.msra.mxu0 0.0
  %730 = vmatprep.subr.mxu0 0.0
  %731 = vmatpush2.msra.mxu0 0.0
  %732 = vmatprep.subr.mxu0 0.0
  %733 = vmatpush2.msra.mxu0 0.0
  %734 = vmatprep.subr.mxu0 0.0
  %735 = vmatpush2.msra.mxu0 0.0
  %736 = vmatprep.subr.mxu0 0.0
  %737 = vmatpush2.msra.mxu0 0.0
  %738 = vmatprep.subr.mxu0 0.0
  %739 = vmatpush2.msra.mxu0 0.0
  %740 = vmatprep.subr.mxu0 0.0
  %741 = vmatpush2.msra.mxu0 0.0
  %742 = vmatprep.subr.mxu0 0.0
  %743 = vmatpush2.msra.mxu0 0.0
  %744 = vmatprep.subr.mxu0 0.0
  %745 = vmatpush2.msra.mxu0 0.0
  %746 = vmatprep.subr.mxu0 0.0
  %747 = vmatpush2.msra.mxu0 0.0
  %748 = vmatprep.subr.mxu0 0.0
  %749 = vmatpush2.msra.mxu0 0.0
  %750 = vmatprep.subr.mxu0 0.0
  %751 = vmatpush2.msra.mxu0 0.0
  %752 = vmatprep.subr.mxu0 0.0
  %753 = vmatpush2.msra.mxu0 0.0
  %754 = vmatprep.subr.mxu0 0.0
  %755 = vmatpush2.msra.mxu0 0.0
  %756 = vmatprep.subr.mxu0 0.0
  %757 = vmatpush2.msra.mxu0 0.0
  %758 = vmatprep.subr.mxu0 0.0
  %759 = vmatpush2.msra.mxu0 0.0
  %760 = vmatprep.mubr.f32.mxu0 0.0
  %761 = vmatmul.mubr.f32.gmra.mxu0 %v534
  %v762 = vpop.f32.mrf.mxu0
  %v763 = vadd.f32 0.0, %v762
  %v764 = vpop.f32.mrf.mxu0
  %765 = vdwg.mxu0
  %766 = vmatprep.subr.mxu0 0.0
  %767 = vmatpush1.msra.mxu0 0.0
  %768 = vmatprep.subr.mxu0 0.0
  %769 = vmatpush1.msra.mxu0 0.0
  %770 = vmatprep.subr.mxu0 0.0
  %771 = vmatpush1.msra.mxu0 0.0
  %772 = vmatprep.subr.mxu0 0.0
  %773 = vmatpush1.msra.mxu0 0.0
  %774 = vmatprep.subr.mxu0 0.0
  %775 = vmatpush1.msra.mxu0 0.0
  %776 = vmatprep.subr.mxu0 0.0
  %777 = vmatpush1.msra.mxu0 0.0
  %778 = vmatprep.subr.mxu0 0.0
  %779 = vmatpush1.msra.mxu0 0.0
  %780 = vmatprep.subr.mxu0 0.0
  %781 = vmatpush1.msra.mxu0 0.0
  %782 = vmatprep.subr.mxu0 0.0
  %783 = vmatpush1.msra.mxu0 0.0
  %784 = vmatprep.subr.mxu0 0.0
  %785 = vmatpush1.msra.mxu0 0.0
  %786 = vmatprep.subr.mxu0 0.0
  %787 = vmatpush1.msra.mxu0 0.0
  %788 = vmatprep.subr.mxu0 0.0
  %789 = vmatpush1.msra.mxu0 0.0
  %790 = vmatprep.subr.mxu0 0.0
  %791 = vmatpush1.msra.mxu0 %v694
  %792 = vmatprep.subr.mxu0 0.0
  %793 = vmatpush1.msra.mxu0 %v693
  %794 = vmatprep.subr.mxu0 0.0
  %795 = vmatpush1.msra.mxu0 %v692
  %796 = vmatprep.subr.mxu0 0.0
  %797 = vmatpush1.msra.mxu0 %v691
  %798 = vmatprep.subr.mxu0 0.0
  %799 = vmatpush2.msra.mxu0 0.0
  %800 = vmatprep.subr.mxu0 0.0
  %801 = vmatpush2.msra.mxu0 0.0
  %802 = vmatprep.subr.mxu0 0.0
  %803 = vmatpush2.msra.mxu0 0.0
  %804 = vmatprep.subr.mxu0 0.0
  %805 = vmatpush2.msra.mxu0 0.0
  %806 = vmatprep.subr.mxu0 0.0
  %807 = vmatpush2.msra.mxu0 0.0
  %808 = vmatprep.subr.mxu0 0.0
  %809 = vmatpush2.msra.mxu0 0.0
  %810 = vmatprep.subr.mxu0 0.0
  %811 = vmatpush2.msra.mxu0 0.0
  %812 = vmatprep.subr.mxu0 0.0
  %813 = vmatpush2.msra.mxu0 0.0
  %814 = vmatprep.subr.mxu0 0.0
  %815 = vmatpush2.msra.mxu0 0.0
  %816 = vmatprep.subr.mxu0 0.0
  %817 = vmatpush2.msra.mxu0 0.0
  %818 = vmatprep.subr.mxu0 0.0
  %819 = vmatpush2.msra.mxu0 0.0
  %820 = vmatprep.subr.mxu0 0.0
  %821 = vmatpush2.msra.mxu0 0.0
  %822 = vmatprep.subr.mxu0 0.0
  %823 = vmatpush2.msra.mxu0 0.0
  %824 = vmatprep.subr.mxu0 0.0
  %825 = vmatpush2.msra.mxu0 0.0
  %826 = vmatprep.subr.mxu0 0.0
  %827 = vmatpush2.msra.mxu0 0.0
  %828 = vmatprep.subr.mxu0 0.0
  %829 = vmatpush2.msra.mxu0 0.0
  %830 = vmatprep.mubr.f32.mxu0 0.0
  %831 = vmatmul.mubr.f32.gmra.mxu0 %v118
  %v832 = vpop.f32.mrf.mxu0
  %v833 = vadd.f32 %v763, %v832
  %v834 = vpop.f32.mrf.mxu0
  %835 = vdwg.mxu0
  %v836 = vadd.f32 %v833, %v94
  %v837 = vxor.u32 %v836, 2147483648
  %v838 = vmul.f32 %v837, 1.442695
  %v839 = vpow.pop %v838
  %v840 = vadd.f32 %v839, 1.0
  %v841 = vrcp.pop %v840
  %v842 = vmul.f32 1.0, %v841
  %v843 = vsel %vm100, %v842, %v369
  %844 = vst [vmem:[%s17] sm:$0xff] %v843
  %s845 = scalar_lea.vmem %s0, 8
  %v846 = vld [vmem:[%s845] sm:$0xff]
  %s847 = scalar_lea.vmem %s1, 8
  %v848 = vld [vmem:[%s847] sm:$0xff]
  %v849 = vld [vmem:[%s3] sm:$0xff]
  %v850 = vld [vmem:[%s3 + $0x8] sm:$0xff]
  %v851 = vld [vmem:[%s3 + $0x10] sm:$0xff]
  %v852 = vld [vmem:[%s3 + $0x18] sm:$0xff]
  %v853 = vld [vmem:[%s4] sm:$0xff]
  %v854 = vld [vmem:[%s4 + $0x8] sm:$0xff]
  %v855 = vld [vmem:[%s4 + $0x10] sm:$0xff]
  %v856 = vld [vmem:[%s4 + $0x18] sm:$0xff]
  %v857 = vld [vmem:[%s4 + $0x20] sm:$0xff]
  %v858 = vld [vmem:[%s4 + $0x28] sm:$0xff]
  %v859 = vld [vmem:[%s4 + $0x30] sm:$0xff]
  %v860 = vld [vmem:[%s4 + $0x38] sm:$0xff]
  %v862 = vsel %vm116, %v688, 0
  %864 = vmatprep.subr.mxu0 0.0
  %865 = vmatpush1.msra.mxu0 0.0
  %866 = vmatprep.subr.mxu0 0.0
  %867 = vmatpush1.msra.mxu0 0.0
  %868 = vmatprep.subr.mxu0 0.0
  %869 = vmatpush1.msra.mxu0 0.0
  %870 = vmatprep.subr.mxu0 0.0
  %871 = vmatpush1.msra.mxu0 0.0
  %872 = vmatprep.subr.mxu0 0.0
  %873 = vmatpush1.msra.mxu0 0.0
  %874 = vmatprep.subr.mxu0 0.0
  %875 = vmatpush1.msra.mxu0 0.0
  %876 = vmatprep.subr.mxu0 0.0
  %877 = vmatpush1.msra.mxu0 0.0
  %878 = vmatprep.subr.mxu0 0.0
  %879 = vmatpush1.msra.mxu0 0.0
  %880 = vmatprep.subr.mxu0 0.0
  %881 = vmatpush1.msra.mxu0 0.0
  %882 = vmatprep.subr.mxu0 0.0
  %883 = vmatpush1.msra.mxu0 0.0
  %884 = vmatprep.subr.mxu0 0.0
  %885 = vmatpush1.msra.mxu0 0.0
  %886 = vmatprep.subr.mxu0 0.0
  %887 = vmatpush1.msra.mxu0 0.0
  %888 = vmatprep.subr.mxu0 %v860
  %889 = vmatpush1.msra.mxu0 %v859
  %890 = vmatprep.subr.mxu0 %v858
  %891 = vmatpush1.msra.mxu0 %v857
  %892 = vmatprep.subr.mxu0 %v856
  %893 = vmatpush1.msra.mxu0 %v855
  %894 = vmatprep.subr.mxu0 %v854
  %895 = vmatpush1.msra.mxu0 %v853
  %896 = vmatprep.subr.mxu0 0.0
  %897 = vmatpush2.msra.mxu0 0.0
  %898 = vmatprep.subr.mxu0 0.0
  %899 = vmatpush2.msra.mxu0 0.0
  %900 = vmatprep.subr.mxu0 0.0
  %901 = vmatpush2.msra.mxu0 0.0
  %902 = vmatprep.subr.mxu0 0.0
  %903 = vmatpush2.msra.mxu0 0.0
  %904 = vmatprep.subr.mxu0 0.0
  %905 = vmatpush2.msra.mxu0 0.0
  %906 = vmatprep.subr.mxu0 0.0
  %907 = vmatpush2.msra.mxu0 0.0
  %908 = vmatprep.subr.mxu0 0.0
  %909 = vmatpush2.msra.mxu0 0.0
  %910 = vmatprep.subr.mxu0 0.0
  %911 = vmatpush2.msra.mxu0 0.0
  %912 = vmatprep.subr.mxu0 0.0
  %913 = vmatpush2.msra.mxu0 0.0
  %914 = vmatprep.subr.mxu0 0.0
  %915 = vmatpush2.msra.mxu0 0.0
  %916 = vmatprep.subr.mxu0 0.0
  %917 = vmatpush2.msra.mxu0 0.0
  %918 = vmatprep.subr.mxu0 0.0
  %919 = vmatpush2.msra.mxu0 0.0
  %920 = vmatprep.subr.mxu0 0.0
  %921 = vmatpush2.msra.mxu0 0.0
  %922 = vmatprep.subr.mxu0 0.0
  %923 = vmatpush2.msra.mxu0 0.0
  %924 = vmatprep.subr.mxu0 0.0
  %925 = vmatpush2.msra.mxu0 0.0
  %926 = vmatprep.subr.mxu0 0.0
  %927 = vmatpush2.msra.mxu0 0.0
  %928 = vmatprep.mubr.f32.mxu0 0.0
  %929 = vmatmul.mubr.f32.gmra.mxu0 %v862
  %v930 = vpop.f32.mrf.mxu0
  %v931 = vadd.f32 0.0, %v930
  %v932 = vpop.f32.mrf.mxu0
  %v933 = vadd.f32 0.0, %v932
  %934 = vdwg.mxu0
  %v936 = vsel %vm191, %v846, 0
  %938 = vmatprep.subr.mxu0 0.0
  %939 = vmatpush1.msra.mxu0 0.0
  %940 = vmatprep.subr.mxu0 0.0
  %941 = vmatpush1.msra.mxu0 0.0
  %942 = vmatprep.subr.mxu0 0.0
  %943 = vmatpush1.msra.mxu0 0.0
  %944 = vmatprep.subr.mxu0 0.0
  %945 = vmatpush1.msra.mxu0 0.0
  %946 = vmatprep.subr.mxu0 0.0
  %947 = vmatpush1.msra.mxu0 0.0
  %948 = vmatprep.subr.mxu0 0.0
  %949 = vmatpush1.msra.mxu0 0.0
  %950 = vmatprep.subr.mxu0 0.0
  %951 = vmatpush1.msra.mxu0 0.0
  %952 = vmatprep.subr.mxu0 0.0
  %953 = vmatpush1.msra.mxu0 0.0
  %954 = vmatprep.subr.mxu0 0.0
  %955 = vmatpush1.msra.mxu0 0.0
  %956 = vmatprep.subr.mxu0 0.0
  %957 = vmatpush1.msra.mxu0 0.0
  %958 = vmatprep.subr.mxu0 0.0
  %959 = vmatpush1.msra.mxu0 0.0
  %960 = vmatprep.subr.mxu0 0.0
  %961 = vmatpush1.msra.mxu0 0.0
  %962 = vmatprep.subr.mxu0 0.0
  %963 = vmatpush1.msra.mxu0 0.0
  %964 = vmatprep.subr.mxu0 0.0
  %965 = vmatpush1.msra.mxu0 0.0
  %966 = vmatprep.subr.mxu0 %v852
  %967 = vmatpush1.msra.mxu0 %v851
  %968 = vmatprep.subr.mxu0 %v850
  %969 = vmatpush1.msra.mxu0 %v849
  %970 = vmatprep.subr.mxu0 0.0
  %971 = vmatpush2.msra.mxu0 0.0
  %972 = vmatprep.subr.mxu0 0.0
  %973 = vmatpush2.msra.mxu0 0.0
  %974 = vmatprep.subr.mxu0 0.0
  %975 = vmatpush2.msra.mxu0 0.0
  %976 = vmatprep.subr.mxu0 0.0
  %977 = vmatpush2.msra.mxu0 0.0
  %978 = vmatprep.subr.mxu0 0.0
  %979 = vmatpush2.msra.mxu0 0.0
  %980 = vmatprep.subr.mxu0 0.0
  %981 = vmatpush2.msra.mxu0 0.0
  %982 = vmatprep.subr.mxu0 0.0
  %983 = vmatpush2.msra.mxu0 0.0
  %984 = vmatprep.subr.mxu0 0.0
  %985 = vmatpush2.msra.mxu0 0.0
  %986 = vmatprep.subr.mxu0 0.0
  %987 = vmatpush2.msra.mxu0 0.0
  %988 = vmatprep.subr.mxu0 0.0
  %989 = vmatpush2.msra.mxu0 0.0
  %990 = vmatprep.subr.mxu0 0.0
  %991 = vmatpush2.msra.mxu0 0.0
  %992 = vmatprep.subr.mxu0 0.0
  %993 = vmatpush2.msra.mxu0 0.0
  %994 = vmatprep.subr.mxu0 0.0
  %995 = vmatpush2.msra.mxu0 0.0
  %996 = vmatprep.subr.mxu0 0.0
  %997 = vmatpush2.msra.mxu0 0.0
  %998 = vmatprep.subr.mxu0 0.0
  %999 = vmatpush2.msra.mxu0 0.0
  %1000 = vmatprep.subr.mxu0 0.0
  %1001 = vmatpush2.msra.mxu0 0.0
  %1002 = vmatprep.mubr.f32.mxu0 0.0
  %1003 = vmatmul.mubr.f32.gmra.mxu0 %v936
  %v1004 = vpop.f32.mrf.mxu0
  %v1005 = vadd.f32 %v931, %v1004
  %v1006 = vpop.f32.mrf.mxu0
  %v1007 = vadd.f32 %v933, %v1006
  %1008 = vdwg.mxu0
  %v1009 = vadd.f32 %v1005, %v61
  %v1010 = vadd.f32 %v1007, %v65
  %v1011 = vmax.f32 %v1009, 0.0
  %v1012 = vmax.f32 %v1010, 0.0
  %v1013 = vld [vmem:[%s6] sm:$0xff]
  %v1014 = vld [vmem:[%s6 + $0x8] sm:$0xff]
  %v1015 = vld [vmem:[%s6 + $0x10] sm:$0xff]
  %v1016 = vld [vmem:[%s6 + $0x18] sm:$0xff]
  %v1017 = vld [vmem:[%s6 + $0x20] sm:$0xff]
  %v1018 = vld [vmem:[%s6 + $0x28] sm:$0xff]
  %v1019 = vld [vmem:[%s6 + $0x30] sm:$0xff]
  %v1020 = vld [vmem:[%s6 + $0x38] sm:$0xff]
  %v1021 = vld [vmem:[%s6 + $0x40] sm:$0xff]
  %v1022 = vld [vmem:[%s6 + $0x48] sm:$0xff]
  %v1023 = vld [vmem:[%s6 + $0x50] sm:$0xff]
  %v1024 = vld [vmem:[%s6 + $0x58] sm:$0xff]
  %v1025 = vld [vmem:[%s6 + $0x60] sm:$0xff]
  %v1026 = vld [vmem:[%s6 + $0x68] sm:$0xff]
  %v1027 = vld [vmem:[%s6 + $0x70] sm:$0xff]
  %v1028 = vld [vmem:[%s6 + $0x78] sm:$0xff]
  %v1029 = vld [vmem:[%s6 + $0x80] sm:$0xff]
  %v1030 = vld [vmem:[%s6 + $0x88] sm:$0xff]
  %v1031 = vld [vmem:[%s6 + $0x90] sm:$0xff]
  %v1032 = vld [vmem:[%s6 + $0x98] sm:$0xff]
  %v1033 = vld [vmem:[%s6 + $0xa0] sm:$0xff]
  %v1034 = vld [vmem:[%s6 + $0xa8] sm:$0xff]
  %v1035 = vld [vmem:[%s6 + $0xb0] sm:$0xff]
  %v1036 = vld [vmem:[%s6 + $0xb8] sm:$0xff]
  %v1037 = vld [vmem:[%s6 + $0xc0] sm:$0xff]
  %v1038 = vld [vmem:[%s6 + $0xc8] sm:$0xff]
  %v1039 = vld [vmem:[%s6 + $0xd0] sm:$0xff]
  %v1040 = vld [vmem:[%s6 + $0xd8] sm:$0xff]
  %v1041 = vld [vmem:[%s6 + $0xe0] sm:$0xff]
  %v1042 = vld [vmem:[%s6 + $0xe8] sm:$0xff]
  %v1043 = vld [vmem:[%s6 + $0xf0] sm:$0xff]
  %v1044 = vld [vmem:[%s6 + $0xf8] sm:$0xff]
  %1045 = vmatprep.subr.mxu0 0.0
  %1046 = vmatpush1.msra.mxu0 %v1028
  %1047 = vmatprep.subr.mxu0 0.0
  %1048 = vmatpush1.msra.mxu0 %v1027
  %1049 = vmatprep.subr.mxu0 0.0
  %1050 = vmatpush1.msra.mxu0 %v1026
  %1051 = vmatprep.subr.mxu0 0.0
  %1052 = vmatpush1.msra.mxu0 %v1025
  %1053 = vmatprep.subr.mxu0 0.0
  %1054 = vmatpush1.msra.mxu0 %v1024
  %1055 = vmatprep.subr.mxu0 0.0
  %1056 = vmatpush1.msra.mxu0 %v1023
  %1057 = vmatprep.subr.mxu0 0.0
  %1058 = vmatpush1.msra.mxu0 %v1022
  %1059 = vmatprep.subr.mxu0 0.0
  %1060 = vmatpush1.msra.mxu0 %v1021
  %1061 = vmatprep.subr.mxu0 0.0
  %1062 = vmatpush1.msra.mxu0 %v1020
  %1063 = vmatprep.subr.mxu0 0.0
  %1064 = vmatpush1.msra.mxu0 %v1019
  %1065 = vmatprep.subr.mxu0 0.0
  %1066 = vmatpush1.msra.mxu0 %v1018
  %1067 = vmatprep.subr.mxu0 0.0
  %1068 = vmatpush1.msra.mxu0 %v1017
  %1069 = vmatprep.subr.mxu0 0.0
  %1070 = vmatpush1.msra.mxu0 %v1016
  %1071 = vmatprep.subr.mxu0 0.0
  %1072 = vmatpush1.msra.mxu0 %v1015
  %1073 = vmatprep.subr.mxu0 0.0
  %1074 = vmatpush1.msra.mxu0 %v1014
  %1075 = vmatprep.subr.mxu0 0.0
  %1076 = vmatpush1.msra.mxu0 %v1013
  %1077 = vmatprep.subr.mxu0 0.0
  %1078 = vmatpush2.msra.mxu0 %v1044
  %1079 = vmatprep.subr.mxu0 0.0
  %1080 = vmatpush2.msra.mxu0 %v1043
  %1081 = vmatprep.subr.mxu0 0.0
  %1082 = vmatpush2.msra.mxu0 %v1042
  %1083 = vmatprep.subr.mxu0 0.0
  %1084 = vmatpush2.msra.mxu0 %v1041
  %1085 = vmatprep.subr.mxu0 0.0
  %1086 = vmatpush2.msra.mxu0 %v1040
  %1087 = vmatprep.subr.mxu0 0.0
  %1088 = vmatpush2.msra.mxu0 %v1039
  %1089 = vmatprep.subr.mxu0 0.0
  %1090 = vmatpush2.msra.mxu0 %v1038
  %1091 = vmatprep.subr.mxu0 0.0
  %1092 = vmatpush2.msra.mxu0 %v1037
  %1093 = vmatprep.subr.mxu0 0.0
  %1094 = vmatpush2.msra.mxu0 %v1036
  %1095 = vmatprep.subr.mxu0 0.0
  %1096 = vmatpush2.msra.mxu0 %v1035
  %1097 = vmatprep.subr.mxu0 0.0
  %1098 = vmatpush2.msra.mxu0 %v1034
  %1099 = vmatprep.subr.mxu0 0.0
  %1100 = vmatpush2.msra.mxu0 %v1033
  %1101 = vmatprep.subr.mxu0 0.0
  %1102 = vmatpush2.msra.mxu0 %v1032
  %1103 = vmatprep.subr.mxu0 0.0
  %1104 = vmatpush2.msra.mxu0 %v1031
  %1105 = vmatprep.subr.mxu0 0.0
  %1106 = vmatpush2.msra.mxu0 %v1030
  %1107 = vmatprep.subr.mxu0 0.0
  %1108 = vmatpush2.msra.mxu0 %v1029
  %1109 = vmatprep.mubr.f32.mxu0 %v1012
  %1110 = vmatmul.mubr.f32.gmra.mxu0 %v1011
  %v1111 = vpop.f32.mrf.mxu0
  %v1112 = vadd.f32 %v73, %v1111
  %v1113 = vpop.f32.mrf.mxu0
  %1114 = vdwg.mxu0
  %v1115 = vmul.f32 %v1112, 0.5
  %v1116 = vmul.f32 %v1115, 1.442695
  %v1117 = vpow.pop %v1116
  %1119 = vrot.lane.b32.xlu0 %v848, 8
  %v1120 = vpop.permute.xlu0 %1119
  %v1122 = vmul.f32 %v1117, %v1120
  %1124 = vrot.lane.b32.xlu0 %v1122, 120
  %v1125 = vpop.permute.xlu0 %1124
  %v1127 = vadd.f32 %v1112, %v1125
  %v1128 = vld [vmem:[%s8] sm:$0xff]
  %v1129 = vld [vmem:[%s8 + $0x8] sm:$0xff]
  %v1130 = vld [vmem:[%s9] sm:$0xff]
  %v1131 = vld [vmem:[%s9 + $0x8] sm:$0xff]
  %v1132 = vld [vmem:[%s9 + $0x10] sm:$0xff]
  %v1133 = vld [vmem:[%s9 + $0x18] sm:$0xff]
  %1134 = vmatprep.subr.mxu0 0.0
  %1135 = vmatpush1.msra.mxu0 0.0
  %1136 = vmatprep.subr.mxu0 0.0
  %1137 = vmatpush1.msra.mxu0 0.0
  %1138 = vmatprep.subr.mxu0 0.0
  %1139 = vmatpush1.msra.mxu0 0.0
  %1140 = vmatprep.subr.mxu0 0.0
  %1141 = vmatpush1.msra.mxu0 0.0
  %1142 = vmatprep.subr.mxu0 0.0
  %1143 = vmatpush1.msra.mxu0 0.0
  %1144 = vmatprep.subr.mxu0 0.0
  %1145 = vmatpush1.msra.mxu0 0.0
  %1146 = vmatprep.subr.mxu0 0.0
  %1147 = vmatpush1.msra.mxu0 0.0
  %1148 = vmatprep.subr.mxu0 0.0
  %1149 = vmatpush1.msra.mxu0 0.0
  %1150 = vmatprep.subr.mxu0 0.0
  %1151 = vmatpush1.msra.mxu0 0.0
  %1152 = vmatprep.subr.mxu0 0.0
  %1153 = vmatpush1.msra.mxu0 0.0
  %1154 = vmatprep.subr.mxu0 0.0
  %1155 = vmatpush1.msra.mxu0 0.0
  %1156 = vmatprep.subr.mxu0 0.0
  %1157 = vmatpush1.msra.mxu0 0.0
  %1158 = vmatprep.subr.mxu0 0.0
  %1159 = vmatpush1.msra.mxu0 %v1133
  %1160 = vmatprep.subr.mxu0 0.0
  %1161 = vmatpush1.msra.mxu0 %v1132
  %1162 = vmatprep.subr.mxu0 0.0
  %1163 = vmatpush1.msra.mxu0 %v1131
  %1164 = vmatprep.subr.mxu0 0.0
  %1165 = vmatpush1.msra.mxu0 %v1130
  %1166 = vmatprep.subr.mxu0 0.0
  %1167 = vmatpush2.msra.mxu0 0.0
  %1168 = vmatprep.subr.mxu0 0.0
  %1169 = vmatpush2.msra.mxu0 0.0
  %1170 = vmatprep.subr.mxu0 0.0
  %1171 = vmatpush2.msra.mxu0 0.0
  %1172 = vmatprep.subr.mxu0 0.0
  %1173 = vmatpush2.msra.mxu0 0.0
  %1174 = vmatprep.subr.mxu0 0.0
  %1175 = vmatpush2.msra.mxu0 0.0
  %1176 = vmatprep.subr.mxu0 0.0
  %1177 = vmatpush2.msra.mxu0 0.0
  %1178 = vmatprep.subr.mxu0 0.0
  %1179 = vmatpush2.msra.mxu0 0.0
  %1180 = vmatprep.subr.mxu0 0.0
  %1181 = vmatpush2.msra.mxu0 0.0
  %1182 = vmatprep.subr.mxu0 0.0
  %1183 = vmatpush2.msra.mxu0 0.0
  %1184 = vmatprep.subr.mxu0 0.0
  %1185 = vmatpush2.msra.mxu0 0.0
  %1186 = vmatprep.subr.mxu0 0.0
  %1187 = vmatpush2.msra.mxu0 0.0
  %1188 = vmatprep.subr.mxu0 0.0
  %1189 = vmatpush2.msra.mxu0 0.0
  %1190 = vmatprep.subr.mxu0 0.0
  %1191 = vmatpush2.msra.mxu0 0.0
  %1192 = vmatprep.subr.mxu0 0.0
  %1193 = vmatpush2.msra.mxu0 0.0
  %1194 = vmatprep.subr.mxu0 0.0
  %1195 = vmatpush2.msra.mxu0 0.0
  %1196 = vmatprep.subr.mxu0 0.0
  %1197 = vmatpush2.msra.mxu0 0.0
  %1198 = vmatprep.mubr.f32.mxu0 0.0
  %1199 = vmatmul.mubr.f32.gmra.mxu0 %v862
  %v1200 = vpop.f32.mrf.mxu0
  %v1201 = vadd.f32 0.0, %v1200
  %v1202 = vpop.f32.mrf.mxu0
  %1203 = vdwg.mxu0
  %1204 = vmatprep.subr.mxu0 0.0
  %1205 = vmatpush1.msra.mxu0 0.0
  %1206 = vmatprep.subr.mxu0 0.0
  %1207 = vmatpush1.msra.mxu0 0.0
  %1208 = vmatprep.subr.mxu0 0.0
  %1209 = vmatpush1.msra.mxu0 0.0
  %1210 = vmatprep.subr.mxu0 0.0
  %1211 = vmatpush1.msra.mxu0 0.0
  %1212 = vmatprep.subr.mxu0 0.0
  %1213 = vmatpush1.msra.mxu0 0.0
  %1214 = vmatprep.subr.mxu0 0.0
  %1215 = vmatpush1.msra.mxu0 0.0
  %1216 = vmatprep.subr.mxu0 0.0
  %1217 = vmatpush1.msra.mxu0 0.0
  %1218 = vmatprep.subr.mxu0 0.0
  %1219 = vmatpush1.msra.mxu0 0.0
  %1220 = vmatprep.subr.mxu0 0.0
  %1221 = vmatpush1.msra.mxu0 0.0
  %1222 = vmatprep.subr.mxu0 0.0
  %1223 = vmatpush1.msra.mxu0 0.0
  %1224 = vmatprep.subr.mxu0 0.0
  %1225 = vmatpush1.msra.mxu0 0.0
  %1226 = vmatprep.subr.mxu0 0.0
  %1227 = vmatpush1.msra.mxu0 0.0
  %1228 = vmatprep.subr.mxu0 0.0
  %1229 = vmatpush1.msra.mxu0 0.0
  %1230 = vmatprep.subr.mxu0 0.0
  %1231 = vmatpush1.msra.mxu0 0.0
  %1232 = vmatprep.subr.mxu0 0.0
  %1233 = vmatpush1.msra.mxu0 %v1129
  %1234 = vmatprep.subr.mxu0 0.0
  %1235 = vmatpush1.msra.mxu0 %v1128
  %1236 = vmatprep.subr.mxu0 0.0
  %1237 = vmatpush2.msra.mxu0 0.0
  %1238 = vmatprep.subr.mxu0 0.0
  %1239 = vmatpush2.msra.mxu0 0.0
  %1240 = vmatprep.subr.mxu0 0.0
  %1241 = vmatpush2.msra.mxu0 0.0
  %1242 = vmatprep.subr.mxu0 0.0
  %1243 = vmatpush2.msra.mxu0 0.0
  %1244 = vmatprep.subr.mxu0 0.0
  %1245 = vmatpush2.msra.mxu0 0.0
  %1246 = vmatprep.subr.mxu0 0.0
  %1247 = vmatpush2.msra.mxu0 0.0
  %1248 = vmatprep.subr.mxu0 0.0
  %1249 = vmatpush2.msra.mxu0 0.0
  %1250 = vmatprep.subr.mxu0 0.0
  %1251 = vmatpush2.msra.mxu0 0.0
  %1252 = vmatprep.subr.mxu0 0.0
  %1253 = vmatpush2.msra.mxu0 0.0
  %1254 = vmatprep.subr.mxu0 0.0
  %1255 = vmatpush2.msra.mxu0 0.0
  %1256 = vmatprep.subr.mxu0 0.0
  %1257 = vmatpush2.msra.mxu0 0.0
  %1258 = vmatprep.subr.mxu0 0.0
  %1259 = vmatpush2.msra.mxu0 0.0
  %1260 = vmatprep.subr.mxu0 0.0
  %1261 = vmatpush2.msra.mxu0 0.0
  %1262 = vmatprep.subr.mxu0 0.0
  %1263 = vmatpush2.msra.mxu0 0.0
  %1264 = vmatprep.subr.mxu0 0.0
  %1265 = vmatpush2.msra.mxu0 0.0
  %1266 = vmatprep.subr.mxu0 0.0
  %1267 = vmatpush2.msra.mxu0 0.0
  %1268 = vmatprep.mubr.f32.mxu0 0.0
  %1269 = vmatmul.mubr.f32.gmra.mxu0 %v936
  %v1270 = vpop.f32.mrf.mxu0
  %v1271 = vadd.f32 %v1201, %v1270
  %v1272 = vpop.f32.mrf.mxu0
  %1273 = vdwg.mxu0
  %v1274 = vld [vmem:[%s10] sm:$0xff]
  %v1276 = vsel %vm532, %v1127, 0
  %1278 = vmatprep.subr.mxu0 0.0
  %1279 = vmatpush1.msra.mxu0 0.0
  %1280 = vmatprep.subr.mxu0 0.0
  %1281 = vmatpush1.msra.mxu0 0.0
  %1282 = vmatprep.subr.mxu0 0.0
  %1283 = vmatpush1.msra.mxu0 0.0
  %1284 = vmatprep.subr.mxu0 0.0
  %1285 = vmatpush1.msra.mxu0 0.0
  %1286 = vmatprep.subr.mxu0 0.0
  %1287 = vmatpush1.msra.mxu0 0.0
  %1288 = vmatprep.subr.mxu0 0.0
  %1289 = vmatpush1.msra.mxu0 0.0
  %1290 = vmatprep.subr.mxu0 0.0
  %1291 = vmatpush1.msra.mxu0 0.0
  %1292 = vmatprep.subr.mxu0 0.0
  %1293 = vmatpush1.msra.mxu0 0.0
  %1294 = vmatprep.subr.mxu0 0.0
  %1295 = vmatpush1.msra.mxu0 0.0
  %1296 = vmatprep.subr.mxu0 0.0
  %1297 = vmatpush1.msra.mxu0 0.0
  %1298 = vmatprep.subr.mxu0 0.0
  %1299 = vmatpush1.msra.mxu0 0.0
  %1300 = vmatprep.subr.mxu0 0.0
  %1301 = vmatpush1.msra.mxu0 0.0
  %1302 = vmatprep.subr.mxu0 0.0
  %1303 = vmatpush1.msra.mxu0 0.0
  %1304 = vmatprep.subr.mxu0 0.0
  %1305 = vmatpush1.msra.mxu0 0.0
  %1306 = vmatprep.subr.mxu0 0.0
  %1307 = vmatpush1.msra.mxu0 0.0
  %1308 = vmatprep.subr.mxu0 0.0
  %1309 = vmatpush1.msra.mxu0 %v1274
  %1310 = vmatprep.subr.mxu0 0.0
  %1311 = vmatpush2.msra.mxu0 0.0
  %1312 = vmatprep.subr.mxu0 0.0
  %1313 = vmatpush2.msra.mxu0 0.0
  %1314 = vmatprep.subr.mxu0 0.0
  %1315 = vmatpush2.msra.mxu0 0.0
  %1316 = vmatprep.subr.mxu0 0.0
  %1317 = vmatpush2.msra.mxu0 0.0
  %1318 = vmatprep.subr.mxu0 0.0
  %1319 = vmatpush2.msra.mxu0 0.0
  %1320 = vmatprep.subr.mxu0 0.0
  %1321 = vmatpush2.msra.mxu0 0.0
  %1322 = vmatprep.subr.mxu0 0.0
  %1323 = vmatpush2.msra.mxu0 0.0
  %1324 = vmatprep.subr.mxu0 0.0
  %1325 = vmatpush2.msra.mxu0 0.0
  %1326 = vmatprep.subr.mxu0 0.0
  %1327 = vmatpush2.msra.mxu0 0.0
  %1328 = vmatprep.subr.mxu0 0.0
  %1329 = vmatpush2.msra.mxu0 0.0
  %1330 = vmatprep.subr.mxu0 0.0
  %1331 = vmatpush2.msra.mxu0 0.0
  %1332 = vmatprep.subr.mxu0 0.0
  %1333 = vmatpush2.msra.mxu0 0.0
  %1334 = vmatprep.subr.mxu0 0.0
  %1335 = vmatpush2.msra.mxu0 0.0
  %1336 = vmatprep.subr.mxu0 0.0
  %1337 = vmatpush2.msra.mxu0 0.0
  %1338 = vmatprep.subr.mxu0 0.0
  %1339 = vmatpush2.msra.mxu0 0.0
  %1340 = vmatprep.subr.mxu0 0.0
  %1341 = vmatpush2.msra.mxu0 0.0
  %1342 = vmatprep.mubr.f32.mxu0 0.0
  %1343 = vmatmul.mubr.f32.gmra.mxu0 %v1276
  %v1344 = vpop.f32.mrf.mxu0
  %v1345 = vadd.f32 0.0, %v1344
  %v1346 = vpop.f32.mrf.mxu0
  %1347 = vdwg.mxu0
  %v1348 = vadd.f32 %v1271, %v1345
  %v1349 = vadd.f32 %v1348, %v80
  %v1350 = vmax.f32 %v1349, 0.0
  %v1351 = vld [vmem:[%s12] sm:$0xff]
  %v1352 = vld [vmem:[%s12 + $0x8] sm:$0xff]
  %v1353 = vld [vmem:[%s12 + $0x10] sm:$0xff]
  %v1354 = vld [vmem:[%s12 + $0x18] sm:$0xff]
  %v1355 = vld [vmem:[%s12 + $0x20] sm:$0xff]
  %v1356 = vld [vmem:[%s12 + $0x28] sm:$0xff]
  %v1357 = vld [vmem:[%s12 + $0x30] sm:$0xff]
  %v1358 = vld [vmem:[%s12 + $0x38] sm:$0xff]
  %v1360 = vsel %vm617, %v1350, 0
  %1362 = vmatprep.subr.mxu0 0.0
  %1363 = vmatpush1.msra.mxu0 0.0
  %1364 = vmatprep.subr.mxu0 0.0
  %1365 = vmatpush1.msra.mxu0 0.0
  %1366 = vmatprep.subr.mxu0 0.0
  %1367 = vmatpush1.msra.mxu0 0.0
  %1368 = vmatprep.subr.mxu0 0.0
  %1369 = vmatpush1.msra.mxu0 0.0
  %1370 = vmatprep.subr.mxu0 0.0
  %1371 = vmatpush1.msra.mxu0 0.0
  %1372 = vmatprep.subr.mxu0 0.0
  %1373 = vmatpush1.msra.mxu0 0.0
  %1374 = vmatprep.subr.mxu0 0.0
  %1375 = vmatpush1.msra.mxu0 0.0
  %1376 = vmatprep.subr.mxu0 0.0
  %1377 = vmatpush1.msra.mxu0 0.0
  %1378 = vmatprep.subr.mxu0 0.0
  %1379 = vmatpush1.msra.mxu0 %v1358
  %1380 = vmatprep.subr.mxu0 0.0
  %1381 = vmatpush1.msra.mxu0 %v1357
  %1382 = vmatprep.subr.mxu0 0.0
  %1383 = vmatpush1.msra.mxu0 %v1356
  %1384 = vmatprep.subr.mxu0 0.0
  %1385 = vmatpush1.msra.mxu0 %v1355
  %1386 = vmatprep.subr.mxu0 0.0
  %1387 = vmatpush1.msra.mxu0 %v1354
  %1388 = vmatprep.subr.mxu0 0.0
  %1389 = vmatpush1.msra.mxu0 %v1353
  %1390 = vmatprep.subr.mxu0 0.0
  %1391 = vmatpush1.msra.mxu0 %v1352
  %1392 = vmatprep.subr.mxu0 0.0
  %1393 = vmatpush1.msra.mxu0 %v1351
  %1394 = vmatprep.subr.mxu0 0.0
  %1395 = vmatpush2.msra.mxu0 0.0
  %1396 = vmatprep.subr.mxu0 0.0
  %1397 = vmatpush2.msra.mxu0 0.0
  %1398 = vmatprep.subr.mxu0 0.0
  %1399 = vmatpush2.msra.mxu0 0.0
  %1400 = vmatprep.subr.mxu0 0.0
  %1401 = vmatpush2.msra.mxu0 0.0
  %1402 = vmatprep.subr.mxu0 0.0
  %1403 = vmatpush2.msra.mxu0 0.0
  %1404 = vmatprep.subr.mxu0 0.0
  %1405 = vmatpush2.msra.mxu0 0.0
  %1406 = vmatprep.subr.mxu0 0.0
  %1407 = vmatpush2.msra.mxu0 0.0
  %1408 = vmatprep.subr.mxu0 0.0
  %1409 = vmatpush2.msra.mxu0 0.0
  %1410 = vmatprep.subr.mxu0 0.0
  %1411 = vmatpush2.msra.mxu0 0.0
  %1412 = vmatprep.subr.mxu0 0.0
  %1413 = vmatpush2.msra.mxu0 0.0
  %1414 = vmatprep.subr.mxu0 0.0
  %1415 = vmatpush2.msra.mxu0 0.0
  %1416 = vmatprep.subr.mxu0 0.0
  %1417 = vmatpush2.msra.mxu0 0.0
  %1418 = vmatprep.subr.mxu0 0.0
  %1419 = vmatpush2.msra.mxu0 0.0
  %1420 = vmatprep.subr.mxu0 0.0
  %1421 = vmatpush2.msra.mxu0 0.0
  %1422 = vmatprep.subr.mxu0 0.0
  %1423 = vmatpush2.msra.mxu0 0.0
  %1424 = vmatprep.subr.mxu0 0.0
  %1425 = vmatpush2.msra.mxu0 0.0
  %1426 = vmatprep.mubr.f32.mxu0 0.0
  %1427 = vmatmul.mubr.f32.gmra.mxu0 %v1360
  %v1428 = vpop.f32.mrf.mxu0
  %v1429 = vadd.f32 %v87, %v1428
  %v1430 = vpop.f32.mrf.mxu0
  %1431 = vdwg.mxu0
  %v1432 = vld [vmem:[%s14] sm:$0xff]
  %v1433 = vld [vmem:[%s14 + $0x8] sm:$0xff]
  %v1434 = vld [vmem:[%s14 + $0x10] sm:$0xff]
  %v1435 = vld [vmem:[%s14 + $0x18] sm:$0xff]
  %v1436 = vld [vmem:[%s15] sm:$0xff]
  %1437 = vmatprep.subr.mxu0 0.0
  %1438 = vmatpush1.msra.mxu0 0.0
  %1439 = vmatprep.subr.mxu0 0.0
  %1440 = vmatpush1.msra.mxu0 0.0
  %1441 = vmatprep.subr.mxu0 0.0
  %1442 = vmatpush1.msra.mxu0 0.0
  %1443 = vmatprep.subr.mxu0 0.0
  %1444 = vmatpush1.msra.mxu0 0.0
  %1445 = vmatprep.subr.mxu0 0.0
  %1446 = vmatpush1.msra.mxu0 0.0
  %1447 = vmatprep.subr.mxu0 0.0
  %1448 = vmatpush1.msra.mxu0 0.0
  %1449 = vmatprep.subr.mxu0 0.0
  %1450 = vmatpush1.msra.mxu0 0.0
  %1451 = vmatprep.subr.mxu0 0.0
  %1452 = vmatpush1.msra.mxu0 0.0
  %1453 = vmatprep.subr.mxu0 0.0
  %1454 = vmatpush1.msra.mxu0 0.0
  %1455 = vmatprep.subr.mxu0 0.0
  %1456 = vmatpush1.msra.mxu0 0.0
  %1457 = vmatprep.subr.mxu0 0.0
  %1458 = vmatpush1.msra.mxu0 0.0
  %1459 = vmatprep.subr.mxu0 0.0
  %1460 = vmatpush1.msra.mxu0 0.0
  %1461 = vmatprep.subr.mxu0 0.0
  %1462 = vmatpush1.msra.mxu0 0.0
  %1463 = vmatprep.subr.mxu0 0.0
  %1464 = vmatpush1.msra.mxu0 0.0
  %1465 = vmatprep.subr.mxu0 0.0
  %1466 = vmatpush1.msra.mxu0 0.0
  %1467 = vmatprep.subr.mxu0 0.0
  %1468 = vmatpush1.msra.mxu0 %v1436
  %1469 = vmatprep.subr.mxu0 0.0
  %1470 = vmatpush2.msra.mxu0 0.0
  %1471 = vmatprep.subr.mxu0 0.0
  %1472 = vmatpush2.msra.mxu0 0.0
  %1473 = vmatprep.subr.mxu0 0.0
  %1474 = vmatpush2.msra.mxu0 0.0
  %1475 = vmatprep.subr.mxu0 0.0
  %1476 = vmatpush2.msra.mxu0 0.0
  %1477 = vmatprep.subr.mxu0 0.0
  %1478 = vmatpush2.msra.mxu0 0.0
  %1479 = vmatprep.subr.mxu0 0.0
  %1480 = vmatpush2.msra.mxu0 0.0
  %1481 = vmatprep.subr.mxu0 0.0
  %1482 = vmatpush2.msra.mxu0 0.0
  %1483 = vmatprep.subr.mxu0 0.0
  %1484 = vmatpush2.msra.mxu0 0.0
  %1485 = vmatprep.subr.mxu0 0.0
  %1486 = vmatpush2.msra.mxu0 0.0
  %1487 = vmatprep.subr.mxu0 0.0
  %1488 = vmatpush2.msra.mxu0 0.0
  %1489 = vmatprep.subr.mxu0 0.0
  %1490 = vmatpush2.msra.mxu0 0.0
  %1491 = vmatprep.subr.mxu0 0.0
  %1492 = vmatpush2.msra.mxu0 0.0
  %1493 = vmatprep.subr.mxu0 0.0
  %1494 = vmatpush2.msra.mxu0 0.0
  %1495 = vmatprep.subr.mxu0 0.0
  %1496 = vmatpush2.msra.mxu0 0.0
  %1497 = vmatprep.subr.mxu0 0.0
  %1498 = vmatpush2.msra.mxu0 0.0
  %1499 = vmatprep.subr.mxu0 0.0
  %1500 = vmatpush2.msra.mxu0 0.0
  %1501 = vmatprep.mubr.f32.mxu0 0.0
  %1502 = vmatmul.mubr.f32.gmra.mxu0 %v1276
  %v1503 = vpop.f32.mrf.mxu0
  %v1504 = vadd.f32 0.0, %v1503
  %v1505 = vpop.f32.mrf.mxu0
  %1506 = vdwg.mxu0
  %1507 = vmatprep.subr.mxu0 0.0
  %1508 = vmatpush1.msra.mxu0 0.0
  %1509 = vmatprep.subr.mxu0 0.0
  %1510 = vmatpush1.msra.mxu0 0.0
  %1511 = vmatprep.subr.mxu0 0.0
  %1512 = vmatpush1.msra.mxu0 0.0
  %1513 = vmatprep.subr.mxu0 0.0
  %1514 = vmatpush1.msra.mxu0 0.0
  %1515 = vmatprep.subr.mxu0 0.0
  %1516 = vmatpush1.msra.mxu0 0.0
  %1517 = vmatprep.subr.mxu0 0.0
  %1518 = vmatpush1.msra.mxu0 0.0
  %1519 = vmatprep.subr.mxu0 0.0
  %1520 = vmatpush1.msra.mxu0 0.0
  %1521 = vmatprep.subr.mxu0 0.0
  %1522 = vmatpush1.msra.mxu0 0.0
  %1523 = vmatprep.subr.mxu0 0.0
  %1524 = vmatpush1.msra.mxu0 0.0
  %1525 = vmatprep.subr.mxu0 0.0
  %1526 = vmatpush1.msra.mxu0 0.0
  %1527 = vmatprep.subr.mxu0 0.0
  %1528 = vmatpush1.msra.mxu0 0.0
  %1529 = vmatprep.subr.mxu0 0.0
  %1530 = vmatpush1.msra.mxu0 0.0
  %1531 = vmatprep.subr.mxu0 0.0
  %1532 = vmatpush1.msra.mxu0 %v1435
  %1533 = vmatprep.subr.mxu0 0.0
  %1534 = vmatpush1.msra.mxu0 %v1434
  %1535 = vmatprep.subr.mxu0 0.0
  %1536 = vmatpush1.msra.mxu0 %v1433
  %1537 = vmatprep.subr.mxu0 0.0
  %1538 = vmatpush1.msra.mxu0 %v1432
  %1539 = vmatprep.subr.mxu0 0.0
  %1540 = vmatpush2.msra.mxu0 0.0
  %1541 = vmatprep.subr.mxu0 0.0
  %1542 = vmatpush2.msra.mxu0 0.0
  %1543 = vmatprep.subr.mxu0 0.0
  %1544 = vmatpush2.msra.mxu0 0.0
  %1545 = vmatprep.subr.mxu0 0.0
  %1546 = vmatpush2.msra.mxu0 0.0
  %1547 = vmatprep.subr.mxu0 0.0
  %1548 = vmatpush2.msra.mxu0 0.0
  %1549 = vmatprep.subr.mxu0 0.0
  %1550 = vmatpush2.msra.mxu0 0.0
  %1551 = vmatprep.subr.mxu0 0.0
  %1552 = vmatpush2.msra.mxu0 0.0
  %1553 = vmatprep.subr.mxu0 0.0
  %1554 = vmatpush2.msra.mxu0 0.0
  %1555 = vmatprep.subr.mxu0 0.0
  %1556 = vmatpush2.msra.mxu0 0.0
  %1557 = vmatprep.subr.mxu0 0.0
  %1558 = vmatpush2.msra.mxu0 0.0
  %1559 = vmatprep.subr.mxu0 0.0
  %1560 = vmatpush2.msra.mxu0 0.0
  %1561 = vmatprep.subr.mxu0 0.0
  %1562 = vmatpush2.msra.mxu0 0.0
  %1563 = vmatprep.subr.mxu0 0.0
  %1564 = vmatpush2.msra.mxu0 0.0
  %1565 = vmatprep.subr.mxu0 0.0
  %1566 = vmatpush2.msra.mxu0 0.0
  %1567 = vmatprep.subr.mxu0 0.0
  %1568 = vmatpush2.msra.mxu0 0.0
  %1569 = vmatprep.subr.mxu0 0.0
  %1570 = vmatpush2.msra.mxu0 0.0
  %1571 = vmatprep.mubr.f32.mxu0 0.0
  %1572 = vmatmul.mubr.f32.gmra.mxu0 %v862
  %v1573 = vpop.f32.mrf.mxu0
  %v1574 = vadd.f32 %v1504, %v1573
  %v1575 = vpop.f32.mrf.mxu0
  %1576 = vdwg.mxu0
  %v1577 = vadd.f32 %v1574, %v94
  %v1578 = vxor.u32 %v1577, 2147483648
  %v1579 = vmul.f32 %v1578, 1.442695
  %v1580 = vpow.pop %v1579
  %v1581 = vadd.f32 %v1580, 1.0
  %v1582 = vrcp.pop %v1581
  %v1583 = vmul.f32 1.0, %v1582
  %v1584 = vsel %vm100, %v1583, %v1112
  %s1585 = scalar_lea.vmem %s17, 8
  %1586 = vst [vmem:[%s1585] sm:$0xff] %v1584
  %s1587 = scalar_lea.vmem %s0, 16
  %v1588 = vld [vmem:[%s1587] sm:$0xff]
  %s1589 = scalar_lea.vmem %s1, 16
  %v1590 = vld [vmem:[%s1589] sm:$0xff]
  %v1591 = vld [vmem:[%s3] sm:$0xff]
  %v1592 = vld [vmem:[%s3 + $0x8] sm:$0xff]
  %v1593 = vld [vmem:[%s3 + $0x10] sm:$0xff]
  %v1594 = vld [vmem:[%s3 + $0x18] sm:$0xff]
  %v1595 = vld [vmem:[%s4] sm:$0xff]
  %v1596 = vld [vmem:[%s4 + $0x8] sm:$0xff]
  %v1597 = vld [vmem:[%s4 + $0x10] sm:$0xff]
  %v1598 = vld [vmem:[%s4 + $0x18] sm:$0xff]
  %v1599 = vld [vmem:[%s4 + $0x20] sm:$0xff]
  %v1600 = vld [vmem:[%s4 + $0x28] sm:$0xff]
  %v1601 = vld [vmem:[%s4 + $0x30] sm:$0xff]
  %v1602 = vld [vmem:[%s4 + $0x38] sm:$0xff]
  %v1604 = vsel %vm116, %v1429, 0
  %1606 = vmatprep.subr.mxu0 0.0
  %1607 = vmatpush1.msra.mxu0 0.0
  %1608 = vmatprep.subr.mxu0 0.0
  %1609 = vmatpush1.msra.mxu0 0.0
  %1610 = vmatprep.subr.mxu0 0.0
  %1611 = vmatpush1.msra.mxu0 0.0
  %1612 = vmatprep.subr.mxu0 0.0
  %1613 = vmatpush1.msra.mxu0 0.0
  %1614 = vmatprep.subr.mxu0 0.0
  %1615 = vmatpush1.msra.mxu0 0.0
  %1616 = vmatprep.subr.mxu0 0.0
  %1617 = vmatpush1.msra.mxu0 0.0
  %1618 = vmatprep.subr.mxu0 0.0
  %1619 = vmatpush1.msra.mxu0 0.0
  %1620 = vmatprep.subr.mxu0 0.0
  %1621 = vmatpush1.msra.mxu0 0.0
  %1622 = vmatprep.subr.mxu0 0.0
  %1623 = vmatpush1.msra.mxu0 0.0
  %1624 = vmatprep.subr.mxu0 0.0
  %1625 = vmatpush1.msra.mxu0 0.0
  %1626 = vmatprep.subr.mxu0 0.0
  %1627 = vmatpush1.msra.mxu0 0.0
  %1628 = vmatprep.subr.mxu0 0.0
  %1629 = vmatpush1.msra.mxu0 0.0
  %1630 = vmatprep.subr.mxu0 %v1602
  %1631 = vmatpush1.msra.mxu0 %v1601
  %1632 = vmatprep.subr.mxu0 %v1600
  %1633 = vmatpush1.msra.mxu0 %v1599
  %1634 = vmatprep.subr.mxu0 %v1598
  %1635 = vmatpush1.msra.mxu0 %v1597
  %1636 = vmatprep.subr.mxu0 %v1596
  %1637 = vmatpush1.msra.mxu0 %v1595
  %1638 = vmatprep.subr.mxu0 0.0
  %1639 = vmatpush2.msra.mxu0 0.0
  %1640 = vmatprep.subr.mxu0 0.0
  %1641 = vmatpush2.msra.mxu0 0.0
  %1642 = vmatprep.subr.mxu0 0.0
  %1643 = vmatpush2.msra.mxu0 0.0
  %1644 = vmatprep.subr.mxu0 0.0
  %1645 = vmatpush2.msra.mxu0 0.0
  %1646 = vmatprep.subr.mxu0 0.0
  %1647 = vmatpush2.msra.mxu0 0.0
  %1648 = vmatprep.subr.mxu0 0.0
  %1649 = vmatpush2.msra.mxu0 0.0
  %1650 = vmatprep.subr.mxu0 0.0
  %1651 = vmatpush2.msra.mxu0 0.0
  %1652 = vmatprep.subr.mxu0 0.0
  %1653 = vmatpush2.msra.mxu0 0.0
  %1654 = vmatprep.subr.mxu0 0.0
  %1655 = vmatpush2.msra.mxu0 0.0
  %1656 = vmatprep.subr.mxu0 0.0
  %1657 = vmatpush2.msra.mxu0 0.0
  %1658 = vmatprep.subr.mxu0 0.0
  %1659 = vmatpush2.msra.mxu0 0.0
  %1660 = vmatprep.subr.mxu0 0.0
  %1661 = vmatpush2.msra.mxu0 0.0
  %1662 = vmatprep.subr.mxu0 0.0
  %1663 = vmatpush2.msra.mxu0 0.0
  %1664 = vmatprep.subr.mxu0 0.0
  %1665 = vmatpush2.msra.mxu0 0.0
  %1666 = vmatprep.subr.mxu0 0.0
  %1667 = vmatpush2.msra.mxu0 0.0
  %1668 = vmatprep.subr.mxu0 0.0
  %1669 = vmatpush2.msra.mxu0 0.0
  %1670 = vmatprep.mubr.f32.mxu0 0.0
  %1671 = vmatmul.mubr.f32.gmra.mxu0 %v1604
  %v1672 = vpop.f32.mrf.mxu0
  %v1673 = vadd.f32 0.0, %v1672
  %v1674 = vpop.f32.mrf.mxu0
  %v1675 = vadd.f32 0.0, %v1674
  %1676 = vdwg.mxu0
  %v1678 = vsel %vm191, %v1588, 0
  %1680 = vmatprep.subr.mxu0 0.0
  %1681 = vmatpush1.msra.mxu0 0.0
  %1682 = vmatprep.subr.mxu0 0.0
  %1683 = vmatpush1.msra.mxu0 0.0
  %1684 = vmatprep.subr.mxu0 0.0
  %1685 = vmatpush1.msra.mxu0 0.0
  %1686 = vmatprep.subr.mxu0 0.0
  %1687 = vmatpush1.msra.mxu0 0.0
  %1688 = vmatprep.subr.mxu0 0.0
  %1689 = vmatpush1.msra.mxu0 0.0
  %1690 = vmatprep.subr.mxu0 0.0
  %1691 = vmatpush1.msra.mxu0 0.0
  %1692 = vmatprep.subr.mxu0 0.0
  %1693 = vmatpush1.msra.mxu0 0.0
  %1694 = vmatprep.subr.mxu0 0.0
  %1695 = vmatpush1.msra.mxu0 0.0
  %1696 = vmatprep.subr.mxu0 0.0
  %1697 = vmatpush1.msra.mxu0 0.0
  %1698 = vmatprep.subr.mxu0 0.0
  %1699 = vmatpush1.msra.mxu0 0.0
  %1700 = vmatprep.subr.mxu0 0.0
  %1701 = vmatpush1.msra.mxu0 0.0
  %1702 = vmatprep.subr.mxu0 0.0
  %1703 = vmatpush1.msra.mxu0 0.0
  %1704 = vmatprep.subr.mxu0 0.0
  %1705 = vmatpush1.msra.mxu0 0.0
  %1706 = vmatprep.subr.mxu0 0.0
  %1707 = vmatpush1.msra.mxu0 0.0
  %1708 = vmatprep.subr.mxu0 %v1594
  %1709 = vmatpush1.msra.mxu0 %v1593
  %1710 = vmatprep.subr.mxu0 %v1592
  %1711 = vmatpush1.msra.mxu0 %v1591
  %1712 = vmatprep.subr.mxu0 0.0
  %1713 = vmatpush2.msra.mxu0 0.0
  %1714 = vmatprep.subr.mxu0 0.0
  %1715 = vmatpush2.msra.mxu0 0.0
  %1716 = vmatprep.subr.mxu0 0.0
  %1717 = vmatpush2.msra.mxu0 0.0
  %1718 = vmatprep.subr.mxu0 0.0
  %1719 = vmatpush2.msra.mxu0 0.0
  %1720 = vmatprep.subr.mxu0 0.0
  %1721 = vmatpush2.msra.mxu0 0.0
  %1722 = vmatprep.subr.mxu0 0.0
  %1723 = vmatpush2.msra.mxu0 0.0
  %1724 = vmatprep.subr.mxu0 0.0
  %1725 = vmatpush2.msra.mxu0 0.0
  %1726 = vmatprep.subr.mxu0 0.0
  %1727 = vmatpush2.msra.mxu0 0.0
  %1728 = vmatprep.subr.mxu0 0.0
  %1729 = vmatpush2.msra.mxu0 0.0
  %1730 = vmatprep.subr.mxu0 0.0
  %1731 = vmatpush2.msra.mxu0 0.0
  %1732 = vmatprep.subr.mxu0 0.0
  %1733 = vmatpush2.msra.mxu0 0.0
  %1734 = vmatprep.subr.mxu0 0.0
  %1735 = vmatpush2.msra.mxu0 0.0
  %1736 = vmatprep.subr.mxu0 0.0
  %1737 = vmatpush2.msra.mxu0 0.0
  %1738 = vmatprep.subr.mxu0 0.0
  %1739 = vmatpush2.msra.mxu0 0.0
  %1740 = vmatprep.subr.mxu0 0.0
  %1741 = vmatpush2.msra.mxu0 0.0
  %1742 = vmatprep.subr.mxu0 0.0
  %1743 = vmatpush2.msra.mxu0 0.0
  %1744 = vmatprep.mubr.f32.mxu0 0.0
  %1745 = vmatmul.mubr.f32.gmra.mxu0 %v1678
  %v1746 = vpop.f32.mrf.mxu0
  %v1747 = vadd.f32 %v1673, %v1746
  %v1748 = vpop.f32.mrf.mxu0
  %v1749 = vadd.f32 %v1675, %v1748
  %1750 = vdwg.mxu0
  %v1751 = vadd.f32 %v1747, %v61
  %v1752 = vadd.f32 %v1749, %v65
  %v1753 = vmax.f32 %v1751, 0.0
  %v1754 = vmax.f32 %v1752, 0.0
  %v1755 = vld [vmem:[%s6] sm:$0xff]
  %v1756 = vld [vmem:[%s6 + $0x8] sm:$0xff]
  %v1757 = vld [vmem:[%s6 + $0x10] sm:$0xff]
  %v1758 = vld [vmem:[%s6 + $0x18] sm:$0xff]
  %v1759 = vld [vmem:[%s6 + $0x20] sm:$0xff]
  %v1760 = vld [vmem:[%s6 + $0x28] sm:$0xff]
  %v1761 = vld [vmem:[%s6 + $0x30] sm:$0xff]
  %v1762 = vld [vmem:[%s6 + $0x38] sm:$0xff]
  %v1763 = vld [vmem:[%s6 + $0x40] sm:$0xff]
  %v1764 = vld [vmem:[%s6 + $0x48] sm:$0xff]
  %v1765 = vld [vmem:[%s6 + $0x50] sm:$0xff]
  %v1766 = vld [vmem:[%s6 + $0x58] sm:$0xff]
  %v1767 = vld [vmem:[%s6 + $0x60] sm:$0xff]
  %v1768 = vld [vmem:[%s6 + $0x68] sm:$0xff]
  %v1769 = vld [vmem:[%s6 + $0x70] sm:$0xff]
  %v1770 = vld [vmem:[%s6 + $0x78] sm:$0xff]
  %v1771 = vld [vmem:[%s6 + $0x80] sm:$0xff]
  %v1772 = vld [vmem:[%s6 + $0x88] sm:$0xff]
  %v1773 = vld [vmem:[%s6 + $0x90] sm:$0xff]
  %v1774 = vld [vmem:[%s6 + $0x98] sm:$0xff]
  %v1775 = vld [vmem:[%s6 + $0xa0] sm:$0xff]
  %v1776 = vld [vmem:[%s6 + $0xa8] sm:$0xff]
  %v1777 = vld [vmem:[%s6 + $0xb0] sm:$0xff]
  %v1778 = vld [vmem:[%s6 + $0xb8] sm:$0xff]
  %v1779 = vld [vmem:[%s6 + $0xc0] sm:$0xff]
  %v1780 = vld [vmem:[%s6 + $0xc8] sm:$0xff]
  %v1781 = vld [vmem:[%s6 + $0xd0] sm:$0xff]
  %v1782 = vld [vmem:[%s6 + $0xd8] sm:$0xff]
  %v1783 = vld [vmem:[%s6 + $0xe0] sm:$0xff]
  %v1784 = vld [vmem:[%s6 + $0xe8] sm:$0xff]
  %v1785 = vld [vmem:[%s6 + $0xf0] sm:$0xff]
  %v1786 = vld [vmem:[%s6 + $0xf8] sm:$0xff]
  %1787 = vmatprep.subr.mxu0 0.0
  %1788 = vmatpush1.msra.mxu0 %v1770
  %1789 = vmatprep.subr.mxu0 0.0
  %1790 = vmatpush1.msra.mxu0 %v1769
  %1791 = vmatprep.subr.mxu0 0.0
  %1792 = vmatpush1.msra.mxu0 %v1768
  %1793 = vmatprep.subr.mxu0 0.0
  %1794 = vmatpush1.msra.mxu0 %v1767
  %1795 = vmatprep.subr.mxu0 0.0
  %1796 = vmatpush1.msra.mxu0 %v1766
  %1797 = vmatprep.subr.mxu0 0.0
  %1798 = vmatpush1.msra.mxu0 %v1765
  %1799 = vmatprep.subr.mxu0 0.0
  %1800 = vmatpush1.msra.mxu0 %v1764
  %1801 = vmatprep.subr.mxu0 0.0
  %1802 = vmatpush1.msra.mxu0 %v1763
  %1803 = vmatprep.subr.mxu0 0.0
  %1804 = vmatpush1.msra.mxu0 %v1762
  %1805 = vmatprep.subr.mxu0 0.0
  %1806 = vmatpush1.msra.mxu0 %v1761
  %1807 = vmatprep.subr.mxu0 0.0
  %1808 = vmatpush1.msra.mxu0 %v1760
  %1809 = vmatprep.subr.mxu0 0.0
  %1810 = vmatpush1.msra.mxu0 %v1759
  %1811 = vmatprep.subr.mxu0 0.0
  %1812 = vmatpush1.msra.mxu0 %v1758
  %1813 = vmatprep.subr.mxu0 0.0
  %1814 = vmatpush1.msra.mxu0 %v1757
  %1815 = vmatprep.subr.mxu0 0.0
  %1816 = vmatpush1.msra.mxu0 %v1756
  %1817 = vmatprep.subr.mxu0 0.0
  %1818 = vmatpush1.msra.mxu0 %v1755
  %1819 = vmatprep.subr.mxu0 0.0
  %1820 = vmatpush2.msra.mxu0 %v1786
  %1821 = vmatprep.subr.mxu0 0.0
  %1822 = vmatpush2.msra.mxu0 %v1785
  %1823 = vmatprep.subr.mxu0 0.0
  %1824 = vmatpush2.msra.mxu0 %v1784
  %1825 = vmatprep.subr.mxu0 0.0
  %1826 = vmatpush2.msra.mxu0 %v1783
  %1827 = vmatprep.subr.mxu0 0.0
  %1828 = vmatpush2.msra.mxu0 %v1782
  %1829 = vmatprep.subr.mxu0 0.0
  %1830 = vmatpush2.msra.mxu0 %v1781
  %1831 = vmatprep.subr.mxu0 0.0
  %1832 = vmatpush2.msra.mxu0 %v1780
  %1833 = vmatprep.subr.mxu0 0.0
  %1834 = vmatpush2.msra.mxu0 %v1779
  %1835 = vmatprep.subr.mxu0 0.0
  %1836 = vmatpush2.msra.mxu0 %v1778
  %1837 = vmatprep.subr.mxu0 0.0
  %1838 = vmatpush2.msra.mxu0 %v1777
  %1839 = vmatprep.subr.mxu0 0.0
  %1840 = vmatpush2.msra.mxu0 %v1776
  %1841 = vmatprep.subr.mxu0 0.0
  %1842 = vmatpush2.msra.mxu0 %v1775
  %1843 = vmatprep.subr.mxu0 0.0
  %1844 = vmatpush2.msra.mxu0 %v1774
  %1845 = vmatprep.subr.mxu0 0.0
  %1846 = vmatpush2.msra.mxu0 %v1773
  %1847 = vmatprep.subr.mxu0 0.0
  %1848 = vmatpush2.msra.mxu0 %v1772
  %1849 = vmatprep.subr.mxu0 0.0
  %1850 = vmatpush2.msra.mxu0 %v1771
  %1851 = vmatprep.mubr.f32.mxu0 %v1754
  %1852 = vmatmul.mubr.f32.gmra.mxu0 %v1753
  %v1853 = vpop.f32.mrf.mxu0
  %v1854 = vadd.f32 %v73, %v1853
  %v1855 = vpop.f32.mrf.mxu0
  %1856 = vdwg.mxu0
  %v1857 = vmul.f32 %v1854, 0.5
  %v1858 = vmul.f32 %v1857, 1.442695
  %v1859 = vpow.pop %v1858
  %1861 = vrot.lane.b32.xlu0 %v1590, 8
  %v1862 = vpop.permute.xlu0 %1861
  %v1864 = vmul.f32 %v1859, %v1862
  %1866 = vrot.lane.b32.xlu0 %v1864, 120
  %v1867 = vpop.permute.xlu0 %1866
  %v1869 = vadd.f32 %v1854, %v1867
  %v1870 = vld [vmem:[%s8] sm:$0xff]
  %v1871 = vld [vmem:[%s8 + $0x8] sm:$0xff]
  %v1872 = vld [vmem:[%s9] sm:$0xff]
  %v1873 = vld [vmem:[%s9 + $0x8] sm:$0xff]
  %v1874 = vld [vmem:[%s9 + $0x10] sm:$0xff]
  %v1875 = vld [vmem:[%s9 + $0x18] sm:$0xff]
  %1876 = vmatprep.subr.mxu0 0.0
  %1877 = vmatpush1.msra.mxu0 0.0
  %1878 = vmatprep.subr.mxu0 0.0
  %1879 = vmatpush1.msra.mxu0 0.0
  %1880 = vmatprep.subr.mxu0 0.0
  %1881 = vmatpush1.msra.mxu0 0.0
  %1882 = vmatprep.subr.mxu0 0.0
  %1883 = vmatpush1.msra.mxu0 0.0
  %1884 = vmatprep.subr.mxu0 0.0
  %1885 = vmatpush1.msra.mxu0 0.0
  %1886 = vmatprep.subr.mxu0 0.0
  %1887 = vmatpush1.msra.mxu0 0.0
  %1888 = vmatprep.subr.mxu0 0.0
  %1889 = vmatpush1.msra.mxu0 0.0
  %1890 = vmatprep.subr.mxu0 0.0
  %1891 = vmatpush1.msra.mxu0 0.0
  %1892 = vmatprep.subr.mxu0 0.0
  %1893 = vmatpush1.msra.mxu0 0.0
  %1894 = vmatprep.subr.mxu0 0.0
  %1895 = vmatpush1.msra.mxu0 0.0
  %1896 = vmatprep.subr.mxu0 0.0
  %1897 = vmatpush1.msra.mxu0 0.0
  %1898 = vmatprep.subr.mxu0 0.0
  %1899 = vmatpush1.msra.mxu0 0.0
  %1900 = vmatprep.subr.mxu0 0.0
  %1901 = vmatpush1.msra.mxu0 %v1875
  %1902 = vmatprep.subr.mxu0 0.0
  %1903 = vmatpush1.msra.mxu0 %v1874
  %1904 = vmatprep.subr.mxu0 0.0
  %1905 = vmatpush1.msra.mxu0 %v1873
  %1906 = vmatprep.subr.mxu0 0.0
  %1907 = vmatpush1.msra.mxu0 %v1872
  %1908 = vmatprep.subr.mxu0 0.0
  %1909 = vmatpush2.msra.mxu0 0.0
  %1910 = vmatprep.subr.mxu0 0.0
  %1911 = vmatpush2.msra.mxu0 0.0
  %1912 = vmatprep.subr.mxu0 0.0
  %1913 = vmatpush2.msra.mxu0 0.0
  %1914 = vmatprep.subr.mxu0 0.0
  %1915 = vmatpush2.msra.mxu0 0.0
  %1916 = vmatprep.subr.mxu0 0.0
  %1917 = vmatpush2.msra.mxu0 0.0
  %1918 = vmatprep.subr.mxu0 0.0
  %1919 = vmatpush2.msra.mxu0 0.0
  %1920 = vmatprep.subr.mxu0 0.0
  %1921 = vmatpush2.msra.mxu0 0.0
  %1922 = vmatprep.subr.mxu0 0.0
  %1923 = vmatpush2.msra.mxu0 0.0
  %1924 = vmatprep.subr.mxu0 0.0
  %1925 = vmatpush2.msra.mxu0 0.0
  %1926 = vmatprep.subr.mxu0 0.0
  %1927 = vmatpush2.msra.mxu0 0.0
  %1928 = vmatprep.subr.mxu0 0.0
  %1929 = vmatpush2.msra.mxu0 0.0
  %1930 = vmatprep.subr.mxu0 0.0
  %1931 = vmatpush2.msra.mxu0 0.0
  %1932 = vmatprep.subr.mxu0 0.0
  %1933 = vmatpush2.msra.mxu0 0.0
  %1934 = vmatprep.subr.mxu0 0.0
  %1935 = vmatpush2.msra.mxu0 0.0
  %1936 = vmatprep.subr.mxu0 0.0
  %1937 = vmatpush2.msra.mxu0 0.0
  %1938 = vmatprep.subr.mxu0 0.0
  %1939 = vmatpush2.msra.mxu0 0.0
  %1940 = vmatprep.mubr.f32.mxu0 0.0
  %1941 = vmatmul.mubr.f32.gmra.mxu0 %v1604
  %v1942 = vpop.f32.mrf.mxu0
  %v1943 = vadd.f32 0.0, %v1942
  %v1944 = vpop.f32.mrf.mxu0
  %1945 = vdwg.mxu0
  %1946 = vmatprep.subr.mxu0 0.0
  %1947 = vmatpush1.msra.mxu0 0.0
  %1948 = vmatprep.subr.mxu0 0.0
  %1949 = vmatpush1.msra.mxu0 0.0
  %1950 = vmatprep.subr.mxu0 0.0
  %1951 = vmatpush1.msra.mxu0 0.0
  %1952 = vmatprep.subr.mxu0 0.0
  %1953 = vmatpush1.msra.mxu0 0.0
  %1954 = vmatprep.subr.mxu0 0.0
  %1955 = vmatpush1.msra.mxu0 0.0
  %1956 = vmatprep.subr.mxu0 0.0
  %1957 = vmatpush1.msra.mxu0 0.0
  %1958 = vmatprep.subr.mxu0 0.0
  %1959 = vmatpush1.msra.mxu0 0.0
  %1960 = vmatprep.subr.mxu0 0.0
  %1961 = vmatpush1.msra.mxu0 0.0
  %1962 = vmatprep.subr.mxu0 0.0
  %1963 = vmatpush1.msra.mxu0 0.0
  %1964 = vmatprep.subr.mxu0 0.0
  %1965 = vmatpush1.msra.mxu0 0.0
  %1966 = vmatprep.subr.mxu0 0.0
  %1967 = vmatpush1.msra.mxu0 0.0
  %1968 = vmatprep.subr.mxu0 0.0
  %1969 = vmatpush1.msra.mxu0 0.0
  %1970 = vmatprep.subr.mxu0 0.0
  %1971 = vmatpush1.msra.mxu0 0.0
  %1972 = vmatprep.subr.mxu0 0.0
  %1973 = vmatpush1.msra.mxu0 0.0
  %1974 = vmatprep.subr.mxu0 0.0
  %1975 = vmatpush1.msra.mxu0 %v1871
  %1976 = vmatprep.subr.mxu0 0.0
  %1977 = vmatpush1.msra.mxu0 %v1870
  %1978 = vmatprep.subr.mxu0 0.0
  %1979 = vmatpush2.msra.mxu0 0.0
  %1980 = vmatprep.subr.mxu0 0.0
  %1981 = vmatpush2.msra.mxu0 0.0
  %1982 = vmatprep.subr.mxu0 0.0
  %1983 = vmatpush2.msra.mxu0 0.0
  %1984 = vmatprep.subr.mxu0 0.0
  %1985 = vmatpush2.msra.mxu0 0.0
  %1986 = vmatprep.subr.mxu0 0.0
  %1987 = vmatpush2.msra.mxu0 0.0
  %1988 = vmatprep.subr.mxu0 0.0
  %1989 = vmatpush2.msra.mxu0 0.0
  %1990 = vmatprep.subr.mxu0 0.0
  %1991 = vmatpush2.msra.mxu0 0.0
  %1992 = vmatprep.subr.mxu0 0.0
  %1993 = vmatpush2.msra.mxu0 0.0
  %1994 = vmatprep.subr.mxu0 0.0
  %1995 = vmatpush2.msra.mxu0 0.0
  %1996 = vmatprep.subr.mxu0 0.0
  %1997 = vmatpush2.msra.mxu0 0.0
  %1998 = vmatprep.subr.mxu0 0.0
  %1999 = vmatpush2.msra.mxu0 0.0
  %2000 = vmatprep.subr.mxu0 0.0
  %2001 = vmatpush2.msra.mxu0 0.0
  %2002 = vmatprep.subr.mxu0 0.0
  %2003 = vmatpush2.msra.mxu0 0.0
  %2004 = vmatprep.subr.mxu0 0.0
  %2005 = vmatpush2.msra.mxu0 0.0
  %2006 = vmatprep.subr.mxu0 0.0
  %2007 = vmatpush2.msra.mxu0 0.0
  %2008 = vmatprep.subr.mxu0 0.0
  %2009 = vmatpush2.msra.mxu0 0.0
  %2010 = vmatprep.mubr.f32.mxu0 0.0
  %2011 = vmatmul.mubr.f32.gmra.mxu0 %v1678
  %v2012 = vpop.f32.mrf.mxu0
  %v2013 = vadd.f32 %v1943, %v2012
  %v2014 = vpop.f32.mrf.mxu0
  %2015 = vdwg.mxu0
  %v2016 = vld [vmem:[%s10] sm:$0xff]
  %v2018 = vsel %vm532, %v1869, 0
  %2020 = vmatprep.subr.mxu0 0.0
  %2021 = vmatpush1.msra.mxu0 0.0
  %2022 = vmatprep.subr.mxu0 0.0
  %2023 = vmatpush1.msra.mxu0 0.0
  %2024 = vmatprep.subr.mxu0 0.0
  %2025 = vmatpush1.msra.mxu0 0.0
  %2026 = vmatprep.subr.mxu0 0.0
  %2027 = vmatpush1.msra.mxu0 0.0
  %2028 = vmatprep.subr.mxu0 0.0
  %2029 = vmatpush1.msra.mxu0 0.0
  %2030 = vmatprep.subr.mxu0 0.0
  %2031 = vmatpush1.msra.mxu0 0.0
  %2032 = vmatprep.subr.mxu0 0.0
  %2033 = vmatpush1.msra.mxu0 0.0
  %2034 = vmatprep.subr.mxu0 0.0
  %2035 = vmatpush1.msra.mxu0 0.0
  %2036 = vmatprep.subr.mxu0 0.0
  %2037 = vmatpush1.msra.mxu0 0.0
  %2038 = vmatprep.subr.mxu0 0.0
  %2039 = vmatpush1.msra.mxu0 0.0
  %2040 = vmatprep.subr.mxu0 0.0
  %2041 = vmatpush1.msra.mxu0 0.0
  %2042 = vmatprep.subr.mxu0 0.0
  %2043 = vmatpush1.msra.mxu0 0.0
  %2044 = vmatprep.subr.mxu0 0.0
  %2045 = vmatpush1.msra.mxu0 0.0
  %2046 = vmatprep.subr.mxu0 0.0
  %2047 = vmatpush1.msra.mxu0 0.0
  %2048 = vmatprep.subr.mxu0 0.0
  %2049 = vmatpush1.msra.mxu0 0.0
  %2050 = vmatprep.subr.mxu0 0.0
  %2051 = vmatpush1.msra.mxu0 %v2016
  %2052 = vmatprep.subr.mxu0 0.0
  %2053 = vmatpush2.msra.mxu0 0.0
  %2054 = vmatprep.subr.mxu0 0.0
  %2055 = vmatpush2.msra.mxu0 0.0
  %2056 = vmatprep.subr.mxu0 0.0
  %2057 = vmatpush2.msra.mxu0 0.0
  %2058 = vmatprep.subr.mxu0 0.0
  %2059 = vmatpush2.msra.mxu0 0.0
  %2060 = vmatprep.subr.mxu0 0.0
  %2061 = vmatpush2.msra.mxu0 0.0
  %2062 = vmatprep.subr.mxu0 0.0
  %2063 = vmatpush2.msra.mxu0 0.0
  %2064 = vmatprep.subr.mxu0 0.0
  %2065 = vmatpush2.msra.mxu0 0.0
  %2066 = vmatprep.subr.mxu0 0.0
  %2067 = vmatpush2.msra.mxu0 0.0
  %2068 = vmatprep.subr.mxu0 0.0
  %2069 = vmatpush2.msra.mxu0 0.0
  %2070 = vmatprep.subr.mxu0 0.0
  %2071 = vmatpush2.msra.mxu0 0.0
  %2072 = vmatprep.subr.mxu0 0.0
  %2073 = vmatpush2.msra.mxu0 0.0
  %2074 = vmatprep.subr.mxu0 0.0
  %2075 = vmatpush2.msra.mxu0 0.0
  %2076 = vmatprep.subr.mxu0 0.0
  %2077 = vmatpush2.msra.mxu0 0.0
  %2078 = vmatprep.subr.mxu0 0.0
  %2079 = vmatpush2.msra.mxu0 0.0
  %2080 = vmatprep.subr.mxu0 0.0
  %2081 = vmatpush2.msra.mxu0 0.0
  %2082 = vmatprep.subr.mxu0 0.0
  %2083 = vmatpush2.msra.mxu0 0.0
  %2084 = vmatprep.mubr.f32.mxu0 0.0
  %2085 = vmatmul.mubr.f32.gmra.mxu0 %v2018
  %v2086 = vpop.f32.mrf.mxu0
  %v2087 = vadd.f32 0.0, %v2086
  %v2088 = vpop.f32.mrf.mxu0
  %2089 = vdwg.mxu0
  %v2090 = vadd.f32 %v2013, %v2087
  %v2091 = vadd.f32 %v2090, %v80
  %v2092 = vmax.f32 %v2091, 0.0
  %v2093 = vld [vmem:[%s12] sm:$0xff]
  %v2094 = vld [vmem:[%s12 + $0x8] sm:$0xff]
  %v2095 = vld [vmem:[%s12 + $0x10] sm:$0xff]
  %v2096 = vld [vmem:[%s12 + $0x18] sm:$0xff]
  %v2097 = vld [vmem:[%s12 + $0x20] sm:$0xff]
  %v2098 = vld [vmem:[%s12 + $0x28] sm:$0xff]
  %v2099 = vld [vmem:[%s12 + $0x30] sm:$0xff]
  %v2100 = vld [vmem:[%s12 + $0x38] sm:$0xff]
  %v2102 = vsel %vm617, %v2092, 0
  %2104 = vmatprep.subr.mxu0 0.0
  %2105 = vmatpush1.msra.mxu0 0.0
  %2106 = vmatprep.subr.mxu0 0.0
  %2107 = vmatpush1.msra.mxu0 0.0
  %2108 = vmatprep.subr.mxu0 0.0
  %2109 = vmatpush1.msra.mxu0 0.0
  %2110 = vmatprep.subr.mxu0 0.0
  %2111 = vmatpush1.msra.mxu0 0.0
  %2112 = vmatprep.subr.mxu0 0.0
  %2113 = vmatpush1.msra.mxu0 0.0
  %2114 = vmatprep.subr.mxu0 0.0
  %2115 = vmatpush1.msra.mxu0 0.0
  %2116 = vmatprep.subr.mxu0 0.0
  %2117 = vmatpush1.msra.mxu0 0.0
  %2118 = vmatprep.subr.mxu0 0.0
  %2119 = vmatpush1.msra.mxu0 0.0
  %2120 = vmatprep.subr.mxu0 0.0
  %2121 = vmatpush1.msra.mxu0 %v2100
  %2122 = vmatprep.subr.mxu0 0.0
  %2123 = vmatpush1.msra.mxu0 %v2099
  %2124 = vmatprep.subr.mxu0 0.0
  %2125 = vmatpush1.msra.mxu0 %v2098
  %2126 = vmatprep.subr.mxu0 0.0
  %2127 = vmatpush1.msra.mxu0 %v2097
  %2128 = vmatprep.subr.mxu0 0.0
  %2129 = vmatpush1.msra.mxu0 %v2096
  %2130 = vmatprep.subr.mxu0 0.0
  %2131 = vmatpush1.msra.mxu0 %v2095
  %2132 = vmatprep.subr.mxu0 0.0
  %2133 = vmatpush1.msra.mxu0 %v2094
  %2134 = vmatprep.subr.mxu0 0.0
  %2135 = vmatpush1.msra.mxu0 %v2093
  %2136 = vmatprep.subr.mxu0 0.0
  %2137 = vmatpush2.msra.mxu0 0.0
  %2138 = vmatprep.subr.mxu0 0.0
  %2139 = vmatpush2.msra.mxu0 0.0
  %2140 = vmatprep.subr.mxu0 0.0
  %2141 = vmatpush2.msra.mxu0 0.0
  %2142 = vmatprep.subr.mxu0 0.0
  %2143 = vmatpush2.msra.mxu0 0.0
  %2144 = vmatprep.subr.mxu0 0.0
  %2145 = vmatpush2.msra.mxu0 0.0
  %2146 = vmatprep.subr.mxu0 0.0
  %2147 = vmatpush2.msra.mxu0 0.0
  %2148 = vmatprep.subr.mxu0 0.0
  %2149 = vmatpush2.msra.mxu0 0.0
  %2150 = vmatprep.subr.mxu0 0.0
  %2151 = vmatpush2.msra.mxu0 0.0
  %2152 = vmatprep.subr.mxu0 0.0
  %2153 = vmatpush2.msra.mxu0 0.0
  %2154 = vmatprep.subr.mxu0 0.0
  %2155 = vmatpush2.msra.mxu0 0.0
  %2156 = vmatprep.subr.mxu0 0.0
  %2157 = vmatpush2.msra.mxu0 0.0
  %2158 = vmatprep.subr.mxu0 0.0
  %2159 = vmatpush2.msra.mxu0 0.0
  %2160 = vmatprep.subr.mxu0 0.0
  %2161 = vmatpush2.msra.mxu0 0.0
  %2162 = vmatprep.subr.mxu0 0.0
  %2163 = vmatpush2.msra.mxu0 0.0
  %2164 = vmatprep.subr.mxu0 0.0
  %2165 = vmatpush2.msra.mxu0 0.0
  %2166 = vmatprep.subr.mxu0 0.0
  %2167 = vmatpush2.msra.mxu0 0.0
  %2168 = vmatprep.mubr.f32.mxu0 0.0
  %2169 = vmatmul.mubr.f32.gmra.mxu0 %v2102
  %v2170 = vpop.f32.mrf.mxu0
  %v2171 = vadd.f32 %v87, %v2170
  %v2172 = vpop.f32.mrf.mxu0
  %2173 = vdwg.mxu0
  %v2174 = vld [vmem:[%s14] sm:$0xff]
  %v2175 = vld [vmem:[%s14 + $0x8] sm:$0xff]
  %v2176 = vld [vmem:[%s14 + $0x10] sm:$0xff]
  %v2177 = vld [vmem:[%s14 + $0x18] sm:$0xff]
  %v2178 = vld [vmem:[%s15] sm:$0xff]
  %2179 = vmatprep.subr.mxu0 0.0
  %2180 = vmatpush1.msra.mxu0 0.0
  %2181 = vmatprep.subr.mxu0 0.0
  %2182 = vmatpush1.msra.mxu0 0.0
  %2183 = vmatprep.subr.mxu0 0.0
  %2184 = vmatpush1.msra.mxu0 0.0
  %2185 = vmatprep.subr.mxu0 0.0
  %2186 = vmatpush1.msra.mxu0 0.0
  %2187 = vmatprep.subr.mxu0 0.0
  %2188 = vmatpush1.msra.mxu0 0.0
  %2189 = vmatprep.subr.mxu0 0.0
  %2190 = vmatpush1.msra.mxu0 0.0
  %2191 = vmatprep.subr.mxu0 0.0
  %2192 = vmatpush1.msra.mxu0 0.0
  %2193 = vmatprep.subr.mxu0 0.0
  %2194 = vmatpush1.msra.mxu0 0.0
  %2195 = vmatprep.subr.mxu0 0.0
  %2196 = vmatpush1.msra.mxu0 0.0
  %2197 = vmatprep.subr.mxu0 0.0
  %2198 = vmatpush1.msra.mxu0 0.0
  %2199 = vmatprep.subr.mxu0 0.0
  %2200 = vmatpush1.msra.mxu0 0.0
  %2201 = vmatprep.subr.mxu0 0.0
  %2202 = vmatpush1.msra.mxu0 0.0
  %2203 = vmatprep.subr.mxu0 0.0
  %2204 = vmatpush1.msra.mxu0 0.0
  %2205 = vmatprep.subr.mxu0 0.0
  %2206 = vmatpush1.msra.mxu0 0.0
  %2207 = vmatprep.subr.mxu0 0.0
  %2208 = vmatpush1.msra.mxu0 0.0
  %2209 = vmatprep.subr.mxu0 0.0
  %2210 = vmatpush1.msra.mxu0 %v2178
  %2211 = vmatprep.subr.mxu0 0.0
  %2212 = vmatpush2.msra.mxu0 0.0
  %2213 = vmatprep.subr.mxu0 0.0
  %2214 = vmatpush2.msra.mxu0 0.0
  %2215 = vmatprep.subr.mxu0 0.0
  %2216 = vmatpush2.msra.mxu0 0.0
  %2217 = vmatprep.subr.mxu0 0.0
  %2218 = vmatpush2.msra.mxu0 0.0
  %2219 = vmatprep.subr.mxu0 0.0
  %2220 = vmatpush2.msra.mxu0 0.0
  %2221 = vmatprep.subr.mxu0 0.0
  %2222 = vmatpush2.msra.mxu0 0.0
  %2223 = vmatprep.subr.mxu0 0.0
  %2224 = vmatpush2.msra.mxu0 0.0
  %2225 = vmatprep.subr.mxu0 0.0
  %2226 = vmatpush2.msra.mxu0 0.0
  %2227 = vmatprep.subr.mxu0 0.0
  %2228 = vmatpush2.msra.mxu0 0.0
  %2229 = vmatprep.subr.mxu0 0.0
  %2230 = vmatpush2.msra.mxu0 0.0
  %2231 = vmatprep.subr.mxu0 0.0
  %2232 = vmatpush2.msra.mxu0 0.0
  %2233 = vmatprep.subr.mxu0 0.0
  %2234 = vmatpush2.msra.mxu0 0.0
  %2235 = vmatprep.subr.mxu0 0.0
  %2236 = vmatpush2.msra.mxu0 0.0
  %2237 = vmatprep.subr.mxu0 0.0
  %2238 = vmatpush2.msra.mxu0 0.0
  %2239 = vmatprep.subr.mxu0 0.0
  %2240 = vmatpush2.msra.mxu0 0.0
  %2241 = vmatprep.subr.mxu0 0.0
  %2242 = vmatpush2.msra.mxu0 0.0
  %2243 = vmatprep.mubr.f32.mxu0 0.0
  %2244 = vmatmul.mubr.f32.gmra.mxu0 %v2018
  %v2245 = vpop.f32.mrf.mxu0
  %v2246 = vadd.f32 0.0, %v2245
  %v2247 = vpop.f32.mrf.mxu0
  %2248 = vdwg.mxu0
  %2249 = vmatprep.subr.mxu0 0.0
  %2250 = vmatpush1.msra.mxu0 0.0
  %2251 = vmatprep.subr.mxu0 0.0
  %2252 = vmatpush1.msra.mxu0 0.0
  %2253 = vmatprep.subr.mxu0 0.0
  %2254 = vmatpush1.msra.mxu0 0.0
  %2255 = vmatprep.subr.mxu0 0.0
  %2256 = vmatpush1.msra.mxu0 0.0
  %2257 = vmatprep.subr.mxu0 0.0
  %2258 = vmatpush1.msra.mxu0 0.0
  %2259 = vmatprep.subr.mxu0 0.0
  %2260 = vmatpush1.msra.mxu0 0.0
  %2261 = vmatprep.subr.mxu0 0.0
  %2262 = vmatpush1.msra.mxu0 0.0
  %2263 = vmatprep.subr.mxu0 0.0
  %2264 = vmatpush1.msra.mxu0 0.0
  %2265 = vmatprep.subr.mxu0 0.0
  %2266 = vmatpush1.msra.mxu0 0.0
  %2267 = vmatprep.subr.mxu0 0.0
  %2268 = vmatpush1.msra.mxu0 0.0
  %2269 = vmatprep.subr.mxu0 0.0
  %2270 = vmatpush1.msra.mxu0 0.0
  %2271 = vmatprep.subr.mxu0 0.0
  %2272 = vmatpush1.msra.mxu0 0.0
  %2273 = vmatprep.subr.mxu0 0.0
  %2274 = vmatpush1.msra.mxu0 %v2177
  %2275 = vmatprep.subr.mxu0 0.0
  %2276 = vmatpush1.msra.mxu0 %v2176
  %2277 = vmatprep.subr.mxu0 0.0
  %2278 = vmatpush1.msra.mxu0 %v2175
  %2279 = vmatprep.subr.mxu0 0.0
  %2280 = vmatpush1.msra.mxu0 %v2174
  %2281 = vmatprep.subr.mxu0 0.0
  %2282 = vmatpush2.msra.mxu0 0.0
  %2283 = vmatprep.subr.mxu0 0.0
  %2284 = vmatpush2.msra.mxu0 0.0
  %2285 = vmatprep.subr.mxu0 0.0
  %2286 = vmatpush2.msra.mxu0 0.0
  %2287 = vmatprep.subr.mxu0 0.0
  %2288 = vmatpush2.msra.mxu0 0.0
  %2289 = vmatprep.subr.mxu0 0.0
  %2290 = vmatpush2.msra.mxu0 0.0
  %2291 = vmatprep.subr.mxu0 0.0
  %2292 = vmatpush2.msra.mxu0 0.0
  %2293 = vmatprep.subr.mxu0 0.0
  %2294 = vmatpush2.msra.mxu0 0.0
  %2295 = vmatprep.subr.mxu0 0.0
  %2296 = vmatpush2.msra.mxu0 0.0
  %2297 = vmatprep.subr.mxu0 0.0
  %2298 = vmatpush2.msra.mxu0 0.0
  %2299 = vmatprep.subr.mxu0 0.0
  %2300 = vmatpush2.msra.mxu0 0.0
  %2301 = vmatprep.subr.mxu0 0.0
  %2302 = vmatpush2.msra.mxu0 0.0
  %2303 = vmatprep.subr.mxu0 0.0
  %2304 = vmatpush2.msra.mxu0 0.0
  %2305 = vmatprep.subr.mxu0 0.0
  %2306 = vmatpush2.msra.mxu0 0.0
  %2307 = vmatprep.subr.mxu0 0.0
  %2308 = vmatpush2.msra.mxu0 0.0
  %2309 = vmatprep.subr.mxu0 0.0
  %2310 = vmatpush2.msra.mxu0 0.0
  %2311 = vmatprep.subr.mxu0 0.0
  %2312 = vmatpush2.msra.mxu0 0.0
  %2313 = vmatprep.mubr.f32.mxu0 0.0
  %2314 = vmatmul.mubr.f32.gmra.mxu0 %v1604
  %v2315 = vpop.f32.mrf.mxu0
  %v2316 = vadd.f32 %v2246, %v2315
  %v2317 = vpop.f32.mrf.mxu0
  %2318 = vdwg.mxu0
  %v2319 = vadd.f32 %v2316, %v94
  %v2320 = vxor.u32 %v2319, 2147483648
  %v2321 = vmul.f32 %v2320, 1.442695
  %v2322 = vpow.pop %v2321
  %v2323 = vadd.f32 %v2322, 1.0
  %v2324 = vrcp.pop %v2323
  %v2325 = vmul.f32 1.0, %v2324
  %v2326 = vsel %vm100, %v2325, %v1854
  %s2327 = scalar_lea.vmem %s17, 16
  %2328 = vst [vmem:[%s2327] sm:$0xff] %v2326
  %s2329 = scalar_lea.vmem %s0, 24
  %v2330 = vld [vmem:[%s2329] sm:$0xff]
  %s2331 = scalar_lea.vmem %s1, 24
  %v2332 = vld [vmem:[%s2331] sm:$0xff]
  %v2333 = vld [vmem:[%s3] sm:$0xff]
  %v2334 = vld [vmem:[%s3 + $0x8] sm:$0xff]
  %v2335 = vld [vmem:[%s3 + $0x10] sm:$0xff]
  %v2336 = vld [vmem:[%s3 + $0x18] sm:$0xff]
  %v2337 = vld [vmem:[%s4] sm:$0xff]
  %v2338 = vld [vmem:[%s4 + $0x8] sm:$0xff]
  %v2339 = vld [vmem:[%s4 + $0x10] sm:$0xff]
  %v2340 = vld [vmem:[%s4 + $0x18] sm:$0xff]
  %v2341 = vld [vmem:[%s4 + $0x20] sm:$0xff]
  %v2342 = vld [vmem:[%s4 + $0x28] sm:$0xff]
  %v2343 = vld [vmem:[%s4 + $0x30] sm:$0xff]
  %v2344 = vld [vmem:[%s4 + $0x38] sm:$0xff]
  %v2346 = vsel %vm116, %v2171, 0
  %2348 = vmatprep.subr.mxu0 0.0
  %2349 = vmatpush1.msra.mxu0 0.0
  %2350 = vmatprep.subr.mxu0 0.0
  %2351 = vmatpush1.msra.mxu0 0.0
  %2352 = vmatprep.subr.mxu0 0.0
  %2353 = vmatpush1.msra.mxu0 0.0
  %2354 = vmatprep.subr.mxu0 0.0
  %2355 = vmatpush1.msra.mxu0 0.0
  %2356 = vmatprep.subr.mxu0 0.0
  %2357 = vmatpush1.msra.mxu0 0.0
  %2358 = vmatprep.subr.mxu0 0.0
  %2359 = vmatpush1.msra.mxu0 0.0
  %2360 = vmatprep.subr.mxu0 0.0
  %2361 = vmatpush1.msra.mxu0 0.0
  %2362 = vmatprep.subr.mxu0 0.0
  %2363 = vmatpush1.msra.mxu0 0.0
  %2364 = vmatprep.subr.mxu0 0.0
  %2365 = vmatpush1.msra.mxu0 0.0
  %2366 = vmatprep.subr.mxu0 0.0
  %2367 = vmatpush1.msra.mxu0 0.0
  %2368 = vmatprep.subr.mxu0 0.0
  %2369 = vmatpush1.msra.mxu0 0.0
  %2370 = vmatprep.subr.mxu0 0.0
  %2371 = vmatpush1.msra.mxu0 0.0
  %2372 = vmatprep.subr.mxu0 %v2344
  %2373 = vmatpush1.msra.mxu0 %v2343
  %2374 = vmatprep.subr.mxu0 %v2342
  %2375 = vmatpush1.msra.mxu0 %v2341
  %2376 = vmatprep.subr.mxu0 %v2340
  %2377 = vmatpush1.msra.mxu0 %v2339
  %2378 = vmatprep.subr.mxu0 %v2338
  %2379 = vmatpush1.msra.mxu0 %v2337
  %2380 = vmatprep.subr.mxu0 0.0
  %2381 = vmatpush2.msra.mxu0 0.0
  %2382 = vmatprep.subr.mxu0 0.0
  %2383 = vmatpush2.msra.mxu0 0.0
  %2384 = vmatprep.subr.mxu0 0.0
  %2385 = vmatpush2.msra.mxu0 0.0
  %2386 = vmatprep.subr.mxu0 0.0
  %2387 = vmatpush2.msra.mxu0 0.0
  %2388 = vmatprep.subr.mxu0 0.0
  %2389 = vmatpush2.msra.mxu0 0.0
  %2390 = vmatprep.subr.mxu0 0.0
  %2391 = vmatpush2.msra.mxu0 0.0
  %2392 = vmatprep.subr.mxu0 0.0
  %2393 = vmatpush2.msra.mxu0 0.0
  %2394 = vmatprep.subr.mxu0 0.0
  %2395 = vmatpush2.msra.mxu0 0.0
  %2396 = vmatprep.subr.mxu0 0.0
  %2397 = vmatpush2.msra.mxu0 0.0
  %2398 = vmatprep.subr.mxu0 0.0
  %2399 = vmatpush2.msra.mxu0 0.0
  %2400 = vmatprep.subr.mxu0 0.0
  %2401 = vmatpush2.msra.mxu0 0.0
  %2402 = vmatprep.subr.mxu0 0.0
  %2403 = vmatpush2.msra.mxu0 0.0
  %2404 = vmatprep.subr.mxu0 0.0
  %2405 = vmatpush2.msra.mxu0 0.0
  %2406 = vmatprep.subr.mxu0 0.0
  %2407 = vmatpush2.msra.mxu0 0.0
  %2408 = vmatprep.subr.mxu0 0.0
  %2409 = vmatpush2.msra.mxu0 0.0
  %2410 = vmatprep.subr.mxu0 0.0
  %2411 = vmatpush2.msra.mxu0 0.0
  %2412 = vmatprep.mubr.f32.mxu0 0.0
  %2413 = vmatmul.mubr.f32.gmra.mxu0 %v2346
  %v2414 = vpop.f32.mrf.mxu0
  %v2415 = vadd.f32 0.0, %v2414
  %v2416 = vpop.f32.mrf.mxu0
  %v2417 = vadd.f32 0.0, %v2416
  %2418 = vdwg.mxu0
  %v2420 = vsel %vm191, %v2330, 0
  %2422 = vmatprep.subr.mxu0 0.0
  %2423 = vmatpush1.msra.mxu0 0.0
  %2424 = vmatprep.subr.mxu0 0.0
  %2425 = vmatpush1.msra.mxu0 0.0
  %2426 = vmatprep.subr.mxu0 0.0
  %2427 = vmatpush1.msra.mxu0 0.0
  %2428 = vmatprep.subr.mxu0 0.0
  %2429 = vmatpush1.msra.mxu0 0.0
  %2430 = vmatprep.subr.mxu0 0.0
  %2431 = vmatpush1.msra.mxu0 0.0
  %2432 = vmatprep.subr.mxu0 0.0
  %2433 = vmatpush1.msra.mxu0 0.0
  %2434 = vmatprep.subr.mxu0 0.0
  %2435 = vmatpush1.msra.mxu0 0.0
  %2436 = vmatprep.subr.mxu0 0.0
  %2437 = vmatpush1.msra.mxu0 0.0
  %2438 = vmatprep.subr.mxu0 0.0
  %2439 = vmatpush1.msra.mxu0 0.0
  %2440 = vmatprep.subr.mxu0 0.0
  %2441 = vmatpush1.msra.mxu0 0.0
  %2442 = vmatprep.subr.mxu0 0.0
  %2443 = vmatpush1.msra.mxu0 0.0
  %2444 = vmatprep.subr.mxu0 0.0
  %2445 = vmatpush1.msra.mxu0 0.0
  %2446 = vmatprep.subr.mxu0 0.0
  %2447 = vmatpush1.msra.mxu0 0.0
  %2448 = vmatprep.subr.mxu0 0.0
  %2449 = vmatpush1.msra.mxu0 0.0
  %2450 = vmatprep.subr.mxu0 %v2336
  %2451 = vmatpush1.msra.mxu0 %v2335
  %2452 = vmatprep.subr.mxu0 %v2334
  %2453 = vmatpush1.msra.mxu0 %v2333
  %2454 = vmatprep.subr.mxu0 0.0
  %2455 = vmatpush2.msra.mxu0 0.0
  %2456 = vmatprep.subr.mxu0 0.0
  %2457 = vmatpush2.msra.mxu0 0.0
  %2458 = vmatprep.subr.mxu0 0.0
  %2459 = vmatpush2.msra.mxu0 0.0
  %2460 = vmatprep.subr.mxu0 0.0
  %2461 = vmatpush2.msra.mxu0 0.0
  %2462 = vmatprep.subr.mxu0 0.0
  %2463 = vmatpush2.msra.mxu0 0.0
  %2464 = vmatprep.subr.mxu0 0.0
  %2465 = vmatpush2.msra.mxu0 0.0
  %2466 = vmatprep.subr.mxu0 0.0
  %2467 = vmatpush2.msra.mxu0 0.0
  %2468 = vmatprep.subr.mxu0 0.0
  %2469 = vmatpush2.msra.mxu0 0.0
  %2470 = vmatprep.subr.mxu0 0.0
  %2471 = vmatpush2.msra.mxu0 0.0
  %2472 = vmatprep.subr.mxu0 0.0
  %2473 = vmatpush2.msra.mxu0 0.0
  %2474 = vmatprep.subr.mxu0 0.0
  %2475 = vmatpush2.msra.mxu0 0.0
  %2476 = vmatprep.subr.mxu0 0.0
  %2477 = vmatpush2.msra.mxu0 0.0
  %2478 = vmatprep.subr.mxu0 0.0
  %2479 = vmatpush2.msra.mxu0 0.0
  %2480 = vmatprep.subr.mxu0 0.0
  %2481 = vmatpush2.msra.mxu0 0.0
  %2482 = vmatprep.subr.mxu0 0.0
  %2483 = vmatpush2.msra.mxu0 0.0
  %2484 = vmatprep.subr.mxu0 0.0
  %2485 = vmatpush2.msra.mxu0 0.0
  %2486 = vmatprep.mubr.f32.mxu0 0.0
  %2487 = vmatmul.mubr.f32.gmra.mxu0 %v2420
  %v2488 = vpop.f32.mrf.mxu0
  %v2489 = vadd.f32 %v2415, %v2488
  %v2490 = vpop.f32.mrf.mxu0
  %v2491 = vadd.f32 %v2417, %v2490
  %2492 = vdwg.mxu0
  %v2493 = vadd.f32 %v2489, %v61
  %v2494 = vadd.f32 %v2491, %v65
  %v2495 = vmax.f32 %v2493, 0.0
  %v2496 = vmax.f32 %v2494, 0.0
  %v2497 = vld [vmem:[%s6] sm:$0xff]
  %v2498 = vld [vmem:[%s6 + $0x8] sm:$0xff]
  %v2499 = vld [vmem:[%s6 + $0x10] sm:$0xff]
  %v2500 = vld [vmem:[%s6 + $0x18] sm:$0xff]
  %v2501 = vld [vmem:[%s6 + $0x20] sm:$0xff]
  %v2502 = vld [vmem:[%s6 + $0x28] sm:$0xff]
  %v2503 = vld [vmem:[%s6 + $0x30] sm:$0xff]
  %v2504 = vld [vmem:[%s6 + $0x38] sm:$0xff]
  %v2505 = vld [vmem:[%s6 + $0x40] sm:$0xff]
  %v2506 = vld [vmem:[%s6 + $0x48] sm:$0xff]
  %v2507 = vld [vmem:[%s6 + $0x50] sm:$0xff]
  %v2508 = vld [vmem:[%s6 + $0x58] sm:$0xff]
  %v2509 = vld [vmem:[%s6 + $0x60] sm:$0xff]
  %v2510 = vld [vmem:[%s6 + $0x68] sm:$0xff]
  %v2511 = vld [vmem:[%s6 + $0x70] sm:$0xff]
  %v2512 = vld [vmem:[%s6 + $0x78] sm:$0xff]
  %v2513 = vld [vmem:[%s6 + $0x80] sm:$0xff]
  %v2514 = vld [vmem:[%s6 + $0x88] sm:$0xff]
  %v2515 = vld [vmem:[%s6 + $0x90] sm:$0xff]
  %v2516 = vld [vmem:[%s6 + $0x98] sm:$0xff]
  %v2517 = vld [vmem:[%s6 + $0xa0] sm:$0xff]
  %v2518 = vld [vmem:[%s6 + $0xa8] sm:$0xff]
  %v2519 = vld [vmem:[%s6 + $0xb0] sm:$0xff]
  %v2520 = vld [vmem:[%s6 + $0xb8] sm:$0xff]
  %v2521 = vld [vmem:[%s6 + $0xc0] sm:$0xff]
  %v2522 = vld [vmem:[%s6 + $0xc8] sm:$0xff]
  %v2523 = vld [vmem:[%s6 + $0xd0] sm:$0xff]
  %v2524 = vld [vmem:[%s6 + $0xd8] sm:$0xff]
  %v2525 = vld [vmem:[%s6 + $0xe0] sm:$0xff]
  %v2526 = vld [vmem:[%s6 + $0xe8] sm:$0xff]
  %v2527 = vld [vmem:[%s6 + $0xf0] sm:$0xff]
  %v2528 = vld [vmem:[%s6 + $0xf8] sm:$0xff]
  %2529 = vmatprep.subr.mxu0 0.0
  %2530 = vmatpush1.msra.mxu0 %v2512
  %2531 = vmatprep.subr.mxu0 0.0
  %2532 = vmatpush1.msra.mxu0 %v2511
  %2533 = vmatprep.subr.mxu0 0.0
  %2534 = vmatpush1.msra.mxu0 %v2510
  %2535 = vmatprep.subr.mxu0 0.0
  %2536 = vmatpush1.msra.mxu0 %v2509
  %2537 = vmatprep.subr.mxu0 0.0
  %2538 = vmatpush1.msra.mxu0 %v2508
  %2539 = vmatprep.subr.mxu0 0.0
  %2540 = vmatpush1.msra.mxu0 %v2507
  %2541 = vmatprep.subr.mxu0 0.0
  %2542 = vmatpush1.msra.mxu0 %v2506
  %2543 = vmatprep.subr.mxu0 0.0
  %2544 = vmatpush1.msra.mxu0 %v2505
  %2545 = vmatprep.subr.mxu0 0.0
  %2546 = vmatpush1.msra.mxu0 %v2504
  %2547 = vmatprep.subr.mxu0 0.0
  %2548 = vmatpush1.msra.mxu0 %v2503
  %2549 = vmatprep.subr.mxu0 0.0
  %2550 = vmatpush1.msra.mxu0 %v2502
  %2551 = vmatprep.subr.mxu0 0.0
  %2552 = vmatpush1.msra.mxu0 %v2501
  %2553 = vmatprep.subr.mxu0 0.0
  %2554 = vmatpush1.msra.mxu0 %v2500
  %2555 = vmatprep.subr.mxu0 0.0
  %2556 = vmatpush1.msra.mxu0 %v2499
  %2557 = vmatprep.subr.mxu0 0.0
  %2558 = vmatpush1.msra.mxu0 %v2498
  %2559 = vmatprep.subr.mxu0 0.0
  %2560 = vmatpush1.msra.mxu0 %v2497
  %2561 = vmatprep.subr.mxu0 0.0
  %2562 = vmatpush2.msra.mxu0 %v2528
  %2563 = vmatprep.subr.mxu0 0.0
  %2564 = vmatpush2.msra.mxu0 %v2527
  %2565 = vmatprep.subr.mxu0 0.0
  %2566 = vmatpush2.msra.mxu0 %v2526
  %2567 = vmatprep.subr.mxu0 0.0
  %2568 = vmatpush2.msra.mxu0 %v2525
  %2569 = vmatprep.subr.mxu0 0.0
  %2570 = vmatpush2.msra.mxu0 %v2524
  %2571 = vmatprep.subr.mxu0 0.0
  %2572 = vmatpush2.msra.mxu0 %v2523
  %2573 = vmatprep.subr.mxu0 0.0
  %2574 = vmatpush2.msra.mxu0 %v2522
  %2575 = vmatprep.subr.mxu0 0.0
  %2576 = vmatpush2.msra.mxu0 %v2521
  %2577 = vmatprep.subr.mxu0 0.0
  %2578 = vmatpush2.msra.mxu0 %v2520
  %2579 = vmatprep.subr.mxu0 0.0
  %2580 = vmatpush2.msra.mxu0 %v2519
  %2581 = vmatprep.subr.mxu0 0.0
  %2582 = vmatpush2.msra.mxu0 %v2518
  %2583 = vmatprep.subr.mxu0 0.0
  %2584 = vmatpush2.msra.mxu0 %v2517
  %2585 = vmatprep.subr.mxu0 0.0
  %2586 = vmatpush2.msra.mxu0 %v2516
  %2587 = vmatprep.subr.mxu0 0.0
  %2588 = vmatpush2.msra.mxu0 %v2515
  %2589 = vmatprep.subr.mxu0 0.0
  %2590 = vmatpush2.msra.mxu0 %v2514
  %2591 = vmatprep.subr.mxu0 0.0
  %2592 = vmatpush2.msra.mxu0 %v2513
  %2593 = vmatprep.mubr.f32.mxu0 %v2496
  %2594 = vmatmul.mubr.f32.gmra.mxu0 %v2495
  %v2595 = vpop.f32.mrf.mxu0
  %v2596 = vadd.f32 %v73, %v2595
  %v2597 = vpop.f32.mrf.mxu0
  %2598 = vdwg.mxu0
  %v2599 = vmul.f32 %v2596, 0.5
  %v2600 = vmul.f32 %v2599, 1.442695
  %v2601 = vpow.pop %v2600
  %2603 = vrot.lane.b32.xlu0 %v2332, 8
  %v2604 = vpop.permute.xlu0 %2603
  %v2606 = vmul.f32 %v2601, %v2604
  %2608 = vrot.lane.b32.xlu0 %v2606, 120
  %v2609 = vpop.permute.xlu0 %2608
  %v2611 = vadd.f32 %v2596, %v2609
  %v2612 = vld [vmem:[%s8] sm:$0xff]
  %v2613 = vld [vmem:[%s8 + $0x8] sm:$0xff]
  %v2614 = vld [vmem:[%s9] sm:$0xff]
  %v2615 = vld [vmem:[%s9 + $0x8] sm:$0xff]
  %v2616 = vld [vmem:[%s9 + $0x10] sm:$0xff]
  %v2617 = vld [vmem:[%s9 + $0x18] sm:$0xff]
  %2618 = vmatprep.subr.mxu0 0.0
  %2619 = vmatpush1.msra.mxu0 0.0
  %2620 = vmatprep.subr.mxu0 0.0
  %2621 = vmatpush1.msra.mxu0 0.0
  %2622 = vmatprep.subr.mxu0 0.0
  %2623 = vmatpush1.msra.mxu0 0.0
  %2624 = vmatprep.subr.mxu0 0.0
  %2625 = vmatpush1.msra.mxu0 0.0
  %2626 = vmatprep.subr.mxu0 0.0
  %2627 = vmatpush1.msra.mxu0 0.0
  %2628 = vmatprep.subr.mxu0 0.0
  %2629 = vmatpush1.msra.mxu0 0.0
  %2630 = vmatprep.subr.mxu0 0.0
  %2631 = vmatpush1.msra.mxu0 0.0
  %2632 = vmatprep.subr.mxu0 0.0
  %2633 = vmatpush1.msra.mxu0 0.0
  %2634 = vmatprep.subr.mxu0 0.0
  %2635 = vmatpush1.msra.mxu0 0.0
  %2636 = vmatprep.subr.mxu0 0.0
  %2637 = vmatpush1.msra.mxu0 0.0
  %2638 = vmatprep.subr.mxu0 0.0
  %2639 = vmatpush1.msra.mxu0 0.0
  %2640 = vmatprep.subr.mxu0 0.0
  %2641 = vmatpush1.msra.mxu0 0.0
  %2642 = vmatprep.subr.mxu0 0.0
  %2643 = vmatpush1.msra.mxu0 %v2617
  %2644 = vmatprep.subr.mxu0 0.0
  %2645 = vmatpush1.msra.mxu0 %v2616
  %2646 = vmatprep.subr.mxu0 0.0
  %2647 = vmatpush1.msra.mxu0 %v2615
  %2648 = vmatprep.subr.mxu0 0.0
  %2649 = vmatpush1.msra.mxu0 %v2614
  %2650 = vmatprep.subr.mxu0 0.0
  %2651 = vmatpush2.msra.mxu0 0.0
  %2652 = vmatprep.subr.mxu0 0.0
  %2653 = vmatpush2.msra.mxu0 0.0
  %2654 = vmatprep.subr.mxu0 0.0
  %2655 = vmatpush2.msra.mxu0 0.0
  %2656 = vmatprep.subr.mxu0 0.0
  %2657 = vmatpush2.msra.mxu0 0.0
  %2658 = vmatprep.subr.mxu0 0.0
  %2659 = vmatpush2.msra.mxu0 0.0
  %2660 = vmatprep.subr.mxu0 0.0
  %2661 = vmatpush2.msra.mxu0 0.0
  %2662 = vmatprep.subr.mxu0 0.0
  %2663 = vmatpush2.msra.mxu0 0.0
  %2664 = vmatprep.subr.mxu0 0.0
  %2665 = vmatpush2.msra.mxu0 0.0
  %2666 = vmatprep.subr.mxu0 0.0
  %2667 = vmatpush2.msra.mxu0 0.0
  %2668 = vmatprep.subr.mxu0 0.0
  %2669 = vmatpush2.msra.mxu0 0.0
  %2670 = vmatprep.subr.mxu0 0.0
  %2671 = vmatpush2.msra.mxu0 0.0
  %2672 = vmatprep.subr.mxu0 0.0
  %2673 = vmatpush2.msra.mxu0 0.0
  %2674 = vmatprep.subr.mxu0 0.0
  %2675 = vmatpush2.msra.mxu0 0.0
  %2676 = vmatprep.subr.mxu0 0.0
  %2677 = vmatpush2.msra.mxu0 0.0
  %2678 = vmatprep.subr.mxu0 0.0
  %2679 = vmatpush2.msra.mxu0 0.0
  %2680 = vmatprep.subr.mxu0 0.0
  %2681 = vmatpush2.msra.mxu0 0.0
  %2682 = vmatprep.mubr.f32.mxu0 0.0
  %2683 = vmatmul.mubr.f32.gmra.mxu0 %v2346
  %v2684 = vpop.f32.mrf.mxu0
  %v2685 = vadd.f32 0.0, %v2684
  %v2686 = vpop.f32.mrf.mxu0
  %2687 = vdwg.mxu0
  %2688 = vmatprep.subr.mxu0 0.0
  %2689 = vmatpush1.msra.mxu0 0.0
  %2690 = vmatprep.subr.mxu0 0.0
  %2691 = vmatpush1.msra.mxu0 0.0
  %2692 = vmatprep.subr.mxu0 0.0
  %2693 = vmatpush1.msra.mxu0 0.0
  %2694 = vmatprep.subr.mxu0 0.0
  %2695 = vmatpush1.msra.mxu0 0.0
  %2696 = vmatprep.subr.mxu0 0.0
  %2697 = vmatpush1.msra.mxu0 0.0
  %2698 = vmatprep.subr.mxu0 0.0
  %2699 = vmatpush1.msra.mxu0 0.0
  %2700 = vmatprep.subr.mxu0 0.0
  %2701 = vmatpush1.msra.mxu0 0.0
  %2702 = vmatprep.subr.mxu0 0.0
  %2703 = vmatpush1.msra.mxu0 0.0
  %2704 = vmatprep.subr.mxu0 0.0
  %2705 = vmatpush1.msra.mxu0 0.0
  %2706 = vmatprep.subr.mxu0 0.0
  %2707 = vmatpush1.msra.mxu0 0.0
  %2708 = vmatprep.subr.mxu0 0.0
  %2709 = vmatpush1.msra.mxu0 0.0
  %2710 = vmatprep.subr.mxu0 0.0
  %2711 = vmatpush1.msra.mxu0 0.0
  %2712 = vmatprep.subr.mxu0 0.0
  %2713 = vmatpush1.msra.mxu0 0.0
  %2714 = vmatprep.subr.mxu0 0.0
  %2715 = vmatpush1.msra.mxu0 0.0
  %2716 = vmatprep.subr.mxu0 0.0
  %2717 = vmatpush1.msra.mxu0 %v2613
  %2718 = vmatprep.subr.mxu0 0.0
  %2719 = vmatpush1.msra.mxu0 %v2612
  %2720 = vmatprep.subr.mxu0 0.0
  %2721 = vmatpush2.msra.mxu0 0.0
  %2722 = vmatprep.subr.mxu0 0.0
  %2723 = vmatpush2.msra.mxu0 0.0
  %2724 = vmatprep.subr.mxu0 0.0
  %2725 = vmatpush2.msra.mxu0 0.0
  %2726 = vmatprep.subr.mxu0 0.0
  %2727 = vmatpush2.msra.mxu0 0.0
  %2728 = vmatprep.subr.mxu0 0.0
  %2729 = vmatpush2.msra.mxu0 0.0
  %2730 = vmatprep.subr.mxu0 0.0
  %2731 = vmatpush2.msra.mxu0 0.0
  %2732 = vmatprep.subr.mxu0 0.0
  %2733 = vmatpush2.msra.mxu0 0.0
  %2734 = vmatprep.subr.mxu0 0.0
  %2735 = vmatpush2.msra.mxu0 0.0
  %2736 = vmatprep.subr.mxu0 0.0
  %2737 = vmatpush2.msra.mxu0 0.0
  %2738 = vmatprep.subr.mxu0 0.0
  %2739 = vmatpush2.msra.mxu0 0.0
  %2740 = vmatprep.subr.mxu0 0.0
  %2741 = vmatpush2.msra.mxu0 0.0
  %2742 = vmatprep.subr.mxu0 0.0
  %2743 = vmatpush2.msra.mxu0 0.0
  %2744 = vmatprep.subr.mxu0 0.0
  %2745 = vmatpush2.msra.mxu0 0.0
  %2746 = vmatprep.subr.mxu0 0.0
  %2747 = vmatpush2.msra.mxu0 0.0
  %2748 = vmatprep.subr.mxu0 0.0
  %2749 = vmatpush2.msra.mxu0 0.0
  %2750 = vmatprep.subr.mxu0 0.0
  %2751 = vmatpush2.msra.mxu0 0.0
  %2752 = vmatprep.mubr.f32.mxu0 0.0
  %2753 = vmatmul.mubr.f32.gmra.mxu0 %v2420
  %v2754 = vpop.f32.mrf.mxu0
  %v2755 = vadd.f32 %v2685, %v2754
  %v2756 = vpop.f32.mrf.mxu0
  %2757 = vdwg.mxu0
  %v2758 = vld [vmem:[%s10] sm:$0xff]
  %v2760 = vsel %vm532, %v2611, 0
  %2762 = vmatprep.subr.mxu0 0.0
  %2763 = vmatpush1.msra.mxu0 0.0
  %2764 = vmatprep.subr.mxu0 0.0
  %2765 = vmatpush1.msra.mxu0 0.0
  %2766 = vmatprep.subr.mxu0 0.0
  %2767 = vmatpush1.msra.mxu0 0.0
  %2768 = vmatprep.subr.mxu0 0.0
  %2769 = vmatpush1.msra.mxu0 0.0
  %2770 = vmatprep.subr.mxu0 0.0
  %2771 = vmatpush1.msra.mxu0 0.0
  %2772 = vmatprep.subr.mxu0 0.0
  %2773 = vmatpush1.msra.mxu0 0.0
  %2774 = vmatprep.subr.mxu0 0.0
  %2775 = vmatpush1.msra.mxu0 0.0
  %2776 = vmatprep.subr.mxu0 0.0
  %2777 = vmatpush1.msra.mxu0 0.0
  %2778 = vmatprep.subr.mxu0 0.0
  %2779 = vmatpush1.msra.mxu0 0.0
  %2780 = vmatprep.subr.mxu0 0.0
  %2781 = vmatpush1.msra.mxu0 0.0
  %2782 = vmatprep.subr.mxu0 0.0
  %2783 = vmatpush1.msra.mxu0 0.0
  %2784 = vmatprep.subr.mxu0 0.0
  %2785 = vmatpush1.msra.mxu0 0.0
  %2786 = vmatprep.subr.mxu0 0.0
  %2787 = vmatpush1.msra.mxu0 0.0
  %2788 = vmatprep.subr.mxu0 0.0
  %2789 = vmatpush1.msra.mxu0 0.0
  %2790 = vmatprep.subr.mxu0 0.0
  %2791 = vmatpush1.msra.mxu0 0.0
  %2792 = vmatprep.subr.mxu0 0.0
  %2793 = vmatpush1.msra.mxu0 %v2758
  %2794 = vmatprep.subr.mxu0 0.0
  %2795 = vmatpush2.msra.mxu0 0.0
  %2796 = vmatprep.subr.mxu0 0.0
  %2797 = vmatpush2.msra.mxu0 0.0
  %2798 = vmatprep.subr.mxu0 0.0
  %2799 = vmatpush2.msra.mxu0 0.0
  %2800 = vmatprep.subr.mxu0 0.0
  %2801 = vmatpush2.msra.mxu0 0.0
  %2802 = vmatprep.subr.mxu0 0.0
  %2803 = vmatpush2.msra.mxu0 0.0
  %2804 = vmatprep.subr.mxu0 0.0
  %2805 = vmatpush2.msra.mxu0 0.0
  %2806 = vmatprep.subr.mxu0 0.0
  %2807 = vmatpush2.msra.mxu0 0.0
  %2808 = vmatprep.subr.mxu0 0.0
  %2809 = vmatpush2.msra.mxu0 0.0
  %2810 = vmatprep.subr.mxu0 0.0
  %2811 = vmatpush2.msra.mxu0 0.0
  %2812 = vmatprep.subr.mxu0 0.0
  %2813 = vmatpush2.msra.mxu0 0.0
  %2814 = vmatprep.subr.mxu0 0.0
  %2815 = vmatpush2.msra.mxu0 0.0
  %2816 = vmatprep.subr.mxu0 0.0
  %2817 = vmatpush2.msra.mxu0 0.0
  %2818 = vmatprep.subr.mxu0 0.0
  %2819 = vmatpush2.msra.mxu0 0.0
  %2820 = vmatprep.subr.mxu0 0.0
  %2821 = vmatpush2.msra.mxu0 0.0
  %2822 = vmatprep.subr.mxu0 0.0
  %2823 = vmatpush2.msra.mxu0 0.0
  %2824 = vmatprep.subr.mxu0 0.0
  %2825 = vmatpush2.msra.mxu0 0.0
  %2826 = vmatprep.mubr.f32.mxu0 0.0
  %2827 = vmatmul.mubr.f32.gmra.mxu0 %v2760
  %v2828 = vpop.f32.mrf.mxu0
  %v2829 = vadd.f32 0.0, %v2828
  %v2830 = vpop.f32.mrf.mxu0
  %2831 = vdwg.mxu0
  %v2832 = vadd.f32 %v2755, %v2829
  %v2833 = vadd.f32 %v2832, %v80
  %v2834 = vmax.f32 %v2833, 0.0
  %v2835 = vld [vmem:[%s12] sm:$0xff]
  %v2836 = vld [vmem:[%s12 + $0x8] sm:$0xff]
  %v2837 = vld [vmem:[%s12 + $0x10] sm:$0xff]
  %v2838 = vld [vmem:[%s12 + $0x18] sm:$0xff]
  %v2839 = vld [vmem:[%s12 + $0x20] sm:$0xff]
  %v2840 = vld [vmem:[%s12 + $0x28] sm:$0xff]
  %v2841 = vld [vmem:[%s12 + $0x30] sm:$0xff]
  %v2842 = vld [vmem:[%s12 + $0x38] sm:$0xff]
  %v2844 = vsel %vm617, %v2834, 0
  %2846 = vmatprep.subr.mxu0 0.0
  %2847 = vmatpush1.msra.mxu0 0.0
  %2848 = vmatprep.subr.mxu0 0.0
  %2849 = vmatpush1.msra.mxu0 0.0
  %2850 = vmatprep.subr.mxu0 0.0
  %2851 = vmatpush1.msra.mxu0 0.0
  %2852 = vmatprep.subr.mxu0 0.0
  %2853 = vmatpush1.msra.mxu0 0.0
  %2854 = vmatprep.subr.mxu0 0.0
  %2855 = vmatpush1.msra.mxu0 0.0
  %2856 = vmatprep.subr.mxu0 0.0
  %2857 = vmatpush1.msra.mxu0 0.0
  %2858 = vmatprep.subr.mxu0 0.0
  %2859 = vmatpush1.msra.mxu0 0.0
  %2860 = vmatprep.subr.mxu0 0.0
  %2861 = vmatpush1.msra.mxu0 0.0
  %2862 = vmatprep.subr.mxu0 0.0
  %2863 = vmatpush1.msra.mxu0 %v2842
  %2864 = vmatprep.subr.mxu0 0.0
  %2865 = vmatpush1.msra.mxu0 %v2841
  %2866 = vmatprep.subr.mxu0 0.0
  %2867 = vmatpush1.msra.mxu0 %v2840
  %2868 = vmatprep.subr.mxu0 0.0
  %2869 = vmatpush1.msra.mxu0 %v2839
  %2870 = vmatprep.subr.mxu0 0.0
  %2871 = vmatpush1.msra.mxu0 %v2838
  %2872 = vmatprep.subr.mxu0 0.0
  %2873 = vmatpush1.msra.mxu0 %v2837
  %2874 = vmatprep.subr.mxu0 0.0
  %2875 = vmatpush1.msra.mxu0 %v2836
  %2876 = vmatprep.subr.mxu0 0.0
  %2877 = vmatpush1.msra.mxu0 %v2835
  %2878 = vmatprep.subr.mxu0 0.0
  %2879 = vmatpush2.msra.mxu0 0.0
  %2880 = vmatprep.subr.mxu0 0.0
  %2881 = vmatpush2.msra.mxu0 0.0
  %2882 = vmatprep.subr.mxu0 0.0
  %2883 = vmatpush2.msra.mxu0 0.0
  %2884 = vmatprep.subr.mxu0 0.0
  %2885 = vmatpush2.msra.mxu0 0.0
  %2886 = vmatprep.subr.mxu0 0.0
  %2887 = vmatpush2.msra.mxu0 0.0
  %2888 = vmatprep.subr.mxu0 0.0
  %2889 = vmatpush2.msra.mxu0 0.0
  %2890 = vmatprep.subr.mxu0 0.0
  %2891 = vmatpush2.msra.mxu0 0.0
  %2892 = vmatprep.subr.mxu0 0.0
  %2893 = vmatpush2.msra.mxu0 0.0
  %2894 = vmatprep.subr.mxu0 0.0
  %2895 = vmatpush2.msra.mxu0 0.0
  %2896 = vmatprep.subr.mxu0 0.0
  %2897 = vmatpush2.msra.mxu0 0.0
  %2898 = vmatprep.subr.mxu0 0.0
  %2899 = vmatpush2.msra.mxu0 0.0
  %2900 = vmatprep.subr.mxu0 0.0
  %2901 = vmatpush2.msra.mxu0 0.0
  %2902 = vmatprep.subr.mxu0 0.0
  %2903 = vmatpush2.msra.mxu0 0.0
  %2904 = vmatprep.subr.mxu0 0.0
  %2905 = vmatpush2.msra.mxu0 0.0
  %2906 = vmatprep.subr.mxu0 0.0
  %2907 = vmatpush2.msra.mxu0 0.0
  %2908 = vmatprep.subr.mxu0 0.0
  %2909 = vmatpush2.msra.mxu0 0.0
  %2910 = vmatprep.mubr.f32.mxu0 0.0
  %2911 = vmatmul.mubr.f32.gmra.mxu0 %v2844
  %v2912 = vpop.f32.mrf.mxu0
  %v2913 = vadd.f32 %v87, %v2912
  %v2914 = vpop.f32.mrf.mxu0
  %2915 = vdwg.mxu0
  %v2916 = vld [vmem:[%s14] sm:$0xff]
  %v2917 = vld [vmem:[%s14 + $0x8] sm:$0xff]
  %v2918 = vld [vmem:[%s14 + $0x10] sm:$0xff]
  %v2919 = vld [vmem:[%s14 + $0x18] sm:$0xff]
  %v2920 = vld [vmem:[%s15] sm:$0xff]
  %2921 = vmatprep.subr.mxu0 0.0
  %2922 = vmatpush1.msra.mxu0 0.0
  %2923 = vmatprep.subr.mxu0 0.0
  %2924 = vmatpush1.msra.mxu0 0.0
  %2925 = vmatprep.subr.mxu0 0.0
  %2926 = vmatpush1.msra.mxu0 0.0
  %2927 = vmatprep.subr.mxu0 0.0
  %2928 = vmatpush1.msra.mxu0 0.0
  %2929 = vmatprep.subr.mxu0 0.0
  %2930 = vmatpush1.msra.mxu0 0.0
  %2931 = vmatprep.subr.mxu0 0.0
  %2932 = vmatpush1.msra.mxu0 0.0
  %2933 = vmatprep.subr.mxu0 0.0
  %2934 = vmatpush1.msra.mxu0 0.0
  %2935 = vmatprep.subr.mxu0 0.0
  %2936 = vmatpush1.msra.mxu0 0.0
  %2937 = vmatprep.subr.mxu0 0.0
  %2938 = vmatpush1.msra.mxu0 0.0
  %2939 = vmatprep.subr.mxu0 0.0
  %2940 = vmatpush1.msra.mxu0 0.0
  %2941 = vmatprep.subr.mxu0 0.0
  %2942 = vmatpush1.msra.mxu0 0.0
  %2943 = vmatprep.subr.mxu0 0.0
  %2944 = vmatpush1.msra.mxu0 0.0
  %2945 = vmatprep.subr.mxu0 0.0
  %2946 = vmatpush1.msra.mxu0 0.0
  %2947 = vmatprep.subr.mxu0 0.0
  %2948 = vmatpush1.msra.mxu0 0.0
  %2949 = vmatprep.subr.mxu0 0.0
  %2950 = vmatpush1.msra.mxu0 0.0
  %2951 = vmatprep.subr.mxu0 0.0
  %2952 = vmatpush1.msra.mxu0 %v2920
  %2953 = vmatprep.subr.mxu0 0.0
  %2954 = vmatpush2.msra.mxu0 0.0
  %2955 = vmatprep.subr.mxu0 0.0
  %2956 = vmatpush2.msra.mxu0 0.0
  %2957 = vmatprep.subr.mxu0 0.0
  %2958 = vmatpush2.msra.mxu0 0.0
  %2959 = vmatprep.subr.mxu0 0.0
  %2960 = vmatpush2.msra.mxu0 0.0
  %2961 = vmatprep.subr.mxu0 0.0
  %2962 = vmatpush2.msra.mxu0 0.0
  %2963 = vmatprep.subr.mxu0 0.0
  %2964 = vmatpush2.msra.mxu0 0.0
  %2965 = vmatprep.subr.mxu0 0.0
  %2966 = vmatpush2.msra.mxu0 0.0
  %2967 = vmatprep.subr.mxu0 0.0
  %2968 = vmatpush2.msra.mxu0 0.0
  %2969 = vmatprep.subr.mxu0 0.0
  %2970 = vmatpush2.msra.mxu0 0.0
  %2971 = vmatprep.subr.mxu0 0.0
  %2972 = vmatpush2.msra.mxu0 0.0
  %2973 = vmatprep.subr.mxu0 0.0
  %2974 = vmatpush2.msra.mxu0 0.0
  %2975 = vmatprep.subr.mxu0 0.0
  %2976 = vmatpush2.msra.mxu0 0.0
  %2977 = vmatprep.subr.mxu0 0.0
  %2978 = vmatpush2.msra.mxu0 0.0
  %2979 = vmatprep.subr.mxu0 0.0
  %2980 = vmatpush2.msra.mxu0 0.0
  %2981 = vmatprep.subr.mxu0 0.0
  %2982 = vmatpush2.msra.mxu0 0.0
  %2983 = vmatprep.subr.mxu0 0.0
  %2984 = vmatpush2.msra.mxu0 0.0
  %2985 = vmatprep.mubr.f32.mxu0 0.0
  %2986 = vmatmul.mubr.f32.gmra.mxu0 %v2760
  %v2987 = vpop.f32.mrf.mxu0
  %v2988 = vadd.f32 0.0, %v2987
  %v2989 = vpop.f32.mrf.mxu0
  %2990 = vdwg.mxu0
  %2991 = vmatprep.subr.mxu0 0.0
  %2992 = vmatpush1.msra.mxu0 0.0
  %2993 = vmatprep.subr.mxu0 0.0
  %2994 = vmatpush1.msra.mxu0 0.0
  %2995 = vmatprep.subr.mxu0 0.0
  %2996 = vmatpush1.msra.mxu0 0.0
  %2997 = vmatprep.subr.mxu0 0.0
  %2998 = vmatpush1.msra.mxu0 0.0
  %2999 = vmatprep.subr.mxu0 0.0
  %3000 = vmatpush1.msra.mxu0 0.0
  %3001 = vmatprep.subr.mxu0 0.0
  %3002 = vmatpush1.msra.mxu0 0.0
  %3003 = vmatprep.subr.mxu0 0.0
  %3004 = vmatpush1.msra.mxu0 0.0
  %3005 = vmatprep.subr.mxu0 0.0
  %3006 = vmatpush1.msra.mxu0 0.0
  %3007 = vmatprep.subr.mxu0 0.0
  %3008 = vmatpush1.msra.mxu0 0.0
  %3009 = vmatprep.subr.mxu0 0.0
  %3010 = vmatpush1.msra.mxu0 0.0
  %3011 = vmatprep.subr.mxu0 0.0
  %3012 = vmatpush1.msra.mxu0 0.0
  %3013 = vmatprep.subr.mxu0 0.0
  %3014 = vmatpush1.msra.mxu0 0.0
  %3015 = vmatprep.subr.mxu0 0.0
  %3016 = vmatpush1.msra.mxu0 %v2919
  %3017 = vmatprep.subr.mxu0 0.0
  %3018 = vmatpush1.msra.mxu0 %v2918
  %3019 = vmatprep.subr.mxu0 0.0
  %3020 = vmatpush1.msra.mxu0 %v2917
  %3021 = vmatprep.subr.mxu0 0.0
  %3022 = vmatpush1.msra.mxu0 %v2916
  %3023 = vmatprep.subr.mxu0 0.0
  %3024 = vmatpush2.msra.mxu0 0.0
  %3025 = vmatprep.subr.mxu0 0.0
  %3026 = vmatpush2.msra.mxu0 0.0
  %3027 = vmatprep.subr.mxu0 0.0
  %3028 = vmatpush2.msra.mxu0 0.0
  %3029 = vmatprep.subr.mxu0 0.0
  %3030 = vmatpush2.msra.mxu0 0.0
  %3031 = vmatprep.subr.mxu0 0.0
  %3032 = vmatpush2.msra.mxu0 0.0
  %3033 = vmatprep.subr.mxu0 0.0
  %3034 = vmatpush2.msra.mxu0 0.0
  %3035 = vmatprep.subr.mxu0 0.0
  %3036 = vmatpush2.msra.mxu0 0.0
  %3037 = vmatprep.subr.mxu0 0.0
  %3038 = vmatpush2.msra.mxu0 0.0
  %3039 = vmatprep.subr.mxu0 0.0
  %3040 = vmatpush2.msra.mxu0 0.0
  %3041 = vmatprep.subr.mxu0 0.0
  %3042 = vmatpush2.msra.mxu0 0.0
  %3043 = vmatprep.subr.mxu0 0.0
  %3044 = vmatpush2.msra.mxu0 0.0
  %3045 = vmatprep.subr.mxu0 0.0
  %3046 = vmatpush2.msra.mxu0 0.0
  %3047 = vmatprep.subr.mxu0 0.0
  %3048 = vmatpush2.msra.mxu0 0.0
  %3049 = vmatprep.subr.mxu0 0.0
  %3050 = vmatpush2.msra.mxu0 0.0
  %3051 = vmatprep.subr.mxu0 0.0
  %3052 = vmatpush2.msra.mxu0 0.0
  %3053 = vmatprep.subr.mxu0 0.0
  %3054 = vmatpush2.msra.mxu0 0.0
  %3055 = vmatprep.mubr.f32.mxu0 0.0
  %3056 = vmatmul.mubr.f32.gmra.mxu0 %v2346
  %v3057 = vpop.f32.mrf.mxu0
  %v3058 = vadd.f32 %v2988, %v3057
  %v3059 = vpop.f32.mrf.mxu0
  %3060 = vdwg.mxu0
  %v3061 = vadd.f32 %v3058, %v94
  %v3062 = vxor.u32 %v3061, 2147483648
  %v3063 = vmul.f32 %v3062, 1.442695
  %v3064 = vpow.pop %v3063
  %v3065 = vadd.f32 %v3064, 1.0
  %v3066 = vrcp.pop %v3065
  %v3067 = vmul.f32 1.0, %v3066
  %v3068 = vsel %vm100, %v3067, %v2596
  %s3069 = scalar_lea.vmem %s17, 24
  %3070 = vst [vmem:[%s3069] sm:$0xff] %v3068
  %s3071 = scalar_lea.vmem %s0, 32
  %v3072 = vld [vmem:[%s3071] sm:$0xff]
  %s3073 = scalar_lea.vmem %s1, 32
  %v3074 = vld [vmem:[%s3073] sm:$0xff]
  %v3075 = vld [vmem:[%s3] sm:$0xff]
  %v3076 = vld [vmem:[%s3 + $0x8] sm:$0xff]
  %v3077 = vld [vmem:[%s3 + $0x10] sm:$0xff]
  %v3078 = vld [vmem:[%s3 + $0x18] sm:$0xff]
  %v3079 = vld [vmem:[%s4] sm:$0xff]
  %v3080 = vld [vmem:[%s4 + $0x8] sm:$0xff]
  %v3081 = vld [vmem:[%s4 + $0x10] sm:$0xff]
  %v3082 = vld [vmem:[%s4 + $0x18] sm:$0xff]
  %v3083 = vld [vmem:[%s4 + $0x20] sm:$0xff]
  %v3084 = vld [vmem:[%s4 + $0x28] sm:$0xff]
  %v3085 = vld [vmem:[%s4 + $0x30] sm:$0xff]
  %v3086 = vld [vmem:[%s4 + $0x38] sm:$0xff]
  %v3088 = vsel %vm116, %v2913, 0
  %3090 = vmatprep.subr.mxu0 0.0
  %3091 = vmatpush1.msra.mxu0 0.0
  %3092 = vmatprep.subr.mxu0 0.0
  %3093 = vmatpush1.msra.mxu0 0.0
  %3094 = vmatprep.subr.mxu0 0.0
  %3095 = vmatpush1.msra.mxu0 0.0
  %3096 = vmatprep.subr.mxu0 0.0
  %3097 = vmatpush1.msra.mxu0 0.0
  %3098 = vmatprep.subr.mxu0 0.0
  %3099 = vmatpush1.msra.mxu0 0.0
  %3100 = vmatprep.subr.mxu0 0.0
  %3101 = vmatpush1.msra.mxu0 0.0
  %3102 = vmatprep.subr.mxu0 0.0
  %3103 = vmatpush1.msra.mxu0 0.0
  %3104 = vmatprep.subr.mxu0 0.0
  %3105 = vmatpush1.msra.mxu0 0.0
  %3106 = vmatprep.subr.mxu0 0.0
  %3107 = vmatpush1.msra.mxu0 0.0
  %3108 = vmatprep.subr.mxu0 0.0
  %3109 = vmatpush1.msra.mxu0 0.0
  %3110 = vmatprep.subr.mxu0 0.0
  %3111 = vmatpush1.msra.mxu0 0.0
  %3112 = vmatprep.subr.mxu0 0.0
  %3113 = vmatpush1.msra.mxu0 0.0
  %3114 = vmatprep.subr.mxu0 %v3086
  %3115 = vmatpush1.msra.mxu0 %v3085
  %3116 = vmatprep.subr.mxu0 %v3084
  %3117 = vmatpush1.msra.mxu0 %v3083
  %3118 = vmatprep.subr.mxu0 %v3082
  %3119 = vmatpush1.msra.mxu0 %v3081
  %3120 = vmatprep.subr.mxu0 %v3080
  %3121 = vmatpush1.msra.mxu0 %v3079
  %3122 = vmatprep.subr.mxu0 0.0
  %3123 = vmatpush2.msra.mxu0 0.0
  %3124 = vmatprep.subr.mxu0 0.0
  %3125 = vmatpush2.msra.mxu0 0.0
  %3126 = vmatprep.subr.mxu0 0.0
  %3127 = vmatpush2.msra.mxu0 0.0
  %3128 = vmatprep.subr.mxu0 0.0
  %3129 = vmatpush2.msra.mxu0 0.0
  %3130 = vmatprep.subr.mxu0 0.0
  %3131 = vmatpush2.msra.mxu0 0.0
  %3132 = vmatprep.subr.mxu0 0.0
  %3133 = vmatpush2.msra.mxu0 0.0
  %3134 = vmatprep.subr.mxu0 0.0
  %3135 = vmatpush2.msra.mxu0 0.0
  %3136 = vmatprep.subr.mxu0 0.0
  %3137 = vmatpush2.msra.mxu0 0.0
  %3138 = vmatprep.subr.mxu0 0.0
  %3139 = vmatpush2.msra.mxu0 0.0
  %3140 = vmatprep.subr.mxu0 0.0
  %3141 = vmatpush2.msra.mxu0 0.0
  %3142 = vmatprep.subr.mxu0 0.0
  %3143 = vmatpush2.msra.mxu0 0.0
  %3144 = vmatprep.subr.mxu0 0.0
  %3145 = vmatpush2.msra.mxu0 0.0
  %3146 = vmatprep.subr.mxu0 0.0
  %3147 = vmatpush2.msra.mxu0 0.0
  %3148 = vmatprep.subr.mxu0 0.0
  %3149 = vmatpush2.msra.mxu0 0.0
  %3150 = vmatprep.subr.mxu0 0.0
  %3151 = vmatpush2.msra.mxu0 0.0
  %3152 = vmatprep.subr.mxu0 0.0
  %3153 = vmatpush2.msra.mxu0 0.0
  %3154 = vmatprep.mubr.f32.mxu0 0.0
  %3155 = vmatmul.mubr.f32.gmra.mxu0 %v3088
  %v3156 = vpop.f32.mrf.mxu0
  %v3157 = vadd.f32 0.0, %v3156
  %v3158 = vpop.f32.mrf.mxu0
  %v3159 = vadd.f32 0.0, %v3158
  %3160 = vdwg.mxu0
  %v3162 = vsel %vm191, %v3072, 0
  %3164 = vmatprep.subr.mxu0 0.0
  %3165 = vmatpush1.msra.mxu0 0.0
  %3166 = vmatprep.subr.mxu0 0.0
  %3167 = vmatpush1.msra.mxu0 0.0
  %3168 = vmatprep.subr.mxu0 0.0
  %3169 = vmatpush1.msra.mxu0 0.0
  %3170 = vmatprep.subr.mxu0 0.0
  %3171 = vmatpush1.msra.mxu0 0.0
  %3172 = vmatprep.subr.mxu0 0.0
  %3173 = vmatpush1.msra.mxu0 0.0
  %3174 = vmatprep.subr.mxu0 0.0
  %3175 = vmatpush1.msra.mxu0 0.0
  %3176 = vmatprep.subr.mxu0 0.0
  %3177 = vmatpush1.msra.mxu0 0.0
  %3178 = vmatprep.subr.mxu0 0.0
  %3179 = vmatpush1.msra.mxu0 0.0
  %3180 = vmatprep.subr.mxu0 0.0
  %3181 = vmatpush1.msra.mxu0 0.0
  %3182 = vmatprep.subr.mxu0 0.0
  %3183 = vmatpush1.msra.mxu0 0.0
  %3184 = vmatprep.subr.mxu0 0.0
  %3185 = vmatpush1.msra.mxu0 0.0
  %3186 = vmatprep.subr.mxu0 0.0
  %3187 = vmatpush1.msra.mxu0 0.0
  %3188 = vmatprep.subr.mxu0 0.0
  %3189 = vmatpush1.msra.mxu0 0.0
  %3190 = vmatprep.subr.mxu0 0.0
  %3191 = vmatpush1.msra.mxu0 0.0
  %3192 = vmatprep.subr.mxu0 %v3078
  %3193 = vmatpush1.msra.mxu0 %v3077
  %3194 = vmatprep.subr.mxu0 %v3076
  %3195 = vmatpush1.msra.mxu0 %v3075
  %3196 = vmatprep.subr.mxu0 0.0
  %3197 = vmatpush2.msra.mxu0 0.0
  %3198 = vmatprep.subr.mxu0 0.0
  %3199 = vmatpush2.msra.mxu0 0.0
  %3200 = vmatprep.subr.mxu0 0.0
  %3201 = vmatpush2.msra.mxu0 0.0
  %3202 = vmatprep.subr.mxu0 0.0
  %3203 = vmatpush2.msra.mxu0 0.0
  %3204 = vmatprep.subr.mxu0 0.0
  %3205 = vmatpush2.msra.mxu0 0.0
  %3206 = vmatprep.subr.mxu0 0.0
  %3207 = vmatpush2.msra.mxu0 0.0
  %3208 = vmatprep.subr.mxu0 0.0
  %3209 = vmatpush2.msra.mxu0 0.0
  %3210 = vmatprep.subr.mxu0 0.0
  %3211 = vmatpush2.msra.mxu0 0.0
  %3212 = vmatprep.subr.mxu0 0.0
  %3213 = vmatpush2.msra.mxu0 0.0
  %3214 = vmatprep.subr.mxu0 0.0
  %3215 = vmatpush2.msra.mxu0 0.0
  %3216 = vmatprep.subr.mxu0 0.0
  %3217 = vmatpush2.msra.mxu0 0.0
  %3218 = vmatprep.subr.mxu0 0.0
  %3219 = vmatpush2.msra.mxu0 0.0
  %3220 = vmatprep.subr.mxu0 0.0
  %3221 = vmatpush2.msra.mxu0 0.0
  %3222 = vmatprep.subr.mxu0 0.0
  %3223 = vmatpush2.msra.mxu0 0.0
  %3224 = vmatprep.subr.mxu0 0.0
  %3225 = vmatpush2.msra.mxu0 0.0
  %3226 = vmatprep.subr.mxu0 0.0
  %3227 = vmatpush2.msra.mxu0 0.0
  %3228 = vmatprep.mubr.f32.mxu0 0.0
  %3229 = vmatmul.mubr.f32.gmra.mxu0 %v3162
  %v3230 = vpop.f32.mrf.mxu0
  %v3231 = vadd.f32 %v3157, %v3230
  %v3232 = vpop.f32.mrf.mxu0
  %v3233 = vadd.f32 %v3159, %v3232
  %3234 = vdwg.mxu0
  %v3235 = vadd.f32 %v3231, %v61
  %v3236 = vadd.f32 %v3233, %v65
  %v3237 = vmax.f32 %v3235, 0.0
  %v3238 = vmax.f32 %v3236, 0.0
  %v3239 = vld [vmem:[%s6] sm:$0xff]
  %v3240 = vld [vmem:[%s6 + $0x8] sm:$0xff]
  %v3241 = vld [vmem:[%s6 + $0x10] sm:$0xff]
  %v3242 = vld [vmem:[%s6 + $0x18] sm:$0xff]
  %v3243 = vld [vmem:[%s6 + $0x20] sm:$0xff]
  %v3244 = vld [vmem:[%s6 + $0x28] sm:$0xff]
  %v3245 = vld [vmem:[%s6 + $0x30] sm:$0xff]
  %v3246 = vld [vmem:[%s6 + $0x38] sm:$0xff]
  %v3247 = vld [vmem:[%s6 + $0x40] sm:$0xff]
  %v3248 = vld [vmem:[%s6 + $0x48] sm:$0xff]
  %v3249 = vld [vmem:[%s6 + $0x50] sm:$0xff]
  %v3250 = vld [vmem:[%s6 + $0x58] sm:$0xff]
  %v3251 = vld [vmem:[%s6 + $0x60] sm:$0xff]
  %v3252 = vld [vmem:[%s6 + $0x68] sm:$0xff]
  %v3253 = vld [vmem:[%s6 + $0x70] sm:$0xff]
  %v3254 = vld [vmem:[%s6 + $0x78] sm:$0xff]
  %v3255 = vld [vmem:[%s6 + $0x80] sm:$0xff]
  %v3256 = vld [vmem:[%s6 + $0x88] sm:$0xff]
  %v3257 = vld [vmem:[%s6 + $0x90] sm:$0xff]
  %v3258 = vld [vmem:[%s6 + $0x98] sm:$0xff]
  %v3259 = vld [vmem:[%s6 + $0xa0] sm:$0xff]
  %v3260 = vld [vmem:[%s6 + $0xa8] sm:$0xff]
  %v3261 = vld [vmem:[%s6 + $0xb0] sm:$0xff]
  %v3262 = vld [vmem:[%s6 + $0xb8] sm:$0xff]
  %v3263 = vld [vmem:[%s6 + $0xc0] sm:$0xff]
  %v3264 = vld [vmem:[%s6 + $0xc8] sm:$0xff]
  %v3265 = vld [vmem:[%s6 + $0xd0] sm:$0xff]
  %v3266 = vld [vmem:[%s6 + $0xd8] sm:$0xff]
  %v3267 = vld [vmem:[%s6 + $0xe0] sm:$0xff]
  %v3268 = vld [vmem:[%s6 + $0xe8] sm:$0xff]
  %v3269 = vld [vmem:[%s6 + $0xf0] sm:$0xff]
  %v3270 = vld [vmem:[%s6 + $0xf8] sm:$0xff]
  %3271 = vmatprep.subr.mxu0 0.0
  %3272 = vmatpush1.msra.mxu0 %v3254
  %3273 = vmatprep.subr.mxu0 0.0
  %3274 = vmatpush1.msra.mxu0 %v3253
  %3275 = vmatprep.subr.mxu0 0.0
  %3276 = vmatpush1.msra.mxu0 %v3252
  %3277 = vmatprep.subr.mxu0 0.0
  %3278 = vmatpush1.msra.mxu0 %v3251
  %3279 = vmatprep.subr.mxu0 0.0
  %3280 = vmatpush1.msra.mxu0 %v3250
  %3281 = vmatprep.subr.mxu0 0.0
  %3282 = vmatpush1.msra.mxu0 %v3249
  %3283 = vmatprep.subr.mxu0 0.0
  %3284 = vmatpush1.msra.mxu0 %v3248
  %3285 = vmatprep.subr.mxu0 0.0
  %3286 = vmatpush1.msra.mxu0 %v3247
  %3287 = vmatprep.subr.mxu0 0.0
  %3288 = vmatpush1.msra.mxu0 %v3246
  %3289 = vmatprep.subr.mxu0 0.0
  %3290 = vmatpush1.msra.mxu0 %v3245
  %3291 = vmatprep.subr.mxu0 0.0
  %3292 = vmatpush1.msra.mxu0 %v3244
  %3293 = vmatprep.subr.mxu0 0.0
  %3294 = vmatpush1.msra.mxu0 %v3243
  %3295 = vmatprep.subr.mxu0 0.0
  %3296 = vmatpush1.msra.mxu0 %v3242
  %3297 = vmatprep.subr.mxu0 0.0
  %3298 = vmatpush1.msra.mxu0 %v3241
  %3299 = vmatprep.subr.mxu0 0.0
  %3300 = vmatpush1.msra.mxu0 %v3240
  %3301 = vmatprep.subr.mxu0 0.0
  %3302 = vmatpush1.msra.mxu0 %v3239
  %3303 = vmatprep.subr.mxu0 0.0
  %3304 = vmatpush2.msra.mxu0 %v3270
  %3305 = vmatprep.subr.mxu0 0.0
  %3306 = vmatpush2.msra.mxu0 %v3269
  %3307 = vmatprep.subr.mxu0 0.0
  %3308 = vmatpush2.msra.mxu0 %v3268
  %3309 = vmatprep.subr.mxu0 0.0
  %3310 = vmatpush2.msra.mxu0 %v3267
  %3311 = vmatprep.subr.mxu0 0.0
  %3312 = vmatpush2.msra.mxu0 %v3266
  %3313 = vmatprep.subr.mxu0 0.0
  %3314 = vmatpush2.msra.mxu0 %v3265
  %3315 = vmatprep.subr.mxu0 0.0
  %3316 = vmatpush2.msra.mxu0 %v3264
  %3317 = vmatprep.subr.mxu0 0.0
  %3318 = vmatpush2.msra.mxu0 %v3263
  %3319 = vmatprep.subr.mxu0 0.0
  %3320 = vmatpush2.msra.mxu0 %v3262
  %3321 = vmatprep.subr.mxu0 0.0
  %3322 = vmatpush2.msra.mxu0 %v3261
  %3323 = vmatprep.subr.mxu0 0.0
  %3324 = vmatpush2.msra.mxu0 %v3260
  %3325 = vmatprep.subr.mxu0 0.0
  %3326 = vmatpush2.msra.mxu0 %v3259
  %3327 = vmatprep.subr.mxu0 0.0
  %3328 = vmatpush2.msra.mxu0 %v3258
  %3329 = vmatprep.subr.mxu0 0.0
  %3330 = vmatpush2.msra.mxu0 %v3257
  %3331 = vmatprep.subr.mxu0 0.0
  %3332 = vmatpush2.msra.mxu0 %v3256
  %3333 = vmatprep.subr.mxu0 0.0
  %3334 = vmatpush2.msra.mxu0 %v3255
  %3335 = vmatprep.mubr.f32.mxu0 %v3238
  %3336 = vmatmul.mubr.f32.gmra.mxu0 %v3237
  %v3337 = vpop.f32.mrf.mxu0
  %v3338 = vadd.f32 %v73, %v3337
  %v3339 = vpop.f32.mrf.mxu0
  %3340 = vdwg.mxu0
  %v3341 = vmul.f32 %v3338, 0.5
  %v3342 = vmul.f32 %v3341, 1.442695
  %v3343 = vpow.pop %v3342
  %3345 = vrot.lane.b32.xlu0 %v3074, 8
  %v3346 = vpop.permute.xlu0 %3345
  %v3348 = vmul.f32 %v3343, %v3346
  %3350 = vrot.lane.b32.xlu0 %v3348, 120
  %v3351 = vpop.permute.xlu0 %3350
  %v3353 = vadd.f32 %v3338, %v3351
  %v3354 = vld [vmem:[%s8] sm:$0xff]
  %v3355 = vld [vmem:[%s8 + $0x8] sm:$0xff]
  %v3356 = vld [vmem:[%s9] sm:$0xff]
  %v3357 = vld [vmem:[%s9 + $0x8] sm:$0xff]
  %v3358 = vld [vmem:[%s9 + $0x10] sm:$0xff]
  %v3359 = vld [vmem:[%s9 + $0x18] sm:$0xff]
  %3360 = vmatprep.subr.mxu0 0.0
  %3361 = vmatpush1.msra.mxu0 0.0
  %3362 = vmatprep.subr.mxu0 0.0
  %3363 = vmatpush1.msra.mxu0 0.0
  %3364 = vmatprep.subr.mxu0 0.0
  %3365 = vmatpush1.msra.mxu0 0.0
  %3366 = vmatprep.subr.mxu0 0.0
  %3367 = vmatpush1.msra.mxu0 0.0
  %3368 = vmatprep.subr.mxu0 0.0
  %3369 = vmatpush1.msra.mxu0 0.0
  %3370 = vmatprep.subr.mxu0 0.0
  %3371 = vmatpush1.msra.mxu0 0.0
  %3372 = vmatprep.subr.mxu0 0.0
  %3373 = vmatpush1.msra.mxu0 0.0
  %3374 = vmatprep.subr.mxu0 0.0
  %3375 = vmatpush1.msra.mxu0 0.0
  %3376 = vmatprep.subr.mxu0 0.0
  %3377 = vmatpush1.msra.mxu0 0.0
  %3378 = vmatprep.subr.mxu0 0.0
  %3379 = vmatpush1.msra.mxu0 0.0
  %3380 = vmatprep.subr.mxu0 0.0
  %3381 = vmatpush1.msra.mxu0 0.0
  %3382 = vmatprep.subr.mxu0 0.0
  %3383 = vmatpush1.msra.mxu0 0.0
  %3384 = vmatprep.subr.mxu0 0.0
  %3385 = vmatpush1.msra.mxu0 %v3359
  %3386 = vmatprep.subr.mxu0 0.0
  %3387 = vmatpush1.msra.mxu0 %v3358
  %3388 = vmatprep.subr.mxu0 0.0
  %3389 = vmatpush1.msra.mxu0 %v3357
  %3390 = vmatprep.subr.mxu0 0.0
  %3391 = vmatpush1.msra.mxu0 %v3356
  %3392 = vmatprep.subr.mxu0 0.0
  %3393 = vmatpush2.msra.mxu0 0.0
  %3394 = vmatprep.subr.mxu0 0.0
  %3395 = vmatpush2.msra.mxu0 0.0
  %3396 = vmatprep.subr.mxu0 0.0
  %3397 = vmatpush2.msra.mxu0 0.0
  %3398 = vmatprep.subr.mxu0 0.0
  %3399 = vmatpush2.msra.mxu0 0.0
  %3400 = vmatprep.subr.mxu0 0.0
  %3401 = vmatpush2.msra.mxu0 0.0
  %3402 = vmatprep.subr.mxu0 0.0
  %3403 = vmatpush2.msra.mxu0 0.0
  %3404 = vmatprep.subr.mxu0 0.0
  %3405 = vmatpush2.msra.mxu0 0.0
  %3406 = vmatprep.subr.mxu0 0.0
  %3407 = vmatpush2.msra.mxu0 0.0
  %3408 = vmatprep.subr.mxu0 0.0
  %3409 = vmatpush2.msra.mxu0 0.0
  %3410 = vmatprep.subr.mxu0 0.0
  %3411 = vmatpush2.msra.mxu0 0.0
  %3412 = vmatprep.subr.mxu0 0.0
  %3413 = vmatpush2.msra.mxu0 0.0
  %3414 = vmatprep.subr.mxu0 0.0
  %3415 = vmatpush2.msra.mxu0 0.0
  %3416 = vmatprep.subr.mxu0 0.0
  %3417 = vmatpush2.msra.mxu0 0.0
  %3418 = vmatprep.subr.mxu0 0.0
  %3419 = vmatpush2.msra.mxu0 0.0
  %3420 = vmatprep.subr.mxu0 0.0
  %3421 = vmatpush2.msra.mxu0 0.0
  %3422 = vmatprep.subr.mxu0 0.0
  %3423 = vmatpush2.msra.mxu0 0.0
  %3424 = vmatprep.mubr.f32.mxu0 0.0
  %3425 = vmatmul.mubr.f32.gmra.mxu0 %v3088
  %v3426 = vpop.f32.mrf.mxu0
  %v3427 = vadd.f32 0.0, %v3426
  %v3428 = vpop.f32.mrf.mxu0
  %3429 = vdwg.mxu0
  %3430 = vmatprep.subr.mxu0 0.0
  %3431 = vmatpush1.msra.mxu0 0.0
  %3432 = vmatprep.subr.mxu0 0.0
  %3433 = vmatpush1.msra.mxu0 0.0
  %3434 = vmatprep.subr.mxu0 0.0
  %3435 = vmatpush1.msra.mxu0 0.0
  %3436 = vmatprep.subr.mxu0 0.0
  %3437 = vmatpush1.msra.mxu0 0.0
  %3438 = vmatprep.subr.mxu0 0.0
  %3439 = vmatpush1.msra.mxu0 0.0
  %3440 = vmatprep.subr.mxu0 0.0
  %3441 = vmatpush1.msra.mxu0 0.0
  %3442 = vmatprep.subr.mxu0 0.0
  %3443 = vmatpush1.msra.mxu0 0.0
  %3444 = vmatprep.subr.mxu0 0.0
  %3445 = vmatpush1.msra.mxu0 0.0
  %3446 = vmatprep.subr.mxu0 0.0
  %3447 = vmatpush1.msra.mxu0 0.0
  %3448 = vmatprep.subr.mxu0 0.0
  %3449 = vmatpush1.msra.mxu0 0.0
  %3450 = vmatprep.subr.mxu0 0.0
  %3451 = vmatpush1.msra.mxu0 0.0
  %3452 = vmatprep.subr.mxu0 0.0
  %3453 = vmatpush1.msra.mxu0 0.0
  %3454 = vmatprep.subr.mxu0 0.0
  %3455 = vmatpush1.msra.mxu0 0.0
  %3456 = vmatprep.subr.mxu0 0.0
  %3457 = vmatpush1.msra.mxu0 0.0
  %3458 = vmatprep.subr.mxu0 0.0
  %3459 = vmatpush1.msra.mxu0 %v3355
  %3460 = vmatprep.subr.mxu0 0.0
  %3461 = vmatpush1.msra.mxu0 %v3354
  %3462 = vmatprep.subr.mxu0 0.0
  %3463 = vmatpush2.msra.mxu0 0.0
  %3464 = vmatprep.subr.mxu0 0.0
  %3465 = vmatpush2.msra.mxu0 0.0
  %3466 = vmatprep.subr.mxu0 0.0
  %3467 = vmatpush2.msra.mxu0 0.0
  %3468 = vmatprep.subr.mxu0 0.0
  %3469 = vmatpush2.msra.mxu0 0.0
  %3470 = vmatprep.subr.mxu0 0.0
  %3471 = vmatpush2.msra.mxu0 0.0
  %3472 = vmatprep.subr.mxu0 0.0
  %3473 = vmatpush2.msra.mxu0 0.0
  %3474 = vmatprep.subr.mxu0 0.0
  %3475 = vmatpush2.msra.mxu0 0.0
  %3476 = vmatprep.subr.mxu0 0.0
  %3477 = vmatpush2.msra.mxu0 0.0
  %3478 = vmatprep.subr.mxu0 0.0
  %3479 = vmatpush2.msra.mxu0 0.0
  %3480 = vmatprep.subr.mxu0 0.0
  %3481 = vmatpush2.msra.mxu0 0.0
  %3482 = vmatprep.subr.mxu0 0.0
  %3483 = vmatpush2.msra.mxu0 0.0
  %3484 = vmatprep.subr.mxu0 0.0
  %3485 = vmatpush2.msra.mxu0 0.0
  %3486 = vmatprep.subr.mxu0 0.0
  %3487 = vmatpush2.msra.mxu0 0.0
  %3488 = vmatprep.subr.mxu0 0.0
  %3489 = vmatpush2.msra.mxu0 0.0
  %3490 = vmatprep.subr.mxu0 0.0
  %3491 = vmatpush2.msra.mxu0 0.0
  %3492 = vmatprep.subr.mxu0 0.0
  %3493 = vmatpush2.msra.mxu0 0.0
  %3494 = vmatprep.mubr.f32.mxu0 0.0
  %3495 = vmatmul.mubr.f32.gmra.mxu0 %v3162
  %v3496 = vpop.f32.mrf.mxu0
  %v3497 = vadd.f32 %v3427, %v3496
  %v3498 = vpop.f32.mrf.mxu0
  %3499 = vdwg.mxu0
  %v3500 = vld [vmem:[%s10] sm:$0xff]
  %v3502 = vsel %vm532, %v3353, 0
  %3504 = vmatprep.subr.mxu0 0.0
  %3505 = vmatpush1.msra.mxu0 0.0
  %3506 = vmatprep.subr.mxu0 0.0
  %3507 = vmatpush1.msra.mxu0 0.0
  %3508 = vmatprep.subr.mxu0 0.0
  %3509 = vmatpush1.msra.mxu0 0.0
  %3510 = vmatprep.subr.mxu0 0.0
  %3511 = vmatpush1.msra.mxu0 0.0
  %3512 = vmatprep.subr.mxu0 0.0
  %3513 = vmatpush1.msra.mxu0 0.0
  %3514 = vmatprep.subr.mxu0 0.0
  %3515 = vmatpush1.msra.mxu0 0.0
  %3516 = vmatprep.subr.mxu0 0.0
  %3517 = vmatpush1.msra.mxu0 0.0
  %3518 = vmatprep.subr.mxu0 0.0
  %3519 = vmatpush1.msra.mxu0 0.0
  %3520 = vmatprep.subr.mxu0 0.0
  %3521 = vmatpush1.msra.mxu0 0.0
  %3522 = vmatprep.subr.mxu0 0.0
  %3523 = vmatpush1.msra.mxu0 0.0
  %3524 = vmatprep.subr.mxu0 0.0
  %3525 = vmatpush1.msra.mxu0 0.0
  %3526 = vmatprep.subr.mxu0 0.0
  %3527 = vmatpush1.msra.mxu0 0.0
  %3528 = vmatprep.subr.mxu0 0.0
  %3529 = vmatpush1.msra.mxu0 0.0
  %3530 = vmatprep.subr.mxu0 0.0
  %3531 = vmatpush1.msra.mxu0 0.0
  %3532 = vmatprep.subr.mxu0 0.0
  %3533 = vmatpush1.msra.mxu0 0.0
  %3534 = vmatprep.subr.mxu0 0.0
  %3535 = vmatpush1.msra.mxu0 %v3500
  %3536 = vmatprep.subr.mxu0 0.0
  %3537 = vmatpush2.msra.mxu0 0.0
  %3538 = vmatprep.subr.mxu0 0.0
  %3539 = vmatpush2.msra.mxu0 0.0
  %3540 = vmatprep.subr.mxu0 0.0
  %3541 = vmatpush2.msra.mxu0 0.0
  %3542 = vmatprep.subr.mxu0 0.0
  %3543 = vmatpush2.msra.mxu0 0.0
  %3544 = vmatprep.subr.mxu0 0.0
  %3545 = vmatpush2.msra.mxu0 0.0
  %3546 = vmatprep.subr.mxu0 0.0
  %3547 = vmatpush2.msra.mxu0 0.0
  %3548 = vmatprep.subr.mxu0 0.0
  %3549 = vmatpush2.msra.mxu0 0.0
  %3550 = vmatprep.subr.mxu0 0.0
  %3551 = vmatpush2.msra.mxu0 0.0
  %3552 = vmatprep.subr.mxu0 0.0
  %3553 = vmatpush2.msra.mxu0 0.0
  %3554 = vmatprep.subr.mxu0 0.0
  %3555 = vmatpush2.msra.mxu0 0.0
  %3556 = vmatprep.subr.mxu0 0.0
  %3557 = vmatpush2.msra.mxu0 0.0
  %3558 = vmatprep.subr.mxu0 0.0
  %3559 = vmatpush2.msra.mxu0 0.0
  %3560 = vmatprep.subr.mxu0 0.0
  %3561 = vmatpush2.msra.mxu0 0.0
  %3562 = vmatprep.subr.mxu0 0.0
  %3563 = vmatpush2.msra.mxu0 0.0
  %3564 = vmatprep.subr.mxu0 0.0
  %3565 = vmatpush2.msra.mxu0 0.0
  %3566 = vmatprep.subr.mxu0 0.0
  %3567 = vmatpush2.msra.mxu0 0.0
  %3568 = vmatprep.mubr.f32.mxu0 0.0
  %3569 = vmatmul.mubr.f32.gmra.mxu0 %v3502
  %v3570 = vpop.f32.mrf.mxu0
  %v3571 = vadd.f32 0.0, %v3570
  %v3572 = vpop.f32.mrf.mxu0
  %3573 = vdwg.mxu0
  %v3574 = vadd.f32 %v3497, %v3571
  %v3575 = vadd.f32 %v3574, %v80
  %v3576 = vmax.f32 %v3575, 0.0
  %v3577 = vld [vmem:[%s12] sm:$0xff]
  %v3578 = vld [vmem:[%s12 + $0x8] sm:$0xff]
  %v3579 = vld [vmem:[%s12 + $0x10] sm:$0xff]
  %v3580 = vld [vmem:[%s12 + $0x18] sm:$0xff]
  %v3581 = vld [vmem:[%s12 + $0x20] sm:$0xff]
  %v3582 = vld [vmem:[%s12 + $0x28] sm:$0xff]
  %v3583 = vld [vmem:[%s12 + $0x30] sm:$0xff]
  %v3584 = vld [vmem:[%s12 + $0x38] sm:$0xff]
  %v3586 = vsel %vm617, %v3576, 0
  %3588 = vmatprep.subr.mxu0 0.0
  %3589 = vmatpush1.msra.mxu0 0.0
  %3590 = vmatprep.subr.mxu0 0.0
  %3591 = vmatpush1.msra.mxu0 0.0
  %3592 = vmatprep.subr.mxu0 0.0
  %3593 = vmatpush1.msra.mxu0 0.0
  %3594 = vmatprep.subr.mxu0 0.0
  %3595 = vmatpush1.msra.mxu0 0.0
  %3596 = vmatprep.subr.mxu0 0.0
  %3597 = vmatpush1.msra.mxu0 0.0
  %3598 = vmatprep.subr.mxu0 0.0
  %3599 = vmatpush1.msra.mxu0 0.0
  %3600 = vmatprep.subr.mxu0 0.0
  %3601 = vmatpush1.msra.mxu0 0.0
  %3602 = vmatprep.subr.mxu0 0.0
  %3603 = vmatpush1.msra.mxu0 0.0
  %3604 = vmatprep.subr.mxu0 0.0
  %3605 = vmatpush1.msra.mxu0 %v3584
  %3606 = vmatprep.subr.mxu0 0.0
  %3607 = vmatpush1.msra.mxu0 %v3583
  %3608 = vmatprep.subr.mxu0 0.0
  %3609 = vmatpush1.msra.mxu0 %v3582
  %3610 = vmatprep.subr.mxu0 0.0
  %3611 = vmatpush1.msra.mxu0 %v3581
  %3612 = vmatprep.subr.mxu0 0.0
  %3613 = vmatpush1.msra.mxu0 %v3580
  %3614 = vmatprep.subr.mxu0 0.0
  %3615 = vmatpush1.msra.mxu0 %v3579
  %3616 = vmatprep.subr.mxu0 0.0
  %3617 = vmatpush1.msra.mxu0 %v3578
  %3618 = vmatprep.subr.mxu0 0.0
  %3619 = vmatpush1.msra.mxu0 %v3577
  %3620 = vmatprep.subr.mxu0 0.0
  %3621 = vmatpush2.msra.mxu0 0.0
  %3622 = vmatprep.subr.mxu0 0.0
  %3623 = vmatpush2.msra.mxu0 0.0
  %3624 = vmatprep.subr.mxu0 0.0
  %3625 = vmatpush2.msra.mxu0 0.0
  %3626 = vmatprep.subr.mxu0 0.0
  %3627 = vmatpush2.msra.mxu0 0.0
  %3628 = vmatprep.subr.mxu0 0.0
  %3629 = vmatpush2.msra.mxu0 0.0
  %3630 = vmatprep.subr.mxu0 0.0
  %3631 = vmatpush2.msra.mxu0 0.0
  %3632 = vmatprep.subr.mxu0 0.0
  %3633 = vmatpush2.msra.mxu0 0.0
  %3634 = vmatprep.subr.mxu0 0.0
  %3635 = vmatpush2.msra.mxu0 0.0
  %3636 = vmatprep.subr.mxu0 0.0
  %3637 = vmatpush2.msra.mxu0 0.0
  %3638 = vmatprep.subr.mxu0 0.0
  %3639 = vmatpush2.msra.mxu0 0.0
  %3640 = vmatprep.subr.mxu0 0.0
  %3641 = vmatpush2.msra.mxu0 0.0
  %3642 = vmatprep.subr.mxu0 0.0
  %3643 = vmatpush2.msra.mxu0 0.0
  %3644 = vmatprep.subr.mxu0 0.0
  %3645 = vmatpush2.msra.mxu0 0.0
  %3646 = vmatprep.subr.mxu0 0.0
  %3647 = vmatpush2.msra.mxu0 0.0
  %3648 = vmatprep.subr.mxu0 0.0
  %3649 = vmatpush2.msra.mxu0 0.0
  %3650 = vmatprep.subr.mxu0 0.0
  %3651 = vmatpush2.msra.mxu0 0.0
  %3652 = vmatprep.mubr.f32.mxu0 0.0
  %3653 = vmatmul.mubr.f32.gmra.mxu0 %v3586
  %v3654 = vpop.f32.mrf.mxu0
  %v3655 = vadd.f32 %v87, %v3654
  %v3656 = vpop.f32.mrf.mxu0
  %3657 = vdwg.mxu0
  %v3658 = vld [vmem:[%s14] sm:$0xff]
  %v3659 = vld [vmem:[%s14 + $0x8] sm:$0xff]
  %v3660 = vld [vmem:[%s14 + $0x10] sm:$0xff]
  %v3661 = vld [vmem:[%s14 + $0x18] sm:$0xff]
  %v3662 = vld [vmem:[%s15] sm:$0xff]
  %3663 = vmatprep.subr.mxu0 0.0
  %3664 = vmatpush1.msra.mxu0 0.0
  %3665 = vmatprep.subr.mxu0 0.0
  %3666 = vmatpush1.msra.mxu0 0.0
  %3667 = vmatprep.subr.mxu0 0.0
  %3668 = vmatpush1.msra.mxu0 0.0
  %3669 = vmatprep.subr.mxu0 0.0
  %3670 = vmatpush1.msra.mxu0 0.0
  %3671 = vmatprep.subr.mxu0 0.0
  %3672 = vmatpush1.msra.mxu0 0.0
  %3673 = vmatprep.subr.mxu0 0.0
  %3674 = vmatpush1.msra.mxu0 0.0
  %3675 = vmatprep.subr.mxu0 0.0
  %3676 = vmatpush1.msra.mxu0 0.0
  %3677 = vmatprep.subr.mxu0 0.0
  %3678 = vmatpush1.msra.mxu0 0.0
  %3679 = vmatprep.subr.mxu0 0.0
  %3680 = vmatpush1.msra.mxu0 0.0
  %3681 = vmatprep.subr.mxu0 0.0
  %3682 = vmatpush1.msra.mxu0 0.0
  %3683 = vmatprep.subr.mxu0 0.0
  %3684 = vmatpush1.msra.mxu0 0.0
  %3685 = vmatprep.subr.mxu0 0.0
  %3686 = vmatpush1.msra.mxu0 0.0
  %3687 = vmatprep.subr.mxu0 0.0
  %3688 = vmatpush1.msra.mxu0 0.0
  %3689 = vmatprep.subr.mxu0 0.0
  %3690 = vmatpush1.msra.mxu0 0.0
  %3691 = vmatprep.subr.mxu0 0.0
  %3692 = vmatpush1.msra.mxu0 0.0
  %3693 = vmatprep.subr.mxu0 0.0
  %3694 = vmatpush1.msra.mxu0 %v3662
  %3695 = vmatprep.subr.mxu0 0.0
  %3696 = vmatpush2.msra.mxu0 0.0
  %3697 = vmatprep.subr.mxu0 0.0
  %3698 = vmatpush2.msra.mxu0 0.0
  %3699 = vmatprep.subr.mxu0 0.0
  %3700 = vmatpush2.msra.mxu0 0.0
  %3701 = vmatprep.subr.mxu0 0.0
  %3702 = vmatpush2.msra.mxu0 0.0
  %3703 = vmatprep.subr.mxu0 0.0
  %3704 = vmatpush2.msra.mxu0 0.0
  %3705 = vmatprep.subr.mxu0 0.0
  %3706 = vmatpush2.msra.mxu0 0.0
  %3707 = vmatprep.subr.mxu0 0.0
  %3708 = vmatpush2.msra.mxu0 0.0
  %3709 = vmatprep.subr.mxu0 0.0
  %3710 = vmatpush2.msra.mxu0 0.0
  %3711 = vmatprep.subr.mxu0 0.0
  %3712 = vmatpush2.msra.mxu0 0.0
  %3713 = vmatprep.subr.mxu0 0.0
  %3714 = vmatpush2.msra.mxu0 0.0
  %3715 = vmatprep.subr.mxu0 0.0
  %3716 = vmatpush2.msra.mxu0 0.0
  %3717 = vmatprep.subr.mxu0 0.0
  %3718 = vmatpush2.msra.mxu0 0.0
  %3719 = vmatprep.subr.mxu0 0.0
  %3720 = vmatpush2.msra.mxu0 0.0
  %3721 = vmatprep.subr.mxu0 0.0
  %3722 = vmatpush2.msra.mxu0 0.0
  %3723 = vmatprep.subr.mxu0 0.0
  %3724 = vmatpush2.msra.mxu0 0.0
  %3725 = vmatprep.subr.mxu0 0.0
  %3726 = vmatpush2.msra.mxu0 0.0
  %3727 = vmatprep.mubr.f32.mxu0 0.0
  %3728 = vmatmul.mubr.f32.gmra.mxu0 %v3502
  %v3729 = vpop.f32.mrf.mxu0
  %v3730 = vadd.f32 0.0, %v3729
  %v3731 = vpop.f32.mrf.mxu0
  %3732 = vdwg.mxu0
  %3733 = vmatprep.subr.mxu0 0.0
  %3734 = vmatpush1.msra.mxu0 0.0
  %3735 = vmatprep.subr.mxu0 0.0
  %3736 = vmatpush1.msra.mxu0 0.0
  %3737 = vmatprep.subr.mxu0 0.0
  %3738 = vmatpush1.msra.mxu0 0.0
  %3739 = vmatprep.subr.mxu0 0.0
  %3740 = vmatpush1.msra.mxu0 0.0
  %3741 = vmatprep.subr.mxu0 0.0
  %3742 = vmatpush1.msra.mxu0 0.0
  %3743 = vmatprep.subr.mxu0 0.0
  %3744 = vmatpush1.msra.mxu0 0.0
  %3745 = vmatprep.subr.mxu0 0.0
  %3746 = vmatpush1.msra.mxu0 0.0
  %3747 = vmatprep.subr.mxu0 0.0
  %3748 = vmatpush1.msra.mxu0 0.0
  %3749 = vmatprep.subr.mxu0 0.0
  %3750 = vmatpush1.msra.mxu0 0.0
  %3751 = vmatprep.subr.mxu0 0.0
  %3752 = vmatpush1.msra.mxu0 0.0
  %3753 = vmatprep.subr.mxu0 0.0
  %3754 = vmatpush1.msra.mxu0 0.0
  %3755 = vmatprep.subr.mxu0 0.0
  %3756 = vmatpush1.msra.mxu0 0.0
  %3757 = vmatprep.subr.mxu0 0.0
  %3758 = vmatpush1.msra.mxu0 %v3661
  %3759 = vmatprep.subr.mxu0 0.0
  %3760 = vmatpush1.msra.mxu0 %v3660
  %3761 = vmatprep.subr.mxu0 0.0
  %3762 = vmatpush1.msra.mxu0 %v3659
  %3763 = vmatprep.subr.mxu0 0.0
  %3764 = vmatpush1.msra.mxu0 %v3658
  %3765 = vmatprep.subr.mxu0 0.0
  %3766 = vmatpush2.msra.mxu0 0.0
  %3767 = vmatprep.subr.mxu0 0.0
  %3768 = vmatpush2.msra.mxu0 0.0
  %3769 = vmatprep.subr.mxu0 0.0
  %3770 = vmatpush2.msra.mxu0 0.0
  %3771 = vmatprep.subr.mxu0 0.0
  %3772 = vmatpush2.msra.mxu0 0.0
  %3773 = vmatprep.subr.mxu0 0.0
  %3774 = vmatpush2.msra.mxu0 0.0
  %3775 = vmatprep.subr.mxu0 0.0
  %3776 = vmatpush2.msra.mxu0 0.0
  %3777 = vmatprep.subr.mxu0 0.0
  %3778 = vmatpush2.msra.mxu0 0.0
  %3779 = vmatprep.subr.mxu0 0.0
  %3780 = vmatpush2.msra.mxu0 0.0
  %3781 = vmatprep.subr.mxu0 0.0
  %3782 = vmatpush2.msra.mxu0 0.0
  %3783 = vmatprep.subr.mxu0 0.0
  %3784 = vmatpush2.msra.mxu0 0.0
  %3785 = vmatprep.subr.mxu0 0.0
  %3786 = vmatpush2.msra.mxu0 0.0
  %3787 = vmatprep.subr.mxu0 0.0
  %3788 = vmatpush2.msra.mxu0 0.0
  %3789 = vmatprep.subr.mxu0 0.0
  %3790 = vmatpush2.msra.mxu0 0.0
  %3791 = vmatprep.subr.mxu0 0.0
  %3792 = vmatpush2.msra.mxu0 0.0
  %3793 = vmatprep.subr.mxu0 0.0
  %3794 = vmatpush2.msra.mxu0 0.0
  %3795 = vmatprep.subr.mxu0 0.0
  %3796 = vmatpush2.msra.mxu0 0.0
  %3797 = vmatprep.mubr.f32.mxu0 0.0
  %3798 = vmatmul.mubr.f32.gmra.mxu0 %v3088
  %v3799 = vpop.f32.mrf.mxu0
  %v3800 = vadd.f32 %v3730, %v3799
  %v3801 = vpop.f32.mrf.mxu0
  %3802 = vdwg.mxu0
  %v3803 = vadd.f32 %v3800, %v94
  %v3804 = vxor.u32 %v3803, 2147483648
  %v3805 = vmul.f32 %v3804, 1.442695
  %v3806 = vpow.pop %v3805
  %v3807 = vadd.f32 %v3806, 1.0
  %v3808 = vrcp.pop %v3807
  %v3809 = vmul.f32 1.0, %v3808
  %v3810 = vsel %vm100, %v3809, %v3338
  %s3811 = scalar_lea.vmem %s17, 32
  %3812 = vst [vmem:[%s3811] sm:$0xff] %v3810
  %s3813 = scalar_lea.vmem %s0, 40
  %v3814 = vld [vmem:[%s3813] sm:$0xff]
  %s3815 = scalar_lea.vmem %s1, 40
  %v3816 = vld [vmem:[%s3815] sm:$0xff]
  %v3817 = vld [vmem:[%s3] sm:$0xff]
  %v3818 = vld [vmem:[%s3 + $0x8] sm:$0xff]
  %v3819 = vld [vmem:[%s3 + $0x10] sm:$0xff]
  %v3820 = vld [vmem:[%s3 + $0x18] sm:$0xff]
  %v3821 = vld [vmem:[%s4] sm:$0xff]
  %v3822 = vld [vmem:[%s4 + $0x8] sm:$0xff]
  %v3823 = vld [vmem:[%s4 + $0x10] sm:$0xff]
  %v3824 = vld [vmem:[%s4 + $0x18] sm:$0xff]
  %v3825 = vld [vmem:[%s4 + $0x20] sm:$0xff]
  %v3826 = vld [vmem:[%s4 + $0x28] sm:$0xff]
  %v3827 = vld [vmem:[%s4 + $0x30] sm:$0xff]
  %v3828 = vld [vmem:[%s4 + $0x38] sm:$0xff]
  %v3830 = vsel %vm116, %v3655, 0
  %3832 = vmatprep.subr.mxu0 0.0
  %3833 = vmatpush1.msra.mxu0 0.0
  %3834 = vmatprep.subr.mxu0 0.0
  %3835 = vmatpush1.msra.mxu0 0.0
  %3836 = vmatprep.subr.mxu0 0.0
  %3837 = vmatpush1.msra.mxu0 0.0
  %3838 = vmatprep.subr.mxu0 0.0
  %3839 = vmatpush1.msra.mxu0 0.0
  %3840 = vmatprep.subr.mxu0 0.0
  %3841 = vmatpush1.msra.mxu0 0.0
  %3842 = vmatprep.subr.mxu0 0.0
  %3843 = vmatpush1.msra.mxu0 0.0
  %3844 = vmatprep.subr.mxu0 0.0
  %3845 = vmatpush1.msra.mxu0 0.0
  %3846 = vmatprep.subr.mxu0 0.0
  %3847 = vmatpush1.msra.mxu0 0.0
  %3848 = vmatprep.subr.mxu0 0.0
  %3849 = vmatpush1.msra.mxu0 0.0
  %3850 = vmatprep.subr.mxu0 0.0
  %3851 = vmatpush1.msra.mxu0 0.0
  %3852 = vmatprep.subr.mxu0 0.0
  %3853 = vmatpush1.msra.mxu0 0.0
  %3854 = vmatprep.subr.mxu0 0.0
  %3855 = vmatpush1.msra.mxu0 0.0
  %3856 = vmatprep.subr.mxu0 %v3828
  %3857 = vmatpush1.msra.mxu0 %v3827
  %3858 = vmatprep.subr.mxu0 %v3826
  %3859 = vmatpush1.msra.mxu0 %v3825
  %3860 = vmatprep.subr.mxu0 %v3824
  %3861 = vmatpush1.msra.mxu0 %v3823
  %3862 = vmatprep.subr.mxu0 %v3822
  %3863 = vmatpush1.msra.mxu0 %v3821
  %3864 = vmatprep.subr.mxu0 0.0
  %3865 = vmatpush2.msra.mxu0 0.0
  %3866 = vmatprep.subr.mxu0 0.0
  %3867 = vmatpush2.msra.mxu0 0.0
  %3868 = vmatprep.subr.mxu0 0.0
  %3869 = vmatpush2.msra.mxu0 0.0
  %3870 = vmatprep.subr.mxu0 0.0
  %3871 = vmatpush2.msra.mxu0 0.0
  %3872 = vmatprep.subr.mxu0 0.0
  %3873 = vmatpush2.msra.mxu0 0.0
  %3874 = vmatprep.subr.mxu0 0.0
  %3875 = vmatpush2.msra.mxu0 0.0
  %3876 = vmatprep.subr.mxu0 0.0
  %3877 = vmatpush2.msra.mxu0 0.0
  %3878 = vmatprep.subr.mxu0 0.0
  %3879 = vmatpush2.msra.mxu0 0.0
  %3880 = vmatprep.subr.mxu0 0.0
  %3881 = vmatpush2.msra.mxu0 0.0
  %3882 = vmatprep.subr.mxu0 0.0
  %3883 = vmatpush2.msra.mxu0 0.0
  %3884 = vmatprep.subr.mxu0 0.0
  %3885 = vmatpush2.msra.mxu0 0.0
  %3886 = vmatprep.subr.mxu0 0.0
  %3887 = vmatpush2.msra.mxu0 0.0
  %3888 = vmatprep.subr.mxu0 0.0
  %3889 = vmatpush2.msra.mxu0 0.0
  %3890 = vmatprep.subr.mxu0 0.0
  %3891 = vmatpush2.msra.mxu0 0.0
  %3892 = vmatprep.subr.mxu0 0.0
  %3893 = vmatpush2.msra.mxu0 0.0
  %3894 = vmatprep.subr.mxu0 0.0
  %3895 = vmatpush2.msra.mxu0 0.0
  %3896 = vmatprep.mubr.f32.mxu0 0.0
  %3897 = vmatmul.mubr.f32.gmra.mxu0 %v3830
  %v3898 = vpop.f32.mrf.mxu0
  %v3899 = vadd.f32 0.0, %v3898
  %v3900 = vpop.f32.mrf.mxu0
  %v3901 = vadd.f32 0.0, %v3900
  %3902 = vdwg.mxu0
  %v3904 = vsel %vm191, %v3814, 0
  %3906 = vmatprep.subr.mxu0 0.0
  %3907 = vmatpush1.msra.mxu0 0.0
  %3908 = vmatprep.subr.mxu0 0.0
  %3909 = vmatpush1.msra.mxu0 0.0
  %3910 = vmatprep.subr.mxu0 0.0
  %3911 = vmatpush1.msra.mxu0 0.0
  %3912 = vmatprep.subr.mxu0 0.0
  %3913 = vmatpush1.msra.mxu0 0.0
  %3914 = vmatprep.subr.mxu0 0.0
  %3915 = vmatpush1.msra.mxu0 0.0
  %3916 = vmatprep.subr.mxu0 0.0
  %3917 = vmatpush1.msra.mxu0 0.0
  %3918 = vmatprep.subr.mxu0 0.0
  %3919 = vmatpush1.msra.mxu0 0.0
  %3920 = vmatprep.subr.mxu0 0.0
  %3921 = vmatpush1.msra.mxu0 0.0
  %3922 = vmatprep.subr.mxu0 0.0
  %3923 = vmatpush1.msra.mxu0 0.0
  %3924 = vmatprep.subr.mxu0 0.0
  %3925 = vmatpush1.msra.mxu0 0.0
  %3926 = vmatprep.subr.mxu0 0.0
  %3927 = vmatpush1.msra.mxu0 0.0
  %3928 = vmatprep.subr.mxu0 0.0
  %3929 = vmatpush1.msra.mxu0 0.0
  %3930 = vmatprep.subr.mxu0 0.0
  %3931 = vmatpush1.msra.mxu0 0.0
  %3932 = vmatprep.subr.mxu0 0.0
  %3933 = vmatpush1.msra.mxu0 0.0
  %3934 = vmatprep.subr.mxu0 %v3820
  %3935 = vmatpush1.msra.mxu0 %v3819
  %3936 = vmatprep.subr.mxu0 %v3818
  %3937 = vmatpush1.msra.mxu0 %v3817
  %3938 = vmatprep.subr.mxu0 0.0
  %3939 = vmatpush2.msra.mxu0 0.0
  %3940 = vmatprep.subr.mxu0 0.0
  %3941 = vmatpush2.msra.mxu0 0.0
  %3942 = vmatprep.subr.mxu0 0.0
  %3943 = vmatpush2.msra.mxu0 0.0
  %3944 = vmatprep.subr.mxu0 0.0
  %3945 = vmatpush2.msra.mxu0 0.0
  %3946 = vmatprep.subr.mxu0 0.0
  %3947 = vmatpush2.msra.mxu0 0.0
  %3948 = vmatprep.subr.mxu0 0.0
  %3949 = vmatpush2.msra.mxu0 0.0
  %3950 = vmatprep.subr.mxu0 0.0
  %3951 = vmatpush2.msra.mxu0 0.0
  %3952 = vmatprep.subr.mxu0 0.0
  %3953 = vmatpush2.msra.mxu0 0.0
  %3954 = vmatprep.subr.mxu0 0.0
  %3955 = vmatpush2.msra.mxu0 0.0
  %3956 = vmatprep.subr.mxu0 0.0
  %3957 = vmatpush2.msra.mxu0 0.0
  %3958 = vmatprep.subr.mxu0 0.0
  %3959 = vmatpush2.msra.mxu0 0.0
  %3960 = vmatprep.subr.mxu0 0.0
  %3961 = vmatpush2.msra.mxu0 0.0
  %3962 = vmatprep.subr.mxu0 0.0
  %3963 = vmatpush2.msra.mxu0 0.0
  %3964 = vmatprep.subr.mxu0 0.0
  %3965 = vmatpush2.msra.mxu0 0.0
  %3966 = vmatprep.subr.mxu0 0.0
  %3967 = vmatpush2.msra.mxu0 0.0
  %3968 = vmatprep.subr.mxu0 0.0
  %3969 = vmatpush2.msra.mxu0 0.0
  %3970 = vmatprep.mubr.f32.mxu0 0.0
  %3971 = vmatmul.mubr.f32.gmra.mxu0 %v3904
  %v3972 = vpop.f32.mrf.mxu0
  %v3973 = vadd.f32 %v3899, %v3972
  %v3974 = vpop.f32.mrf.mxu0
  %v3975 = vadd.f32 %v3901, %v3974
  %3976 = vdwg.mxu0
  %v3977 = vadd.f32 %v3973, %v61
  %v3978 = vadd.f32 %v3975, %v65
  %v3979 = vmax.f32 %v3977, 0.0
  %v3980 = vmax.f32 %v3978, 0.0
  %v3981 = vld [vmem:[%s6] sm:$0xff]
  %v3982 = vld [vmem:[%s6 + $0x8] sm:$0xff]
  %v3983 = vld [vmem:[%s6 + $0x10] sm:$0xff]
  %v3984 = vld [vmem:[%s6 + $0x18] sm:$0xff]
  %v3985 = vld [vmem:[%s6 + $0x20] sm:$0xff]
  %v3986 = vld [vmem:[%s6 + $0x28] sm:$0xff]
  %v3987 = vld [vmem:[%s6 + $0x30] sm:$0xff]
  %v3988 = vld [vmem:[%s6 + $0x38] sm:$0xff]
  %v3989 = vld [vmem:[%s6 + $0x40] sm:$0xff]
  %v3990 = vld [vmem:[%s6 + $0x48] sm:$0xff]
  %v3991 = vld [vmem:[%s6 + $0x50] sm:$0xff]
  %v3992 = vld [vmem:[%s6 + $0x58] sm:$0xff]
  %v3993 = vld [vmem:[%s6 + $0x60] sm:$0xff]
  %v3994 = vld [vmem:[%s6 + $0x68] sm:$0xff]
  %v3995 = vld [vmem:[%s6 + $0x70] sm:$0xff]
  %v3996 = vld [vmem:[%s6 + $0x78] sm:$0xff]
  %v3997 = vld [vmem:[%s6 + $0x80] sm:$0xff]
  %v3998 = vld [vmem:[%s6 + $0x88] sm:$0xff]
  %v3999 = vld [vmem:[%s6 + $0x90] sm:$0xff]
  %v4000 = vld [vmem:[%s6 + $0x98] sm:$0xff]
  %v4001 = vld [vmem:[%s6 + $0xa0] sm:$0xff]
  %v4002 = vld [vmem:[%s6 + $0xa8] sm:$0xff]
  %v4003 = vld [vmem:[%s6 + $0xb0] sm:$0xff]
  %v4004 = vld [vmem:[%s6 + $0xb8] sm:$0xff]
  %v4005 = vld [vmem:[%s6 + $0xc0] sm:$0xff]
  %v4006 = vld [vmem:[%s6 + $0xc8] sm:$0xff]
  %v4007 = vld [vmem:[%s6 + $0xd0] sm:$0xff]
  %v4008 = vld [vmem:[%s6 + $0xd8] sm:$0xff]
  %v4009 = vld [vmem:[%s6 + $0xe0] sm:$0xff]
  %v4010 = vld [vmem:[%s6 + $0xe8] sm:$0xff]
  %v4011 = vld [vmem:[%s6 + $0xf0] sm:$0xff]
  %v4012 = vld [vmem:[%s6 + $0xf8] sm:$0xff]
  %4013 = vmatprep.subr.mxu0 0.0
  %4014 = vmatpush1.msra.mxu0 %v3996
  %4015 = vmatprep.subr.mxu0 0.0
  %4016 = vmatpush1.msra.mxu0 %v3995
  %4017 = vmatprep.subr.mxu0 0.0
  %4018 = vmatpush1.msra.mxu0 %v3994
  %4019 = vmatprep.subr.mxu0 0.0
  %4020 = vmatpush1.msra.mxu0 %v3993
  %4021 = vmatprep.subr.mxu0 0.0
  %4022 = vmatpush1.msra.mxu0 %v3992
  %4023 = vmatprep.subr.mxu0 0.0
  %4024 = vmatpush1.msra.mxu0 %v3991
  %4025 = vmatprep.subr.mxu0 0.0
  %4026 = vmatpush1.msra.mxu0 %v3990
  %4027 = vmatprep.subr.mxu0 0.0
  %4028 = vmatpush1.msra.mxu0 %v3989
  %4029 = vmatprep.subr.mxu0 0.0
  %4030 = vmatpush1.msra.mxu0 %v3988
  %4031 = vmatprep.subr.mxu0 0.0
  %4032 = vmatpush1.msra.mxu0 %v3987
  %4033 = vmatprep.subr.mxu0 0.0
  %4034 = vmatpush1.msra.mxu0 %v3986
  %4035 = vmatprep.subr.mxu0 0.0
  %4036 = vmatpush1.msra.mxu0 %v3985
  %4037 = vmatprep.subr.mxu0 0.0
  %4038 = vmatpush1.msra.mxu0 %v3984
  %4039 = vmatprep.subr.mxu0 0.0
  %4040 = vmatpush1.msra.mxu0 %v3983
  %4041 = vmatprep.subr.mxu0 0.0
  %4042 = vmatpush1.msra.mxu0 %v3982
  %4043 = vmatprep.subr.mxu0 0.0
  %4044 = vmatpush1.msra.mxu0 %v3981
  %4045 = vmatprep.subr.mxu0 0.0
  %4046 = vmatpush2.msra.mxu0 %v4012
  %4047 = vmatprep.subr.mxu0 0.0
  %4048 = vmatpush2.msra.mxu0 %v4011
  %4049 = vmatprep.subr.mxu0 0.0
  %4050 = vmatpush2.msra.mxu0 %v4010
  %4051 = vmatprep.subr.mxu0 0.0
  %4052 = vmatpush2.msra.mxu0 %v4009
  %4053 = vmatprep.subr.mxu0 0.0
  %4054 = vmatpush2.msra.mxu0 %v4008
  %4055 = vmatprep.subr.mxu0 0.0
  %4056 = vmatpush2.msra.mxu0 %v4007
  %4057 = vmatprep.subr.mxu0 0.0
  %4058 = vmatpush2.msra.mxu0 %v4006
  %4059 = vmatprep.subr.mxu0 0.0
  %4060 = vmatpush2.msra.mxu0 %v4005
  %4061 = vmatprep.subr.mxu0 0.0
  %4062 = vmatpush2.msra.mxu0 %v4004
  %4063 = vmatprep.subr.mxu0 0.0
  %4064 = vmatpush2.msra.mxu0 %v4003
  %4065 = vmatprep.subr.mxu0 0.0
  %4066 = vmatpush2.msra.mxu0 %v4002
  %4067 = vmatprep.subr.mxu0 0.0
  %4068 = vmatpush2.msra.mxu0 %v4001
  %4069 = vmatprep.subr.mxu0 0.0
  %4070 = vmatpush2.msra.mxu0 %v4000
  %4071 = vmatprep.subr.mxu0 0.0
  %4072 = vmatpush2.msra.mxu0 %v3999
  %4073 = vmatprep.subr.mxu0 0.0
  %4074 = vmatpush2.msra.mxu0 %v3998
  %4075 = vmatprep.subr.mxu0 0.0
  %4076 = vmatpush2.msra.mxu0 %v3997
  %4077 = vmatprep.mubr.f32.mxu0 %v3980
  %4078 = vmatmul.mubr.f32.gmra.mxu0 %v3979
  %v4079 = vpop.f32.mrf.mxu0
  %v4080 = vadd.f32 %v73, %v4079
  %v4081 = vpop.f32.mrf.mxu0
  %4082 = vdwg.mxu0
  %v4083 = vmul.f32 %v4080, 0.5
  %v4084 = vmul.f32 %v4083, 1.442695
  %v4085 = vpow.pop %v4084
  %4087 = vrot.lane.b32.xlu0 %v3816, 8
  %v4088 = vpop.permute.xlu0 %4087
  %v4090 = vmul.f32 %v4085, %v4088
  %4092 = vrot.lane.b32.xlu0 %v4090, 120
  %v4093 = vpop.permute.xlu0 %4092
  %v4095 = vadd.f32 %v4080, %v4093
  %v4096 = vld [vmem:[%s8] sm:$0xff]
  %v4097 = vld [vmem:[%s8 + $0x8] sm:$0xff]
  %v4098 = vld [vmem:[%s9] sm:$0xff]
  %v4099 = vld [vmem:[%s9 + $0x8] sm:$0xff]
  %v4100 = vld [vmem:[%s9 + $0x10] sm:$0xff]
  %v4101 = vld [vmem:[%s9 + $0x18] sm:$0xff]
  %4102 = vmatprep.subr.mxu0 0.0
  %4103 = vmatpush1.msra.mxu0 0.0
  %4104 = vmatprep.subr.mxu0 0.0
  %4105 = vmatpush1.msra.mxu0 0.0
  %4106 = vmatprep.subr.mxu0 0.0
  %4107 = vmatpush1.msra.mxu0 0.0
  %4108 = vmatprep.subr.mxu0 0.0
  %4109 = vmatpush1.msra.mxu0 0.0
  %4110 = vmatprep.subr.mxu0 0.0
  %4111 = vmatpush1.msra.mxu0 0.0
  %4112 = vmatprep.subr.mxu0 0.0
  %4113 = vmatpush1.msra.mxu0 0.0
  %4114 = vmatprep.subr.mxu0 0.0
  %4115 = vmatpush1.msra.mxu0 0.0
  %4116 = vmatprep.subr.mxu0 0.0
  %4117 = vmatpush1.msra.mxu0 0.0
  %4118 = vmatprep.subr.mxu0 0.0
  %4119 = vmatpush1.msra.mxu0 0.0
  %4120 = vmatprep.subr.mxu0 0.0
  %4121 = vmatpush1.msra.mxu0 0.0
  %4122 = vmatprep.subr.mxu0 0.0
  %4123 = vmatpush1.msra.mxu0 0.0
  %4124 = vmatprep.subr.mxu0 0.0
  %4125 = vmatpush1.msra.mxu0 0.0
  %4126 = vmatprep.subr.mxu0 0.0
  %4127 = vmatpush1.msra.mxu0 %v4101
  %4128 = vmatprep.subr.mxu0 0.0
  %4129 = vmatpush1.msra.mxu0 %v4100
  %4130 = vmatprep.subr.mxu0 0.0
  %4131 = vmatpush1.msra.mxu0 %v4099
  %4132 = vmatprep.subr.mxu0 0.0
  %4133 = vmatpush1.msra.mxu0 %v4098
  %4134 = vmatprep.subr.mxu0 0.0
  %4135 = vmatpush2.msra.mxu0 0.0
  %4136 = vmatprep.subr.mxu0 0.0
  %4137 = vmatpush2.msra.mxu0 0.0
  %4138 = vmatprep.subr.mxu0 0.0
  %4139 = vmatpush2.msra.mxu0 0.0
  %4140 = vmatprep.subr.mxu0 0.0
  %4141 = vmatpush2.msra.mxu0 0.0
  %4142 = vmatprep.subr.mxu0 0.0
  %4143 = vmatpush2.msra.mxu0 0.0
  %4144 = vmatprep.subr.mxu0 0.0
  %4145 = vmatpush2.msra.mxu0 0.0
  %4146 = vmatprep.subr.mxu0 0.0
  %4147 = vmatpush2.msra.mxu0 0.0
  %4148 = vmatprep.subr.mxu0 0.0
  %4149 = vmatpush2.msra.mxu0 0.0
  %4150 = vmatprep.subr.mxu0 0.0
  %4151 = vmatpush2.msra.mxu0 0.0
  %4152 = vmatprep.subr.mxu0 0.0
  %4153 = vmatpush2.msra.mxu0 0.0
  %4154 = vmatprep.subr.mxu0 0.0
  %4155 = vmatpush2.msra.mxu0 0.0
  %4156 = vmatprep.subr.mxu0 0.0
  %4157 = vmatpush2.msra.mxu0 0.0
  %4158 = vmatprep.subr.mxu0 0.0
  %4159 = vmatpush2.msra.mxu0 0.0
  %4160 = vmatprep.subr.mxu0 0.0
  %4161 = vmatpush2.msra.mxu0 0.0
  %4162 = vmatprep.subr.mxu0 0.0
  %4163 = vmatpush2.msra.mxu0 0.0
  %4164 = vmatprep.subr.mxu0 0.0
  %4165 = vmatpush2.msra.mxu0 0.0
  %4166 = vmatprep.mubr.f32.mxu0 0.0
  %4167 = vmatmul.mubr.f32.gmra.mxu0 %v3830
  %v4168 = vpop.f32.mrf.mxu0
  %v4169 = vadd.f32 0.0, %v4168
  %v4170 = vpop.f32.mrf.mxu0
  %4171 = vdwg.mxu0
  %4172 = vmatprep.subr.mxu0 0.0
  %4173 = vmatpush1.msra.mxu0 0.0
  %4174 = vmatprep.subr.mxu0 0.0
  %4175 = vmatpush1.msra.mxu0 0.0
  %4176 = vmatprep.subr.mxu0 0.0
  %4177 = vmatpush1.msra.mxu0 0.0
  %4178 = vmatprep.subr.mxu0 0.0
  %4179 = vmatpush1.msra.mxu0 0.0
  %4180 = vmatprep.subr.mxu0 0.0
  %4181 = vmatpush1.msra.mxu0 0.0
  %4182 = vmatprep.subr.mxu0 0.0
  %4183 = vmatpush1.msra.mxu0 0.0
  %4184 = vmatprep.subr.mxu0 0.0
  %4185 = vmatpush1.msra.mxu0 0.0
  %4186 = vmatprep.subr.mxu0 0.0
  %4187 = vmatpush1.msra.mxu0 0.0
  %4188 = vmatprep.subr.mxu0 0.0
  %4189 = vmatpush1.msra.mxu0 0.0
  %4190 = vmatprep.subr.mxu0 0.0
  %4191 = vmatpush1.msra.mxu0 0.0
  %4192 = vmatprep.subr.mxu0 0.0
  %4193 = vmatpush1.msra.mxu0 0.0
  %4194 = vmatprep.subr.mxu0 0.0
  %4195 = vmatpush1.msra.mxu0 0.0
  %4196 = vmatprep.subr.mxu0 0.0
  %4197 = vmatpush1.msra.mxu0 0.0
  %4198 = vmatprep.subr.mxu0 0.0
  %4199 = vmatpush1.msra.mxu0 0.0
  %4200 = vmatprep.subr.mxu0 0.0
  %4201 = vmatpush1.msra.mxu0 %v4097
  %4202 = vmatprep.subr.mxu0 0.0
  %4203 = vmatpush1.msra.mxu0 %v4096
  %4204 = vmatprep.subr.mxu0 0.0
  %4205 = vmatpush2.msra.mxu0 0.0
  %4206 = vmatprep.subr.mxu0 0.0
  %4207 = vmatpush2.msra.mxu0 0.0
  %4208 = vmatprep.subr.mxu0 0.0
  %4209 = vmatpush2.msra.mxu0 0.0
  %4210 = vmatprep.subr.mxu0 0.0
  %4211 = vmatpush2.msra.mxu0 0.0
  %4212 = vmatprep.subr.mxu0 0.0
  %4213 = vmatpush2.msra.mxu0 0.0
  %4214 = vmatprep.subr.mxu0 0.0
  %4215 = vmatpush2.msra.mxu0 0.0
  %4216 = vmatprep.subr.mxu0 0.0
  %4217 = vmatpush2.msra.mxu0 0.0
  %4218 = vmatprep.subr.mxu0 0.0
  %4219 = vmatpush2.msra.mxu0 0.0
  %4220 = vmatprep.subr.mxu0 0.0
  %4221 = vmatpush2.msra.mxu0 0.0
  %4222 = vmatprep.subr.mxu0 0.0
  %4223 = vmatpush2.msra.mxu0 0.0
  %4224 = vmatprep.subr.mxu0 0.0
  %4225 = vmatpush2.msra.mxu0 0.0
  %4226 = vmatprep.subr.mxu0 0.0
  %4227 = vmatpush2.msra.mxu0 0.0
  %4228 = vmatprep.subr.mxu0 0.0
  %4229 = vmatpush2.msra.mxu0 0.0
  %4230 = vmatprep.subr.mxu0 0.0
  %4231 = vmatpush2.msra.mxu0 0.0
  %4232 = vmatprep.subr.mxu0 0.0
  %4233 = vmatpush2.msra.mxu0 0.0
  %4234 = vmatprep.subr.mxu0 0.0
  %4235 = vmatpush2.msra.mxu0 0.0
  %4236 = vmatprep.mubr.f32.mxu0 0.0
  %4237 = vmatmul.mubr.f32.gmra.mxu0 %v3904
  %v4238 = vpop.f32.mrf.mxu0
  %v4239 = vadd.f32 %v4169, %v4238
  %v4240 = vpop.f32.mrf.mxu0
  %4241 = vdwg.mxu0
  %v4242 = vld [vmem:[%s10] sm:$0xff]
  %v4244 = vsel %vm532, %v4095, 0
  %4246 = vmatprep.subr.mxu0 0.0
  %4247 = vmatpush1.msra.mxu0 0.0
  %4248 = vmatprep.subr.mxu0 0.0
  %4249 = vmatpush1.msra.mxu0 0.0
  %4250 = vmatprep.subr.mxu0 0.0
  %4251 = vmatpush1.msra.mxu0 0.0
  %4252 = vmatprep.subr.mxu0 0.0
  %4253 = vmatpush1.msra.mxu0 0.0
  %4254 = vmatprep.subr.mxu0 0.0
  %4255 = vmatpush1.msra.mxu0 0.0
  %4256 = vmatprep.subr.mxu0 0.0
  %4257 = vmatpush1.msra.mxu0 0.0
  %4258 = vmatprep.subr.mxu0 0.0
  %4259 = vmatpush1.msra.mxu0 0.0
  %4260 = vmatprep.subr.mxu0 0.0
  %4261 = vmatpush1.msra.mxu0 0.0
  %4262 = vmatprep.subr.mxu0 0.0
  %4263 = vmatpush1.msra.mxu0 0.0
  %4264 = vmatprep.subr.mxu0 0.0
  %4265 = vmatpush1.msra.mxu0 0.0
  %4266 = vmatprep.subr.mxu0 0.0
  %4267 = vmatpush1.msra.mxu0 0.0
  %4268 = vmatprep.subr.mxu0 0.0
  %4269 = vmatpush1.msra.mxu0 0.0
  %4270 = vmatprep.subr.mxu0 0.0
  %4271 = vmatpush1.msra.mxu0 0.0
  %4272 = vmatprep.subr.mxu0 0.0
  %4273 = vmatpush1.msra.mxu0 0.0
  %4274 = vmatprep.subr.mxu0 0.0
  %4275 = vmatpush1.msra.mxu0 0.0
  %4276 = vmatprep.subr.mxu0 0.0
  %4277 = vmatpush1.msra.mxu0 %v4242
  %4278 = vmatprep.subr.mxu0 0.0
  %4279 = vmatpush2.msra.mxu0 0.0
  %4280 = vmatprep.subr.mxu0 0.0
  %4281 = vmatpush2.msra.mxu0 0.0
  %4282 = vmatprep.subr.mxu0 0.0
  %4283 = vmatpush2.msra.mxu0 0.0
  %4284 = vmatprep.subr.mxu0 0.0
  %4285 = vmatpush2.msra.mxu0 0.0
  %4286 = vmatprep.subr.mxu0 0.0
  %4287 = vmatpush2.msra.mxu0 0.0
  %4288 = vmatprep.subr.mxu0 0.0
  %4289 = vmatpush2.msra.mxu0 0.0
  %4290 = vmatprep.subr.mxu0 0.0
  %4291 = vmatpush2.msra.mxu0 0.0
  %4292 = vmatprep.subr.mxu0 0.0
  %4293 = vmatpush2.msra.mxu0 0.0
  %4294 = vmatprep.subr.mxu0 0.0
  %4295 = vmatpush2.msra.mxu0 0.0
  %4296 = vmatprep.subr.mxu0 0.0
  %4297 = vmatpush2.msra.mxu0 0.0
  %4298 = vmatprep.subr.mxu0 0.0
  %4299 = vmatpush2.msra.mxu0 0.0
  %4300 = vmatprep.subr.mxu0 0.0
  %4301 = vmatpush2.msra.mxu0 0.0
  %4302 = vmatprep.subr.mxu0 0.0
  %4303 = vmatpush2.msra.mxu0 0.0
  %4304 = vmatprep.subr.mxu0 0.0
  %4305 = vmatpush2.msra.mxu0 0.0
  %4306 = vmatprep.subr.mxu0 0.0
  %4307 = vmatpush2.msra.mxu0 0.0
  %4308 = vmatprep.subr.mxu0 0.0
  %4309 = vmatpush2.msra.mxu0 0.0
  %4310 = vmatprep.mubr.f32.mxu0 0.0
  %4311 = vmatmul.mubr.f32.gmra.mxu0 %v4244
  %v4312 = vpop.f32.mrf.mxu0
  %v4313 = vadd.f32 0.0, %v4312
  %v4314 = vpop.f32.mrf.mxu0
  %4315 = vdwg.mxu0
  %v4316 = vadd.f32 %v4239, %v4313
  %v4317 = vadd.f32 %v4316, %v80
  %v4318 = vmax.f32 %v4317, 0.0
  %v4319 = vld [vmem:[%s12] sm:$0xff]
  %v4320 = vld [vmem:[%s12 + $0x8] sm:$0xff]
  %v4321 = vld [vmem:[%s12 + $0x10] sm:$0xff]
  %v4322 = vld [vmem:[%s12 + $0x18] sm:$0xff]
  %v4323 = vld [vmem:[%s12 + $0x20] sm:$0xff]
  %v4324 = vld [vmem:[%s12 + $0x28] sm:$0xff]
  %v4325 = vld [vmem:[%s12 + $0x30] sm:$0xff]
  %v4326 = vld [vmem:[%s12 + $0x38] sm:$0xff]
  %v4328 = vsel %vm617, %v4318, 0
  %4330 = vmatprep.subr.mxu0 0.0
  %4331 = vmatpush1.msra.mxu0 0.0
  %4332 = vmatprep.subr.mxu0 0.0
  %4333 = vmatpush1.msra.mxu0 0.0
  %4334 = vmatprep.subr.mxu0 0.0
  %4335 = vmatpush1.msra.mxu0 0.0
  %4336 = vmatprep.subr.mxu0 0.0
  %4337 = vmatpush1.msra.mxu0 0.0
  %4338 = vmatprep.subr.mxu0 0.0
  %4339 = vmatpush1.msra.mxu0 0.0
  %4340 = vmatprep.subr.mxu0 0.0
  %4341 = vmatpush1.msra.mxu0 0.0
  %4342 = vmatprep.subr.mxu0 0.0
  %4343 = vmatpush1.msra.mxu0 0.0
  %4344 = vmatprep.subr.mxu0 0.0
  %4345 = vmatpush1.msra.mxu0 0.0
  %4346 = vmatprep.subr.mxu0 0.0
  %4347 = vmatpush1.msra.mxu0 %v4326
  %4348 = vmatprep.subr.mxu0 0.0
  %4349 = vmatpush1.msra.mxu0 %v4325
  %4350 = vmatprep.subr.mxu0 0.0
  %4351 = vmatpush1.msra.mxu0 %v4324
  %4352 = vmatprep.subr.mxu0 0.0
  %4353 = vmatpush1.msra.mxu0 %v4323
  %4354 = vmatprep.subr.mxu0 0.0
  %4355 = vmatpush1.msra.mxu0 %v4322
  %4356 = vmatprep.subr.mxu0 0.0
  %4357 = vmatpush1.msra.mxu0 %v4321
  %4358 = vmatprep.subr.mxu0 0.0
  %4359 = vmatpush1.msra.mxu0 %v4320
  %4360 = vmatprep.subr.mxu0 0.0
  %4361 = vmatpush1.msra.mxu0 %v4319
  %4362 = vmatprep.subr.mxu0 0.0
  %4363 = vmatpush2.msra.mxu0 0.0
  %4364 = vmatprep.subr.mxu0 0.0
  %4365 = vmatpush2.msra.mxu0 0.0
  %4366 = vmatprep.subr.mxu0 0.0
  %4367 = vmatpush2.msra.mxu0 0.0
  %4368 = vmatprep.subr.mxu0 0.0
  %4369 = vmatpush2.msra.mxu0 0.0
  %4370 = vmatprep.subr.mxu0 0.0
  %4371 = vmatpush2.msra.mxu0 0.0
  %4372 = vmatprep.subr.mxu0 0.0
  %4373 = vmatpush2.msra.mxu0 0.0
  %4374 = vmatprep.subr.mxu0 0.0
  %4375 = vmatpush2.msra.mxu0 0.0
  %4376 = vmatprep.subr.mxu0 0.0
  %4377 = vmatpush2.msra.mxu0 0.0
  %4378 = vmatprep.subr.mxu0 0.0
  %4379 = vmatpush2.msra.mxu0 0.0
  %4380 = vmatprep.subr.mxu0 0.0
  %4381 = vmatpush2.msra.mxu0 0.0
  %4382 = vmatprep.subr.mxu0 0.0
  %4383 = vmatpush2.msra.mxu0 0.0
  %4384 = vmatprep.subr.mxu0 0.0
  %4385 = vmatpush2.msra.mxu0 0.0
  %4386 = vmatprep.subr.mxu0 0.0
  %4387 = vmatpush2.msra.mxu0 0.0
  %4388 = vmatprep.subr.mxu0 0.0
  %4389 = vmatpush2.msra.mxu0 0.0
  %4390 = vmatprep.subr.mxu0 0.0
  %4391 = vmatpush2.msra.mxu0 0.0
  %4392 = vmatprep.subr.mxu0 0.0
  %4393 = vmatpush2.msra.mxu0 0.0
  %4394 = vmatprep.mubr.f32.mxu0 0.0
  %4395 = vmatmul.mubr.f32.gmra.mxu0 %v4328
  %v4396 = vpop.f32.mrf.mxu0
  %v4397 = vadd.f32 %v87, %v4396
  %v4398 = vpop.f32.mrf.mxu0
  %4399 = vdwg.mxu0
  %v4400 = vld [vmem:[%s14] sm:$0xff]
  %v4401 = vld [vmem:[%s14 + $0x8] sm:$0xff]
  %v4402 = vld [vmem:[%s14 + $0x10] sm:$0xff]
  %v4403 = vld [vmem:[%s14 + $0x18] sm:$0xff]
  %v4404 = vld [vmem:[%s15] sm:$0xff]
  %4405 = vmatprep.subr.mxu0 0.0
  %4406 = vmatpush1.msra.mxu0 0.0
  %4407 = vmatprep.subr.mxu0 0.0
  %4408 = vmatpush1.msra.mxu0 0.0
  %4409 = vmatprep.subr.mxu0 0.0
  %4410 = vmatpush1.msra.mxu0 0.0
  %4411 = vmatprep.subr.mxu0 0.0
  %4412 = vmatpush1.msra.mxu0 0.0
  %4413 = vmatprep.subr.mxu0 0.0
  %4414 = vmatpush1.msra.mxu0 0.0
  %4415 = vmatprep.subr.mxu0 0.0
  %4416 = vmatpush1.msra.mxu0 0.0
  %4417 = vmatprep.subr.mxu0 0.0
  %4418 = vmatpush1.msra.mxu0 0.0
  %4419 = vmatprep.subr.mxu0 0.0
  %4420 = vmatpush1.msra.mxu0 0.0
  %4421 = vmatprep.subr.mxu0 0.0
  %4422 = vmatpush1.msra.mxu0 0.0
  %4423 = vmatprep.subr.mxu0 0.0
  %4424 = vmatpush1.msra.mxu0 0.0
  %4425 = vmatprep.subr.mxu0 0.0
  %4426 = vmatpush1.msra.mxu0 0.0
  %4427 = vmatprep.subr.mxu0 0.0
  %4428 = vmatpush1.msra.mxu0 0.0
  %4429 = vmatprep.subr.mxu0 0.0
  %4430 = vmatpush1.msra.mxu0 0.0
  %4431 = vmatprep.subr.mxu0 0.0
  %4432 = vmatpush1.msra.mxu0 0.0
  %4433 = vmatprep.subr.mxu0 0.0
  %4434 = vmatpush1.msra.mxu0 0.0
  %4435 = vmatprep.subr.mxu0 0.0
  %4436 = vmatpush1.msra.mxu0 %v4404
  %4437 = vmatprep.subr.mxu0 0.0
  %4438 = vmatpush2.msra.mxu0 0.0
  %4439 = vmatprep.subr.mxu0 0.0
  %4440 = vmatpush2.msra.mxu0 0.0
  %4441 = vmatprep.subr.mxu0 0.0
  %4442 = vmatpush2.msra.mxu0 0.0
  %4443 = vmatprep.subr.mxu0 0.0
  %4444 = vmatpush2.msra.mxu0 0.0
  %4445 = vmatprep.subr.mxu0 0.0
  %4446 = vmatpush2.msra.mxu0 0.0
  %4447 = vmatprep.subr.mxu0 0.0
  %4448 = vmatpush2.msra.mxu0 0.0
  %4449 = vmatprep.subr.mxu0 0.0
  %4450 = vmatpush2.msra.mxu0 0.0
  %4451 = vmatprep.subr.mxu0 0.0
  %4452 = vmatpush2.msra.mxu0 0.0
  %4453 = vmatprep.subr.mxu0 0.0
  %4454 = vmatpush2.msra.mxu0 0.0
  %4455 = vmatprep.subr.mxu0 0.0
  %4456 = vmatpush2.msra.mxu0 0.0
  %4457 = vmatprep.subr.mxu0 0.0
  %4458 = vmatpush2.msra.mxu0 0.0
  %4459 = vmatprep.subr.mxu0 0.0
  %4460 = vmatpush2.msra.mxu0 0.0
  %4461 = vmatprep.subr.mxu0 0.0
  %4462 = vmatpush2.msra.mxu0 0.0
  %4463 = vmatprep.subr.mxu0 0.0
  %4464 = vmatpush2.msra.mxu0 0.0
  %4465 = vmatprep.subr.mxu0 0.0
  %4466 = vmatpush2.msra.mxu0 0.0
  %4467 = vmatprep.subr.mxu0 0.0
  %4468 = vmatpush2.msra.mxu0 0.0
  %4469 = vmatprep.mubr.f32.mxu0 0.0
  %4470 = vmatmul.mubr.f32.gmra.mxu0 %v4244
  %v4471 = vpop.f32.mrf.mxu0
  %v4472 = vadd.f32 0.0, %v4471
  %v4473 = vpop.f32.mrf.mxu0
  %4474 = vdwg.mxu0
  %4475 = vmatprep.subr.mxu0 0.0
  %4476 = vmatpush1.msra.mxu0 0.0
  %4477 = vmatprep.subr.mxu0 0.0
  %4478 = vmatpush1.msra.mxu0 0.0
  %4479 = vmatprep.subr.mxu0 0.0
  %4480 = vmatpush1.msra.mxu0 0.0
  %4481 = vmatprep.subr.mxu0 0.0
  %4482 = vmatpush1.msra.mxu0 0.0
  %4483 = vmatprep.subr.mxu0 0.0
  %4484 = vmatpush1.msra.mxu0 0.0
  %4485 = vmatprep.subr.mxu0 0.0
  %4486 = vmatpush1.msra.mxu0 0.0
  %4487 = vmatprep.subr.mxu0 0.0
  %4488 = vmatpush1.msra.mxu0 0.0
  %4489 = vmatprep.subr.mxu0 0.0
  %4490 = vmatpush1.msra.mxu0 0.0
  %4491 = vmatprep.subr.mxu0 0.0
  %4492 = vmatpush1.msra.mxu0 0.0
  %4493 = vmatprep.subr.mxu0 0.0
  %4494 = vmatpush1.msra.mxu0 0.0
  %4495 = vmatprep.subr.mxu0 0.0
  %4496 = vmatpush1.msra.mxu0 0.0
  %4497 = vmatprep.subr.mxu0 0.0
  %4498 = vmatpush1.msra.mxu0 0.0
  %4499 = vmatprep.subr.mxu0 0.0
  %4500 = vmatpush1.msra.mxu0 %v4403
  %4501 = vmatprep.subr.mxu0 0.0
  %4502 = vmatpush1.msra.mxu0 %v4402
  %4503 = vmatprep.subr.mxu0 0.0
  %4504 = vmatpush1.msra.mxu0 %v4401
  %4505 = vmatprep.subr.mxu0 0.0
  %4506 = vmatpush1.msra.mxu0 %v4400
  %4507 = vmatprep.subr.mxu0 0.0
  %4508 = vmatpush2.msra.mxu0 0.0
  %4509 = vmatprep.subr.mxu0 0.0
  %4510 = vmatpush2.msra.mxu0 0.0
  %4511 = vmatprep.subr.mxu0 0.0
  %4512 = vmatpush2.msra.mxu0 0.0
  %4513 = vmatprep.subr.mxu0 0.0
  %4514 = vmatpush2.msra.mxu0 0.0
  %4515 = vmatprep.subr.mxu0 0.0
  %4516 = vmatpush2.msra.mxu0 0.0
  %4517 = vmatprep.subr.mxu0 0.0
  %4518 = vmatpush2.msra.mxu0 0.0
  %4519 = vmatprep.subr.mxu0 0.0
  %4520 = vmatpush2.msra.mxu0 0.0
  %4521 = vmatprep.subr.mxu0 0.0
  %4522 = vmatpush2.msra.mxu0 0.0
  %4523 = vmatprep.subr.mxu0 0.0
  %4524 = vmatpush2.msra.mxu0 0.0
  %4525 = vmatprep.subr.mxu0 0.0
  %4526 = vmatpush2.msra.mxu0 0.0
  %4527 = vmatprep.subr.mxu0 0.0
  %4528 = vmatpush2.msra.mxu0 0.0
  %4529 = vmatprep.subr.mxu0 0.0
  %4530 = vmatpush2.msra.mxu0 0.0
  %4531 = vmatprep.subr.mxu0 0.0
  %4532 = vmatpush2.msra.mxu0 0.0
  %4533 = vmatprep.subr.mxu0 0.0
  %4534 = vmatpush2.msra.mxu0 0.0
  %4535 = vmatprep.subr.mxu0 0.0
  %4536 = vmatpush2.msra.mxu0 0.0
  %4537 = vmatprep.subr.mxu0 0.0
  %4538 = vmatpush2.msra.mxu0 0.0
  %4539 = vmatprep.mubr.f32.mxu0 0.0
  %4540 = vmatmul.mubr.f32.gmra.mxu0 %v3830
  %v4541 = vpop.f32.mrf.mxu0
  %v4542 = vadd.f32 %v4472, %v4541
  %v4543 = vpop.f32.mrf.mxu0
  %4544 = vdwg.mxu0
  %v4545 = vadd.f32 %v4542, %v94
  %v4546 = vxor.u32 %v4545, 2147483648
  %v4547 = vmul.f32 %v4546, 1.442695
  %v4548 = vpow.pop %v4547
  %v4549 = vadd.f32 %v4548, 1.0
  %v4550 = vrcp.pop %v4549
  %v4551 = vmul.f32 1.0, %v4550
  %v4552 = vsel %vm100, %v4551, %v4080
  %s4553 = scalar_lea.vmem %s17, 40
  %4554 = vst [vmem:[%s4553] sm:$0xff] %v4552
  %s4555 = scalar_lea.vmem %s0, 48
  %v4556 = vld [vmem:[%s4555] sm:$0xff]
  %s4557 = scalar_lea.vmem %s1, 48
  %v4558 = vld [vmem:[%s4557] sm:$0xff]
  %v4559 = vld [vmem:[%s3] sm:$0xff]
  %v4560 = vld [vmem:[%s3 + $0x8] sm:$0xff]
  %v4561 = vld [vmem:[%s3 + $0x10] sm:$0xff]
  %v4562 = vld [vmem:[%s3 + $0x18] sm:$0xff]
  %v4563 = vld [vmem:[%s4] sm:$0xff]
  %v4564 = vld [vmem:[%s4 + $0x8] sm:$0xff]
  %v4565 = vld [vmem:[%s4 + $0x10] sm:$0xff]
  %v4566 = vld [vmem:[%s4 + $0x18] sm:$0xff]
  %v4567 = vld [vmem:[%s4 + $0x20] sm:$0xff]
  %v4568 = vld [vmem:[%s4 + $0x28] sm:$0xff]
  %v4569 = vld [vmem:[%s4 + $0x30] sm:$0xff]
  %v4570 = vld [vmem:[%s4 + $0x38] sm:$0xff]
  %v4572 = vsel %vm116, %v4397, 0
  %4574 = vmatprep.subr.mxu0 0.0
  %4575 = vmatpush1.msra.mxu0 0.0
  %4576 = vmatprep.subr.mxu0 0.0
  %4577 = vmatpush1.msra.mxu0 0.0
  %4578 = vmatprep.subr.mxu0 0.0
  %4579 = vmatpush1.msra.mxu0 0.0
  %4580 = vmatprep.subr.mxu0 0.0
  %4581 = vmatpush1.msra.mxu0 0.0
  %4582 = vmatprep.subr.mxu0 0.0
  %4583 = vmatpush1.msra.mxu0 0.0
  %4584 = vmatprep.subr.mxu0 0.0
  %4585 = vmatpush1.msra.mxu0 0.0
  %4586 = vmatprep.subr.mxu0 0.0
  %4587 = vmatpush1.msra.mxu0 0.0
  %4588 = vmatprep.subr.mxu0 0.0
  %4589 = vmatpush1.msra.mxu0 0.0
  %4590 = vmatprep.subr.mxu0 0.0
  %4591 = vmatpush1.msra.mxu0 0.0
  %4592 = vmatprep.subr.mxu0 0.0
  %4593 = vmatpush1.msra.mxu0 0.0
  %4594 = vmatprep.subr.mxu0 0.0
  %4595 = vmatpush1.msra.mxu0 0.0
  %4596 = vmatprep.subr.mxu0 0.0
  %4597 = vmatpush1.msra.mxu0 0.0
  %4598 = vmatprep.subr.mxu0 %v4570
  %4599 = vmatpush1.msra.mxu0 %v4569
  %4600 = vmatprep.subr.mxu0 %v4568
  %4601 = vmatpush1.msra.mxu0 %v4567
  %4602 = vmatprep.subr.mxu0 %v4566
  %4603 = vmatpush1.msra.mxu0 %v4565
  %4604 = vmatprep.subr.mxu0 %v4564
  %4605 = vmatpush1.msra.mxu0 %v4563
  %4606 = vmatprep.subr.mxu0 0.0
  %4607 = vmatpush2.msra.mxu0 0.0
  %4608 = vmatprep.subr.mxu0 0.0
  %4609 = vmatpush2.msra.mxu0 0.0
  %4610 = vmatprep.subr.mxu0 0.0
  %4611 = vmatpush2.msra.mxu0 0.0
  %4612 = vmatprep.subr.mxu0 0.0
  %4613 = vmatpush2.msra.mxu0 0.0
  %4614 = vmatprep.subr.mxu0 0.0
  %4615 = vmatpush2.msra.mxu0 0.0
  %4616 = vmatprep.subr.mxu0 0.0
  %4617 = vmatpush2.msra.mxu0 0.0
  %4618 = vmatprep.subr.mxu0 0.0
  %4619 = vmatpush2.msra.mxu0 0.0
  %4620 = vmatprep.subr.mxu0 0.0
  %4621 = vmatpush2.msra.mxu0 0.0
  %4622 = vmatprep.subr.mxu0 0.0
  %4623 = vmatpush2.msra.mxu0 0.0
  %4624 = vmatprep.subr.mxu0 0.0
  %4625 = vmatpush2.msra.mxu0 0.0
  %4626 = vmatprep.subr.mxu0 0.0
  %4627 = vmatpush2.msra.mxu0 0.0
  %4628 = vmatprep.subr.mxu0 0.0
  %4629 = vmatpush2.msra.mxu0 0.0
  %4630 = vmatprep.subr.mxu0 0.0
  %4631 = vmatpush2.msra.mxu0 0.0
  %4632 = vmatprep.subr.mxu0 0.0
  %4633 = vmatpush2.msra.mxu0 0.0
  %4634 = vmatprep.subr.mxu0 0.0
  %4635 = vmatpush2.msra.mxu0 0.0
  %4636 = vmatprep.subr.mxu0 0.0
  %4637 = vmatpush2.msra.mxu0 0.0
  %4638 = vmatprep.mubr.f32.mxu0 0.0
  %4639 = vmatmul.mubr.f32.gmra.mxu0 %v4572
  %v4640 = vpop.f32.mrf.mxu0
  %v4641 = vadd.f32 0.0, %v4640
  %v4642 = vpop.f32.mrf.mxu0
  %v4643 = vadd.f32 0.0, %v4642
  %4644 = vdwg.mxu0
  %v4646 = vsel %vm191, %v4556, 0
  %4648 = vmatprep.subr.mxu0 0.0
  %4649 = vmatpush1.msra.mxu0 0.0
  %4650 = vmatprep.subr.mxu0 0.0
  %4651 = vmatpush1.msra.mxu0 0.0
  %4652 = vmatprep.subr.mxu0 0.0
  %4653 = vmatpush1.msra.mxu0 0.0
  %4654 = vmatprep.subr.mxu0 0.0
  %4655 = vmatpush1.msra.mxu0 0.0
  %4656 = vmatprep.subr.mxu0 0.0
  %4657 = vmatpush1.msra.mxu0 0.0
  %4658 = vmatprep.subr.mxu0 0.0
  %4659 = vmatpush1.msra.mxu0 0.0
  %4660 = vmatprep.subr.mxu0 0.0
  %4661 = vmatpush1.msra.mxu0 0.0
  %4662 = vmatprep.subr.mxu0 0.0
  %4663 = vmatpush1.msra.mxu0 0.0
  %4664 = vmatprep.subr.mxu0 0.0
  %4665 = vmatpush1.msra.mxu0 0.0
  %4666 = vmatprep.subr.mxu0 0.0
  %4667 = vmatpush1.msra.mxu0 0.0
  %4668 = vmatprep.subr.mxu0 0.0
  %4669 = vmatpush1.msra.mxu0 0.0
  %4670 = vmatprep.subr.mxu0 0.0
  %4671 = vmatpush1.msra.mxu0 0.0
  %4672 = vmatprep.subr.mxu0 0.0
  %4673 = vmatpush1.msra.mxu0 0.0
  %4674 = vmatprep.subr.mxu0 0.0
  %4675 = vmatpush1.msra.mxu0 0.0
  %4676 = vmatprep.subr.mxu0 %v4562
  %4677 = vmatpush1.msra.mxu0 %v4561
  %4678 = vmatprep.subr.mxu0 %v4560
  %4679 = vmatpush1.msra.mxu0 %v4559
  %4680 = vmatprep.subr.mxu0 0.0
  %4681 = vmatpush2.msra.mxu0 0.0
  %4682 = vmatprep.subr.mxu0 0.0
  %4683 = vmatpush2.msra.mxu0 0.0
  %4684 = vmatprep.subr.mxu0 0.0
  %4685 = vmatpush2.msra.mxu0 0.0
  %4686 = vmatprep.subr.mxu0 0.0
  %4687 = vmatpush2.msra.mxu0 0.0
  %4688 = vmatprep.subr.mxu0 0.0
  %4689 = vmatpush2.msra.mxu0 0.0
  %4690 = vmatprep.subr.mxu0 0.0
  %4691 = vmatpush2.msra.mxu0 0.0
  %4692 = vmatprep.subr.mxu0 0.0
  %4693 = vmatpush2.msra.mxu0 0.0
  %4694 = vmatprep.subr.mxu0 0.0
  %4695 = vmatpush2.msra.mxu0 0.0
  %4696 = vmatprep.subr.mxu0 0.0
  %4697 = vmatpush2.msra.mxu0 0.0
  %4698 = vmatprep.subr.mxu0 0.0
  %4699 = vmatpush2.msra.mxu0 0.0
  %4700 = vmatprep.subr.mxu0 0.0
  %4701 = vmatpush2.msra.mxu0 0.0
  %4702 = vmatprep.subr.mxu0 0.0
  %4703 = vmatpush2.msra.mxu0 0.0
  %4704 = vmatprep.subr.mxu0 0.0
  %4705 = vmatpush2.msra.mxu0 0.0
  %4706 = vmatprep.subr.mxu0 0.0
  %4707 = vmatpush2.msra.mxu0 0.0
  %4708 = vmatprep.subr.mxu0 0.0
  %4709 = vmatpush2.msra.mxu0 0.0
  %4710 = vmatprep.subr.mxu0 0.0
  %4711 = vmatpush2.msra.mxu0 0.0
  %4712 = vmatprep.mubr.f32.mxu0 0.0
  %4713 = vmatmul.mubr.f32.gmra.mxu0 %v4646
  %v4714 = vpop.f32.mrf.mxu0
  %v4715 = vadd.f32 %v4641, %v4714
  %v4716 = vpop.f32.mrf.mxu0
  %v4717 = vadd.f32 %v4643, %v4716
  %4718 = vdwg.mxu0
  %v4719 = vadd.f32 %v4715, %v61
  %v4720 = vadd.f32 %v4717, %v65
  %v4721 = vmax.f32 %v4719, 0.0
  %v4722 = vmax.f32 %v4720, 0.0
  %v4723 = vld [vmem:[%s6] sm:$0xff]
  %v4724 = vld [vmem:[%s6 + $0x8] sm:$0xff]
  %v4725 = vld [vmem:[%s6 + $0x10] sm:$0xff]
  %v4726 = vld [vmem:[%s6 + $0x18] sm:$0xff]
  %v4727 = vld [vmem:[%s6 + $0x20] sm:$0xff]
  %v4728 = vld [vmem:[%s6 + $0x28] sm:$0xff]
  %v4729 = vld [vmem:[%s6 + $0x30] sm:$0xff]
  %v4730 = vld [vmem:[%s6 + $0x38] sm:$0xff]
  %v4731 = vld [vmem:[%s6 + $0x40] sm:$0xff]
  %v4732 = vld [vmem:[%s6 + $0x48] sm:$0xff]
  %v4733 = vld [vmem:[%s6 + $0x50] sm:$0xff]
  %v4734 = vld [vmem:[%s6 + $0x58] sm:$0xff]
  %v4735 = vld [vmem:[%s6 + $0x60] sm:$0xff]
  %v4736 = vld [vmem:[%s6 + $0x68] sm:$0xff]
  %v4737 = vld [vmem:[%s6 + $0x70] sm:$0xff]
  %v4738 = vld [vmem:[%s6 + $0x78] sm:$0xff]
  %v4739 = vld [vmem:[%s6 + $0x80] sm:$0xff]
  %v4740 = vld [vmem:[%s6 + $0x88] sm:$0xff]
  %v4741 = vld [vmem:[%s6 + $0x90] sm:$0xff]
  %v4742 = vld [vmem:[%s6 + $0x98] sm:$0xff]
  %v4743 = vld [vmem:[%s6 + $0xa0] sm:$0xff]
  %v4744 = vld [vmem:[%s6 + $0xa8] sm:$0xff]
  %v4745 = vld [vmem:[%s6 + $0xb0] sm:$0xff]
  %v4746 = vld [vmem:[%s6 + $0xb8] sm:$0xff]
  %v4747 = vld [vmem:[%s6 + $0xc0] sm:$0xff]
  %v4748 = vld [vmem:[%s6 + $0xc8] sm:$0xff]
  %v4749 = vld [vmem:[%s6 + $0xd0] sm:$0xff]
  %v4750 = vld [vmem:[%s6 + $0xd8] sm:$0xff]
  %v4751 = vld [vmem:[%s6 + $0xe0] sm:$0xff]
  %v4752 = vld [vmem:[%s6 + $0xe8] sm:$0xff]
  %v4753 = vld [vmem:[%s6 + $0xf0] sm:$0xff]
  %v4754 = vld [vmem:[%s6 + $0xf8] sm:$0xff]
  %4755 = vmatprep.subr.mxu0 0.0
  %4756 = vmatpush1.msra.mxu0 %v4738
  %4757 = vmatprep.subr.mxu0 0.0
  %4758 = vmatpush1.msra.mxu0 %v4737
  %4759 = vmatprep.subr.mxu0 0.0
  %4760 = vmatpush1.msra.mxu0 %v4736
  %4761 = vmatprep.subr.mxu0 0.0
  %4762 = vmatpush1.msra.mxu0 %v4735
  %4763 = vmatprep.subr.mxu0 0.0
  %4764 = vmatpush1.msra.mxu0 %v4734
  %4765 = vmatprep.subr.mxu0 0.0
  %4766 = vmatpush1.msra.mxu0 %v4733
  %4767 = vmatprep.subr.mxu0 0.0
  %4768 = vmatpush1.msra.mxu0 %v4732
  %4769 = vmatprep.subr.mxu0 0.0
  %4770 = vmatpush1.msra.mxu0 %v4731
  %4771 = vmatprep.subr.mxu0 0.0
  %4772 = vmatpush1.msra.mxu0 %v4730
  %4773 = vmatprep.subr.mxu0 0.0
  %4774 = vmatpush1.msra.mxu0 %v4729
  %4775 = vmatprep.subr.mxu0 0.0
  %4776 = vmatpush1.msra.mxu0 %v4728
  %4777 = vmatprep.subr.mxu0 0.0
  %4778 = vmatpush1.msra.mxu0 %v4727
  %4779 = vmatprep.subr.mxu0 0.0
  %4780 = vmatpush1.msra.mxu0 %v4726
  %4781 = vmatprep.subr.mxu0 0.0
  %4782 = vmatpush1.msra.mxu0 %v4725
  %4783 = vmatprep.subr.mxu0 0.0
  %4784 = vmatpush1.msra.mxu0 %v4724
  %4785 = vmatprep.subr.mxu0 0.0
  %4786 = vmatpush1.msra.mxu0 %v4723
  %4787 = vmatprep.subr.mxu0 0.0
  %4788 = vmatpush2.msra.mxu0 %v4754
  %4789 = vmatprep.subr.mxu0 0.0
  %4790 = vmatpush2.msra.mxu0 %v4753
  %4791 = vmatprep.subr.mxu0 0.0
  %4792 = vmatpush2.msra.mxu0 %v4752
  %4793 = vmatprep.subr.mxu0 0.0
  %4794 = vmatpush2.msra.mxu0 %v4751
  %4795 = vmatprep.subr.mxu0 0.0
  %4796 = vmatpush2.msra.mxu0 %v4750
  %4797 = vmatprep.subr.mxu0 0.0
  %4798 = vmatpush2.msra.mxu0 %v4749
  %4799 = vmatprep.subr.mxu0 0.0
  %4800 = vmatpush2.msra.mxu0 %v4748
  %4801 = vmatprep.subr.mxu0 0.0
  %4802 = vmatpush2.msra.mxu0 %v4747
  %4803 = vmatprep.subr.mxu0 0.0
  %4804 = vmatpush2.msra.mxu0 %v4746
  %4805 = vmatprep.subr.mxu0 0.0
  %4806 = vmatpush2.msra.mxu0 %v4745
  %4807 = vmatprep.subr.mxu0 0.0
  %4808 = vmatpush2.msra.mxu0 %v4744
  %4809 = vmatprep.subr.mxu0 0.0
  %4810 = vmatpush2.msra.mxu0 %v4743
  %4811 = vmatprep.subr.mxu0 0.0
  %4812 = vmatpush2.msra.mxu0 %v4742
  %4813 = vmatprep.subr.mxu0 0.0
  %4814 = vmatpush2.msra.mxu0 %v4741
  %4815 = vmatprep.subr.mxu0 0.0
  %4816 = vmatpush2.msra.mxu0 %v4740
  %4817 = vmatprep.subr.mxu0 0.0
  %4818 = vmatpush2.msra.mxu0 %v4739
  %4819 = vmatprep.mubr.f32.mxu0 %v4722
  %4820 = vmatmul.mubr.f32.gmra.mxu0 %v4721
  %v4821 = vpop.f32.mrf.mxu0
  %v4822 = vadd.f32 %v73, %v4821
  %v4823 = vpop.f32.mrf.mxu0
  %4824 = vdwg.mxu0
  %v4825 = vmul.f32 %v4822, 0.5
  %v4826 = vmul.f32 %v4825, 1.442695
  %v4827 = vpow.pop %v4826
  %4829 = vrot.lane.b32.xlu0 %v4558, 8
  %v4830 = vpop.permute.xlu0 %4829
  %v4832 = vmul.f32 %v4827, %v4830
  %4834 = vrot.lane.b32.xlu0 %v4832, 120
  %v4835 = vpop.permute.xlu0 %4834
  %v4837 = vadd.f32 %v4822, %v4835
  %v4838 = vld [vmem:[%s8] sm:$0xff]
  %v4839 = vld [vmem:[%s8 + $0x8] sm:$0xff]
  %v4840 = vld [vmem:[%s9] sm:$0xff]
  %v4841 = vld [vmem:[%s9 + $0x8] sm:$0xff]
  %v4842 = vld [vmem:[%s9 + $0x10] sm:$0xff]
  %v4843 = vld [vmem:[%s9 + $0x18] sm:$0xff]
  %4844 = vmatprep.subr.mxu0 0.0
  %4845 = vmatpush1.msra.mxu0 0.0
  %4846 = vmatprep.subr.mxu0 0.0
  %4847 = vmatpush1.msra.mxu0 0.0
  %4848 = vmatprep.subr.mxu0 0.0
  %4849 = vmatpush1.msra.mxu0 0.0
  %4850 = vmatprep.subr.mxu0 0.0
  %4851 = vmatpush1.msra.mxu0 0.0
  %4852 = vmatprep.subr.mxu0 0.0
  %4853 = vmatpush1.msra.mxu0 0.0
  %4854 = vmatprep.subr.mxu0 0.0
  %4855 = vmatpush1.msra.mxu0 0.0
  %4856 = vmatprep.subr.mxu0 0.0
  %4857 = vmatpush1.msra.mxu0 0.0
  %4858 = vmatprep.subr.mxu0 0.0
  %4859 = vmatpush1.msra.mxu0 0.0
  %4860 = vmatprep.subr.mxu0 0.0
  %4861 = vmatpush1.msra.mxu0 0.0
  %4862 = vmatprep.subr.mxu0 0.0
  %4863 = vmatpush1.msra.mxu0 0.0
  %4864 = vmatprep.subr.mxu0 0.0
  %4865 = vmatpush1.msra.mxu0 0.0
  %4866 = vmatprep.subr.mxu0 0.0
  %4867 = vmatpush1.msra.mxu0 0.0
  %4868 = vmatprep.subr.mxu0 0.0
  %4869 = vmatpush1.msra.mxu0 %v4843
  %4870 = vmatprep.subr.mxu0 0.0
  %4871 = vmatpush1.msra.mxu0 %v4842
  %4872 = vmatprep.subr.mxu0 0.0
  %4873 = vmatpush1.msra.mxu0 %v4841
  %4874 = vmatprep.subr.mxu0 0.0
  %4875 = vmatpush1.msra.mxu0 %v4840
  %4876 = vmatprep.subr.mxu0 0.0
  %4877 = vmatpush2.msra.mxu0 0.0
  %4878 = vmatprep.subr.mxu0 0.0
  %4879 = vmatpush2.msra.mxu0 0.0
  %4880 = vmatprep.subr.mxu0 0.0
  %4881 = vmatpush2.msra.mxu0 0.0
  %4882 = vmatprep.subr.mxu0 0.0
  %4883 = vmatpush2.msra.mxu0 0.0
  %4884 = vmatprep.subr.mxu0 0.0
  %4885 = vmatpush2.msra.mxu0 0.0
  %4886 = vmatprep.subr.mxu0 0.0
  %4887 = vmatpush2.msra.mxu0 0.0
  %4888 = vmatprep.subr.mxu0 0.0
  %4889 = vmatpush2.msra.mxu0 0.0
  %4890 = vmatprep.subr.mxu0 0.0
  %4891 = vmatpush2.msra.mxu0 0.0
  %4892 = vmatprep.subr.mxu0 0.0
  %4893 = vmatpush2.msra.mxu0 0.0
  %4894 = vmatprep.subr.mxu0 0.0
  %4895 = vmatpush2.msra.mxu0 0.0
  %4896 = vmatprep.subr.mxu0 0.0
  %4897 = vmatpush2.msra.mxu0 0.0
  %4898 = vmatprep.subr.mxu0 0.0
  %4899 = vmatpush2.msra.mxu0 0.0
  %4900 = vmatprep.subr.mxu0 0.0
  %4901 = vmatpush2.msra.mxu0 0.0
  %4902 = vmatprep.subr.mxu0 0.0
  %4903 = vmatpush2.msra.mxu0 0.0
  %4904 = vmatprep.subr.mxu0 0.0
  %4905 = vmatpush2.msra.mxu0 0.0
  %4906 = vmatprep.subr.mxu0 0.0
  %4907 = vmatpush2.msra.mxu0 0.0
  %4908 = vmatprep.mubr.f32.mxu0 0.0
  %4909 = vmatmul.mubr.f32.gmra.mxu0 %v4572
  %v4910 = vpop.f32.mrf.mxu0
  %v4911 = vadd.f32 0.0, %v4910
  %v4912 = vpop.f32.mrf.mxu0
  %4913 = vdwg.mxu0
  %4914 = vmatprep.subr.mxu0 0.0
  %4915 = vmatpush1.msra.mxu0 0.0
  %4916 = vmatprep.subr.mxu0 0.0
  %4917 = vmatpush1.msra.mxu0 0.0
  %4918 = vmatprep.subr.mxu0 0.0
  %4919 = vmatpush1.msra.mxu0 0.0
  %4920 = vmatprep.subr.mxu0 0.0
  %4921 = vmatpush1.msra.mxu0 0.0
  %4922 = vmatprep.subr.mxu0 0.0
  %4923 = vmatpush1.msra.mxu0 0.0
  %4924 = vmatprep.subr.mxu0 0.0
  %4925 = vmatpush1.msra.mxu0 0.0
  %4926 = vmatprep.subr.mxu0 0.0
  %4927 = vmatpush1.msra.mxu0 0.0
  %4928 = vmatprep.subr.mxu0 0.0
  %4929 = vmatpush1.msra.mxu0 0.0
  %4930 = vmatprep.subr.mxu0 0.0
  %4931 = vmatpush1.msra.mxu0 0.0
  %4932 = vmatprep.subr.mxu0 0.0
  %4933 = vmatpush1.msra.mxu0 0.0
  %4934 = vmatprep.subr.mxu0 0.0
  %4935 = vmatpush1.msra.mxu0 0.0
  %4936 = vmatprep.subr.mxu0 0.0
  %4937 = vmatpush1.msra.mxu0 0.0
  %4938 = vmatprep.subr.mxu0 0.0
  %4939 = vmatpush1.msra.mxu0 0.0
  %4940 = vmatprep.subr.mxu0 0.0
  %4941 = vmatpush1.msra.mxu0 0.0
  %4942 = vmatprep.subr.mxu0 0.0
  %4943 = vmatpush1.msra.mxu0 %v4839
  %4944 = vmatprep.subr.mxu0 0.0
  %4945 = vmatpush1.msra.mxu0 %v4838
  %4946 = vmatprep.subr.mxu0 0.0
  %4947 = vmatpush2.msra.mxu0 0.0
  %4948 = vmatprep.subr.mxu0 0.0
  %4949 = vmatpush2.msra.mxu0 0.0
  %4950 = vmatprep.subr.mxu0 0.0
  %4951 = vmatpush2.msra.mxu0 0.0
  %4952 = vmatprep.subr.mxu0 0.0
  %4953 = vmatpush2.msra.mxu0 0.0
  %4954 = vmatprep.subr.mxu0 0.0
  %4955 = vmatpush2.msra.mxu0 0.0
  %4956 = vmatprep.subr.mxu0 0.0
  %4957 = vmatpush2.msra.mxu0 0.0
  %4958 = vmatprep.subr.mxu0 0.0
  %4959 = vmatpush2.msra.mxu0 0.0
  %4960 = vmatprep.subr.mxu0 0.0
  %4961 = vmatpush2.msra.mxu0 0.0
  %4962 = vmatprep.subr.mxu0 0.0
  %4963 = vmatpush2.msra.mxu0 0.0
  %4964 = vmatprep.subr.mxu0 0.0
  %4965 = vmatpush2.msra.mxu0 0.0
  %4966 = vmatprep.subr.mxu0 0.0
  %4967 = vmatpush2.msra.mxu0 0.0
  %4968 = vmatprep.subr.mxu0 0.0
  %4969 = vmatpush2.msra.mxu0 0.0
  %4970 = vmatprep.subr.mxu0 0.0
  %4971 = vmatpush2.msra.mxu0 0.0
  %4972 = vmatprep.subr.mxu0 0.0
  %4973 = vmatpush2.msra.mxu0 0.0
  %4974 = vmatprep.subr.mxu0 0.0
  %4975 = vmatpush2.msra.mxu0 0.0
  %4976 = vmatprep.subr.mxu0 0.0
  %4977 = vmatpush2.msra.mxu0 0.0
  %4978 = vmatprep.mubr.f32.mxu0 0.0
  %4979 = vmatmul.mubr.f32.gmra.mxu0 %v4646
  %v4980 = vpop.f32.mrf.mxu0
  %v4981 = vadd.f32 %v4911, %v4980
  %v4982 = vpop.f32.mrf.mxu0
  %4983 = vdwg.mxu0
  %v4984 = vld [vmem:[%s10] sm:$0xff]
  %v4986 = vsel %vm532, %v4837, 0
  %4988 = vmatprep.subr.mxu0 0.0
  %4989 = vmatpush1.msra.mxu0 0.0
  %4990 = vmatprep.subr.mxu0 0.0
  %4991 = vmatpush1.msra.mxu0 0.0
  %4992 = vmatprep.subr.mxu0 0.0
  %4993 = vmatpush1.msra.mxu0 0.0
  %4994 = vmatprep.subr.mxu0 0.0
  %4995 = vmatpush1.msra.mxu0 0.0
  %4996 = vmatprep.subr.mxu0 0.0
  %4997 = vmatpush1.msra.mxu0 0.0
  %4998 = vmatprep.subr.mxu0 0.0
  %4999 = vmatpush1.msra.mxu0 0.0
  %5000 = vmatprep.subr.mxu0 0.0
  %5001 = vmatpush1.msra.mxu0 0.0
  %5002 = vmatprep.subr.mxu0 0.0
  %5003 = vmatpush1.msra.mxu0 0.0
  %5004 = vmatprep.subr.mxu0 0.0
  %5005 = vmatpush1.msra.mxu0 0.0
  %5006 = vmatprep.subr.mxu0 0.0
  %5007 = vmatpush1.msra.mxu0 0.0
  %5008 = vmatprep.subr.mxu0 0.0
  %5009 = vmatpush1.msra.mxu0 0.0
  %5010 = vmatprep.subr.mxu0 0.0
  %5011 = vmatpush1.msra.mxu0 0.0
  %5012 = vmatprep.subr.mxu0 0.0
  %5013 = vmatpush1.msra.mxu0 0.0
  %5014 = vmatprep.subr.mxu0 0.0
  %5015 = vmatpush1.msra.mxu0 0.0
  %5016 = vmatprep.subr.mxu0 0.0
  %5017 = vmatpush1.msra.mxu0 0.0
  %5018 = vmatprep.subr.mxu0 0.0
  %5019 = vmatpush1.msra.mxu0 %v4984
  %5020 = vmatprep.subr.mxu0 0.0
  %5021 = vmatpush2.msra.mxu0 0.0
  %5022 = vmatprep.subr.mxu0 0.0
  %5023 = vmatpush2.msra.mxu0 0.0
  %5024 = vmatprep.subr.mxu0 0.0
  %5025 = vmatpush2.msra.mxu0 0.0
  %5026 = vmatprep.subr.mxu0 0.0
  %5027 = vmatpush2.msra.mxu0 0.0
  %5028 = vmatprep.subr.mxu0 0.0
  %5029 = vmatpush2.msra.mxu0 0.0
  %5030 = vmatprep.subr.mxu0 0.0
  %5031 = vmatpush2.msra.mxu0 0.0
  %5032 = vmatprep.subr.mxu0 0.0
  %5033 = vmatpush2.msra.mxu0 0.0
  %5034 = vmatprep.subr.mxu0 0.0
  %5035 = vmatpush2.msra.mxu0 0.0
  %5036 = vmatprep.subr.mxu0 0.0
  %5037 = vmatpush2.msra.mxu0 0.0
  %5038 = vmatprep.subr.mxu0 0.0
  %5039 = vmatpush2.msra.mxu0 0.0
  %5040 = vmatprep.subr.mxu0 0.0
  %5041 = vmatpush2.msra.mxu0 0.0
  %5042 = vmatprep.subr.mxu0 0.0
  %5043 = vmatpush2.msra.mxu0 0.0
  %5044 = vmatprep.subr.mxu0 0.0
  %5045 = vmatpush2.msra.mxu0 0.0
  %5046 = vmatprep.subr.mxu0 0.0
  %5047 = vmatpush2.msra.mxu0 0.0
  %5048 = vmatprep.subr.mxu0 0.0
  %5049 = vmatpush2.msra.mxu0 0.0
  %5050 = vmatprep.subr.mxu0 0.0
  %5051 = vmatpush2.msra.mxu0 0.0
  %5052 = vmatprep.mubr.f32.mxu0 0.0
  %5053 = vmatmul.mubr.f32.gmra.mxu0 %v4986
  %v5054 = vpop.f32.mrf.mxu0
  %v5055 = vadd.f32 0.0, %v5054
  %v5056 = vpop.f32.mrf.mxu0
  %5057 = vdwg.mxu0
  %v5058 = vadd.f32 %v4981, %v5055
  %v5059 = vadd.f32 %v5058, %v80
  %v5060 = vmax.f32 %v5059, 0.0
  %v5061 = vld [vmem:[%s12] sm:$0xff]
  %v5062 = vld [vmem:[%s12 + $0x8] sm:$0xff]
  %v5063 = vld [vmem:[%s12 + $0x10] sm:$0xff]
  %v5064 = vld [vmem:[%s12 + $0x18] sm:$0xff]
  %v5065 = vld [vmem:[%s12 + $0x20] sm:$0xff]
  %v5066 = vld [vmem:[%s12 + $0x28] sm:$0xff]
  %v5067 = vld [vmem:[%s12 + $0x30] sm:$0xff]
  %v5068 = vld [vmem:[%s12 + $0x38] sm:$0xff]
  %v5070 = vsel %vm617, %v5060, 0
  %5072 = vmatprep.subr.mxu0 0.0
  %5073 = vmatpush1.msra.mxu0 0.0
  %5074 = vmatprep.subr.mxu0 0.0
  %5075 = vmatpush1.msra.mxu0 0.0
  %5076 = vmatprep.subr.mxu0 0.0
  %5077 = vmatpush1.msra.mxu0 0.0
  %5078 = vmatprep.subr.mxu0 0.0
  %5079 = vmatpush1.msra.mxu0 0.0
  %5080 = vmatprep.subr.mxu0 0.0
  %5081 = vmatpush1.msra.mxu0 0.0
  %5082 = vmatprep.subr.mxu0 0.0
  %5083 = vmatpush1.msra.mxu0 0.0
  %5084 = vmatprep.subr.mxu0 0.0
  %5085 = vmatpush1.msra.mxu0 0.0
  %5086 = vmatprep.subr.mxu0 0.0
  %5087 = vmatpush1.msra.mxu0 0.0
  %5088 = vmatprep.subr.mxu0 0.0
  %5089 = vmatpush1.msra.mxu0 %v5068
  %5090 = vmatprep.subr.mxu0 0.0
  %5091 = vmatpush1.msra.mxu0 %v5067
  %5092 = vmatprep.subr.mxu0 0.0
  %5093 = vmatpush1.msra.mxu0 %v5066
  %5094 = vmatprep.subr.mxu0 0.0
  %5095 = vmatpush1.msra.mxu0 %v5065
  %5096 = vmatprep.subr.mxu0 0.0
  %5097 = vmatpush1.msra.mxu0 %v5064
  %5098 = vmatprep.subr.mxu0 0.0
  %5099 = vmatpush1.msra.mxu0 %v5063
  %5100 = vmatprep.subr.mxu0 0.0
  %5101 = vmatpush1.msra.mxu0 %v5062
  %5102 = vmatprep.subr.mxu0 0.0
  %5103 = vmatpush1.msra.mxu0 %v5061
  %5104 = vmatprep.subr.mxu0 0.0
  %5105 = vmatpush2.msra.mxu0 0.0
  %5106 = vmatprep.subr.mxu0 0.0
  %5107 = vmatpush2.msra.mxu0 0.0
  %5108 = vmatprep.subr.mxu0 0.0
  %5109 = vmatpush2.msra.mxu0 0.0
  %5110 = vmatprep.subr.mxu0 0.0
  %5111 = vmatpush2.msra.mxu0 0.0
  %5112 = vmatprep.subr.mxu0 0.0
  %5113 = vmatpush2.msra.mxu0 0.0
  %5114 = vmatprep.subr.mxu0 0.0
  %5115 = vmatpush2.msra.mxu0 0.0
  %5116 = vmatprep.subr.mxu0 0.0
  %5117 = vmatpush2.msra.mxu0 0.0
  %5118 = vmatprep.subr.mxu0 0.0
  %5119 = vmatpush2.msra.mxu0 0.0
  %5120 = vmatprep.subr.mxu0 0.0
  %5121 = vmatpush2.msra.mxu0 0.0
  %5122 = vmatprep.subr.mxu0 0.0
  %5123 = vmatpush2.msra.mxu0 0.0
  %5124 = vmatprep.subr.mxu0 0.0
  %5125 = vmatpush2.msra.mxu0 0.0
  %5126 = vmatprep.subr.mxu0 0.0
  %5127 = vmatpush2.msra.mxu0 0.0
  %5128 = vmatprep.subr.mxu0 0.0
  %5129 = vmatpush2.msra.mxu0 0.0
  %5130 = vmatprep.subr.mxu0 0.0
  %5131 = vmatpush2.msra.mxu0 0.0
  %5132 = vmatprep.subr.mxu0 0.0
  %5133 = vmatpush2.msra.mxu0 0.0
  %5134 = vmatprep.subr.mxu0 0.0
  %5135 = vmatpush2.msra.mxu0 0.0
  %5136 = vmatprep.mubr.f32.mxu0 0.0
  %5137 = vmatmul.mubr.f32.gmra.mxu0 %v5070
  %v5138 = vpop.f32.mrf.mxu0
  %v5139 = vadd.f32 %v87, %v5138
  %v5140 = vpop.f32.mrf.mxu0
  %5141 = vdwg.mxu0
  %v5142 = vld [vmem:[%s14] sm:$0xff]
  %v5143 = vld [vmem:[%s14 + $0x8] sm:$0xff]
  %v5144 = vld [vmem:[%s14 + $0x10] sm:$0xff]
  %v5145 = vld [vmem:[%s14 + $0x18] sm:$0xff]
  %v5146 = vld [vmem:[%s15] sm:$0xff]
  %5147 = vmatprep.subr.mxu0 0.0
  %5148 = vmatpush1.msra.mxu0 0.0
  %5149 = vmatprep.subr.mxu0 0.0
  %5150 = vmatpush1.msra.mxu0 0.0
  %5151 = vmatprep.subr.mxu0 0.0
  %5152 = vmatpush1.msra.mxu0 0.0
  %5153 = vmatprep.subr.mxu0 0.0
  %5154 = vmatpush1.msra.mxu0 0.0
  %5155 = vmatprep.subr.mxu0 0.0
  %5156 = vmatpush1.msra.mxu0 0.0
  %5157 = vmatprep.subr.mxu0 0.0
  %5158 = vmatpush1.msra.mxu0 0.0
  %5159 = vmatprep.subr.mxu0 0.0
  %5160 = vmatpush1.msra.mxu0 0.0
  %5161 = vmatprep.subr.mxu0 0.0
  %5162 = vmatpush1.msra.mxu0 0.0
  %5163 = vmatprep.subr.mxu0 0.0
  %5164 = vmatpush1.msra.mxu0 0.0
  %5165 = vmatprep.subr.mxu0 0.0
  %5166 = vmatpush1.msra.mxu0 0.0
  %5167 = vmatprep.subr.mxu0 0.0
  %5168 = vmatpush1.msra.mxu0 0.0
  %5169 = vmatprep.subr.mxu0 0.0
  %5170 = vmatpush1.msra.mxu0 0.0
  %5171 = vmatprep.subr.mxu0 0.0
  %5172 = vmatpush1.msra.mxu0 0.0
  %5173 = vmatprep.subr.mxu0 0.0
  %5174 = vmatpush1.msra.mxu0 0.0
  %5175 = vmatprep.subr.mxu0 0.0
  %5176 = vmatpush1.msra.mxu0 0.0
  %5177 = vmatprep.subr.mxu0 0.0
  %5178 = vmatpush1.msra.mxu0 %v5146
  %5179 = vmatprep.subr.mxu0 0.0
  %5180 = vmatpush2.msra.mxu0 0.0
  %5181 = vmatprep.subr.mxu0 0.0
  %5182 = vmatpush2.msra.mxu0 0.0
  %5183 = vmatprep.subr.mxu0 0.0
  %5184 = vmatpush2.msra.mxu0 0.0
  %5185 = vmatprep.subr.mxu0 0.0
  %5186 = vmatpush2.msra.mxu0 0.0
  %5187 = vmatprep.subr.mxu0 0.0
  %5188 = vmatpush2.msra.mxu0 0.0
  %5189 = vmatprep.subr.mxu0 0.0
  %5190 = vmatpush2.msra.mxu0 0.0
  %5191 = vmatprep.subr.mxu0 0.0
  %5192 = vmatpush2.msra.mxu0 0.0
  %5193 = vmatprep.subr.mxu0 0.0
  %5194 = vmatpush2.msra.mxu0 0.0
  %5195 = vmatprep.subr.mxu0 0.0
  %5196 = vmatpush2.msra.mxu0 0.0
  %5197 = vmatprep.subr.mxu0 0.0
  %5198 = vmatpush2.msra.mxu0 0.0
  %5199 = vmatprep.subr.mxu0 0.0
  %5200 = vmatpush2.msra.mxu0 0.0
  %5201 = vmatprep.subr.mxu0 0.0
  %5202 = vmatpush2.msra.mxu0 0.0
  %5203 = vmatprep.subr.mxu0 0.0
  %5204 = vmatpush2.msra.mxu0 0.0
  %5205 = vmatprep.subr.mxu0 0.0
  %5206 = vmatpush2.msra.mxu0 0.0
  %5207 = vmatprep.subr.mxu0 0.0
  %5208 = vmatpush2.msra.mxu0 0.0
  %5209 = vmatprep.subr.mxu0 0.0
  %5210 = vmatpush2.msra.mxu0 0.0
  %5211 = vmatprep.mubr.f32.mxu0 0.0
  %5212 = vmatmul.mubr.f32.gmra.mxu0 %v4986
  %v5213 = vpop.f32.mrf.mxu0
  %v5214 = vadd.f32 0.0, %v5213
  %v5215 = vpop.f32.mrf.mxu0
  %5216 = vdwg.mxu0
  %5217 = vmatprep.subr.mxu0 0.0
  %5218 = vmatpush1.msra.mxu0 0.0
  %5219 = vmatprep.subr.mxu0 0.0
  %5220 = vmatpush1.msra.mxu0 0.0
  %5221 = vmatprep.subr.mxu0 0.0
  %5222 = vmatpush1.msra.mxu0 0.0
  %5223 = vmatprep.subr.mxu0 0.0
  %5224 = vmatpush1.msra.mxu0 0.0
  %5225 = vmatprep.subr.mxu0 0.0
  %5226 = vmatpush1.msra.mxu0 0.0
  %5227 = vmatprep.subr.mxu0 0.0
  %5228 = vmatpush1.msra.mxu0 0.0
  %5229 = vmatprep.subr.mxu0 0.0
  %5230 = vmatpush1.msra.mxu0 0.0
  %5231 = vmatprep.subr.mxu0 0.0
  %5232 = vmatpush1.msra.mxu0 0.0
  %5233 = vmatprep.subr.mxu0 0.0
  %5234 = vmatpush1.msra.mxu0 0.0
  %5235 = vmatprep.subr.mxu0 0.0
  %5236 = vmatpush1.msra.mxu0 0.0
  %5237 = vmatprep.subr.mxu0 0.0
  %5238 = vmatpush1.msra.mxu0 0.0
  %5239 = vmatprep.subr.mxu0 0.0
  %5240 = vmatpush1.msra.mxu0 0.0
  %5241 = vmatprep.subr.mxu0 0.0
  %5242 = vmatpush1.msra.mxu0 %v5145
  %5243 = vmatprep.subr.mxu0 0.0
  %5244 = vmatpush1.msra.mxu0 %v5144
  %5245 = vmatprep.subr.mxu0 0.0
  %5246 = vmatpush1.msra.mxu0 %v5143
  %5247 = vmatprep.subr.mxu0 0.0
  %5248 = vmatpush1.msra.mxu0 %v5142
  %5249 = vmatprep.subr.mxu0 0.0
  %5250 = vmatpush2.msra.mxu0 0.0
  %5251 = vmatprep.subr.mxu0 0.0
  %5252 = vmatpush2.msra.mxu0 0.0
  %5253 = vmatprep.subr.mxu0 0.0
  %5254 = vmatpush2.msra.mxu0 0.0
  %5255 = vmatprep.subr.mxu0 0.0
  %5256 = vmatpush2.msra.mxu0 0.0
  %5257 = vmatprep.subr.mxu0 0.0
  %5258 = vmatpush2.msra.mxu0 0.0
  %5259 = vmatprep.subr.mxu0 0.0
  %5260 = vmatpush2.msra.mxu0 0.0
  %5261 = vmatprep.subr.mxu0 0.0
  %5262 = vmatpush2.msra.mxu0 0.0
  %5263 = vmatprep.subr.mxu0 0.0
  %5264 = vmatpush2.msra.mxu0 0.0
  %5265 = vmatprep.subr.mxu0 0.0
  %5266 = vmatpush2.msra.mxu0 0.0
  %5267 = vmatprep.subr.mxu0 0.0
  %5268 = vmatpush2.msra.mxu0 0.0
  %5269 = vmatprep.subr.mxu0 0.0
  %5270 = vmatpush2.msra.mxu0 0.0
  %5271 = vmatprep.subr.mxu0 0.0
  %5272 = vmatpush2.msra.mxu0 0.0
  %5273 = vmatprep.subr.mxu0 0.0
  %5274 = vmatpush2.msra.mxu0 0.0
  %5275 = vmatprep.subr.mxu0 0.0
  %5276 = vmatpush2.msra.mxu0 0.0
  %5277 = vmatprep.subr.mxu0 0.0
  %5278 = vmatpush2.msra.mxu0 0.0
  %5279 = vmatprep.subr.mxu0 0.0
  %5280 = vmatpush2.msra.mxu0 0.0
  %5281 = vmatprep.mubr.f32.mxu0 0.0
  %5282 = vmatmul.mubr.f32.gmra.mxu0 %v4572
  %v5283 = vpop.f32.mrf.mxu0
  %v5284 = vadd.f32 %v5214, %v5283
  %v5285 = vpop.f32.mrf.mxu0
  %5286 = vdwg.mxu0
  %v5287 = vadd.f32 %v5284, %v94
  %v5288 = vxor.u32 %v5287, 2147483648
  %v5289 = vmul.f32 %v5288, 1.442695
  %v5290 = vpow.pop %v5289
  %v5291 = vadd.f32 %v5290, 1.0
  %v5292 = vrcp.pop %v5291
  %v5293 = vmul.f32 1.0, %v5292
  %v5294 = vsel %vm100, %v5293, %v4822
  %s5295 = scalar_lea.vmem %s17, 48
  %5296 = vst [vmem:[%s5295] sm:$0xff] %v5294
  %s5297 = scalar_lea.vmem %s0, 56
  %v5298 = vld [vmem:[%s5297] sm:$0xff]
  %s5299 = scalar_lea.vmem %s1, 56
  %v5300 = vld [vmem:[%s5299] sm:$0xff]
  %v5301 = vld [vmem:[%s3] sm:$0xff]
  %v5302 = vld [vmem:[%s3 + $0x8] sm:$0xff]
  %v5303 = vld [vmem:[%s3 + $0x10] sm:$0xff]
  %v5304 = vld [vmem:[%s3 + $0x18] sm:$0xff]
  %v5305 = vld [vmem:[%s4] sm:$0xff]
  %v5306 = vld [vmem:[%s4 + $0x8] sm:$0xff]
  %v5307 = vld [vmem:[%s4 + $0x10] sm:$0xff]
  %v5308 = vld [vmem:[%s4 + $0x18] sm:$0xff]
  %v5309 = vld [vmem:[%s4 + $0x20] sm:$0xff]
  %v5310 = vld [vmem:[%s4 + $0x28] sm:$0xff]
  %v5311 = vld [vmem:[%s4 + $0x30] sm:$0xff]
  %v5312 = vld [vmem:[%s4 + $0x38] sm:$0xff]
  %v5314 = vsel %vm116, %v5139, 0
  %5316 = vmatprep.subr.mxu0 0.0
  %5317 = vmatpush1.msra.mxu0 0.0
  %5318 = vmatprep.subr.mxu0 0.0
  %5319 = vmatpush1.msra.mxu0 0.0
  %5320 = vmatprep.subr.mxu0 0.0
  %5321 = vmatpush1.msra.mxu0 0.0
  %5322 = vmatprep.subr.mxu0 0.0
  %5323 = vmatpush1.msra.mxu0 0.0
  %5324 = vmatprep.subr.mxu0 0.0
  %5325 = vmatpush1.msra.mxu0 0.0
  %5326 = vmatprep.subr.mxu0 0.0
  %5327 = vmatpush1.msra.mxu0 0.0
  %5328 = vmatprep.subr.mxu0 0.0
  %5329 = vmatpush1.msra.mxu0 0.0
  %5330 = vmatprep.subr.mxu0 0.0
  %5331 = vmatpush1.msra.mxu0 0.0
  %5332 = vmatprep.subr.mxu0 0.0
  %5333 = vmatpush1.msra.mxu0 0.0
  %5334 = vmatprep.subr.mxu0 0.0
  %5335 = vmatpush1.msra.mxu0 0.0
  %5336 = vmatprep.subr.mxu0 0.0
  %5337 = vmatpush1.msra.mxu0 0.0
  %5338 = vmatprep.subr.mxu0 0.0
  %5339 = vmatpush1.msra.mxu0 0.0
  %5340 = vmatprep.subr.mxu0 %v5312
  %5341 = vmatpush1.msra.mxu0 %v5311
  %5342 = vmatprep.subr.mxu0 %v5310
  %5343 = vmatpush1.msra.mxu0 %v5309
  %5344 = vmatprep.subr.mxu0 %v5308
  %5345 = vmatpush1.msra.mxu0 %v5307
  %5346 = vmatprep.subr.mxu0 %v5306
  %5347 = vmatpush1.msra.mxu0 %v5305
  %5348 = vmatprep.subr.mxu0 0.0
  %5349 = vmatpush2.msra.mxu0 0.0
  %5350 = vmatprep.subr.mxu0 0.0
  %5351 = vmatpush2.msra.mxu0 0.0
  %5352 = vmatprep.subr.mxu0 0.0
  %5353 = vmatpush2.msra.mxu0 0.0
  %5354 = vmatprep.subr.mxu0 0.0
  %5355 = vmatpush2.msra.mxu0 0.0
  %5356 = vmatprep.subr.mxu0 0.0
  %5357 = vmatpush2.msra.mxu0 0.0
  %5358 = vmatprep.subr.mxu0 0.0
  %5359 = vmatpush2.msra.mxu0 0.0
  %5360 = vmatprep.subr.mxu0 0.0
  %5361 = vmatpush2.msra.mxu0 0.0
  %5362 = vmatprep.subr.mxu0 0.0
  %5363 = vmatpush2.msra.mxu0 0.0
  %5364 = vmatprep.subr.mxu0 0.0
  %5365 = vmatpush2.msra.mxu0 0.0
  %5366 = vmatprep.subr.mxu0 0.0
  %5367 = vmatpush2.msra.mxu0 0.0
  %5368 = vmatprep.subr.mxu0 0.0
  %5369 = vmatpush2.msra.mxu0 0.0
  %5370 = vmatprep.subr.mxu0 0.0
  %5371 = vmatpush2.msra.mxu0 0.0
  %5372 = vmatprep.subr.mxu0 0.0
  %5373 = vmatpush2.msra.mxu0 0.0
  %5374 = vmatprep.subr.mxu0 0.0
  %5375 = vmatpush2.msra.mxu0 0.0
  %5376 = vmatprep.subr.mxu0 0.0
  %5377 = vmatpush2.msra.mxu0 0.0
  %5378 = vmatprep.subr.mxu0 0.0
  %5379 = vmatpush2.msra.mxu0 0.0
  %5380 = vmatprep.mubr.f32.mxu0 0.0
  %5381 = vmatmul.mubr.f32.gmra.mxu0 %v5314
  %v5382 = vpop.f32.mrf.mxu0
  %v5383 = vadd.f32 0.0, %v5382
  %v5384 = vpop.f32.mrf.mxu0
  %v5385 = vadd.f32 0.0, %v5384
  %5386 = vdwg.mxu0
  %v5388 = vsel %vm191, %v5298, 0
  %5390 = vmatprep.subr.mxu0 0.0
  %5391 = vmatpush1.msra.mxu0 0.0
  %5392 = vmatprep.subr.mxu0 0.0
  %5393 = vmatpush1.msra.mxu0 0.0
  %5394 = vmatprep.subr.mxu0 0.0
  %5395 = vmatpush1.msra.mxu0 0.0
  %5396 = vmatprep.subr.mxu0 0.0
  %5397 = vmatpush1.msra.mxu0 0.0
  %5398 = vmatprep.subr.mxu0 0.0
  %5399 = vmatpush1.msra.mxu0 0.0
  %5400 = vmatprep.subr.mxu0 0.0
  %5401 = vmatpush1.msra.mxu0 0.0
  %5402 = vmatprep.subr.mxu0 0.0
  %5403 = vmatpush1.msra.mxu0 0.0
  %5404 = vmatprep.subr.mxu0 0.0
  %5405 = vmatpush1.msra.mxu0 0.0
  %5406 = vmatprep.subr.mxu0 0.0
  %5407 = vmatpush1.msra.mxu0 0.0
  %5408 = vmatprep.subr.mxu0 0.0
  %5409 = vmatpush1.msra.mxu0 0.0
  %5410 = vmatprep.subr.mxu0 0.0
  %5411 = vmatpush1.msra.mxu0 0.0
  %5412 = vmatprep.subr.mxu0 0.0
  %5413 = vmatpush1.msra.mxu0 0.0
  %5414 = vmatprep.subr.mxu0 0.0
  %5415 = vmatpush1.msra.mxu0 0.0
  %5416 = vmatprep.subr.mxu0 0.0
  %5417 = vmatpush1.msra.mxu0 0.0
  %5418 = vmatprep.subr.mxu0 %v5304
  %5419 = vmatpush1.msra.mxu0 %v5303
  %5420 = vmatprep.subr.mxu0 %v5302
  %5421 = vmatpush1.msra.mxu0 %v5301
  %5422 = vmatprep.subr.mxu0 0.0
  %5423 = vmatpush2.msra.mxu0 0.0
  %5424 = vmatprep.subr.mxu0 0.0
  %5425 = vmatpush2.msra.mxu0 0.0
  %5426 = vmatprep.subr.mxu0 0.0
  %5427 = vmatpush2.msra.mxu0 0.0
  %5428 = vmatprep.subr.mxu0 0.0
  %5429 = vmatpush2.msra.mxu0 0.0
  %5430 = vmatprep.subr.mxu0 0.0
  %5431 = vmatpush2.msra.mxu0 0.0
  %5432 = vmatprep.subr.mxu0 0.0
  %5433 = vmatpush2.msra.mxu0 0.0
  %5434 = vmatprep.subr.mxu0 0.0
  %5435 = vmatpush2.msra.mxu0 0.0
  %5436 = vmatprep.subr.mxu0 0.0
  %5437 = vmatpush2.msra.mxu0 0.0
  %5438 = vmatprep.subr.mxu0 0.0
  %5439 = vmatpush2.msra.mxu0 0.0
  %5440 = vmatprep.subr.mxu0 0.0
  %5441 = vmatpush2.msra.mxu0 0.0
  %5442 = vmatprep.subr.mxu0 0.0
  %5443 = vmatpush2.msra.mxu0 0.0
  %5444 = vmatprep.subr.mxu0 0.0
  %5445 = vmatpush2.msra.mxu0 0.0
  %5446 = vmatprep.subr.mxu0 0.0
  %5447 = vmatpush2.msra.mxu0 0.0
  %5448 = vmatprep.subr.mxu0 0.0
  %5449 = vmatpush2.msra.mxu0 0.0
  %5450 = vmatprep.subr.mxu0 0.0
  %5451 = vmatpush2.msra.mxu0 0.0
  %5452 = vmatprep.subr.mxu0 0.0
  %5453 = vmatpush2.msra.mxu0 0.0
  %5454 = vmatprep.mubr.f32.mxu0 0.0
  %5455 = vmatmul.mubr.f32.gmra.mxu0 %v5388
  %v5456 = vpop.f32.mrf.mxu0
  %v5457 = vadd.f32 %v5383, %v5456
  %v5458 = vpop.f32.mrf.mxu0
  %v5459 = vadd.f32 %v5385, %v5458
  %5460 = vdwg.mxu0
  %v5461 = vadd.f32 %v5457, %v61
  %v5462 = vadd.f32 %v5459, %v65
  %v5463 = vmax.f32 %v5461, 0.0
  %v5464 = vmax.f32 %v5462, 0.0
  %v5465 = vld [vmem:[%s6] sm:$0xff]
  %v5466 = vld [vmem:[%s6 + $0x8] sm:$0xff]
  %v5467 = vld [vmem:[%s6 + $0x10] sm:$0xff]
  %v5468 = vld [vmem:[%s6 + $0x18] sm:$0xff]
  %v5469 = vld [vmem:[%s6 + $0x20] sm:$0xff]
  %v5470 = vld [vmem:[%s6 + $0x28] sm:$0xff]
  %v5471 = vld [vmem:[%s6 + $0x30] sm:$0xff]
  %v5472 = vld [vmem:[%s6 + $0x38] sm:$0xff]
  %v5473 = vld [vmem:[%s6 + $0x40] sm:$0xff]
  %v5474 = vld [vmem:[%s6 + $0x48] sm:$0xff]
  %v5475 = vld [vmem:[%s6 + $0x50] sm:$0xff]
  %v5476 = vld [vmem:[%s6 + $0x58] sm:$0xff]
  %v5477 = vld [vmem:[%s6 + $0x60] sm:$0xff]
  %v5478 = vld [vmem:[%s6 + $0x68] sm:$0xff]
  %v5479 = vld [vmem:[%s6 + $0x70] sm:$0xff]
  %v5480 = vld [vmem:[%s6 + $0x78] sm:$0xff]
  %v5481 = vld [vmem:[%s6 + $0x80] sm:$0xff]
  %v5482 = vld [vmem:[%s6 + $0x88] sm:$0xff]
  %v5483 = vld [vmem:[%s6 + $0x90] sm:$0xff]
  %v5484 = vld [vmem:[%s6 + $0x98] sm:$0xff]
  %v5485 = vld [vmem:[%s6 + $0xa0] sm:$0xff]
  %v5486 = vld [vmem:[%s6 + $0xa8] sm:$0xff]
  %v5487 = vld [vmem:[%s6 + $0xb0] sm:$0xff]
  %v5488 = vld [vmem:[%s6 + $0xb8] sm:$0xff]
  %v5489 = vld [vmem:[%s6 + $0xc0] sm:$0xff]
  %v5490 = vld [vmem:[%s6 + $0xc8] sm:$0xff]
  %v5491 = vld [vmem:[%s6 + $0xd0] sm:$0xff]
  %v5492 = vld [vmem:[%s6 + $0xd8] sm:$0xff]
  %v5493 = vld [vmem:[%s6 + $0xe0] sm:$0xff]
  %v5494 = vld [vmem:[%s6 + $0xe8] sm:$0xff]
  %v5495 = vld [vmem:[%s6 + $0xf0] sm:$0xff]
  %v5496 = vld [vmem:[%s6 + $0xf8] sm:$0xff]
  %5497 = vmatprep.subr.mxu0 0.0
  %5498 = vmatpush1.msra.mxu0 %v5480
  %5499 = vmatprep.subr.mxu0 0.0
  %5500 = vmatpush1.msra.mxu0 %v5479
  %5501 = vmatprep.subr.mxu0 0.0
  %5502 = vmatpush1.msra.mxu0 %v5478
  %5503 = vmatprep.subr.mxu0 0.0
  %5504 = vmatpush1.msra.mxu0 %v5477
  %5505 = vmatprep.subr.mxu0 0.0
  %5506 = vmatpush1.msra.mxu0 %v5476
  %5507 = vmatprep.subr.mxu0 0.0
  %5508 = vmatpush1.msra.mxu0 %v5475
  %5509 = vmatprep.subr.mxu0 0.0
  %5510 = vmatpush1.msra.mxu0 %v5474
  %5511 = vmatprep.subr.mxu0 0.0
  %5512 = vmatpush1.msra.mxu0 %v5473
  %5513 = vmatprep.subr.mxu0 0.0
  %5514 = vmatpush1.msra.mxu0 %v5472
  %5515 = vmatprep.subr.mxu0 0.0
  %5516 = vmatpush1.msra.mxu0 %v5471
  %5517 = vmatprep.subr.mxu0 0.0
  %5518 = vmatpush1.msra.mxu0 %v5470
  %5519 = vmatprep.subr.mxu0 0.0
  %5520 = vmatpush1.msra.mxu0 %v5469
  %5521 = vmatprep.subr.mxu0 0.0
  %5522 = vmatpush1.msra.mxu0 %v5468
  %5523 = vmatprep.subr.mxu0 0.0
  %5524 = vmatpush1.msra.mxu0 %v5467
  %5525 = vmatprep.subr.mxu0 0.0
  %5526 = vmatpush1.msra.mxu0 %v5466
  %5527 = vmatprep.subr.mxu0 0.0
  %5528 = vmatpush1.msra.mxu0 %v5465
  %5529 = vmatprep.subr.mxu0 0.0
  %5530 = vmatpush2.msra.mxu0 %v5496
  %5531 = vmatprep.subr.mxu0 0.0
  %5532 = vmatpush2.msra.mxu0 %v5495
  %5533 = vmatprep.subr.mxu0 0.0
  %5534 = vmatpush2.msra.mxu0 %v5494
  %5535 = vmatprep.subr.mxu0 0.0
  %5536 = vmatpush2.msra.mxu0 %v5493
  %5537 = vmatprep.subr.mxu0 0.0
  %5538 = vmatpush2.msra.mxu0 %v5492
  %5539 = vmatprep.subr.mxu0 0.0
  %5540 = vmatpush2.msra.mxu0 %v5491
  %5541 = vmatprep.subr.mxu0 0.0
  %5542 = vmatpush2.msra.mxu0 %v5490
  %5543 = vmatprep.subr.mxu0 0.0
  %5544 = vmatpush2.msra.mxu0 %v5489
  %5545 = vmatprep.subr.mxu0 0.0
  %5546 = vmatpush2.msra.mxu0 %v5488
  %5547 = vmatprep.subr.mxu0 0.0
  %5548 = vmatpush2.msra.mxu0 %v5487
  %5549 = vmatprep.subr.mxu0 0.0
  %5550 = vmatpush2.msra.mxu0 %v5486
  %5551 = vmatprep.subr.mxu0 0.0
  %5552 = vmatpush2.msra.mxu0 %v5485
  %5553 = vmatprep.subr.mxu0 0.0
  %5554 = vmatpush2.msra.mxu0 %v5484
  %5555 = vmatprep.subr.mxu0 0.0
  %5556 = vmatpush2.msra.mxu0 %v5483
  %5557 = vmatprep.subr.mxu0 0.0
  %5558 = vmatpush2.msra.mxu0 %v5482
  %5559 = vmatprep.subr.mxu0 0.0
  %5560 = vmatpush2.msra.mxu0 %v5481
  %5561 = vmatprep.mubr.f32.mxu0 %v5464
  %5562 = vmatmul.mubr.f32.gmra.mxu0 %v5463
  %v5563 = vpop.f32.mrf.mxu0
  %v5564 = vadd.f32 %v73, %v5563
  %v5565 = vpop.f32.mrf.mxu0
  %5566 = vdwg.mxu0
  %v5567 = vmul.f32 %v5564, 0.5
  %v5568 = vmul.f32 %v5567, 1.442695
  %v5569 = vpow.pop %v5568
  %5571 = vrot.lane.b32.xlu0 %v5300, 8
  %v5572 = vpop.permute.xlu0 %5571
  %v5574 = vmul.f32 %v5569, %v5572
  %5576 = vrot.lane.b32.xlu0 %v5574, 120
  %v5577 = vpop.permute.xlu0 %5576
  %v5579 = vadd.f32 %v5564, %v5577
  %v5580 = vld [vmem:[%s14] sm:$0xff]
  %v5581 = vld [vmem:[%s14 + $0x8] sm:$0xff]
  %v5582 = vld [vmem:[%s14 + $0x10] sm:$0xff]
  %v5583 = vld [vmem:[%s14 + $0x18] sm:$0xff]
  %v5584 = vld [vmem:[%s15] sm:$0xff]
  %v5586 = vsel %vm532, %v5579, 0
  %5588 = vmatprep.subr.mxu0 0.0
  %5589 = vmatpush1.msra.mxu0 0.0
  %5590 = vmatprep.subr.mxu0 0.0
  %5591 = vmatpush1.msra.mxu0 0.0
  %5592 = vmatprep.subr.mxu0 0.0
  %5593 = vmatpush1.msra.mxu0 0.0
  %5594 = vmatprep.subr.mxu0 0.0
  %5595 = vmatpush1.msra.mxu0 0.0
  %5596 = vmatprep.subr.mxu0 0.0
  %5597 = vmatpush1.msra.mxu0 0.0
  %5598 = vmatprep.subr.mxu0 0.0
  %5599 = vmatpush1.msra.mxu0 0.0
  %5600 = vmatprep.subr.mxu0 0.0
  %5601 = vmatpush1.msra.mxu0 0.0
  %5602 = vmatprep.subr.mxu0 0.0
  %5603 = vmatpush1.msra.mxu0 0.0
  %5604 = vmatprep.subr.mxu0 0.0
  %5605 = vmatpush1.msra.mxu0 0.0
  %5606 = vmatprep.subr.mxu0 0.0
  %5607 = vmatpush1.msra.mxu0 0.0
  %5608 = vmatprep.subr.mxu0 0.0
  %5609 = vmatpush1.msra.mxu0 0.0
  %5610 = vmatprep.subr.mxu0 0.0
  %5611 = vmatpush1.msra.mxu0 0.0
  %5612 = vmatprep.subr.mxu0 0.0
  %5613 = vmatpush1.msra.mxu0 0.0
  %5614 = vmatprep.subr.mxu0 0.0
  %5615 = vmatpush1.msra.mxu0 0.0
  %5616 = vmatprep.subr.mxu0 0.0
  %5617 = vmatpush1.msra.mxu0 0.0
  %5618 = vmatprep.subr.mxu0 0.0
  %5619 = vmatpush1.msra.mxu0 %v5584
  %5620 = vmatprep.subr.mxu0 0.0
  %5621 = vmatpush2.msra.mxu0 0.0
  %5622 = vmatprep.subr.mxu0 0.0
  %5623 = vmatpush2.msra.mxu0 0.0
  %5624 = vmatprep.subr.mxu0 0.0
  %5625 = vmatpush2.msra.mxu0 0.0
  %5626 = vmatprep.subr.mxu0 0.0
  %5627 = vmatpush2.msra.mxu0 0.0
  %5628 = vmatprep.subr.mxu0 0.0
  %5629 = vmatpush2.msra.mxu0 0.0
  %5630 = vmatprep.subr.mxu0 0.0
  %5631 = vmatpush2.msra.mxu0 0.0
  %5632 = vmatprep.subr.mxu0 0.0
  %5633 = vmatpush2.msra.mxu0 0.0
  %5634 = vmatprep.subr.mxu0 0.0
  %5635 = vmatpush2.msra.mxu0 0.0
  %5636 = vmatprep.subr.mxu0 0.0
  %5637 = vmatpush2.msra.mxu0 0.0
  %5638 = vmatprep.subr.mxu0 0.0
  %5639 = vmatpush2.msra.mxu0 0.0
  %5640 = vmatprep.subr.mxu0 0.0
  %5641 = vmatpush2.msra.mxu0 0.0
  %5642 = vmatprep.subr.mxu0 0.0
  %5643 = vmatpush2.msra.mxu0 0.0
  %5644 = vmatprep.subr.mxu0 0.0
  %5645 = vmatpush2.msra.mxu0 0.0
  %5646 = vmatprep.subr.mxu0 0.0
  %5647 = vmatpush2.msra.mxu0 0.0
  %5648 = vmatprep.subr.mxu0 0.0
  %5649 = vmatpush2.msra.mxu0 0.0
  %5650 = vmatprep.subr.mxu0 0.0
  %5651 = vmatpush2.msra.mxu0 0.0
  %5652 = vmatprep.mubr.f32.mxu0 0.0
  %5653 = vmatmul.mubr.f32.gmra.mxu0 %v5586
  %v5654 = vpop.f32.mrf.mxu0
  %v5655 = vadd.f32 0.0, %v5654
  %v5656 = vpop.f32.mrf.mxu0
  %5657 = vdwg.mxu0
  %5658 = vmatprep.subr.mxu0 0.0
  %5659 = vmatpush1.msra.mxu0 0.0
  %5660 = vmatprep.subr.mxu0 0.0
  %5661 = vmatpush1.msra.mxu0 0.0
  %5662 = vmatprep.subr.mxu0 0.0
  %5663 = vmatpush1.msra.mxu0 0.0
  %5664 = vmatprep.subr.mxu0 0.0
  %5665 = vmatpush1.msra.mxu0 0.0
  %5666 = vmatprep.subr.mxu0 0.0
  %5667 = vmatpush1.msra.mxu0 0.0
  %5668 = vmatprep.subr.mxu0 0.0
  %5669 = vmatpush1.msra.mxu0 0.0
  %5670 = vmatprep.subr.mxu0 0.0
  %5671 = vmatpush1.msra.mxu0 0.0
  %5672 = vmatprep.subr.mxu0 0.0
  %5673 = vmatpush1.msra.mxu0 0.0
  %5674 = vmatprep.subr.mxu0 0.0
  %5675 = vmatpush1.msra.mxu0 0.0
  %5676 = vmatprep.subr.mxu0 0.0
  %5677 = vmatpush1.msra.mxu0 0.0
  %5678 = vmatprep.subr.mxu0 0.0
  %5679 = vmatpush1.msra.mxu0 0.0
  %5680 = vmatprep.subr.mxu0 0.0
  %5681 = vmatpush1.msra.mxu0 0.0
  %5682 = vmatprep.subr.mxu0 0.0
  %5683 = vmatpush1.msra.mxu0 %v5583
  %5684 = vmatprep.subr.mxu0 0.0
  %5685 = vmatpush1.msra.mxu0 %v5582
  %5686 = vmatprep.subr.mxu0 0.0
  %5687 = vmatpush1.msra.mxu0 %v5581
  %5688 = vmatprep.subr.mxu0 0.0
  %5689 = vmatpush1.msra.mxu0 %v5580
  %5690 = vmatprep.subr.mxu0 0.0
  %5691 = vmatpush2.msra.mxu0 0.0
  %5692 = vmatprep.subr.mxu0 0.0
  %5693 = vmatpush2.msra.mxu0 0.0
  %5694 = vmatprep.subr.mxu0 0.0
  %5695 = vmatpush2.msra.mxu0 0.0
  %5696 = vmatprep.subr.mxu0 0.0
  %5697 = vmatpush2.msra.mxu0 0.0
  %5698 = vmatprep.subr.mxu0 0.0
  %5699 = vmatpush2.msra.mxu0 0.0
  %5700 = vmatprep.subr.mxu0 0.0
  %5701 = vmatpush2.msra.mxu0 0.0
  %5702 = vmatprep.subr.mxu0 0.0
  %5703 = vmatpush2.msra.mxu0 0.0
  %5704 = vmatprep.subr.mxu0 0.0
  %5705 = vmatpush2.msra.mxu0 0.0
  %5706 = vmatprep.subr.mxu0 0.0
  %5707 = vmatpush2.msra.mxu0 0.0
  %5708 = vmatprep.subr.mxu0 0.0
  %5709 = vmatpush2.msra.mxu0 0.0
  %5710 = vmatprep.subr.mxu0 0.0
  %5711 = vmatpush2.msra.mxu0 0.0
  %5712 = vmatprep.subr.mxu0 0.0
  %5713 = vmatpush2.msra.mxu0 0.0
  %5714 = vmatprep.subr.mxu0 0.0
  %5715 = vmatpush2.msra.mxu0 0.0
  %5716 = vmatprep.subr.mxu0 0.0
  %5717 = vmatpush2.msra.mxu0 0.0
  %5718 = vmatprep.subr.mxu0 0.0
  %5719 = vmatpush2.msra.mxu0 0.0
  %5720 = vmatprep.subr.mxu0 0.0
  %5721 = vmatpush2.msra.mxu0 0.0
  %5722 = vmatprep.mubr.f32.mxu0 0.0
  %5723 = vmatmul.mubr.f32.gmra.mxu0 %v5314
  %v5724 = vpop.f32.mrf.mxu0
  %v5725 = vadd.f32 %v5655, %v5724
  %v5726 = vpop.f32.mrf.mxu0
  %5727 = vdwg.mxu0
  %v5728 = vadd.f32 %v5725, %v94
  %v5729 = vxor.u32 %v5728, 2147483648
  %v5730 = vmul.f32 %v5729, 1.442695
  %v5731 = vpow.pop %v5730
  %v5732 = vadd.f32 %v5731, 1.0
  %v5733 = vrcp.pop %v5732
  %v5734 = vmul.f32 1.0, %v5733
  %v5735 = vsel %vm100, %v5734, %v5564
  %s5736 = scalar_lea.vmem %s17, 56
  %5737 = vst [vmem:[%s5736] sm:$0xff] %v5735
  // Predicated region
  $region70: #{stochastic_lstm_forward.1} parent=0 // pred_check
    _
  $region71: #{stochastic_lstm_forward.1} parent=0 // pred_check_branch
    %5739 = sbr.rel (0) target = $region73
  $region72: #{stochastic_lstm_forward.1} parent=0 // pred_region
    _
  $region73: #{stochastic_lstm_forward.1} parent=0 // pred_fallthru
    _
  // Predicated region
  $region74: #{stochastic_lstm_forward.1} parent=0 // pred_check
    _
  $region75: #{stochastic_lstm_forward.1} parent=0 // pred_check_branch
    %5741 = sbr.rel (0) target = $region77
  $region76: #{stochastic_lstm_forward.1} parent=0 // pred_region
    _
  $region77: #{stochastic_lstm_forward.1} parent=0 // pred_fallthru
    _

</llo_original>
